<compile_context>
chip_gen: v6e
topology: v6e:2x2x1
jax: 0.10.0
libtpu: 0.0.40
codegen_flags: <defaults>
</compile_context>

<pallas_src>
import functools
import math

import jax
import jax.numpy as jnp
from jax.experimental import pallas as pl
from jax.experimental.pallas import tpu as pltpu


# -----------------------------------------------------------------------------
# Pallas matmul kernel (bias + optional residual + activation fused epilogue)
# -----------------------------------------------------------------------------

def _round_up(x, m):
    return ((x + m - 1) // m) * m


def _mm_bias_act_kernel(x_ref, w_ref, b_ref, *rest, act, has_res):
    """o = act(x @ w + b [+ res]) for one (TM, Kp) x (Kp, Np) tile."""
    if has_res:
        r_ref, o_ref = rest
    else:
        (o_ref,) = rest
        r_ref = None
    y = jnp.dot(x_ref[...], w_ref[...], preferred_element_type=jnp.float32)
    y = y + b_ref[...]
    if has_res:
        y = y + r_ref[...]
    if act == "relu":
        y = jnp.maximum(y, 0.0)
    elif act == "sigmoid":
        y = jax.nn.sigmoid(y)
    o_ref[...] = y.astype(o_ref.dtype)


def pallas_matmul_bias(x, w, b, act="none", residual=None):
    """x: (M, K), w: (K, N), b: (N,) [, residual: (M, N)] -> (M, N) f32.

    MXU matmul with bf16 operands, f32 accumulation/epilogue, lane-dense
    (N padded to 128) output stores, adaptive row tiling.
    """
    M, K = x.shape
    _, N = w.shape

    Kp = _round_up(K, 8)      # sublane-aligned contraction dim
    Np = _round_up(N, 128)    # lane-dense output stores

    Mp8 = _round_up(M, 8)
    if Mp8 <= 256:
        TM = Mp8              # single full-extent block
    elif M < 1024:
        TM = 256              # >=2 parallel grid steps (v7x dual-TC)
    else:
        TM = 512              # big tiles for HBM roofline
    Mp = _round_up(M, TM)

    xp = jnp.pad(x.astype(jnp.bfloat16), ((0, Mp - M), (0, Kp - K)))
    wp = jnp.pad(w.astype(jnp.bfloat16), ((0, Kp - K), (0, Np - N)))
    bp = jnp.pad(b.astype(jnp.float32).reshape(1, N), ((0, 0), (0, Np - N)))

    in_specs = [
        pl.BlockSpec((TM, Kp), lambda i: (i, 0)),
        pl.BlockSpec((Kp, Np), lambda i: (0, 0)),
        pl.BlockSpec((1, Np), lambda i: (0, 0)),
    ]
    args = [xp, wp, bp]
    has_res = residual is not None
    if has_res:
        rp = jnp.pad(residual.astype(jnp.float32), ((0, Mp - M), (0, Np - N)))
        in_specs.append(pl.BlockSpec((TM, Np), lambda i: (i, 0)))
        args.append(rp)

    out = pl.pallas_call(
        functools.partial(_mm_bias_act_kernel, act=act, has_res=has_res),
        out_shape=jax.ShapeDtypeStruct((Mp, Np), jnp.float32),
        grid=(Mp // TM,),
        in_specs=in_specs,
        out_specs=pl.BlockSpec((TM, Np), lambda i: (i, 0)),
        compiler_params=pltpu.CompilerParams(dimension_semantics=("parallel",)),
    )(*args)
    return out[:M, :N]


# -----------------------------------------------------------------------------
# Conv helpers (im2col glue feeding the Pallas matmul)
# -----------------------------------------------------------------------------

def _im2col(x, KH, KW, stride, pad):
    """x: (N, H, W, C) -> patches (N, Ho, Wo, KH*KW, C)."""
    N, H, W, C = x.shape
    xp = jnp.pad(x, ((0, 0), (pad, pad), (pad, pad), (0, 0)))
    Ho = (H + 2 * pad - KH) // stride + 1
    Wo = (W + 2 * pad - KW) // stride + 1
    cols = []
    for kh in range(KH):
        for kw in range(KW):
            cols.append(
                xp[:,
                   kh: kh + (Ho - 1) * stride + 1: stride,
                   kw: kw + (Wo - 1) * stride + 1: stride,
                   :]
            )
    patches = jnp.stack(cols, axis=3)  # (N, Ho, Wo, KK, C)
    return patches, Ho, Wo


def conv2d(x, w_hwio, b, stride=1, pad=1, act="none", residual=None):
    """x NHWC, w in HWIO layout, bias (Cout,), optional residual add (fused)."""
    KH, KW, Cin, Cout = w_hwio.shape
    N = x.shape[0]
    # bf16 before im2col so the 9x-amplified patch matrix is half the bytes.
    patches, Ho, Wo = _im2col(x.astype(jnp.bfloat16), KH, KW, stride, pad)
    pm = patches.reshape(N * Ho * Wo, KH * KW * Cin)
    wm = w_hwio.reshape(KH * KW * Cin, Cout)
    rm = None
    if residual is not None:
        rm = residual.reshape(N * Ho * Wo, Cout)
    y = pallas_matmul_bias(pm, wm, b, act, residual=rm)
    return y.reshape(N, Ho, Wo, Cout)


def upsample2x(x):
    return jnp.repeat(jnp.repeat(x, 2, axis=1), 2, axis=2)


# ---- multi-level (shared-weight head) helpers -------------------------------

def _flatten_level_patches(feats):
    """3x3/pad1 im2col per level, rows concatenated across all levels."""
    pms, shapes = [], []
    for f in feats:
        Nb, _, _, C = f.shape
        patches, Ho, Wo = _im2col(f.astype(jnp.bfloat16), 3, 3, 1, 1)
        pms.append(patches.reshape(Nb * Ho * Wo, 9 * C))
        shapes.append((Nb, Ho, Wo))
    return jnp.concatenate(pms, axis=0), shapes


def _split_levels(y, shapes, C):
    outs, off = [], 0
    for (Nb, Ho, Wo) in shapes:
        n = Nb * Ho * Wo
        outs.append(y[off:off + n].reshape(Nb, Ho, Wo, C))
        off += n
    return outs


def multi_level_conv(pm, shapes, w_hwio, b, act):
    """One fused matmul over the concatenated row matrix of all levels."""
    Cout = w_hwio.shape[-1]
    wm = w_hwio.reshape(-1, Cout)
    y = pallas_matmul_bias(pm, wm, b, act)
    return _split_levels(y, shapes, Cout)


# -----------------------------------------------------------------------------
# Parameter construction (deterministic, mirrors RetinaNet.__init__ init rules)
# -----------------------------------------------------------------------------

def he_conv(key, kh, kw, cin, cout):
    n = kh * kw * cout
    return jax.random.normal(key, (kh, kw, cin, cout), jnp.float32) * math.sqrt(2.0 / n)


def make_params(key, num_classes, F, A):
    keys = iter(jax.random.split(key, 64))
    p = {}

    # ---- simplified backbone (strides 2,2,2,2,2 -> C3:/8, C4:/16, C5:/32) ----
    bb_ch = [(3, 8), (8, 8), (8, 16), (16, 32), (32, 64)]
    for i, (cin, cout) in enumerate(bb_ch):
        p[f"bb_w{i}"] = he_conv(next(keys), 3, 3, cin, cout)
        p[f"bb_b{i}"] = jnp.zeros((cout,), jnp.float32)
    c3c, c4c, c5c = 16, 32, 64

    # ---- FPN ----
    for name, cin in (("lat3", c3c), ("lat4", c4c), ("lat5", c5c)):
        p[f"fpn_{name}_w"] = he_conv(next(keys), 1, 1, cin, F)
        p[f"fpn_{name}_b"] = jnp.zeros((F,), jnp.float32)
    for name in ("out3", "out4", "out5"):
        p[f"fpn_{name}_w"] = he_conv(next(keys), 3, 3, F, F)
        p[f"fpn_{name}_b"] = jnp.zeros((F,), jnp.float32)
    p["fpn_p6_w"] = he_conv(next(keys), 3, 3, c5c, F)
    p["fpn_p6_b"] = jnp.zeros((F,), jnp.float32)
    p["fpn_p7_w"] = he_conv(next(keys), 3, 3, F, F)
    p["fpn_p7_b"] = jnp.zeros((F,), jnp.float32)

    # ---- Regressor head (shared across pyramid levels) ----
    for i in range(4):
        p[f"reg_w{i}"] = he_conv(next(keys), 3, 3, F, F)
        p[f"reg_b{i}"] = jnp.zeros((F,), jnp.float32)
    p["reg_dw"] = (jax.random.normal(next(keys), (9, F), jnp.float32)
                   * math.sqrt(2.0 / (3 * 3 * F)))
    p["reg_pw_w"] = jnp.zeros((1, 1, F, A * 4), jnp.float32)      # filled with 0
    p["reg_pw_b"] = jnp.zeros((A * 4,), jnp.float32)              # filled with 0

    # ---- Classifier head (shared across pyramid levels) ----
    for i in range(4):
        p[f"cls_w{i}"] = he_conv(next(keys), 3, 3, F, F)
        p[f"cls_b{i}"] = jnp.zeros((F,), jnp.float32)
    p["cls_dw"] = (jax.random.normal(next(keys), (9, F), jnp.float32)
                   * math.sqrt(2.0 / (3 * 3 * F)))
    prior = 0.01
    p["cls_pw_w"] = jnp.zeros((1, 1, F, A * num_classes), jnp.float32)  # filled with 0
    p["cls_pw_b"] = jnp.full((A * num_classes,),
                             -math.log((1.0 - prior) / prior), jnp.float32)
    return p


# -----------------------------------------------------------------------------
# Anchor generator (glue; anchor_scale=4, order: scale outer, aspect_ratio inner)
# -----------------------------------------------------------------------------

def generate_anchors(image_hw, feat_shapes, anchor_scale, scales, aspect_ratios):
    H, W = image_hw
    all_boxes = []
    for fh, fw in feat_shapes:
        stride_h = H / fh
        stride_w = W / fw
        ys = (jnp.arange(fh, dtype=jnp.float32) + 0.5) * stride_h
        xs = (jnp.arange(fw, dtype=jnp.float32) + 0.5) * stride_w
        cy, cx = jnp.meshgrid(ys, xs, indexing="ij")  # (fh, fw)
        per_cell = []
        for s in scales:
            for ar in aspect_ratios:
                aw = anchor_scale * stride_w * s * math.sqrt(ar)
                ah = anchor_scale * stride_h * s / math.sqrt(ar)
                box = jnp.stack([cx - aw / 2.0, cy - ah / 2.0,
                                 cx + aw / 2.0, cy + ah / 2.0], axis=-1)
                per_cell.append(box)
        level = jnp.stack(per_cell, axis=2)  # (fh, fw, A, 4)
        all_boxes.append(level.reshape(-1, 4))
    return jnp.concatenate(all_boxes, axis=0)[None]  # (1, total_anchors, 4)


# -----------------------------------------------------------------------------
# RetinaNet forward
# -----------------------------------------------------------------------------

def retinanet_forward(params, inputs_nchw, *, num_classes, num_anchors,
                      scales, aspect_ratios):
    x = jnp.transpose(inputs_nchw, (0, 2, 3, 1)).astype(jnp.float32)  # -> NHWC
    img_h, img_w = inputs_nchw.shape[2], inputs_nchw.shape[3]
    A = num_anchors

    # ---- backbone ----
    feats = []
    h = x
    for i in range(5):
        h = conv2d(h, params[f"bb_w{i}"], params[f"bb_b{i}"],
                   stride=2, pad=1, act="relu")
        feats.append(h)
    C3, C4, C5 = feats[2], feats[3], feats[4]

    # ---- FPN (top-down adds fused into the lateral 1x1 conv epilogue) ----
    P5 = conv2d(C5, params["fpn_lat5_w"], params["fpn_lat5_b"], 1, 0, "none")
    P4 = conv2d(C4, params["fpn_lat4_w"], params["fpn_lat4_b"], 1, 0, "none",
                residual=upsample2x(P5))
    P3 = conv2d(C3, params["fpn_lat3_w"], params["fpn_lat3_b"], 1, 0, "none",
                residual=upsample2x(P4))
    P3 = conv2d(P3, params["fpn_out3_w"], params["fpn_out3_b"], 1, 1, "none")
    P4 = conv2d(P4, params["fpn_out4_w"], params["fpn_out4_b"], 1, 1, "none")
    P5 = conv2d(P5, params["fpn_out5_w"], params["fpn_out5_b"], 1, 1, "none")
    P6 = conv2d(C5, params["fpn_p6_w"], params["fpn_p6_b"], 2, 1, "none")
    P7 = conv2d(jnp.maximum(P6, 0.0), params["fpn_p7_w"], params["fpn_p7_b"], 2, 1, "none")
    pyramid = [P3, P4, P5, P6, P7]

    # ---- heads (weights shared across pyramid levels -> batched over levels) ----
    # Layer-0 im2col is shared between the regressor and classifier heads.
    pm0, shapes0 = _flatten_level_patches(pyramid)

    def run_head(prefix, out_per_anchor, final_act):
        pm, shapes = pm0, shapes0
        for i in range(4):
            levels = multi_level_conv(pm, shapes, params[f"{prefix}_w{i}"],
                                      params[f"{prefix}_b{i}"], "relu")
            pm, shapes = _flatten_level_patches(levels)
        # Separable conv composed into a single 3x3 conv:
        #   w_full[kh,kw,cin,cout] = dw[kh*3+kw,cin] * pw[cin,cout]
        # (no nonlinearity between depthwise and pointwise -> exact).
        dw = params[f"{prefix}_dw"]                 # (9, F)
        pw = params[f"{prefix}_pw_w"][0, 0]         # (F, Cout)
        Fch, Cout = pw.shape
        w_full = (dw[:, :, None] * pw[None, :, :]).reshape(3, 3, Fch, Cout)
        levels = multi_level_conv(pm, shapes, w_full,
                                  params[f"{prefix}_pw_b"], final_act)
        per = []
        for o in levels:
            B, H, W, _ = o.shape
            per.append(o.reshape(B, H * W * A, out_per_anchor))
        return jnp.concatenate(per, axis=1)

    reg_preds = run_head("reg", 4, "none")
    cls_preds = run_head("cls", num_classes, "sigmoid")

    # ---- anchors ----
    feat_shapes = [(f.shape[1], f.shape[2]) for f in pyramid]
    anchors = generate_anchors((img_h, img_w), feat_shapes,
                               anchor_scale=4, scales=scales,
                               aspect_ratios=aspect_ratios)
    return cls_preds, reg_preds, anchors


# -----------------------------------------------------------------------------
# main
# -----------------------------------------------------------------------------

if __name__ == "__main__":
    # Small, module-consistent shapes.
    num_classes = 8
    FPN_out_channels = 32
    scales = [2 ** 0, 2 ** (1 / 3), 2 ** (2 / 3)]
    aspect_ratios = [0.5, 1.0, 2.0]
    A = len(scales) * len(aspect_ratios)  # 9 anchors per location

    key = jax.random.PRNGKey(0)
    k_param, k_input = jax.random.split(key)
    params = make_params(k_param, num_classes, FPN_out_channels, A)

    # PyTorch-style NCHW input.
    inputs = jax.random.normal(k_input, (2, 3, 64, 64), jnp.float32)

    fwd = jax.jit(functools.partial(
        retinanet_forward,
        num_classes=num_classes, num_anchors=A,
        scales=scales, aspect_ratios=aspect_ratios))

    cls_preds, reg_preds, anchors = fwd(params, inputs)
    jax.block_until_ready((cls_preds, reg_preds, anchors))

    # Sanity checks on shapes: 5 levels (8x8, 4x4, 2x2, 1x1, 1x1) * 9 anchors = 774
    total = (64 + 16 + 4 + 1 + 1) * A
    assert cls_preds.shape == (2, total, num_classes), cls_preds.shape
    assert reg_preds.shape == (2, total, 4), reg_preds.shape
    assert anchors.shape == (1, total, 4), anchors.shape

    # With zero-initialized header pointwise weights, outputs are exact:
    #   reg = 0, cls = sigmoid(-log((1-p)/p)) = p = 0.01.
    assert float(jnp.max(jnp.abs(reg_preds))) == 0.0
    assert abs(float(jnp.max(jnp.abs(cls_preds - 0.01)))) < 1e-6

    print("KERNEL_OK")
</pallas_src>

<mosaic_0001>
module attributes {stable_mosaic.version = 11 : i64} {
  func.func @_mm_bias_act_kernel(%arg0: i32, %arg1: memref<512x32xbf16, #tpu.memory_space<vmem>>, %arg2: memref<32x128xbf16, #tpu.memory_space<vmem>>, %arg3: memref<1x128xf32, #tpu.memory_space<vmem>>, %arg4: memref<512x128xf32, #tpu.memory_space<vmem>>) attributes {dimension_semantics = [#tpu.dimension_semantics<parallel>], iteration_bounds = array<i64: 4>, scalar_prefetch = 0 : i64, scratch_operands = 0 : i64, tpu.core_type = #tpu.core_type<tc>, window_params = [{transform_indices = @transform_0, window_bounds = array<i64: 512, 32>}, {pipeline_mode = #tpu.pipeline_mode<synchronous>, transform_indices = @transform_1, window_bounds = array<i64: 32, 128>}, {pipeline_mode = #tpu.pipeline_mode<synchronous>, transform_indices = @transform_2, window_bounds = array<i64: 1, 128>}, {transform_indices = @transform_3, window_bounds = array<i64: 512, 128>}]} {
    %c0 = arith.constant 0 : index
    %c0_0 = arith.constant 0 : index
    %0 = vector.load %arg1[%c0, %c0_0] : memref<512x32xbf16, #tpu.memory_space<vmem>>, vector<512x32xbf16>
    %c0_1 = arith.constant 0 : index
    %c0_2 = arith.constant 0 : index
    %1 = vector.load %arg2[%c0_1, %c0_2] : memref<32x128xbf16, #tpu.memory_space<vmem>>, vector<32x128xbf16>
    %cst = arith.constant dense<0.000000e+00> : vector<512x128xf32>
    %2 = tpu.matmul %0, %1, %cst {dimension_numbers = #tpu.dot_dimension_numbers<[1], [0], [0], [1], [0, 0, 1, 1], [], []>} : vector<512x32xbf16>, vector<32x128xbf16>, vector<512x128xf32> -> vector<512x128xf32>
    %c0_3 = arith.constant 0 : index
    %c0_4 = arith.constant 0 : index
    %3 = vector.load %arg3[%c0_3, %c0_4] : memref<1x128xf32, #tpu.memory_space<vmem>>, vector<1x128xf32>
    %4 = vector.broadcast %3 : vector<1x128xf32> to vector<512x128xf32>
    %5 = arith.addf %2, %4 : vector<512x128xf32>
    %cst_5 = arith.constant 0.000000e+00 : f32
    %6 = vector.broadcast %cst_5 : f32 to vector<512x128xf32>
    %7 = arith.maximumf %5, %6 : vector<512x128xf32>
    %c0_6 = arith.constant 0 : index
    %c0_7 = arith.constant 0 : index
    %8 = vector.load %arg4[%c0_6, %c0_7] : memref<512x128xf32, #tpu.memory_space<vmem>>, vector<512x128xf32>
    tpu.vector_store %arg4[%c0_6, %c0_7], %7 {strides = array<i32>} : memref<512x128xf32, #tpu.memory_space<vmem>>, vector<512x128xf32>,
    return
  }
  func.func @transform_0(%arg0: i32) -> (i32, i32) {
    %c0_i32 = arith.constant 0 : i32
    %c0_i32_0 = arith.constant 0 : i32
    return %arg0, %c0_i32 : i32, i32
  }
  func.func @transform_1(%arg0: i32) -> (i32, i32) {
    %c0_i32 = arith.constant 0 : i32
    %c0_i32_0 = arith.constant 0 : i32
    %c0_i32_1 = arith.constant 0 : i32
    return %c0_i32, %c0_i32_0 : i32, i32
  }
  func.func @transform_2(%arg0: i32) -> (i32, i32) {
    %c0_i32 = arith.constant 0 : i32
    %c0_i32_0 = arith.constant 0 : i32
    %c0_i32_1 = arith.constant 0 : i32
    return %c0_i32, %c0_i32_0 : i32, i32
  }
  func.func @transform_3(%arg0: i32) -> (i32, i32) {
    %c0_i32 = arith.constant 0 : i32
    %c0_i32_0 = arith.constant 0 : i32
    return %arg0, %c0_i32 : i32, i32
  }
}

module attributes {stable_mosaic.version = 11 : i64} {
  func.func @_mm_bias_act_kernel(%arg0: i32, %arg1: memref<256x72xbf16, #tpu.memory_space<vmem>>, %arg2: memref<72x128xbf16, #tpu.memory_space<vmem>>, %arg3: memref<1x128xf32, #tpu.memory_space<vmem>>, %arg4: memref<256x128xf32, #tpu.memory_space<vmem>>) attributes {dimension_semantics = [#tpu.dimension_semantics<parallel>], iteration_bounds = array<i64: 2>, scalar_prefetch = 0 : i64, scratch_operands = 0 : i64, tpu.core_type = #tpu.core_type<tc>, window_params = [{transform_indices = @transform_0, window_bounds = array<i64: 256, 72>}, {pipeline_mode = #tpu.pipeline_mode<synchronous>, transform_indices = @transform_1, window_bounds = array<i64: 72, 128>}, {pipeline_mode = #tpu.pipeline_mode<synchronous>, transform_indices = @transform_2, window_bounds = array<i64: 1, 128>}, {transform_indices = @transform_3, window_bounds = array<i64: 256, 128>}]} {
    %c0 = arith.constant 0 : index
    %c0_0 = arith.constant 0 : index
    %0 = vector.load %arg1[%c0, %c0_0] : memref<256x72xbf16, #tpu.memory_space<vmem>>, vector<256x72xbf16>
    %c0_1 = arith.constant 0 : index
    %c0_2 = arith.constant 0 : index
    %1 = vector.load %arg2[%c0_1, %c0_2] : memref<72x128xbf16, #tpu.memory_space<vmem>>, vector<72x128xbf16>
    %cst = arith.constant dense<0.000000e+00> : vector<256x128xf32>
    %2 = tpu.matmul %0, %1, %cst {dimension_numbers = #tpu.dot_dimension_numbers<[1], [0], [0], [1], [0, 0, 1, 1], [], []>} : vector<256x72xbf16>, vector<72x128xbf16>, vector<256x128xf32> -> vector<256x128xf32>
    %c0_3 = arith.constant 0 : index
    %c0_4 = arith.constant 0 : index
    %3 = vector.load %arg3[%c0_3, %c0_4] : memref<1x128xf32, #tpu.memory_space<vmem>>, vector<1x128xf32>
    %4 = vector.broadcast %3 : vector<1x128xf32> to vector<256x128xf32>
    %5 = arith.addf %2, %4 : vector<256x128xf32>
    %cst_5 = arith.constant 0.000000e+00 : f32
    %6 = vector.broadcast %cst_5 : f32 to vector<256x128xf32>
    %7 = arith.maximumf %5, %6 : vector<256x128xf32>
    %c0_6 = arith.constant 0 : index
    %c0_7 = arith.constant 0 : index
    %8 = vector.load %arg4[%c0_6, %c0_7] : memref<256x128xf32, #tpu.memory_space<vmem>>, vector<256x128xf32>
    tpu.vector_store %arg4[%c0_6, %c0_7], %7 {strides = array<i32>} : memref<256x128xf32, #tpu.memory_space<vmem>>, vector<256x128xf32>,
    return
  }
  func.func @transform_0(%arg0: i32) -> (i32, i32) {
    %c0_i32 = arith.constant 0 : i32
    %c0_i32_0 = arith.constant 0 : i32
    return %arg0, %c0_i32 : i32, i32
  }
  func.func @transform_1(%arg0: i32) -> (i32, i32) {
    %c0_i32 = arith.constant 0 : i32
    %c0_i32_0 = arith.constant 0 : i32
    %c0_i32_1 = arith.constant 0 : i32
    return %c0_i32, %c0_i32_0 : i32, i32
  }
  func.func @transform_2(%arg0: i32) -> (i32, i32) {
    %c0_i32 = arith.constant 0 : i32
    %c0_i32_0 = arith.constant 0 : i32
    %c0_i32_1 = arith.constant 0 : i32
    return %c0_i32, %c0_i32_0 : i32, i32
  }
  func.func @transform_3(%arg0: i32) -> (i32, i32) {
    %c0_i32 = arith.constant 0 : i32
    %c0_i32_0 = arith.constant 0 : i32
    return %arg0, %c0_i32 : i32, i32
  }
}

module attributes {stable_mosaic.version = 11 : i64} {
  func.func @_mm_bias_act_kernel(%arg0: i32, %arg1: memref<128x72xbf16, #tpu.memory_space<vmem>>, %arg2: memref<72x128xbf16, #tpu.memory_space<vmem>>, %arg3: memref<1x128xf32, #tpu.memory_space<vmem>>, %arg4: memref<128x128xf32, #tpu.memory_space<vmem>>) attributes {dimension_semantics = [#tpu.dimension_semantics<parallel>], iteration_bounds = array<i64: 1>, scalar_prefetch = 0 : i64, scratch_operands = 0 : i64, tpu.core_type = #tpu.core_type<tc>, window_params = [{transform_indices = @transform_0, window_bounds = array<i64: 128, 72>}, {pipeline_mode = #tpu.pipeline_mode<synchronous>, transform_indices = @transform_1, window_bounds = array<i64: 72, 128>}, {pipeline_mode = #tpu.pipeline_mode<synchronous>, transform_indices = @transform_2, window_bounds = array<i64: 1, 128>}, {transform_indices = @transform_3, window_bounds = array<i64: 128, 128>}]} {
    %c0 = arith.constant 0 : index
    %c0_0 = arith.constant 0 : index
    %0 = vector.load %arg1[%c0, %c0_0] : memref<128x72xbf16, #tpu.memory_space<vmem>>, vector<128x72xbf16>
    %c0_1 = arith.constant 0 : index
    %c0_2 = arith.constant 0 : index
    %1 = vector.load %arg2[%c0_1, %c0_2] : memref<72x128xbf16, #tpu.memory_space<vmem>>, vector<72x128xbf16>
    %cst = arith.constant dense<0.000000e+00> : vector<128x128xf32>
    %2 = tpu.matmul %0, %1, %cst {dimension_numbers = #tpu.dot_dimension_numbers<[1], [0], [0], [1], [0, 0, 1, 1], [], []>} : vector<128x72xbf16>, vector<72x128xbf16>, vector<128x128xf32> -> vector<128x128xf32>
    %c0_3 = arith.constant 0 : index
    %c0_4 = arith.constant 0 : index
    %3 = vector.load %arg3[%c0_3, %c0_4] : memref<1x128xf32, #tpu.memory_space<vmem>>, vector<1x128xf32>
    %4 = vector.broadcast %3 : vector<1x128xf32> to vector<128x128xf32>
    %5 = arith.addf %2, %4 : vector<128x128xf32>
    %cst_5 = arith.constant 0.000000e+00 : f32
    %6 = vector.broadcast %cst_5 : f32 to vector<128x128xf32>
    %7 = arith.maximumf %5, %6 : vector<128x128xf32>
    %c0_6 = arith.constant 0 : index
    %c0_7 = arith.constant 0 : index
    %8 = vector.load %arg4[%c0_6, %c0_7] : memref<128x128xf32, #tpu.memory_space<vmem>>, vector<128x128xf32>
    tpu.vector_store %arg4[%c0_6, %c0_7], %7 {strides = array<i32>} : memref<128x128xf32, #tpu.memory_space<vmem>>, vector<128x128xf32>,
    return
  }
  func.func @transform_0(%arg0: i32) -> (i32, i32) {
    %c0_i32 = arith.constant 0 : i32
    %c0_i32_0 = arith.constant 0 : i32
    return %arg0, %c0_i32 : i32, i32
  }
  func.func @transform_1(%arg0: i32) -> (i32, i32) {
    %c0_i32 = arith.constant 0 : i32
    %c0_i32_0 = arith.constant 0 : i32
    %c0_i32_1 = arith.constant 0 : i32
    return %c0_i32, %c0_i32_0 : i32, i32
  }
  func.func @transform_2(%arg0: i32) -> (i32, i32) {
    %c0_i32 = arith.constant 0 : i32
    %c0_i32_0 = arith.constant 0 : i32
    %c0_i32_1 = arith.constant 0 : i32
    return %c0_i32, %c0_i32_0 : i32, i32
  }
  func.func @transform_3(%arg0: i32) -> (i32, i32) {
    %c0_i32 = arith.constant 0 : i32
    %c0_i32_0 = arith.constant 0 : i32
    return %arg0, %c0_i32 : i32, i32
  }
}

module attributes {stable_mosaic.version = 11 : i64} {
  func.func @_mm_bias_act_kernel(%arg0: i32, %arg1: memref<32x144xbf16, #tpu.memory_space<vmem>>, %arg2: memref<144x128xbf16, #tpu.memory_space<vmem>>, %arg3: memref<1x128xf32, #tpu.memory_space<vmem>>, %arg4: memref<32x128xf32, #tpu.memory_space<vmem>>) attributes {dimension_semantics = [#tpu.dimension_semantics<parallel>], iteration_bounds = array<i64: 1>, scalar_prefetch = 0 : i64, scratch_operands = 0 : i64, tpu.core_type = #tpu.core_type<tc>, window_params = [{transform_indices = @transform_0, window_bounds = array<i64: 32, 144>}, {pipeline_mode = #tpu.pipeline_mode<synchronous>, transform_indices = @transform_1, window_bounds = array<i64: 144, 128>}, {pipeline_mode = #tpu.pipeline_mode<synchronous>, transform_indices = @transform_2, window_bounds = array<i64: 1, 128>}, {transform_indices = @transform_3, window_bounds = array<i64: 32, 128>}]} {
    %c0 = arith.constant 0 : index
    %c0_0 = arith.constant 0 : index
    %0 = vector.load %arg1[%c0, %c0_0] : memref<32x144xbf16, #tpu.memory_space<vmem>>, vector<32x144xbf16>
    %c0_1 = arith.constant 0 : index
    %c0_2 = arith.constant 0 : index
    %1 = vector.load %arg2[%c0_1, %c0_2] : memref<144x128xbf16, #tpu.memory_space<vmem>>, vector<144x128xbf16>
    %cst = arith.constant dense<0.000000e+00> : vector<32x128xf32>
    %2 = tpu.matmul %0, %1, %cst {dimension_numbers = #tpu.dot_dimension_numbers<[1], [0], [0], [1], [0, 0, 1, 1], [], []>} : vector<32x144xbf16>, vector<144x128xbf16>, vector<32x128xf32> -> vector<32x128xf32>
    %c0_3 = arith.constant 0 : index
    %c0_4 = arith.constant 0 : index
    %3 = vector.load %arg3[%c0_3, %c0_4] : memref<1x128xf32, #tpu.memory_space<vmem>>, vector<1x128xf32>
    %4 = vector.broadcast %3 : vector<1x128xf32> to vector<32x128xf32>
    %5 = arith.addf %2, %4 : vector<32x128xf32>
    %cst_5 = arith.constant 0.000000e+00 : f32
    %6 = vector.broadcast %cst_5 : f32 to vector<32x128xf32>
    %7 = arith.maximumf %5, %6 : vector<32x128xf32>
    %c0_6 = arith.constant 0 : index
    %c0_7 = arith.constant 0 : index
    %8 = vector.load %arg4[%c0_6, %c0_7] : memref<32x128xf32, #tpu.memory_space<vmem>>, vector<32x128xf32>
    tpu.vector_store %arg4[%c0_6, %c0_7], %7 {strides = array<i32>} : memref<32x128xf32, #tpu.memory_space<vmem>>, vector<32x128xf32>,
    return
  }
  func.func @transform_0(%arg0: i32) -> (i32, i32) {
    %c0_i32 = arith.constant 0 : i32
    %c0_i32_0 = arith.constant 0 : i32
    return %arg0, %c0_i32 : i32, i32
  }
  func.func @transform_1(%arg0: i32) -> (i32, i32) {
    %c0_i32 = arith.constant 0 : i32
    %c0_i32_0 = arith.constant 0 : i32
    %c0_i32_1 = arith.constant 0 : i32
    return %c0_i32, %c0_i32_0 : i32, i32
  }
  func.func @transform_2(%arg0: i32) -> (i32, i32) {
    %c0_i32 = arith.constant 0 : i32
    %c0_i32_0 = arith.constant 0 : i32
    %c0_i32_1 = arith.constant 0 : i32
    return %c0_i32, %c0_i32_0 : i32, i32
  }
  func.func @transform_3(%arg0: i32) -> (i32, i32) {
    %c0_i32 = arith.constant 0 : i32
    %c0_i32_0 = arith.constant 0 : i32
    return %arg0, %c0_i32 : i32, i32
  }
}

module attributes {stable_mosaic.version = 11 : i64} {
  func.func @_mm_bias_act_kernel(%arg0: i32, %arg1: memref<8x288xbf16, #tpu.memory_space<vmem>>, %arg2: memref<288x128xbf16, #tpu.memory_space<vmem>>, %arg3: memref<1x128xf32, #tpu.memory_space<vmem>>, %arg4: memref<8x128xf32, #tpu.memory_space<vmem>>) attributes {dimension_semantics = [#tpu.dimension_semantics<parallel>], iteration_bounds = array<i64: 1>, scalar_prefetch = 0 : i64, scratch_operands = 0 : i64, tpu.core_type = #tpu.core_type<tc>, window_params = [{transform_indices = @transform_0, window_bounds = array<i64: 8, 288>}, {pipeline_mode = #tpu.pipeline_mode<synchronous>, transform_indices = @transform_1, window_bounds = array<i64: 288, 128>}, {pipeline_mode = #tpu.pipeline_mode<synchronous>, transform_indices = @transform_2, window_bounds = array<i64: 1, 128>}, {transform_indices = @transform_3, window_bounds = array<i64: 8, 128>}]} {
    %c0 = arith.constant 0 : index
    %c0_0 = arith.constant 0 : index
    %0 = vector.load %arg1[%c0, %c0_0] : memref<8x288xbf16, #tpu.memory_space<vmem>>, vector<8x288xbf16>
    %c0_1 = arith.constant 0 : index
    %c0_2 = arith.constant 0 : index
    %1 = vector.load %arg2[%c0_1, %c0_2] : memref<288x128xbf16, #tpu.memory_space<vmem>>, vector<288x128xbf16>
    %cst = arith.constant dense<0.000000e+00> : vector<8x128xf32>
    %2 = tpu.matmul %0, %1, %cst {dimension_numbers = #tpu.dot_dimension_numbers<[1], [0], [0], [1], [0, 0, 1, 1], [], []>} : vector<8x288xbf16>, vector<288x128xbf16>, vector<8x128xf32> -> vector<8x128xf32>
    %c0_3 = arith.constant 0 : index
    %c0_4 = arith.constant 0 : index
    %3 = vector.load %arg3[%c0_3, %c0_4] : memref<1x128xf32, #tpu.memory_space<vmem>>, vector<1x128xf32>
    %4 = vector.broadcast %3 : vector<1x128xf32> to vector<8x128xf32>
    %5 = arith.addf %2, %4 : vector<8x128xf32>
    %cst_5 = arith.constant 0.000000e+00 : f32
    %6 = vector.broadcast %cst_5 : f32 to vector<8x128xf32>
    %7 = arith.maximumf %5, %6 : vector<8x128xf32>
    %c0_6 = arith.constant 0 : index
    %c0_7 = arith.constant 0 : index
    %8 = vector.load %arg4[%c0_6, %c0_7] : memref<8x128xf32, #tpu.memory_space<vmem>>, vector<8x128xf32>
    tpu.vector_store %arg4[%c0_6, %c0_7], %7 {strides = array<i32>} : memref<8x128xf32, #tpu.memory_space<vmem>>, vector<8x128xf32>,
    return
  }
  func.func @transform_0(%arg0: i32) -> (i32, i32) {
    %c0_i32 = arith.constant 0 : i32
    %c0_i32_0 = arith.constant 0 : i32
    return %arg0, %c0_i32 : i32, i32
  }
  func.func @transform_1(%arg0: i32) -> (i32, i32) {
    %c0_i32 = arith.constant 0 : i32
    %c0_i32_0 = arith.constant 0 : i32
    %c0_i32_1 = arith.constant 0 : i32
    return %c0_i32, %c0_i32_0 : i32, i32
  }
  func.func @transform_2(%arg0: i32) -> (i32, i32) {
    %c0_i32 = arith.constant 0 : i32
    %c0_i32_0 = arith.constant 0 : i32
    %c0_i32_1 = arith.constant 0 : i32
    return %c0_i32, %c0_i32_0 : i32, i32
  }
  func.func @transform_3(%arg0: i32) -> (i32, i32) {
    %c0_i32 = arith.constant 0 : i32
    %c0_i32_0 = arith.constant 0 : i32
    return %arg0, %c0_i32 : i32, i32
  }
}

module attributes {stable_mosaic.version = 11 : i64} {
  func.func @_mm_bias_act_kernel(%arg0: i32, %arg1: memref<8x576xbf16, #tpu.memory_space<vmem>>, %arg2: memref<576x128xbf16, #tpu.memory_space<vmem>>, %arg3: memref<1x128xf32, #tpu.memory_space<vmem>>, %arg4: memref<8x128xf32, #tpu.memory_space<vmem>>) attributes {dimension_semantics = [#tpu.dimension_semantics<parallel>], iteration_bounds = array<i64: 1>, scalar_prefetch = 0 : i64, scratch_operands = 0 : i64, tpu.core_type = #tpu.core_type<tc>, window_params = [{transform_indices = @transform_0, window_bounds = array<i64: 8, 576>}, {pipeline_mode = #tpu.pipeline_mode<synchronous>, transform_indices = @transform_1, window_bounds = array<i64: 576, 128>}, {pipeline_mode = #tpu.pipeline_mode<synchronous>, transform_indices = @transform_2, window_bounds = array<i64: 1, 128>}, {transform_indices = @transform_3, window_bounds = array<i64: 8, 128>}]} {
    %c0 = arith.constant 0 : index
    %c0_0 = arith.constant 0 : index
    %0 = vector.load %arg1[%c0, %c0_0] : memref<8x576xbf16, #tpu.memory_space<vmem>>, vector<8x576xbf16>
    %c0_1 = arith.constant 0 : index
    %c0_2 = arith.constant 0 : index
    %1 = vector.load %arg2[%c0_1, %c0_2] : memref<576x128xbf16, #tpu.memory_space<vmem>>, vector<576x128xbf16>
    %cst = arith.constant dense<0.000000e+00> : vector<8x128xf32>
    %2 = tpu.matmul %0, %1, %cst {dimension_numbers = #tpu.dot_dimension_numbers<[1], [0], [0], [1], [0, 0, 1, 1], [], []>} : vector<8x576xbf16>, vector<576x128xbf16>, vector<8x128xf32> -> vector<8x128xf32>
    %c0_3 = arith.constant 0 : index
    %c0_4 = arith.constant 0 : index
    %3 = vector.load %arg3[%c0_3, %c0_4] : memref<1x128xf32, #tpu.memory_space<vmem>>, vector<1x128xf32>
    %4 = vector.broadcast %3 : vector<1x128xf32> to vector<8x128xf32>
    %5 = arith.addf %2, %4 : vector<8x128xf32>
    %c0_5 = arith.constant 0 : index
    %c0_6 = arith.constant 0 : index
    %6 = vector.load %arg4[%c0_5, %c0_6] : memref<8x128xf32, #tpu.memory_space<vmem>>, vector<8x128xf32>
    tpu.vector_store %arg4[%c0_5, %c0_6], %5 {strides = array<i32>} : memref<8x128xf32, #tpu.memory_space<vmem>>, vector<8x128xf32>,
    return
  }
  func.func @transform_0(%arg0: i32) -> (i32, i32) {
    %c0_i32 = arith.constant 0 : i32
    %c0_i32_0 = arith.constant 0 : i32
    return %arg0, %c0_i32 : i32, i32
  }
  func.func @transform_1(%arg0: i32) -> (i32, i32) {
    %c0_i32 = arith.constant 0 : i32
    %c0_i32_0 = arith.constant 0 : i32
    %c0_i32_1 = arith.constant 0 : i32
    return %c0_i32, %c0_i32_0 : i32, i32
  }
  func.func @transform_2(%arg0: i32) -> (i32, i32) {
    %c0_i32 = arith.constant 0 : i32
    %c0_i32_0 = arith.constant 0 : i32
    %c0_i32_1 = arith.constant 0 : i32
    return %c0_i32, %c0_i32_0 : i32, i32
  }
  func.func @transform_3(%arg0: i32) -> (i32, i32) {
    %c0_i32 = arith.constant 0 : i32
    %c0_i32_0 = arith.constant 0 : i32
    return %arg0, %c0_i32 : i32, i32
  }
}

module attributes {stable_mosaic.version = 11 : i64} {
  func.func @_mm_bias_act_kernel(%arg0: i32, %arg1: memref<8x288xbf16, #tpu.memory_space<vmem>>, %arg2: memref<288x128xbf16, #tpu.memory_space<vmem>>, %arg3: memref<1x128xf32, #tpu.memory_space<vmem>>, %arg4: memref<8x128xf32, #tpu.memory_space<vmem>>) attributes {dimension_semantics = [#tpu.dimension_semantics<parallel>], iteration_bounds = array<i64: 1>, scalar_prefetch = 0 : i64, scratch_operands = 0 : i64, tpu.core_type = #tpu.core_type<tc>, window_params = [{transform_indices = @transform_0, window_bounds = array<i64: 8, 288>}, {pipeline_mode = #tpu.pipeline_mode<synchronous>, transform_indices = @transform_1, window_bounds = array<i64: 288, 128>}, {pipeline_mode = #tpu.pipeline_mode<synchronous>, transform_indices = @transform_2, window_bounds = array<i64: 1, 128>}, {transform_indices = @transform_3, window_bounds = array<i64: 8, 128>}]} {
    %c0 = arith.constant 0 : index
    %c0_0 = arith.constant 0 : index
    %0 = vector.load %arg1[%c0, %c0_0] : memref<8x288xbf16, #tpu.memory_space<vmem>>, vector<8x288xbf16>
    %c0_1 = arith.constant 0 : index
    %c0_2 = arith.constant 0 : index
    %1 = vector.load %arg2[%c0_1, %c0_2] : memref<288x128xbf16, #tpu.memory_space<vmem>>, vector<288x128xbf16>
    %cst = arith.constant dense<0.000000e+00> : vector<8x128xf32>
    %2 = tpu.matmul %0, %1, %cst {dimension_numbers = #tpu.dot_dimension_numbers<[1], [0], [0], [1], [0, 0, 1, 1], [], []>} : vector<8x288xbf16>, vector<288x128xbf16>, vector<8x128xf32> -> vector<8x128xf32>
    %c0_3 = arith.constant 0 : index
    %c0_4 = arith.constant 0 : index
    %3 = vector.load %arg3[%c0_3, %c0_4] : memref<1x128xf32, #tpu.memory_space<vmem>>, vector<1x128xf32>
    %4 = vector.broadcast %3 : vector<1x128xf32> to vector<8x128xf32>
    %5 = arith.addf %2, %4 : vector<8x128xf32>
    %c0_5 = arith.constant 0 : index
    %c0_6 = arith.constant 0 : index
    %6 = vector.load %arg4[%c0_5, %c0_6] : memref<8x128xf32, #tpu.memory_space<vmem>>, vector<8x128xf32>
    tpu.vector_store %arg4[%c0_5, %c0_6], %5 {strides = array<i32>} : memref<8x128xf32, #tpu.memory_space<vmem>>, vector<8x128xf32>,
    return
  }
  func.func @transform_0(%arg0: i32) -> (i32, i32) {
    %c0_i32 = arith.constant 0 : i32
    %c0_i32_0 = arith.constant 0 : i32
    return %arg0, %c0_i32 : i32, i32
  }
  func.func @transform_1(%arg0: i32) -> (i32, i32) {
    %c0_i32 = arith.constant 0 : i32
    %c0_i32_0 = arith.constant 0 : i32
    %c0_i32_1 = arith.constant 0 : i32
    return %c0_i32, %c0_i32_0 : i32, i32
  }
  func.func @transform_2(%arg0: i32) -> (i32, i32) {
    %c0_i32 = arith.constant 0 : i32
    %c0_i32_0 = arith.constant 0 : i32
    %c0_i32_1 = arith.constant 0 : i32
    return %c0_i32, %c0_i32_0 : i32, i32
  }
  func.func @transform_3(%arg0: i32) -> (i32, i32) {
    %c0_i32 = arith.constant 0 : i32
    %c0_i32_0 = arith.constant 0 : i32
    return %arg0, %c0_i32 : i32, i32
  }
}

module attributes {stable_mosaic.version = 11 : i64} {
  func.func @_mm_bias_act_kernel(%arg0: i32, %arg1: memref<8x64xbf16, #tpu.memory_space<vmem>>, %arg2: memref<64x128xbf16, #tpu.memory_space<vmem>>, %arg3: memref<1x128xf32, #tpu.memory_space<vmem>>, %arg4: memref<8x128xf32, #tpu.memory_space<vmem>>) attributes {dimension_semantics = [#tpu.dimension_semantics<parallel>], iteration_bounds = array<i64: 1>, scalar_prefetch = 0 : i64, scratch_operands = 0 : i64, tpu.core_type = #tpu.core_type<tc>, window_params = [{transform_indices = @transform_0, window_bounds = array<i64: 8, 64>}, {pipeline_mode = #tpu.pipeline_mode<synchronous>, transform_indices = @transform_1, window_bounds = array<i64: 64, 128>}, {pipeline_mode = #tpu.pipeline_mode<synchronous>, transform_indices = @transform_2, window_bounds = array<i64: 1, 128>}, {transform_indices = @transform_3, window_bounds = array<i64: 8, 128>}]} {
    %c0 = arith.constant 0 : index
    %c0_0 = arith.constant 0 : index
    %0 = vector.load %arg1[%c0, %c0_0] : memref<8x64xbf16, #tpu.memory_space<vmem>>, vector<8x64xbf16>
    %c0_1 = arith.constant 0 : index
    %c0_2 = arith.constant 0 : index
    %1 = vector.load %arg2[%c0_1, %c0_2] : memref<64x128xbf16, #tpu.memory_space<vmem>>, vector<64x128xbf16>
    %cst = arith.constant dense<0.000000e+00> : vector<8x128xf32>
    %2 = tpu.matmul %0, %1, %cst {dimension_numbers = #tpu.dot_dimension_numbers<[1], [0], [0], [1], [0, 0, 1, 1], [], []>} : vector<8x64xbf16>, vector<64x128xbf16>, vector<8x128xf32> -> vector<8x128xf32>
    %c0_3 = arith.constant 0 : index
    %c0_4 = arith.constant 0 : index
    %3 = vector.load %arg3[%c0_3, %c0_4] : memref<1x128xf32, #tpu.memory_space<vmem>>, vector<1x128xf32>
    %4 = vector.broadcast %3 : vector<1x128xf32> to vector<8x128xf32>
    %5 = arith.addf %2, %4 : vector<8x128xf32>
    %c0_5 = arith.constant 0 : index
    %c0_6 = arith.constant 0 : index
    %6 = vector.load %arg4[%c0_5, %c0_6] : memref<8x128xf32, #tpu.memory_space<vmem>>, vector<8x128xf32>
    tpu.vector_store %arg4[%c0_5, %c0_6], %5 {strides = array<i32>} : memref<8x128xf32, #tpu.memory_space<vmem>>, vector<8x128xf32>,
    return
  }
  func.func @transform_0(%arg0: i32) -> (i32, i32) {
    %c0_i32 = arith.constant 0 : i32
    %c0_i32_0 = arith.constant 0 : i32
    return %arg0, %c0_i32 : i32, i32
  }
  func.func @transform_1(%arg0: i32) -> (i32, i32) {
    %c0_i32 = arith.constant 0 : i32
    %c0_i32_0 = arith.constant 0 : i32
    %c0_i32_1 = arith.constant 0 : i32
    return %c0_i32, %c0_i32_0 : i32, i32
  }
  func.func @transform_2(%arg0: i32) -> (i32, i32) {
    %c0_i32 = arith.constant 0 : i32
    %c0_i32_0 = arith.constant 0 : i32
    %c0_i32_1 = arith.constant 0 : i32
    return %c0_i32, %c0_i32_0 : i32, i32
  }
  func.func @transform_3(%arg0: i32) -> (i32, i32) {
    %c0_i32 = arith.constant 0 : i32
    %c0_i32_0 = arith.constant 0 : i32
    return %arg0, %c0_i32 : i32, i32
  }
}

module attributes {stable_mosaic.version = 11 : i64} {
  func.func @_mm_bias_act_kernel(%arg0: i32, %arg1: memref<32x32xbf16, #tpu.memory_space<vmem>>, %arg2: memref<32x128xbf16, #tpu.memory_space<vmem>>, %arg3: memref<1x128xf32, #tpu.memory_space<vmem>>, %arg4: memref<32x128xf32, #tpu.memory_space<vmem>>, %arg5: memref<32x128xf32, #tpu.memory_space<vmem>>) attributes {dimension_semantics = [#tpu.dimension_semantics<parallel>], iteration_bounds = array<i64: 1>, scalar_prefetch = 0 : i64, scratch_operands = 0 : i64, tpu.core_type = #tpu.core_type<tc>, window_params = [{transform_indices = @transform_0, window_bounds = array<i64: 32, 32>}, {pipeline_mode = #tpu.pipeline_mode<synchronous>, transform_indices = @transform_1, window_bounds = array<i64: 32, 128>}, {pipeline_mode = #tpu.pipeline_mode<synchronous>, transform_indices = @transform_2, window_bounds = array<i64: 1, 128>}, {transform_indices = @transform_3, window_bounds = array<i64: 32, 128>}, {transform_indices = @transform_4, window_bounds = array<i64: 32, 128>}]} {
    %c0 = arith.constant 0 : index
    %c0_0 = arith.constant 0 : index
    %0 = vector.load %arg1[%c0, %c0_0] : memref<32x32xbf16, #tpu.memory_space<vmem>>, vector<32x32xbf16>
    %c0_1 = arith.constant 0 : index
    %c0_2 = arith.constant 0 : index
    %1 = vector.load %arg2[%c0_1, %c0_2] : memref<32x128xbf16, #tpu.memory_space<vmem>>, vector<32x128xbf16>
    %cst = arith.constant dense<0.000000e+00> : vector<32x128xf32>
    %2 = tpu.matmul %0, %1, %cst {dimension_numbers = #tpu.dot_dimension_numbers<[1], [0], [0], [1], [0, 0, 1, 1], [], []>} : vector<32x32xbf16>, vector<32x128xbf16>, vector<32x128xf32> -> vector<32x128xf32>
    %c0_3 = arith.constant 0 : index
    %c0_4 = arith.constant 0 : index
    %3 = vector.load %arg3[%c0_3, %c0_4] : memref<1x128xf32, #tpu.memory_space<vmem>>, vector<1x128xf32>
    %4 = vector.broadcast %3 : vector<1x128xf32> to vector<32x128xf32>
    %5 = arith.addf %2, %4 : vector<32x128xf32>
    %c0_5 = arith.constant 0 : index
    %c0_6 = arith.constant 0 : index
    %6 = vector.load %arg4[%c0_5, %c0_6] : memref<32x128xf32, #tpu.memory_space<vmem>>, vector<32x128xf32>
    %7 = arith.addf %5, %6 : vector<32x128xf32>
    %c0_7 = arith.constant 0 : index
    %c0_8 = arith.constant 0 : index
    %8 = vector.load %arg5[%c0_7, %c0_8] : memref<32x128xf32, #tpu.memory_space<vmem>>, vector<32x128xf32>
    tpu.vector_store %arg5[%c0_7, %c0_8], %7 {strides = array<i32>} : memref<32x128xf32, #tpu.memory_space<vmem>>, vector<32x128xf32>,
    return
  }
  func.func @transform_0(%arg0: i32) -> (i32, i32) {
    %c0_i32 = arith.constant 0 : i32
    %c0_i32_0 = arith.constant 0 : i32
    return %arg0, %c0_i32 : i32, i32
  }
  func.func @transform_1(%arg0: i32) -> (i32, i32) {
    %c0_i32 = arith.constant 0 : i32
    %c0_i32_0 = arith.constant 0 : i32
    %c0_i32_1 = arith.constant 0 : i32
    return %c0_i32, %c0_i32_0 : i32, i32
  }
  func.func @transform_2(%arg0: i32) -> (i32, i32) {
    %c0_i32 = arith.constant 0 : i32
    %c0_i32_0 = arith.constant 0 : i32
    %c0_i32_1 = arith.constant 0 : i32
    return %c0_i32, %c0_i32_0 : i32, i32
  }
  func.func @transform_3(%arg0: i32) -> (i32, i32) {
    %c0_i32 = arith.constant 0 : i32
    %c0_i32_0 = arith.constant 0 : i32
    return %arg0, %c0_i32 : i32, i32
  }
  func.func @transform_4(%arg0: i32) -> (i32, i32) {
    %c0_i32 = arith.constant 0 : i32
    %c0_i32_0 = arith.constant 0 : i32
    return %arg0, %c0_i32 : i32, i32
  }
}

module attributes {stable_mosaic.version = 11 : i64} {
  func.func @_mm_bias_act_kernel(%arg0: i32, %arg1: memref<32x288xbf16, #tpu.memory_space<vmem>>, %arg2: memref<288x128xbf16, #tpu.memory_space<vmem>>, %arg3: memref<1x128xf32, #tpu.memory_space<vmem>>, %arg4: memref<32x128xf32, #tpu.memory_space<vmem>>) attributes {dimension_semantics = [#tpu.dimension_semantics<parallel>], iteration_bounds = array<i64: 1>, scalar_prefetch = 0 : i64, scratch_operands = 0 : i64, tpu.core_type = #tpu.core_type<tc>, window_params = [{transform_indices = @transform_0, window_bounds = array<i64: 32, 288>}, {pipeline_mode = #tpu.pipeline_mode<synchronous>, transform_indices = @transform_1, window_bounds = array<i64: 288, 128>}, {pipeline_mode = #tpu.pipeline_mode<synchronous>, transform_indices = @transform_2, window_bounds = array<i64: 1, 128>}, {transform_indices = @transform_3, window_bounds = array<i64: 32, 128>}]} {
    %c0 = arith.constant 0 : index
    %c0_0 = arith.constant 0 : index
    %0 = vector.load %arg1[%c0, %c0_0] : memref<32x288xbf16, #tpu.memory_space<vmem>>, vector<32x288xbf16>
    %c0_1 = arith.constant 0 : index
    %c0_2 = arith.constant 0 : index
    %1 = vector.load %arg2[%c0_1, %c0_2] : memref<288x128xbf16, #tpu.memory_space<vmem>>, vector<288x128xbf16>
    %cst = arith.constant dense<0.000000e+00> : vector<32x128xf32>
    %2 = tpu.matmul %0, %1, %cst {dimension_numbers = #tpu.dot_dimension_numbers<[1], [0], [0], [1], [0, 0, 1, 1], [], []>} : vector<32x288xbf16>, vector<288x128xbf16>, vector<32x128xf32> -> vector<32x128xf32>
    %c0_3 = arith.constant 0 : index
    %c0_4 = arith.constant 0 : index
    %3 = vector.load %arg3[%c0_3, %c0_4] : memref<1x128xf32, #tpu.memory_space<vmem>>, vector<1x128xf32>
    %4 = vector.broadcast %3 : vector<1x128xf32> to vector<32x128xf32>
    %5 = arith.addf %2, %4 : vector<32x128xf32>
    %c0_5 = arith.constant 0 : index
    %c0_6 = arith.constant 0 : index
    %6 = vector.load %arg4[%c0_5, %c0_6] : memref<32x128xf32, #tpu.memory_space<vmem>>, vector<32x128xf32>
    tpu.vector_store %arg4[%c0_5, %c0_6], %5 {strides = array<i32>} : memref<32x128xf32, #tpu.memory_space<vmem>>, vector<32x128xf32>,
    return
  }
  func.func @transform_0(%arg0: i32) -> (i32, i32) {
    %c0_i32 = arith.constant 0 : i32
    %c0_i32_0 = arith.constant 0 : i32
    return %arg0, %c0_i32 : i32, i32
  }
  func.func @transform_1(%arg0: i32) -> (i32, i32) {
    %c0_i32 = arith.constant 0 : i32
    %c0_i32_0 = arith.constant 0 : i32
    %c0_i32_1 = arith.constant 0 : i32
    return %c0_i32, %c0_i32_0 : i32, i32
  }
  func.func @transform_2(%arg0: i32) -> (i32, i32) {
    %c0_i32 = arith.constant 0 : i32
    %c0_i32_0 = arith.constant 0 : i32
    %c0_i32_1 = arith.constant 0 : i32
    return %c0_i32, %c0_i32_0 : i32, i32
  }
  func.func @transform_3(%arg0: i32) -> (i32, i32) {
    %c0_i32 = arith.constant 0 : i32
    %c0_i32_0 = arith.constant 0 : i32
    return %arg0, %c0_i32 : i32, i32
  }
}

module attributes {stable_mosaic.version = 11 : i64} {
  func.func @_mm_bias_act_kernel(%arg0: i32, %arg1: memref<128x16xbf16, #tpu.memory_space<vmem>>, %arg2: memref<16x128xbf16, #tpu.memory_space<vmem>>, %arg3: memref<1x128xf32, #tpu.memory_space<vmem>>, %arg4: memref<128x128xf32, #tpu.memory_space<vmem>>, %arg5: memref<128x128xf32, #tpu.memory_space<vmem>>) attributes {dimension_semantics = [#tpu.dimension_semantics<parallel>], iteration_bounds = array<i64: 1>, scalar_prefetch = 0 : i64, scratch_operands = 0 : i64, tpu.core_type = #tpu.core_type<tc>, window_params = [{transform_indices = @transform_0, window_bounds = array<i64: 128, 16>}, {pipeline_mode = #tpu.pipeline_mode<synchronous>, transform_indices = @transform_1, window_bounds = array<i64: 16, 128>}, {pipeline_mode = #tpu.pipeline_mode<synchronous>, transform_indices = @transform_2, window_bounds = array<i64: 1, 128>}, {transform_indices = @transform_3, window_bounds = array<i64: 128, 128>}, {transform_indices = @transform_4, window_bounds = array<i64: 128, 128>}]} {
    %c0 = arith.constant 0 : index
    %c0_0 = arith.constant 0 : index
    %0 = vector.load %arg1[%c0, %c0_0] : memref<128x16xbf16, #tpu.memory_space<vmem>>, vector<128x16xbf16>
    %c0_1 = arith.constant 0 : index
    %c0_2 = arith.constant 0 : index
    %1 = vector.load %arg2[%c0_1, %c0_2] : memref<16x128xbf16, #tpu.memory_space<vmem>>, vector<16x128xbf16>
    %cst = arith.constant dense<0.000000e+00> : vector<128x128xf32>
    %2 = tpu.matmul %0, %1, %cst {dimension_numbers = #tpu.dot_dimension_numbers<[1], [0], [0], [1], [0, 0, 1, 1], [], []>} : vector<128x16xbf16>, vector<16x128xbf16>, vector<128x128xf32> -> vector<128x128xf32>
    %c0_3 = arith.constant 0 : index
    %c0_4 = arith.constant 0 : index
    %3 = vector.load %arg3[%c0_3, %c0_4] : memref<1x128xf32, #tpu.memory_space<vmem>>, vector<1x128xf32>
    %4 = vector.broadcast %3 : vector<1x128xf32> to vector<128x128xf32>
    %5 = arith.addf %2, %4 : vector<128x128xf32>
    %c0_5 = arith.constant 0 : index
    %c0_6 = arith.constant 0 : index
    %6 = vector.load %arg4[%c0_5, %c0_6] : memref<128x128xf32, #tpu.memory_space<vmem>>, vector<128x128xf32>
    %7 = arith.addf %5, %6 : vector<128x128xf32>
    %c0_7 = arith.constant 0 : index
    %c0_8 = arith.constant 0 : index
    %8 = vector.load %arg5[%c0_7, %c0_8] : memref<128x128xf32, #tpu.memory_space<vmem>>, vector<128x128xf32>
    tpu.vector_store %arg5[%c0_7, %c0_8], %7 {strides = array<i32>} : memref<128x128xf32, #tpu.memory_space<vmem>>, vector<128x128xf32>,
    return
  }
  func.func @transform_0(%arg0: i32) -> (i32, i32) {
    %c0_i32 = arith.constant 0 : i32
    %c0_i32_0 = arith.constant 0 : i32
    return %arg0, %c0_i32 : i32, i32
  }
  func.func @transform_1(%arg0: i32) -> (i32, i32) {
    %c0_i32 = arith.constant 0 : i32
    %c0_i32_0 = arith.constant 0 : i32
    %c0_i32_1 = arith.constant 0 : i32
    return %c0_i32, %c0_i32_0 : i32, i32
  }
  func.func @transform_2(%arg0: i32) -> (i32, i32) {
    %c0_i32 = arith.constant 0 : i32
    %c0_i32_0 = arith.constant 0 : i32
    %c0_i32_1 = arith.constant 0 : i32
    return %c0_i32, %c0_i32_0 : i32, i32
  }
  func.func @transform_3(%arg0: i32) -> (i32, i32) {
    %c0_i32 = arith.constant 0 : i32
    %c0_i32_0 = arith.constant 0 : i32
    return %arg0, %c0_i32 : i32, i32
  }
  func.func @transform_4(%arg0: i32) -> (i32, i32) {
    %c0_i32 = arith.constant 0 : i32
    %c0_i32_0 = arith.constant 0 : i32
    return %arg0, %c0_i32 : i32, i32
  }
}

module attributes {stable_mosaic.version = 11 : i64} {
  func.func @_mm_bias_act_kernel(%arg0: i32, %arg1: memref<128x288xbf16, #tpu.memory_space<vmem>>, %arg2: memref<288x128xbf16, #tpu.memory_space<vmem>>, %arg3: memref<1x128xf32, #tpu.memory_space<vmem>>, %arg4: memref<128x128xf32, #tpu.memory_space<vmem>>) attributes {dimension_semantics = [#tpu.dimension_semantics<parallel>], iteration_bounds = array<i64: 1>, scalar_prefetch = 0 : i64, scratch_operands = 0 : i64, tpu.core_type = #tpu.core_type<tc>, window_params = [{transform_indices = @transform_0, window_bounds = array<i64: 128, 288>}, {pipeline_mode = #tpu.pipeline_mode<synchronous>, transform_indices = @transform_1, window_bounds = array<i64: 288, 128>}, {pipeline_mode = #tpu.pipeline_mode<synchronous>, transform_indices = @transform_2, window_bounds = array<i64: 1, 128>}, {transform_indices = @transform_3, window_bounds = array<i64: 128, 128>}]} {
    %c0 = arith.constant 0 : index
    %c0_0 = arith.constant 0 : index
    %0 = vector.load %arg1[%c0, %c0_0] : memref<128x288xbf16, #tpu.memory_space<vmem>>, vector<128x288xbf16>
    %c0_1 = arith.constant 0 : index
    %c0_2 = arith.constant 0 : index
    %1 = vector.load %arg2[%c0_1, %c0_2] : memref<288x128xbf16, #tpu.memory_space<vmem>>, vector<288x128xbf16>
    %cst = arith.constant dense<0.000000e+00> : vector<128x128xf32>
    %2 = tpu.matmul %0, %1, %cst {dimension_numbers = #tpu.dot_dimension_numbers<[1], [0], [0], [1], [0, 0, 1, 1], [], []>} : vector<128x288xbf16>, vector<288x128xbf16>, vector<128x128xf32> -> vector<128x128xf32>
    %c0_3 = arith.constant 0 : index
    %c0_4 = arith.constant 0 : index
    %3 = vector.load %arg3[%c0_3, %c0_4] : memref<1x128xf32, #tpu.memory_space<vmem>>, vector<1x128xf32>
    %4 = vector.broadcast %3 : vector<1x128xf32> to vector<128x128xf32>
    %5 = arith.addf %2, %4 : vector<128x128xf32>
    %c0_5 = arith.constant 0 : index
    %c0_6 = arith.constant 0 : index
    %6 = vector.load %arg4[%c0_5, %c0_6] : memref<128x128xf32, #tpu.memory_space<vmem>>, vector<128x128xf32>
    tpu.vector_store %arg4[%c0_5, %c0_6], %5 {strides = array<i32>} : memref<128x128xf32, #tpu.memory_space<vmem>>, vector<128x128xf32>,
    return
  }
  func.func @transform_0(%arg0: i32) -> (i32, i32) {
    %c0_i32 = arith.constant 0 : i32
    %c0_i32_0 = arith.constant 0 : i32
    return %arg0, %c0_i32 : i32, i32
  }
  func.func @transform_1(%arg0: i32) -> (i32, i32) {
    %c0_i32 = arith.constant 0 : i32
    %c0_i32_0 = arith.constant 0 : i32
    %c0_i32_1 = arith.constant 0 : i32
    return %c0_i32, %c0_i32_0 : i32, i32
  }
  func.func @transform_2(%arg0: i32) -> (i32, i32) {
    %c0_i32 = arith.constant 0 : i32
    %c0_i32_0 = arith.constant 0 : i32
    %c0_i32_1 = arith.constant 0 : i32
    return %c0_i32, %c0_i32_0 : i32, i32
  }
  func.func @transform_3(%arg0: i32) -> (i32, i32) {
    %c0_i32 = arith.constant 0 : i32
    %c0_i32_0 = arith.constant 0 : i32
    return %arg0, %c0_i32 : i32, i32
  }
}

module attributes {stable_mosaic.version = 11 : i64} {
  func.func @_mm_bias_act_kernel(%arg0: i32, %arg1: memref<176x288xbf16, #tpu.memory_space<vmem>>, %arg2: memref<288x128xbf16, #tpu.memory_space<vmem>>, %arg3: memref<1x128xf32, #tpu.memory_space<vmem>>, %arg4: memref<176x128xf32, #tpu.memory_space<vmem>>) attributes {dimension_semantics = [#tpu.dimension_semantics<parallel>], iteration_bounds = array<i64: 1>, scalar_prefetch = 0 : i64, scratch_operands = 0 : i64, tpu.core_type = #tpu.core_type<tc>, window_params = [{transform_indices = @transform_0, window_bounds = array<i64: 176, 288>}, {pipeline_mode = #tpu.pipeline_mode<synchronous>, transform_indices = @transform_1, window_bounds = array<i64: 288, 128>}, {pipeline_mode = #tpu.pipeline_mode<synchronous>, transform_indices = @transform_2, window_bounds = array<i64: 1, 128>}, {transform_indices = @transform_3, window_bounds = array<i64: 176, 128>}]} {
    %c0 = arith.constant 0 : index
    %c0_0 = arith.constant 0 : index
    %0 = vector.load %arg1[%c0, %c0_0] : memref<176x288xbf16, #tpu.memory_space<vmem>>, vector<176x288xbf16>
    %c0_1 = arith.constant 0 : index
    %c0_2 = arith.constant 0 : index
    %1 = vector.load %arg2[%c0_1, %c0_2] : memref<288x128xbf16, #tpu.memory_space<vmem>>, vector<288x128xbf16>
    %cst = arith.constant dense<0.000000e+00> : vector<176x128xf32>
    %2 = tpu.matmul %0, %1, %cst {dimension_numbers = #tpu.dot_dimension_numbers<[1], [0], [0], [1], [0, 0, 1, 1], [], []>} : vector<176x288xbf16>, vector<288x128xbf16>, vector<176x128xf32> -> vector<176x128xf32>
    %c0_3 = arith.constant 0 : index
    %c0_4 = arith.constant 0 : index
    %3 = vector.load %arg3[%c0_3, %c0_4] : memref<1x128xf32, #tpu.memory_space<vmem>>, vector<1x128xf32>
    %4 = vector.broadcast %3 : vector<1x128xf32> to vector<176x128xf32>
    %5 = arith.addf %2, %4 : vector<176x128xf32>
    %cst_5 = arith.constant 0.000000e+00 : f32
    %6 = vector.broadcast %cst_5 : f32 to vector<176x128xf32>
    %7 = arith.maximumf %5, %6 : vector<176x128xf32>
    %c0_6 = arith.constant 0 : index
    %c0_7 = arith.constant 0 : index
    %8 = vector.load %arg4[%c0_6, %c0_7] : memref<176x128xf32, #tpu.memory_space<vmem>>, vector<176x128xf32>
    tpu.vector_store %arg4[%c0_6, %c0_7], %7 {strides = array<i32>} : memref<176x128xf32, #tpu.memory_space<vmem>>, vector<176x128xf32>,
    return
  }
  func.func @transform_0(%arg0: i32) -> (i32, i32) {
    %c0_i32 = arith.constant 0 : i32
    %c0_i32_0 = arith.constant 0 : i32
    return %arg0, %c0_i32 : i32, i32
  }
  func.func @transform_1(%arg0: i32) -> (i32, i32) {
    %c0_i32 = arith.constant 0 : i32
    %c0_i32_0 = arith.constant 0 : i32
    %c0_i32_1 = arith.constant 0 : i32
    return %c0_i32, %c0_i32_0 : i32, i32
  }
  func.func @transform_2(%arg0: i32) -> (i32, i32) {
    %c0_i32 = arith.constant 0 : i32
    %c0_i32_0 = arith.constant 0 : i32
    %c0_i32_1 = arith.constant 0 : i32
    return %c0_i32, %c0_i32_0 : i32, i32
  }
  func.func @transform_3(%arg0: i32) -> (i32, i32) {
    %c0_i32 = arith.constant 0 : i32
    %c0_i32_0 = arith.constant 0 : i32
    return %arg0, %c0_i32 : i32, i32
  }
}

module attributes {stable_mosaic.version = 11 : i64} {
  func.func @_mm_bias_act_kernel(%arg0: i32, %arg1: memref<176x288xbf16, #tpu.memory_space<vmem>>, %arg2: memref<288x128xbf16, #tpu.memory_space<vmem>>, %arg3: memref<1x128xf32, #tpu.memory_space<vmem>>, %arg4: memref<176x128xf32, #tpu.memory_space<vmem>>) attributes {dimension_semantics = [#tpu.dimension_semantics<parallel>], iteration_bounds = array<i64: 1>, scalar_prefetch = 0 : i64, scratch_operands = 0 : i64, tpu.core_type = #tpu.core_type<tc>, window_params = [{transform_indices = @transform_0, window_bounds = array<i64: 176, 288>}, {pipeline_mode = #tpu.pipeline_mode<synchronous>, transform_indices = @transform_1, window_bounds = array<i64: 288, 128>}, {pipeline_mode = #tpu.pipeline_mode<synchronous>, transform_indices = @transform_2, window_bounds = array<i64: 1, 128>}, {transform_indices = @transform_3, window_bounds = array<i64: 176, 128>}]} {
    %c0 = arith.constant 0 : index
    %c0_0 = arith.constant 0 : index
    %0 = vector.load %arg1[%c0, %c0_0] : memref<176x288xbf16, #tpu.memory_space<vmem>>, vector<176x288xbf16>
    %c0_1 = arith.constant 0 : index
    %c0_2 = arith.constant 0 : index
    %1 = vector.load %arg2[%c0_1, %c0_2] : memref<288x128xbf16, #tpu.memory_space<vmem>>, vector<288x128xbf16>
    %cst = arith.constant dense<0.000000e+00> : vector<176x128xf32>
    %2 = tpu.matmul %0, %1, %cst {dimension_numbers = #tpu.dot_dimension_numbers<[1], [0], [0], [1], [0, 0, 1, 1], [], []>} : vector<176x288xbf16>, vector<288x128xbf16>, vector<176x128xf32> -> vector<176x128xf32>
    %c0_3 = arith.constant 0 : index
    %c0_4 = arith.constant 0 : index
    %3 = vector.load %arg3[%c0_3, %c0_4] : memref<1x128xf32, #tpu.memory_space<vmem>>, vector<1x128xf32>
    %4 = vector.broadcast %3 : vector<1x128xf32> to vector<176x128xf32>
    %5 = arith.addf %2, %4 : vector<176x128xf32>
    %c0_5 = arith.constant 0 : index
    %c0_6 = arith.constant 0 : index
    %6 = vector.load %arg4[%c0_5, %c0_6] : memref<176x128xf32, #tpu.memory_space<vmem>>, vector<176x128xf32>
    tpu.vector_store %arg4[%c0_5, %c0_6], %5 {strides = array<i32>} : memref<176x128xf32, #tpu.memory_space<vmem>>, vector<176x128xf32>,
    return
  }
  func.func @transform_0(%arg0: i32) -> (i32, i32) {
    %c0_i32 = arith.constant 0 : i32
    %c0_i32_0 = arith.constant 0 : i32
    return %arg0, %c0_i32 : i32, i32
  }
  func.func @transform_1(%arg0: i32) -> (i32, i32) {
    %c0_i32 = arith.constant 0 : i32
    %c0_i32_0 = arith.constant 0 : i32
    %c0_i32_1 = arith.constant 0 : i32
    return %c0_i32, %c0_i32_0 : i32, i32
  }
  func.func @transform_2(%arg0: i32) -> (i32, i32) {
    %c0_i32 = arith.constant 0 : i32
    %c0_i32_0 = arith.constant 0 : i32
    %c0_i32_1 = arith.constant 0 : i32
    return %c0_i32, %c0_i32_0 : i32, i32
  }
  func.func @transform_3(%arg0: i32) -> (i32, i32) {
    %c0_i32 = arith.constant 0 : i32
    %c0_i32_0 = arith.constant 0 : i32
    return %arg0, %c0_i32 : i32, i32
  }
}

module attributes {stable_mosaic.version = 11 : i64} {
  func.func @_mm_bias_act_kernel(%arg0: i32, %arg1: memref<176x288xbf16, #tpu.memory_space<vmem>>, %arg2: memref<288x128xbf16, #tpu.memory_space<vmem>>, %arg3: memref<1x128xf32, #tpu.memory_space<vmem>>, %arg4: memref<176x128xf32, #tpu.memory_space<vmem>>) attributes {dimension_semantics = [#tpu.dimension_semantics<parallel>], iteration_bounds = array<i64: 1>, scalar_prefetch = 0 : i64, scratch_operands = 0 : i64, tpu.core_type = #tpu.core_type<tc>, window_params = [{transform_indices = @transform_0, window_bounds = array<i64: 176, 288>}, {pipeline_mode = #tpu.pipeline_mode<synchronous>, transform_indices = @transform_1, window_bounds = array<i64: 288, 128>}, {pipeline_mode = #tpu.pipeline_mode<synchronous>, transform_indices = @transform_2, window_bounds = array<i64: 1, 128>}, {transform_indices = @transform_3, window_bounds = array<i64: 176, 128>}]} {
    %c0 = arith.constant 0 : index
    %c0_0 = arith.constant 0 : index
    %0 = vector.load %arg1[%c0, %c0_0] : memref<176x288xbf16, #tpu.memory_space<vmem>>, vector<176x288xbf16>
    %c0_1 = arith.constant 0 : index
    %c0_2 = arith.constant 0 : index
    %1 = vector.load %arg2[%c0_1, %c0_2] : memref<288x128xbf16, #tpu.memory_space<vmem>>, vector<288x128xbf16>
    %cst = arith.constant dense<0.000000e+00> : vector<176x128xf32>
    %2 = tpu.matmul %0, %1, %cst {dimension_numbers = #tpu.dot_dimension_numbers<[1], [0], [0], [1], [0, 0, 1, 1], [], []>} : vector<176x288xbf16>, vector<288x128xbf16>, vector<176x128xf32> -> vector<176x128xf32>
    %c0_3 = arith.constant 0 : index
    %c0_4 = arith.constant 0 : index
    %3 = vector.load %arg3[%c0_3, %c0_4] : memref<1x128xf32, #tpu.memory_space<vmem>>, vector<1x128xf32>
    %4 = vector.broadcast %3 : vector<1x128xf32> to vector<176x128xf32>
    %5 = arith.addf %2, %4 : vector<176x128xf32>
    %6 = arith.negf %5 : vector<176x128xf32>
    %7 = math.exp %6 : vector<176x128xf32>
    %cst_5 = arith.constant 1.000000e+00 : f32
    %8 = vector.broadcast %cst_5 : f32 to vector<176x128xf32>
    %9 = arith.addf %8, %7 : vector<176x128xf32>
    %10 = arith.divf %8, %9 : vector<176x128xf32>
    %c0_6 = arith.constant 0 : index
    %c0_7 = arith.constant 0 : index
    %11 = vector.load %arg4[%c0_6, %c0_7] : memref<176x128xf32, #tpu.memory_space<vmem>>, vector<176x128xf32>
    tpu.vector_store %arg4[%c0_6, %c0_7], %10 {strides = array<i32>} : memref<176x128xf32, #tpu.memory_space<vmem>>, vector<176x128xf32>,
    return
  }
  func.func @transform_0(%arg0: i32) -> (i32, i32) {
    %c0_i32 = arith.constant 0 : i32
    %c0_i32_0 = arith.constant 0 : i32
    return %arg0, %c0_i32 : i32, i32
  }
  func.func @transform_1(%arg0: i32) -> (i32, i32) {
    %c0_i32 = arith.constant 0 : i32
    %c0_i32_0 = arith.constant 0 : i32
    %c0_i32_1 = arith.constant 0 : i32
    return %c0_i32, %c0_i32_0 : i32, i32
  }
  func.func @transform_2(%arg0: i32) -> (i32, i32) {
    %c0_i32 = arith.constant 0 : i32
    %c0_i32_0 = arith.constant 0 : i32
    %c0_i32_1 = arith.constant 0 : i32
    return %c0_i32, %c0_i32_0 : i32, i32
  }
  func.func @transform_3(%arg0: i32) -> (i32, i32) {
    %c0_i32 = arith.constant 0 : i32
    %c0_i32_0 = arith.constant 0 : i32
    return %arg0, %c0_i32 : i32, i32
  }
}

</mosaic_0001>

<llo_original>
// kernel: retinanet_forward.23
$region0: #{retinanet_forward.23}
  #allocation0 [shape = 'u32[]', space=smem, size = 0x4, offset = 0x4, fixed_abs, tag = 'smem constant byte address 0x4 - core index']
  #allocation1 [shape = 'u32[144,128]{1,0:T(1,128)}', space=vmem, size = 0x12000, scoped, tag = 'internal scratch']
  %s0 = inlined_call_operand.vmem [shape: bf16[2048,32], index: 0, kind: input, shape index: {}]
  %s1 = inlined_call_operand.vmem [shape: bf16[32,128], index: 1, kind: input, shape index: {}]
  %s2 = inlined_call_operand.vmem [shape: f32[1,128], index: 2, kind: input, shape index: {}]
  %s3 = inlined_call_operand.vmem [shape: f32[2048,128], index: 3, kind: output, shape index: {}]
  %s4 = sld [smem:[#allocation0]]
  $region45: #{retinanet_forward.23} parent=0
    _
  %s6 = ssub.s32 1, %s4
  %s7 = scalar_select 0, %s6, %s4
  loop: start=0, step=1, limit=6
  $region2: #{retinanet_forward.23} parent=0 // loop_pre_header
    _
  $region3: #{retinanet_forward.23} parent=0 // loop_header
    %s9 = sphi 0, %s13
    %p10 = scmp.ge.s32.totalorder %s9, 6
    %s19 = sphi 0, %s21
    %s22 = sphi 0, %s19
    %s23 = sphi 0, %s22
    %s39 = sphi 0, %s23
    %s43 = sphi 0, %s43
    %s45 = sphi 0, %s43
    %s46 = sphi 0, %s45
    %s60 = sphi 0, %s46
    %s64 = sphi 0, %s64
    %s66 = sphi 0, %s64
    %s67 = sphi 0, %s66
    %s81 = sphi 0, %s67
    %s87 = sphi 0, %s89
    %s90 = sphi 0, %s87
    %s91 = sphi 0, %s90
    %s107 = sphi 0, %s91
  $region4: #{retinanet_forward.23} parent=0 // loop_header_branch
    %12 = sbr.rel (%p10) target = $region8
  $region5: #{retinanet_forward.23} parent=0 // loop_body
    %s14 = ssub.s32 %s9, 1
    %s15 = ssub.s32 %s9, 2
    %s16 = sadd.s32 %s9, 1
    %s17 = ssub.s32 %s9, %s16
    %p18 = scmp.eq.s32.totalorder %s17, 0
    %s20 = sadd.s32 %s19, 1
    %s21 = scalar_select %p18, %s19, %s20
    %p24 = pneg %p18
    %p25 = scmp.eq.s32.totalorder %s9, 3
    %p26 = por %p24, %p25
    %p27 = scmp.ne.s32.totalorder %s19, %s22
    %p28 = scmp.eq.s32.totalorder %s9, 0
    %p29 = por %p27, %p28
    %p30 = scmp.ne.s32.totalorder %s19, %s22
    %p31 = scmp.eq.s32.totalorder %s14, 3
    %p32 = por %p30, %p31
    %p33 = scmp.ne.s32.totalorder %s22, %s23
    %p34 = scmp.eq.s32.totalorder %s14, 0
    %p35 = por %p33, %p34
    %p36 = scmp.ne.s32.totalorder %s22, %s23
    %p37 = scmp.eq.s32.totalorder %s15, 3
    %p38 = por %p36, %p37
    %p40 = scmp.ne.s32.totalorder %s23, %s39
    %p41 = scmp.eq.s32.totalorder %s15, 0
    %p42 = por %p40, %p41
    %s44 = sadd.s32 %s43, 1
    %p47 = scmp.eq.s32.totalorder %s9, 3
    %p48 = scmp.ne.s32.totalorder %s43, %s45
    %p49 = scmp.eq.s32.totalorder %s9, 0
    %p50 = por %p48, %p49
    %p51 = scmp.ne.s32.totalorder %s43, %s45
    %p52 = scmp.eq.s32.totalorder %s14, 3
    %p53 = por %p51, %p52
    %p54 = scmp.ne.s32.totalorder %s45, %s46
    %p55 = scmp.eq.s32.totalorder %s14, 0
    %p56 = por %p54, %p55
    %p57 = scmp.ne.s32.totalorder %s45, %s46
    %p58 = scmp.eq.s32.totalorder %s15, 3
    %p59 = por %p57, %p58
    %p61 = scmp.ne.s32.totalorder %s46, %s60
    %p62 = scmp.eq.s32.totalorder %s15, 0
    %p63 = por %p61, %p62
    %s65 = sadd.s32 %s64, 1
    %p68 = scmp.eq.s32.totalorder %s9, 3
    %p69 = scmp.ne.s32.totalorder %s64, %s66
    %p70 = scmp.eq.s32.totalorder %s9, 0
    %p71 = por %p69, %p70
    %p72 = scmp.ne.s32.totalorder %s64, %s66
    %p73 = scmp.eq.s32.totalorder %s14, 3
    %p74 = por %p72, %p73
    %p75 = scmp.ne.s32.totalorder %s66, %s67
    %p76 = scmp.eq.s32.totalorder %s14, 0
    %p77 = por %p75, %p76
    %p78 = scmp.ne.s32.totalorder %s66, %s67
    %p79 = scmp.eq.s32.totalorder %s15, 3
    %p80 = por %p78, %p79
    %p82 = scmp.ne.s32.totalorder %s67, %s81
    %p83 = scmp.eq.s32.totalorder %s15, 0
    %p84 = por %p82, %p83
    %s85 = ssub.s32 %s9, %s16
    %p86 = scmp.eq.s32.totalorder %s85, 0
    %s88 = sadd.s32 %s87, 1
    %s89 = scalar_select %p86, %s87, %s88
    %p92 = pneg %p86
    %p93 = scmp.eq.s32.totalorder %s9, 3
    %p94 = por %p92, %p93
    %p95 = scmp.ne.s32.totalorder %s87, %s90
    %p96 = scmp.eq.s32.totalorder %s9, 0
    %p97 = por %p95, %p96
    %p98 = scmp.ne.s32.totalorder %s87, %s90
    %p99 = scmp.eq.s32.totalorder %s14, 3
    %p100 = por %p98, %p99
    %p101 = scmp.ne.s32.totalorder %s90, %s91
    %p102 = scmp.eq.s32.totalorder %s14, 0
    %p103 = por %p101, %p102
    %p104 = scmp.ne.s32.totalorder %s90, %s91
    %p105 = scmp.eq.s32.totalorder %s15, 3
    %p106 = por %p104, %p105
    %p108 = scmp.ne.s32.totalorder %s91, %s107
    %p109 = scmp.eq.s32.totalorder %s15, 0
    %p110 = por %p108, %p109
    %p111 = scmp.le.s32.totalorder 1, %s9
    %p112 = scmp.lt.s32.totalorder %s9, 5
    %p113 = pnand %p111, %p112
    %p114 = pneg %p113
    // Predicated region
    $region9: #{retinanet_forward.23} parent=5 // pred_check
      _
    $region10: #{retinanet_forward.23} parent=5 // pred_check_branch
      %116 = sbr.rel (%p113) target = $region12
    $region11: #{retinanet_forward.23} parent=5 // pred_region
      %s117 = ssub.s32 %s9, 1
      // Predicated region
      $region13: #{retinanet_forward.23} parent=11 // pred_check
        %p118 = pneg %p56
      $region14: #{retinanet_forward.23} parent=11 // pred_check_branch
        %120 = sbr.rel (%p118) target = $region16
      $region15: #{retinanet_forward.23} parent=11 // pred_region
        _
      $region16: #{retinanet_forward.23} parent=11 // pred_fallthru
        _
      // Predicated region
      $region17: #{retinanet_forward.23} parent=11 // pred_check
        %p121 = pneg %p77
      $region18: #{retinanet_forward.23} parent=11 // pred_check_branch
        %123 = sbr.rel (%p121) target = $region20
      $region19: #{retinanet_forward.23} parent=11 // pred_region
        _
      $region20: #{retinanet_forward.23} parent=11 // pred_fallthru
        _
    $region12: #{retinanet_forward.23} parent=5 // pred_fallthru
      _
    %p124 = scmp.lt.s32.totalorder %s9, 4
    // Predicated region
    $region21: #{retinanet_forward.23} parent=5 // pred_check
      %p125 = pneg %p124
    $region22: #{retinanet_forward.23} parent=5 // pred_check_branch
      %127 = sbr.rel (%p125) target = $region24
    $region23: #{retinanet_forward.23} parent=5 // pred_region
      // Predicated region
      $region25: #{retinanet_forward.23} parent=23 // pred_check
        %p128 = pneg %p29
      $region26: #{retinanet_forward.23} parent=23 // pred_check_branch
        %130 = sbr.rel (%p128) target = $region28
      $region27: #{retinanet_forward.23} parent=23 // pred_region
        %s131 = smul.u32 64, %s9
        %p132 = scmp.lt.s32.totalorder %s131, 255
        %s133 = scalar_select %p132, %s131, 255
        %s134 = smul.addr %s133, 4
        %s135 = scalar_lea.vmem %s0, %s134
        %s136 = smul.u32 64, %s9
      $region28: #{retinanet_forward.23} parent=23 // pred_fallthru
        _
    $region24: #{retinanet_forward.23} parent=5 // pred_fallthru
      _
    %p137 = scmp.le.s32.totalorder 1, %s9
    %p138 = scmp.lt.s32.totalorder %s9, 5
    %p139 = pnand %p137, %p138
    %p140 = pneg %p139
    // Predicated region
    $region29: #{retinanet_forward.23} parent=5 // pred_check
      _
    $region30: #{retinanet_forward.23} parent=5 // pred_check_branch
      %142 = sbr.rel (%p139) target = $region32
    $region31: #{retinanet_forward.23} parent=5 // pred_region
      %s143 = ssub.s32 %s9, 1
      %s144 = smul.u32 64, %s14
      %p145 = scmp.lt.s32.totalorder %s144, 255
      %s146 = scalar_select %p145, %s144, 255
      %s147 = smul.addr %s146, 4
      %s148 = scalar_lea.vmem %s0, %s147
      %p149 = pneg %p35
      %p150 = pneg %p32
      %p151 = pneg %p56
      %p152 = pneg %p53
      %p153 = pneg %p77
      %p154 = pneg %p74
      %p155 = pneg %p103
      %p156 = pneg %p100
      %s157 = smul.u32 64, %s14
      %p158 = scmp.lt.s32.totalorder %s157, 255
      %s159 = scalar_select %p158, %s157, 255
      %s160 = smul.addr %s159, 8
      %s161 = scalar_lea.vmem %s3, %s160
      %s162 = smul.u32 64, %s14
      %p163 = scmp.lt.s32.totalorder %s162, 255
      %s164 = scalar_select %p163, %s162, 255
      %s165 = smul.addr %s164, 4
      %s166 = scalar_lea.vmem %s0, %s165
      %s167 = smul.u32 64, %s14
      %s168 = smul.u32 64, %s14
      %p169 = scmp.lt.s32.totalorder %s168, 255
      %s170 = scalar_select %p169, %s168, 255
      %s171 = smul.addr %s170, 8
      %s172 = scalar_lea.vmem %s3, %s171
      %s173 = smul.u32 64, %s14
      %v175 = vld [vmem:[%s166] sm:$0xf]
      %v176 = vld [vmem:[%s166 + $0x4] sm:$0xf]
      %v177 = vld [vmem:[%s166 + $0x8] sm:$0xf]
      %v178 = vld [vmem:[%s166 + $0xc] sm:$0xf]
      %v179 = vld [vmem:[%s166 + $0x10] sm:$0xf]
      %v180 = vld [vmem:[%s166 + $0x14] sm:$0xf]
      %v181 = vld [vmem:[%s166 + $0x18] sm:$0xf]
      %v182 = vld [vmem:[%s166 + $0x1c] sm:$0xf]
      %v183 = vld [vmem:[%s166 + $0x20] sm:$0xf]
      %v184 = vld [vmem:[%s166 + $0x24] sm:$0xf]
      %v185 = vld [vmem:[%s166 + $0x28] sm:$0xf]
      %v186 = vld [vmem:[%s166 + $0x2c] sm:$0xf]
      %v187 = vld [vmem:[%s166 + $0x30] sm:$0xf]
      %v188 = vld [vmem:[%s166 + $0x34] sm:$0xf]
      %v189 = vld [vmem:[%s166 + $0x38] sm:$0xf]
      %v190 = vld [vmem:[%s166 + $0x3c] sm:$0xf]
      %v191 = vld [vmem:[%s166 + $0x40] sm:$0xf]
      %v192 = vld [vmem:[%s166 + $0x44] sm:$0xf]
      %v193 = vld [vmem:[%s166 + $0x48] sm:$0xf]
      %v194 = vld [vmem:[%s166 + $0x4c] sm:$0xf]
      %v195 = vld [vmem:[%s166 + $0x50] sm:$0xf]
      %v196 = vld [vmem:[%s166 + $0x54] sm:$0xf]
      %v197 = vld [vmem:[%s166 + $0x58] sm:$0xf]
      %v198 = vld [vmem:[%s166 + $0x5c] sm:$0xf]
      %v199 = vld [vmem:[%s166 + $0x60] sm:$0xf]
      %v200 = vld [vmem:[%s166 + $0x64] sm:$0xf]
      %v201 = vld [vmem:[%s166 + $0x68] sm:$0xf]
      %v202 = vld [vmem:[%s166 + $0x6c] sm:$0xf]
      %v203 = vld [vmem:[%s166 + $0x70] sm:$0xf]
      %v204 = vld [vmem:[%s166 + $0x74] sm:$0xf]
      %v205 = vld [vmem:[%s166 + $0x78] sm:$0xf]
      %v206 = vld [vmem:[%s166 + $0x7c] sm:$0xf]
      %v207 = vld [vmem:[%s166 + $0x80] sm:$0xf]
      %v208 = vld [vmem:[%s166 + $0x84] sm:$0xf]
      %v209 = vld [vmem:[%s166 + $0x88] sm:$0xf]
      %v210 = vld [vmem:[%s166 + $0x8c] sm:$0xf]
      %v211 = vld [vmem:[%s166 + $0x90] sm:$0xf]
      %v212 = vld [vmem:[%s166 + $0x94] sm:$0xf]
      %v213 = vld [vmem:[%s166 + $0x98] sm:$0xf]
      %v214 = vld [vmem:[%s166 + $0x9c] sm:$0xf]
      %v215 = vld [vmem:[%s166 + $0xa0] sm:$0xf]
      %v216 = vld [vmem:[%s166 + $0xa4] sm:$0xf]
      %v217 = vld [vmem:[%s166 + $0xa8] sm:$0xf]
      %v218 = vld [vmem:[%s166 + $0xac] sm:$0xf]
      %v219 = vld [vmem:[%s166 + $0xb0] sm:$0xf]
      %v220 = vld [vmem:[%s166 + $0xb4] sm:$0xf]
      %v221 = vld [vmem:[%s166 + $0xb8] sm:$0xf]
      %v222 = vld [vmem:[%s166 + $0xbc] sm:$0xf]
      %v223 = vld [vmem:[%s166 + $0xc0] sm:$0xf]
      %v224 = vld [vmem:[%s166 + $0xc4] sm:$0xf]
      %v225 = vld [vmem:[%s166 + $0xc8] sm:$0xf]
      %v226 = vld [vmem:[%s166 + $0xcc] sm:$0xf]
      %v227 = vld [vmem:[%s166 + $0xd0] sm:$0xf]
      %v228 = vld [vmem:[%s166 + $0xd4] sm:$0xf]
      %v229 = vld [vmem:[%s166 + $0xd8] sm:$0xf]
      %v230 = vld [vmem:[%s166 + $0xdc] sm:$0xf]
      %v231 = vld [vmem:[%s166 + $0xe0] sm:$0xf]
      %v232 = vld [vmem:[%s166 + $0xe4] sm:$0xf]
      %v233 = vld [vmem:[%s166 + $0xe8] sm:$0xf]
      %v234 = vld [vmem:[%s166 + $0xec] sm:$0xf]
      %v235 = vld [vmem:[%s166 + $0xf0] sm:$0xf]
      %v236 = vld [vmem:[%s166 + $0xf4] sm:$0xf]
      %v237 = vld [vmem:[%s166 + $0xf8] sm:$0xf]
      %v238 = vld [vmem:[%s166 + $0xfc] sm:$0xf]
      %v239 = vld [vmem:[%s1] sm:$0xf]
      %v240 = vld [vmem:[%s1 + $0x4] sm:$0xf]
      %v241 = vld [vmem:[%s1 + $0x8] sm:$0xf]
      %v242 = vld [vmem:[%s1 + $0xc] sm:$0xf]
      %v243 = vld [vmem:[%s2] sm:$0x1]
      %v245 = vlaneseq
      %v246 = vshrl.u32 %v245, 7
      %v247 = vsub.s32 0, %v246
      %v248 = vrot.slane %v243, %v247
      %v314 = vunpack.c.l.b16 %v175
      %v315 = vunpack.c.l.b16 %v176
      %v316 = vunpack.c.l.b16 %v177
      %v317 = vunpack.c.l.b16 %v178
      %v318 = vunpack.c.l.b16 %v179
      %v319 = vunpack.c.l.b16 %v180
      %v320 = vunpack.c.l.b16 %v181
      %v321 = vunpack.c.l.b16 %v182
      %v322 = vunpack.c.l.b16 %v183
      %v323 = vunpack.c.l.b16 %v184
      %v324 = vunpack.c.l.b16 %v185
      %v325 = vunpack.c.l.b16 %v186
      %v326 = vunpack.c.l.b16 %v187
      %v327 = vunpack.c.l.b16 %v188
      %v328 = vunpack.c.l.b16 %v189
      %v329 = vunpack.c.l.b16 %v190
      %v330 = vunpack.c.l.b16 %v191
      %v331 = vunpack.c.l.b16 %v192
      %v332 = vunpack.c.l.b16 %v193
      %v333 = vunpack.c.l.b16 %v194
      %v334 = vunpack.c.l.b16 %v195
      %v335 = vunpack.c.l.b16 %v196
      %v336 = vunpack.c.l.b16 %v197
      %v337 = vunpack.c.l.b16 %v198
      %v338 = vunpack.c.l.b16 %v199
      %v339 = vunpack.c.l.b16 %v200
      %v340 = vunpack.c.l.b16 %v201
      %v341 = vunpack.c.l.b16 %v202
      %v342 = vunpack.c.l.b16 %v203
      %v343 = vunpack.c.l.b16 %v204
      %v344 = vunpack.c.l.b16 %v205
      %v345 = vunpack.c.l.b16 %v206
      %v346 = vunpack.c.l.b16 %v207
      %v347 = vunpack.c.l.b16 %v208
      %v348 = vunpack.c.l.b16 %v209
      %v349 = vunpack.c.l.b16 %v210
      %v350 = vunpack.c.l.b16 %v211
      %v351 = vunpack.c.l.b16 %v212
      %v352 = vunpack.c.l.b16 %v213
      %v353 = vunpack.c.l.b16 %v214
      %v354 = vunpack.c.l.b16 %v215
      %v355 = vunpack.c.l.b16 %v216
      %v356 = vunpack.c.l.b16 %v217
      %v357 = vunpack.c.l.b16 %v218
      %v358 = vunpack.c.l.b16 %v219
      %v359 = vunpack.c.l.b16 %v220
      %v360 = vunpack.c.l.b16 %v221
      %v361 = vunpack.c.l.b16 %v222
      %v362 = vunpack.c.l.b16 %v223
      %v363 = vunpack.c.l.b16 %v224
      %v364 = vunpack.c.l.b16 %v225
      %v365 = vunpack.c.l.b16 %v226
      %v366 = vunpack.c.l.b16 %v227
      %v367 = vunpack.c.l.b16 %v228
      %v368 = vunpack.c.l.b16 %v229
      %v369 = vunpack.c.l.b16 %v230
      %v370 = vunpack.c.l.b16 %v231
      %v371 = vunpack.c.l.b16 %v232
      %v372 = vunpack.c.l.b16 %v233
      %v373 = vunpack.c.l.b16 %v234
      %v374 = vunpack.c.l.b16 %v235
      %v375 = vunpack.c.l.b16 %v236
      %v376 = vunpack.c.l.b16 %v237
      %v377 = vunpack.c.l.b16 %v238
      %v378 = vpack.c.b16 %v315, %v314
      %v379 = vpack.c.b16 %v317, %v316
      %v380 = vpack.c.b16 %v319, %v318
      %v381 = vpack.c.b16 %v321, %v320
      %v382 = vpack.c.b16 %v323, %v322
      %v383 = vpack.c.b16 %v325, %v324
      %v384 = vpack.c.b16 %v327, %v326
      %v385 = vpack.c.b16 %v329, %v328
      %v386 = vpack.c.b16 %v331, %v330
      %v387 = vpack.c.b16 %v333, %v332
      %v388 = vpack.c.b16 %v335, %v334
      %v389 = vpack.c.b16 %v337, %v336
      %v390 = vpack.c.b16 %v339, %v338
      %v391 = vpack.c.b16 %v341, %v340
      %v392 = vpack.c.b16 %v343, %v342
      %v393 = vpack.c.b16 %v345, %v344
      %v394 = vpack.c.b16 %v347, %v346
      %v395 = vpack.c.b16 %v349, %v348
      %v396 = vpack.c.b16 %v351, %v350
      %v397 = vpack.c.b16 %v353, %v352
      %v398 = vpack.c.b16 %v355, %v354
      %v399 = vpack.c.b16 %v357, %v356
      %v400 = vpack.c.b16 %v359, %v358
      %v401 = vpack.c.b16 %v361, %v360
      %v402 = vpack.c.b16 %v363, %v362
      %v403 = vpack.c.b16 %v365, %v364
      %v404 = vpack.c.b16 %v367, %v366
      %v405 = vpack.c.b16 %v369, %v368
      %v406 = vpack.c.b16 %v371, %v370
      %v407 = vpack.c.b16 %v373, %v372
      %v408 = vpack.c.b16 %v375, %v374
      %v409 = vpack.c.b16 %v377, %v376
      %v414 = vunpack.c.l.b16 %v239
      %v415 = vunpack.c.l.b16 %v240
      %v416 = vunpack.c.l.b16 %v241
      %v417 = vunpack.c.l.b16 %v242
      %v418 = vpack.c.b16 %v415, %v414
      %v419 = vpack.c.b16 %v417, %v416
      %vm422 = vcmask 261120
      %v424 = vsel %vm422, %v378, 0
      %v427 = vsel %vm422, %v379, 0
      %v430 = vsel %vm422, %v380, 0
      %v433 = vsel %vm422, %v381, 0
      %v436 = vsel %vm422, %v382, 0
      %v439 = vsel %vm422, %v383, 0
      %v442 = vsel %vm422, %v384, 0
      %v445 = vsel %vm422, %v385, 0
      %v448 = vsel %vm422, %v386, 0
      %v451 = vsel %vm422, %v387, 0
      %v454 = vsel %vm422, %v388, 0
      %v457 = vsel %vm422, %v389, 0
      %v460 = vsel %vm422, %v390, 0
      %v463 = vsel %vm422, %v391, 0
      %v466 = vsel %vm422, %v392, 0
      %v469 = vsel %vm422, %v393, 0
      %v472 = vsel %vm422, %v394, 0
      %v475 = vsel %vm422, %v395, 0
      %v478 = vsel %vm422, %v396, 0
      %v481 = vsel %vm422, %v397, 0
      %v484 = vsel %vm422, %v398, 0
      %v487 = vsel %vm422, %v399, 0
      %v490 = vsel %vm422, %v400, 0
      %v493 = vsel %vm422, %v401, 0
      %v496 = vsel %vm422, %v402, 0
      %v499 = vsel %vm422, %v403, 0
      %v502 = vsel %vm422, %v404, 0
      %v505 = vsel %vm422, %v405, 0
      %v508 = vsel %vm422, %v406, 0
      %v511 = vsel %vm422, %v407, 0
      %v514 = vsel %vm422, %v408, 0
      %v517 = vsel %vm422, %v409, 0
      %519 = vmatprep.subr.bf16.mxu0 0
      %520 = vmatpush1.bf16.msra.mxu0 0
      %521 = vmatprep.subr.bf16.mxu0 0
      %522 = vmatpush1.bf16.msra.mxu0 0
      %523 = vmatprep.subr.bf16.mxu0 0
      %524 = vmatpush1.bf16.msra.mxu0 0
      %525 = vmatprep.subr.bf16.mxu0 0
      %526 = vmatpush1.bf16.msra.mxu0 0
      %527 = vmatprep.subr.bf16.mxu0 0
      %528 = vmatpush1.bf16.msra.mxu0 0
      %529 = vmatprep.subr.bf16.mxu0 0
      %530 = vmatpush1.bf16.msra.mxu0 0
      %531 = vmatprep.subr.bf16.mxu0 0
      %532 = vmatpush1.bf16.msra.mxu0 %v419
      %533 = vmatprep.subr.bf16.mxu0 0
      %534 = vmatpush1.bf16.msra.mxu0 %v418
      %535 = vmatprep.subr.bf16.mxu0 0
      %536 = vmatpush2.bf16.msra.mxu0 0
      %537 = vmatprep.subr.bf16.mxu0 0
      %538 = vmatpush2.bf16.msra.mxu0 0
      %539 = vmatprep.subr.bf16.mxu0 0
      %540 = vmatpush2.bf16.msra.mxu0 0
      %541 = vmatprep.subr.bf16.mxu0 0
      %542 = vmatpush2.bf16.msra.mxu0 0
      %543 = vmatprep.subr.bf16.mxu0 0
      %544 = vmatpush2.bf16.msra.mxu0 0
      %545 = vmatprep.subr.bf16.mxu0 0
      %546 = vmatpush2.bf16.msra.mxu0 0
      %547 = vmatprep.subr.bf16.mxu0 0
      %548 = vmatpush2.bf16.msra.mxu0 0
      %549 = vmatprep.subr.bf16.mxu0 0
      %550 = vmatpush2.bf16.msra.mxu0 0
      %551 = vmatprep.mubr.bf16.mxu0 0
      %552 = vmatmul.mubr.bf16.gmra.mxu0 %v424
      %v553 = vpop.f32.mrf.mxu0
      %v554 = vadd.f32 %v248, %v553
      %v555 = vpop.f32.mrf.mxu0
      %v556 = vpop.f32.mrf.mxu0
      %v557 = vadd.f32 %v248, %v556
      %v558 = vpop.f32.mrf.mxu0
      %559 = vmatprep.mubr.bf16.mxu0 0
      %560 = vmatmul.mubr.bf16.gmra.mxu0 %v427
      %v561 = vpop.f32.mrf.mxu0
      %v562 = vadd.f32 %v248, %v561
      %v563 = vpop.f32.mrf.mxu0
      %v564 = vpop.f32.mrf.mxu0
      %v565 = vadd.f32 %v248, %v564
      %v566 = vpop.f32.mrf.mxu0
      %567 = vmatprep.mubr.bf16.mxu0 0
      %568 = vmatmul.mubr.bf16.gmra.mxu0 %v430
      %v569 = vpop.f32.mrf.mxu0
      %v570 = vadd.f32 %v248, %v569
      %v571 = vpop.f32.mrf.mxu0
      %v572 = vpop.f32.mrf.mxu0
      %v573 = vadd.f32 %v248, %v572
      %v574 = vpop.f32.mrf.mxu0
      %575 = vmatprep.mubr.bf16.mxu0 0
      %576 = vmatmul.mubr.bf16.gmra.mxu0 %v433
      %v577 = vpop.f32.mrf.mxu0
      %v578 = vadd.f32 %v248, %v577
      %v579 = vpop.f32.mrf.mxu0
      %v580 = vpop.f32.mrf.mxu0
      %v581 = vadd.f32 %v248, %v580
      %v582 = vpop.f32.mrf.mxu0
      %583 = vmatprep.mubr.bf16.mxu0 0
      %584 = vmatmul.mubr.bf16.gmra.mxu0 %v436
      %v585 = vpop.f32.mrf.mxu0
      %v586 = vadd.f32 %v248, %v585
      %v587 = vpop.f32.mrf.mxu0
      %v588 = vpop.f32.mrf.mxu0
      %v589 = vadd.f32 %v248, %v588
      %v590 = vpop.f32.mrf.mxu0
      %591 = vmatprep.mubr.bf16.mxu0 0
      %592 = vmatmul.mubr.bf16.gmra.mxu0 %v439
      %v593 = vpop.f32.mrf.mxu0
      %v594 = vadd.f32 %v248, %v593
      %v595 = vpop.f32.mrf.mxu0
      %v596 = vpop.f32.mrf.mxu0
      %v597 = vadd.f32 %v248, %v596
      %v598 = vpop.f32.mrf.mxu0
      %599 = vmatprep.mubr.bf16.mxu0 0
      %600 = vmatmul.mubr.bf16.gmra.mxu0 %v442
      %v601 = vpop.f32.mrf.mxu0
      %v602 = vadd.f32 %v248, %v601
      %v603 = vpop.f32.mrf.mxu0
      %v604 = vpop.f32.mrf.mxu0
      %v605 = vadd.f32 %v248, %v604
      %v606 = vpop.f32.mrf.mxu0
      %607 = vmatprep.mubr.bf16.mxu0 0
      %608 = vmatmul.mubr.bf16.gmra.mxu0 %v445
      %v609 = vpop.f32.mrf.mxu0
      %v610 = vadd.f32 %v248, %v609
      %v611 = vpop.f32.mrf.mxu0
      %v612 = vpop.f32.mrf.mxu0
      %v613 = vadd.f32 %v248, %v612
      %v614 = vpop.f32.mrf.mxu0
      %615 = vmatprep.mubr.bf16.mxu0 0
      %616 = vmatmul.mubr.bf16.gmra.mxu0 %v448
      %v617 = vpop.f32.mrf.mxu0
      %v618 = vadd.f32 %v248, %v617
      %v619 = vpop.f32.mrf.mxu0
      %v620 = vpop.f32.mrf.mxu0
      %v621 = vadd.f32 %v248, %v620
      %v622 = vpop.f32.mrf.mxu0
      %623 = vmatprep.mubr.bf16.mxu0 0
      %624 = vmatmul.mubr.bf16.gmra.mxu0 %v451
      %v625 = vpop.f32.mrf.mxu0
      %v626 = vadd.f32 %v248, %v625
      %v627 = vpop.f32.mrf.mxu0
      %v628 = vpop.f32.mrf.mxu0
      %v629 = vadd.f32 %v248, %v628
      %v630 = vpop.f32.mrf.mxu0
      %631 = vmatprep.mubr.bf16.mxu0 0
      %632 = vmatmul.mubr.bf16.gmra.mxu0 %v454
      %v633 = vpop.f32.mrf.mxu0
      %v634 = vadd.f32 %v248, %v633
      %v635 = vpop.f32.mrf.mxu0
      %v636 = vpop.f32.mrf.mxu0
      %v637 = vadd.f32 %v248, %v636
      %v638 = vpop.f32.mrf.mxu0
      %639 = vmatprep.mubr.bf16.mxu0 0
      %640 = vmatmul.mubr.bf16.gmra.mxu0 %v457
      %v641 = vpop.f32.mrf.mxu0
      %v642 = vadd.f32 %v248, %v641
      %v643 = vpop.f32.mrf.mxu0
      %v644 = vpop.f32.mrf.mxu0
      %v645 = vadd.f32 %v248, %v644
      %v646 = vpop.f32.mrf.mxu0
      %647 = vmatprep.mubr.bf16.mxu0 0
      %648 = vmatmul.mubr.bf16.gmra.mxu0 %v460
      %v649 = vpop.f32.mrf.mxu0
      %v650 = vadd.f32 %v248, %v649
      %v651 = vpop.f32.mrf.mxu0
      %v652 = vpop.f32.mrf.mxu0
      %v653 = vadd.f32 %v248, %v652
      %v654 = vpop.f32.mrf.mxu0
      %655 = vmatprep.mubr.bf16.mxu0 0
      %656 = vmatmul.mubr.bf16.gmra.mxu0 %v463
      %v657 = vpop.f32.mrf.mxu0
      %v658 = vadd.f32 %v248, %v657
      %v659 = vpop.f32.mrf.mxu0
      %v660 = vpop.f32.mrf.mxu0
      %v661 = vadd.f32 %v248, %v660
      %v662 = vpop.f32.mrf.mxu0
      %663 = vmatprep.mubr.bf16.mxu0 0
      %664 = vmatmul.mubr.bf16.gmra.mxu0 %v466
      %v665 = vpop.f32.mrf.mxu0
      %v666 = vadd.f32 %v248, %v665
      %v667 = vpop.f32.mrf.mxu0
      %v668 = vpop.f32.mrf.mxu0
      %v669 = vadd.f32 %v248, %v668
      %v670 = vpop.f32.mrf.mxu0
      %671 = vmatprep.mubr.bf16.mxu0 0
      %672 = vmatmul.mubr.bf16.gmra.mxu0 %v469
      %v673 = vpop.f32.mrf.mxu0
      %v674 = vadd.f32 %v248, %v673
      %v675 = vpop.f32.mrf.mxu0
      %v676 = vpop.f32.mrf.mxu0
      %v677 = vadd.f32 %v248, %v676
      %v678 = vpop.f32.mrf.mxu0
      %679 = vmatprep.mubr.bf16.mxu0 0
      %680 = vmatmul.mubr.bf16.gmra.mxu0 %v472
      %v681 = vpop.f32.mrf.mxu0
      %v682 = vadd.f32 %v248, %v681
      %v683 = vpop.f32.mrf.mxu0
      %v684 = vpop.f32.mrf.mxu0
      %v685 = vadd.f32 %v248, %v684
      %v686 = vpop.f32.mrf.mxu0
      %687 = vmatprep.mubr.bf16.mxu0 0
      %688 = vmatmul.mubr.bf16.gmra.mxu0 %v475
      %v689 = vpop.f32.mrf.mxu0
      %v690 = vadd.f32 %v248, %v689
      %v691 = vpop.f32.mrf.mxu0
      %v692 = vpop.f32.mrf.mxu0
      %v693 = vadd.f32 %v248, %v692
      %v694 = vpop.f32.mrf.mxu0
      %695 = vmatprep.mubr.bf16.mxu0 0
      %696 = vmatmul.mubr.bf16.gmra.mxu0 %v478
      %v697 = vpop.f32.mrf.mxu0
      %v698 = vadd.f32 %v248, %v697
      %v699 = vpop.f32.mrf.mxu0
      %v700 = vpop.f32.mrf.mxu0
      %v701 = vadd.f32 %v248, %v700
      %v702 = vpop.f32.mrf.mxu0
      %703 = vmatprep.mubr.bf16.mxu0 0
      %704 = vmatmul.mubr.bf16.gmra.mxu0 %v481
      %v705 = vpop.f32.mrf.mxu0
      %v706 = vadd.f32 %v248, %v705
      %v707 = vpop.f32.mrf.mxu0
      %v708 = vpop.f32.mrf.mxu0
      %v709 = vadd.f32 %v248, %v708
      %v710 = vpop.f32.mrf.mxu0
      %711 = vmatprep.mubr.bf16.mxu0 0
      %712 = vmatmul.mubr.bf16.gmra.mxu0 %v484
      %v713 = vpop.f32.mrf.mxu0
      %v714 = vadd.f32 %v248, %v713
      %v715 = vpop.f32.mrf.mxu0
      %v716 = vpop.f32.mrf.mxu0
      %v717 = vadd.f32 %v248, %v716
      %v718 = vpop.f32.mrf.mxu0
      %719 = vmatprep.mubr.bf16.mxu0 0
      %720 = vmatmul.mubr.bf16.gmra.mxu0 %v487
      %v721 = vpop.f32.mrf.mxu0
      %v722 = vadd.f32 %v248, %v721
      %v723 = vpop.f32.mrf.mxu0
      %v724 = vpop.f32.mrf.mxu0
      %v725 = vadd.f32 %v248, %v724
      %v726 = vpop.f32.mrf.mxu0
      %727 = vmatprep.mubr.bf16.mxu0 0
      %728 = vmatmul.mubr.bf16.gmra.mxu0 %v490
      %v729 = vpop.f32.mrf.mxu0
      %v730 = vadd.f32 %v248, %v729
      %v731 = vpop.f32.mrf.mxu0
      %v732 = vpop.f32.mrf.mxu0
      %v733 = vadd.f32 %v248, %v732
      %v734 = vpop.f32.mrf.mxu0
      %735 = vmatprep.mubr.bf16.mxu0 0
      %736 = vmatmul.mubr.bf16.gmra.mxu0 %v493
      %v737 = vpop.f32.mrf.mxu0
      %v738 = vadd.f32 %v248, %v737
      %v739 = vpop.f32.mrf.mxu0
      %v740 = vpop.f32.mrf.mxu0
      %v741 = vadd.f32 %v248, %v740
      %v742 = vpop.f32.mrf.mxu0
      %743 = vmatprep.mubr.bf16.mxu0 0
      %744 = vmatmul.mubr.bf16.gmra.mxu0 %v496
      %v745 = vpop.f32.mrf.mxu0
      %v746 = vadd.f32 %v248, %v745
      %v747 = vpop.f32.mrf.mxu0
      %v748 = vpop.f32.mrf.mxu0
      %v749 = vadd.f32 %v248, %v748
      %v750 = vpop.f32.mrf.mxu0
      %751 = vmatprep.mubr.bf16.mxu0 0
      %752 = vmatmul.mubr.bf16.gmra.mxu0 %v499
      %v753 = vpop.f32.mrf.mxu0
      %v754 = vadd.f32 %v248, %v753
      %v755 = vpop.f32.mrf.mxu0
      %v756 = vpop.f32.mrf.mxu0
      %v757 = vadd.f32 %v248, %v756
      %v758 = vpop.f32.mrf.mxu0
      %759 = vmatprep.mubr.bf16.mxu0 0
      %760 = vmatmul.mubr.bf16.gmra.mxu0 %v502
      %v761 = vpop.f32.mrf.mxu0
      %v762 = vadd.f32 %v248, %v761
      %v763 = vpop.f32.mrf.mxu0
      %v764 = vpop.f32.mrf.mxu0
      %v765 = vadd.f32 %v248, %v764
      %v766 = vpop.f32.mrf.mxu0
      %767 = vmatprep.mubr.bf16.mxu0 0
      %768 = vmatmul.mubr.bf16.gmra.mxu0 %v505
      %v769 = vpop.f32.mrf.mxu0
      %v770 = vadd.f32 %v248, %v769
      %v771 = vpop.f32.mrf.mxu0
      %v772 = vpop.f32.mrf.mxu0
      %v773 = vadd.f32 %v248, %v772
      %v774 = vpop.f32.mrf.mxu0
      %775 = vmatprep.mubr.bf16.mxu0 0
      %776 = vmatmul.mubr.bf16.gmra.mxu0 %v508
      %v777 = vpop.f32.mrf.mxu0
      %v778 = vadd.f32 %v248, %v777
      %v779 = vpop.f32.mrf.mxu0
      %v780 = vpop.f32.mrf.mxu0
      %v781 = vadd.f32 %v248, %v780
      %v782 = vpop.f32.mrf.mxu0
      %783 = vmatprep.mubr.bf16.mxu0 0
      %784 = vmatmul.mubr.bf16.gmra.mxu0 %v511
      %v785 = vpop.f32.mrf.mxu0
      %v786 = vadd.f32 %v248, %v785
      %v787 = vpop.f32.mrf.mxu0
      %v788 = vpop.f32.mrf.mxu0
      %v789 = vadd.f32 %v248, %v788
      %v790 = vpop.f32.mrf.mxu0
      %791 = vmatprep.mubr.bf16.mxu0 0
      %792 = vmatmul.mubr.bf16.gmra.mxu0 %v514
      %v793 = vpop.f32.mrf.mxu0
      %v794 = vadd.f32 %v248, %v793
      %v795 = vpop.f32.mrf.mxu0
      %v796 = vpop.f32.mrf.mxu0
      %v797 = vadd.f32 %v248, %v796
      %v798 = vpop.f32.mrf.mxu0
      %799 = vmatprep.mubr.bf16.mxu0 0
      %800 = vmatmul.mubr.bf16.gmra.mxu0 %v517
      %v801 = vpop.f32.mrf.mxu0
      %v802 = vadd.f32 %v248, %v801
      %v803 = vpop.f32.mrf.mxu0
      %v804 = vpop.f32.mrf.mxu0
      %v805 = vadd.f32 %v248, %v804
      %v806 = vpop.f32.mrf.mxu0
      %807 = vdwg.mxu0
      %v808 = vmax.f32 %v554, 0.0
      %v809 = vmax.f32 %v557, 0.0
      %v810 = vmax.f32 %v562, 0.0
      %v811 = vmax.f32 %v565, 0.0
      %v812 = vmax.f32 %v570, 0.0
      %v813 = vmax.f32 %v573, 0.0
      %v814 = vmax.f32 %v578, 0.0
      %v815 = vmax.f32 %v581, 0.0
      %v816 = vmax.f32 %v586, 0.0
      %v817 = vmax.f32 %v589, 0.0
      %v818 = vmax.f32 %v594, 0.0
      %v819 = vmax.f32 %v597, 0.0
      %v820 = vmax.f32 %v602, 0.0
      %v821 = vmax.f32 %v605, 0.0
      %v822 = vmax.f32 %v610, 0.0
      %v823 = vmax.f32 %v613, 0.0
      %v824 = vmax.f32 %v618, 0.0
      %v825 = vmax.f32 %v621, 0.0
      %v826 = vmax.f32 %v626, 0.0
      %v827 = vmax.f32 %v629, 0.0
      %v828 = vmax.f32 %v634, 0.0
      %v829 = vmax.f32 %v637, 0.0
      %v830 = vmax.f32 %v642, 0.0
      %v831 = vmax.f32 %v645, 0.0
      %v832 = vmax.f32 %v650, 0.0
      %v833 = vmax.f32 %v653, 0.0
      %v834 = vmax.f32 %v658, 0.0
      %v835 = vmax.f32 %v661, 0.0
      %v836 = vmax.f32 %v666, 0.0
      %v837 = vmax.f32 %v669, 0.0
      %v838 = vmax.f32 %v674, 0.0
      %v839 = vmax.f32 %v677, 0.0
      %v840 = vmax.f32 %v682, 0.0
      %v841 = vmax.f32 %v685, 0.0
      %v842 = vmax.f32 %v690, 0.0
      %v843 = vmax.f32 %v693, 0.0
      %v844 = vmax.f32 %v698, 0.0
      %v845 = vmax.f32 %v701, 0.0
      %v846 = vmax.f32 %v706, 0.0
      %v847 = vmax.f32 %v709, 0.0
      %v848 = vmax.f32 %v714, 0.0
      %v849 = vmax.f32 %v717, 0.0
      %v850 = vmax.f32 %v722, 0.0
      %v851 = vmax.f32 %v725, 0.0
      %v852 = vmax.f32 %v730, 0.0
      %v853 = vmax.f32 %v733, 0.0
      %v854 = vmax.f32 %v738, 0.0
      %v855 = vmax.f32 %v741, 0.0
      %v856 = vmax.f32 %v746, 0.0
      %v857 = vmax.f32 %v749, 0.0
      %v858 = vmax.f32 %v754, 0.0
      %v859 = vmax.f32 %v757, 0.0
      %v860 = vmax.f32 %v762, 0.0
      %v861 = vmax.f32 %v765, 0.0
      %v862 = vmax.f32 %v770, 0.0
      %v863 = vmax.f32 %v773, 0.0
      %v864 = vmax.f32 %v778, 0.0
      %v865 = vmax.f32 %v781, 0.0
      %v866 = vmax.f32 %v786, 0.0
      %v867 = vmax.f32 %v789, 0.0
      %v868 = vmax.f32 %v794, 0.0
      %v869 = vmax.f32 %v797, 0.0
      %v870 = vmax.f32 %v802, 0.0
      %v871 = vmax.f32 %v805, 0.0
      %872 = vst [vmem:[%s172] sm:$0xff] %v808
      %873 = vst [vmem:[%s172 + $0x8] sm:$0xff] %v809
      %874 = vst [vmem:[%s172 + $0x10] sm:$0xff] %v810
      %875 = vst [vmem:[%s172 + $0x18] sm:$0xff] %v811
      %876 = vst [vmem:[%s172 + $0x20] sm:$0xff] %v812
      %877 = vst [vmem:[%s172 + $0x28] sm:$0xff] %v813
      %878 = vst [vmem:[%s172 + $0x30] sm:$0xff] %v814
      %879 = vst [vmem:[%s172 + $0x38] sm:$0xff] %v815
      %880 = vst [vmem:[%s172 + $0x40] sm:$0xff] %v816
      %881 = vst [vmem:[%s172 + $0x48] sm:$0xff] %v817
      %882 = vst [vmem:[%s172 + $0x50] sm:$0xff] %v818
      %883 = vst [vmem:[%s172 + $0x58] sm:$0xff] %v819
      %884 = vst [vmem:[%s172 + $0x60] sm:$0xff] %v820
      %885 = vst [vmem:[%s172 + $0x68] sm:$0xff] %v821
      %886 = vst [vmem:[%s172 + $0x70] sm:$0xff] %v822
      %887 = vst [vmem:[%s172 + $0x78] sm:$0xff] %v823
      %888 = vst [vmem:[%s172 + $0x80] sm:$0xff] %v824
      %889 = vst [vmem:[%s172 + $0x88] sm:$0xff] %v825
      %890 = vst [vmem:[%s172 + $0x90] sm:$0xff] %v826
      %891 = vst [vmem:[%s172 + $0x98] sm:$0xff] %v827
      %892 = vst [vmem:[%s172 + $0xa0] sm:$0xff] %v828
      %893 = vst [vmem:[%s172 + $0xa8] sm:$0xff] %v829
      %894 = vst [vmem:[%s172 + $0xb0] sm:$0xff] %v830
      %895 = vst [vmem:[%s172 + $0xb8] sm:$0xff] %v831
      %896 = vst [vmem:[%s172 + $0xc0] sm:$0xff] %v832
      %897 = vst [vmem:[%s172 + $0xc8] sm:$0xff] %v833
      %898 = vst [vmem:[%s172 + $0xd0] sm:$0xff] %v834
      %899 = vst [vmem:[%s172 + $0xd8] sm:$0xff] %v835
      %900 = vst [vmem:[%s172 + $0xe0] sm:$0xff] %v836
      %901 = vst [vmem:[%s172 + $0xe8] sm:$0xff] %v837
      %902 = vst [vmem:[%s172 + $0xf0] sm:$0xff] %v838
      %903 = vst [vmem:[%s172 + $0xf8] sm:$0xff] %v839
      %904 = vst [vmem:[%s172 + $0x100] sm:$0xff] %v840
      %905 = vst [vmem:[%s172 + $0x108] sm:$0xff] %v841
      %906 = vst [vmem:[%s172 + $0x110] sm:$0xff] %v842
      %907 = vst [vmem:[%s172 + $0x118] sm:$0xff] %v843
      %908 = vst [vmem:[%s172 + $0x120] sm:$0xff] %v844
      %909 = vst [vmem:[%s172 + $0x128] sm:$0xff] %v845
      %910 = vst [vmem:[%s172 + $0x130] sm:$0xff] %v846
      %911 = vst [vmem:[%s172 + $0x138] sm:$0xff] %v847
      %912 = vst [vmem:[%s172 + $0x140] sm:$0xff] %v848
      %913 = vst [vmem:[%s172 + $0x148] sm:$0xff] %v849
      %914 = vst [vmem:[%s172 + $0x150] sm:$0xff] %v850
      %915 = vst [vmem:[%s172 + $0x158] sm:$0xff] %v851
      %916 = vst [vmem:[%s172 + $0x160] sm:$0xff] %v852
      %917 = vst [vmem:[%s172 + $0x168] sm:$0xff] %v853
      %918 = vst [vmem:[%s172 + $0x170] sm:$0xff] %v854
      %919 = vst [vmem:[%s172 + $0x178] sm:$0xff] %v855
      %920 = vst [vmem:[%s172 + $0x180] sm:$0xff] %v856
      %921 = vst [vmem:[%s172 + $0x188] sm:$0xff] %v857
      %922 = vst [vmem:[%s172 + $0x190] sm:$0xff] %v858
      %923 = vst [vmem:[%s172 + $0x198] sm:$0xff] %v859
      %924 = vst [vmem:[%s172 + $0x1a0] sm:$0xff] %v860
      %925 = vst [vmem:[%s172 + $0x1a8] sm:$0xff] %v861
      %926 = vst [vmem:[%s172 + $0x1b0] sm:$0xff] %v862
      %927 = vst [vmem:[%s172 + $0x1b8] sm:$0xff] %v863
      %928 = vst [vmem:[%s172 + $0x1c0] sm:$0xff] %v864
      %929 = vst [vmem:[%s172 + $0x1c8] sm:$0xff] %v865
      %930 = vst [vmem:[%s172 + $0x1d0] sm:$0xff] %v866
      %931 = vst [vmem:[%s172 + $0x1d8] sm:$0xff] %v867
      %932 = vst [vmem:[%s172 + $0x1e0] sm:$0xff] %v868
      %933 = vst [vmem:[%s172 + $0x1e8] sm:$0xff] %v869
      %934 = vst [vmem:[%s172 + $0x1f0] sm:$0xff] %v870
      %935 = vst [vmem:[%s172 + $0x1f8] sm:$0xff] %v871
      %s936 = smul.u32 64, %s14
      %p937 = scmp.lt.s32.totalorder %s936, 255
      %s938 = scalar_select %p937, %s936, 255
      %s939 = smul.addr %s938, 8
      %s940 = scalar_lea.vmem %s3, %s939
      // Predicated region
      $region33: #{retinanet_forward.23} parent=31 // pred_check
        %p941 = pneg %p100
      $region34: #{retinanet_forward.23} parent=31 // pred_check_branch
        %943 = sbr.rel (%p941) target = $region36
      $region35: #{retinanet_forward.23} parent=31 // pred_region
        %s944 = smul.u32 64, %s14
      $region36: #{retinanet_forward.23} parent=31 // pred_fallthru
        _
    $region32: #{retinanet_forward.23} parent=5 // pred_fallthru
      _
    %p945 = scmp.le.s32.totalorder 2, %s9
    // Predicated region
    $region37: #{retinanet_forward.23} parent=5 // pred_check
      %p946 = pneg %p945
    $region38: #{retinanet_forward.23} parent=5 // pred_check_branch
      %948 = sbr.rel (%p946) target = $region40
    $region39: #{retinanet_forward.23} parent=5 // pred_region
      %s949 = ssub.s32 %s9, 2
      // Predicated region
      $region41: #{retinanet_forward.23} parent=39 // pred_check
        %p950 = pneg %p106
      $region42: #{retinanet_forward.23} parent=39 // pred_check_branch
        %952 = sbr.rel (%p950) target = $region44
      $region43: #{retinanet_forward.23} parent=39 // pred_region
        %s953 = smul.u32 64, %s15
        %p954 = scmp.lt.s32.totalorder %s953, 255
        %s955 = scalar_select %p954, %s953, 255
        %s956 = smul.addr %s955, 8
        %s957 = scalar_lea.vmem %s3, %s956
      $region44: #{retinanet_forward.23} parent=39 // pred_fallthru
        _
    $region40: #{retinanet_forward.23} parent=5 // pred_fallthru
      _
  $region6: #{retinanet_forward.23} parent=0 // loop_footer
    %s13 = sadd.s32 1, %s9
  $region7: #{retinanet_forward.23} parent=0 // loop_footer_branch
    %8 = sbr.rel target = $region3
  $region8: #{retinanet_forward.23} parent=0 // loop_exit
    _

// kernel: retinanet_forward.24
$region0: #{retinanet_forward.24}
  #allocation0 [shape = 'u32[]', space=smem, size = 0x4, offset = 0x4, fixed_abs, tag = 'smem constant byte address 0x4 - core index']
  #allocation1 [shape = 'u32[144,128]{1,0:T(1,128)}', space=vmem, size = 0x12000, scoped, tag = 'internal scratch']
  %s0 = inlined_call_operand.vmem [shape: bf16[512,72], index: 0, kind: input, shape index: {}]
  %s1 = inlined_call_operand.vmem [shape: bf16[72,128], index: 1, kind: input, shape index: {}]
  %s2 = inlined_call_operand.vmem [shape: f32[1,128], index: 2, kind: input, shape index: {}]
  %s3 = inlined_call_operand.vmem [shape: f32[512,128], index: 3, kind: output, shape index: {}]
  %s4 = sld [smem:[#allocation0]]
  $region45: #{retinanet_forward.24} parent=0
    _
  %s6 = ssub.s32 1, %s4
  %s7 = scalar_select 0, %s6, %s4
  loop: start=0, step=1, limit=4
  $region2: #{retinanet_forward.24} parent=0 // loop_pre_header
    _
  $region3: #{retinanet_forward.24} parent=0 // loop_header
    %s9 = sphi 0, %s13
    %p10 = scmp.ge.s32.totalorder %s9, 4
    %s19 = sphi 0, %s21
    %s22 = sphi 0, %s19
    %s23 = sphi 0, %s22
    %s39 = sphi 0, %s23
    %s43 = sphi 0, %s43
    %s45 = sphi 0, %s43
    %s46 = sphi 0, %s45
    %s60 = sphi 0, %s46
    %s64 = sphi 0, %s64
    %s66 = sphi 0, %s64
    %s67 = sphi 0, %s66
    %s81 = sphi 0, %s67
    %s87 = sphi 0, %s89
    %s90 = sphi 0, %s87
    %s91 = sphi 0, %s90
    %s107 = sphi 0, %s91
  $region4: #{retinanet_forward.24} parent=0 // loop_header_branch
    %12 = sbr.rel (%p10) target = $region8
  $region5: #{retinanet_forward.24} parent=0 // loop_body
    %s14 = ssub.s32 %s9, 1
    %s15 = ssub.s32 %s9, 2
    %s16 = sadd.s32 %s9, 1
    %s17 = ssub.s32 %s9, %s16
    %p18 = scmp.eq.s32.totalorder %s17, 0
    %s20 = sadd.s32 %s19, 1
    %s21 = scalar_select %p18, %s19, %s20
    %p24 = pneg %p18
    %p25 = scmp.eq.s32.totalorder %s9, 1
    %p26 = por %p24, %p25
    %p27 = scmp.ne.s32.totalorder %s19, %s22
    %p28 = scmp.eq.s32.totalorder %s9, 0
    %p29 = por %p27, %p28
    %p30 = scmp.ne.s32.totalorder %s19, %s22
    %p31 = scmp.eq.s32.totalorder %s14, 1
    %p32 = por %p30, %p31
    %p33 = scmp.ne.s32.totalorder %s22, %s23
    %p34 = scmp.eq.s32.totalorder %s14, 0
    %p35 = por %p33, %p34
    %p36 = scmp.ne.s32.totalorder %s22, %s23
    %p37 = scmp.eq.s32.totalorder %s15, 1
    %p38 = por %p36, %p37
    %p40 = scmp.ne.s32.totalorder %s23, %s39
    %p41 = scmp.eq.s32.totalorder %s15, 0
    %p42 = por %p40, %p41
    %s44 = sadd.s32 %s43, 1
    %p47 = scmp.eq.s32.totalorder %s9, 1
    %p48 = scmp.ne.s32.totalorder %s43, %s45
    %p49 = scmp.eq.s32.totalorder %s9, 0
    %p50 = por %p48, %p49
    %p51 = scmp.ne.s32.totalorder %s43, %s45
    %p52 = scmp.eq.s32.totalorder %s14, 1
    %p53 = por %p51, %p52
    %p54 = scmp.ne.s32.totalorder %s45, %s46
    %p55 = scmp.eq.s32.totalorder %s14, 0
    %p56 = por %p54, %p55
    %p57 = scmp.ne.s32.totalorder %s45, %s46
    %p58 = scmp.eq.s32.totalorder %s15, 1
    %p59 = por %p57, %p58
    %p61 = scmp.ne.s32.totalorder %s46, %s60
    %p62 = scmp.eq.s32.totalorder %s15, 0
    %p63 = por %p61, %p62
    %s65 = sadd.s32 %s64, 1
    %p68 = scmp.eq.s32.totalorder %s9, 1
    %p69 = scmp.ne.s32.totalorder %s64, %s66
    %p70 = scmp.eq.s32.totalorder %s9, 0
    %p71 = por %p69, %p70
    %p72 = scmp.ne.s32.totalorder %s64, %s66
    %p73 = scmp.eq.s32.totalorder %s14, 1
    %p74 = por %p72, %p73
    %p75 = scmp.ne.s32.totalorder %s66, %s67
    %p76 = scmp.eq.s32.totalorder %s14, 0
    %p77 = por %p75, %p76
    %p78 = scmp.ne.s32.totalorder %s66, %s67
    %p79 = scmp.eq.s32.totalorder %s15, 1
    %p80 = por %p78, %p79
    %p82 = scmp.ne.s32.totalorder %s67, %s81
    %p83 = scmp.eq.s32.totalorder %s15, 0
    %p84 = por %p82, %p83
    %s85 = ssub.s32 %s9, %s16
    %p86 = scmp.eq.s32.totalorder %s85, 0
    %s88 = sadd.s32 %s87, 1
    %s89 = scalar_select %p86, %s87, %s88
    %p92 = pneg %p86
    %p93 = scmp.eq.s32.totalorder %s9, 1
    %p94 = por %p92, %p93
    %p95 = scmp.ne.s32.totalorder %s87, %s90
    %p96 = scmp.eq.s32.totalorder %s9, 0
    %p97 = por %p95, %p96
    %p98 = scmp.ne.s32.totalorder %s87, %s90
    %p99 = scmp.eq.s32.totalorder %s14, 1
    %p100 = por %p98, %p99
    %p101 = scmp.ne.s32.totalorder %s90, %s91
    %p102 = scmp.eq.s32.totalorder %s14, 0
    %p103 = por %p101, %p102
    %p104 = scmp.ne.s32.totalorder %s90, %s91
    %p105 = scmp.eq.s32.totalorder %s15, 1
    %p106 = por %p104, %p105
    %p108 = scmp.ne.s32.totalorder %s91, %s107
    %p109 = scmp.eq.s32.totalorder %s15, 0
    %p110 = por %p108, %p109
    %p111 = scmp.le.s32.totalorder 1, %s9
    %p112 = scmp.lt.s32.totalorder %s9, 3
    %p113 = pnand %p111, %p112
    %p114 = pneg %p113
    // Predicated region
    $region9: #{retinanet_forward.24} parent=5 // pred_check
      _
    $region10: #{retinanet_forward.24} parent=5 // pred_check_branch
      %116 = sbr.rel (%p113) target = $region12
    $region11: #{retinanet_forward.24} parent=5 // pred_region
      %s117 = ssub.s32 %s9, 1
      // Predicated region
      $region13: #{retinanet_forward.24} parent=11 // pred_check
        %p118 = pneg %p56
      $region14: #{retinanet_forward.24} parent=11 // pred_check_branch
        %120 = sbr.rel (%p118) target = $region16
      $region15: #{retinanet_forward.24} parent=11 // pred_region
        _
      $region16: #{retinanet_forward.24} parent=11 // pred_fallthru
        _
      // Predicated region
      $region17: #{retinanet_forward.24} parent=11 // pred_check
        %p121 = pneg %p77
      $region18: #{retinanet_forward.24} parent=11 // pred_check_branch
        %123 = sbr.rel (%p121) target = $region20
      $region19: #{retinanet_forward.24} parent=11 // pred_region
        _
      $region20: #{retinanet_forward.24} parent=11 // pred_fallthru
        _
    $region12: #{retinanet_forward.24} parent=5 // pred_fallthru
      _
    %p124 = scmp.lt.s32.totalorder %s9, 2
    // Predicated region
    $region21: #{retinanet_forward.24} parent=5 // pred_check
      %p125 = pneg %p124
    $region22: #{retinanet_forward.24} parent=5 // pred_check_branch
      %127 = sbr.rel (%p125) target = $region24
    $region23: #{retinanet_forward.24} parent=5 // pred_region
      // Predicated region
      $region25: #{retinanet_forward.24} parent=23 // pred_check
        %p128 = pneg %p29
      $region26: #{retinanet_forward.24} parent=23 // pred_check_branch
        %130 = sbr.rel (%p128) target = $region28
      $region27: #{retinanet_forward.24} parent=23 // pred_region
        %s131 = smul.u32 32, %s9
        %p132 = scmp.lt.s32.totalorder %s131, 63
        %s133 = scalar_select %p132, %s131, 63
        %s134 = smul.addr %s133, 4
        %s135 = scalar_lea.vmem %s0, %s134
        %s136 = smul.u32 32, %s9
      $region28: #{retinanet_forward.24} parent=23 // pred_fallthru
        _
    $region24: #{retinanet_forward.24} parent=5 // pred_fallthru
      _
    %p137 = scmp.le.s32.totalorder 1, %s9
    %p138 = scmp.lt.s32.totalorder %s9, 3
    %p139 = pnand %p137, %p138
    %p140 = pneg %p139
    // Predicated region
    $region29: #{retinanet_forward.24} parent=5 // pred_check
      _
    $region30: #{retinanet_forward.24} parent=5 // pred_check_branch
      %142 = sbr.rel (%p139) target = $region32
    $region31: #{retinanet_forward.24} parent=5 // pred_region
      %s143 = ssub.s32 %s9, 1
      %s144 = smul.u32 32, %s14
      %p145 = scmp.lt.s32.totalorder %s144, 63
      %s146 = scalar_select %p145, %s144, 63
      %s147 = smul.addr %s146, 4
      %s148 = scalar_lea.vmem %s0, %s147
      %p149 = pneg %p35
      %p150 = pneg %p32
      %p151 = pneg %p56
      %p152 = pneg %p53
      %p153 = pneg %p77
      %p154 = pneg %p74
      %p155 = pneg %p103
      %p156 = pneg %p100
      %s157 = smul.u32 32, %s14
      %p158 = scmp.lt.s32.totalorder %s157, 63
      %s159 = scalar_select %p158, %s157, 63
      %s160 = smul.addr %s159, 8
      %s161 = scalar_lea.vmem %s3, %s160
      %s162 = smul.u32 32, %s14
      %p163 = scmp.lt.s32.totalorder %s162, 63
      %s164 = scalar_select %p163, %s162, 63
      %s165 = smul.addr %s164, 4
      %s166 = scalar_lea.vmem %s0, %s165
      %s167 = smul.u32 32, %s14
      %s168 = smul.u32 32, %s14
      %p169 = scmp.lt.s32.totalorder %s168, 63
      %s170 = scalar_select %p169, %s168, 63
      %s171 = smul.addr %s170, 8
      %s172 = scalar_lea.vmem %s3, %s171
      %s173 = smul.u32 32, %s14
      %v175 = vld [vmem:[%s166] sm:$0xf]
      %v176 = vld [vmem:[%s166 + $0x4] sm:$0xf]
      %v177 = vld [vmem:[%s166 + $0x8] sm:$0xf]
      %v178 = vld [vmem:[%s166 + $0xc] sm:$0xf]
      %v179 = vld [vmem:[%s166 + $0x10] sm:$0xf]
      %v180 = vld [vmem:[%s166 + $0x14] sm:$0xf]
      %v181 = vld [vmem:[%s166 + $0x18] sm:$0xf]
      %v182 = vld [vmem:[%s166 + $0x1c] sm:$0xf]
      %v183 = vld [vmem:[%s166 + $0x20] sm:$0xf]
      %v184 = vld [vmem:[%s166 + $0x24] sm:$0xf]
      %v185 = vld [vmem:[%s166 + $0x28] sm:$0xf]
      %v186 = vld [vmem:[%s166 + $0x2c] sm:$0xf]
      %v187 = vld [vmem:[%s166 + $0x30] sm:$0xf]
      %v188 = vld [vmem:[%s166 + $0x34] sm:$0xf]
      %v189 = vld [vmem:[%s166 + $0x38] sm:$0xf]
      %v190 = vld [vmem:[%s166 + $0x3c] sm:$0xf]
      %v191 = vld [vmem:[%s166 + $0x40] sm:$0xf]
      %v192 = vld [vmem:[%s166 + $0x44] sm:$0xf]
      %v193 = vld [vmem:[%s166 + $0x48] sm:$0xf]
      %v194 = vld [vmem:[%s166 + $0x4c] sm:$0xf]
      %v195 = vld [vmem:[%s166 + $0x50] sm:$0xf]
      %v196 = vld [vmem:[%s166 + $0x54] sm:$0xf]
      %v197 = vld [vmem:[%s166 + $0x58] sm:$0xf]
      %v198 = vld [vmem:[%s166 + $0x5c] sm:$0xf]
      %v199 = vld [vmem:[%s166 + $0x60] sm:$0xf]
      %v200 = vld [vmem:[%s166 + $0x64] sm:$0xf]
      %v201 = vld [vmem:[%s166 + $0x68] sm:$0xf]
      %v202 = vld [vmem:[%s166 + $0x6c] sm:$0xf]
      %v203 = vld [vmem:[%s166 + $0x70] sm:$0xf]
      %v204 = vld [vmem:[%s166 + $0x74] sm:$0xf]
      %v205 = vld [vmem:[%s166 + $0x78] sm:$0xf]
      %v206 = vld [vmem:[%s166 + $0x7c] sm:$0xf]
      %v207 = vld [vmem:[%s1] sm:$0xf]
      %v208 = vld [vmem:[%s1 + $0x4] sm:$0xf]
      %v209 = vld [vmem:[%s1 + $0x8] sm:$0xf]
      %v210 = vld [vmem:[%s1 + $0xc] sm:$0xf]
      %v211 = vld [vmem:[%s1 + $0x10] sm:$0xf]
      %v212 = vld [vmem:[%s1 + $0x14] sm:$0xf]
      %v213 = vld [vmem:[%s1 + $0x18] sm:$0xf]
      %v214 = vld [vmem:[%s1 + $0x1c] sm:$0xf]
      %v215 = vld [vmem:[%s1 + $0x20] sm:$0xf]
      %v216 = vld [vmem:[%s2] sm:$0x1]
      %v218 = vlaneseq
      %v219 = vshrl.u32 %v218, 7
      %v220 = vsub.s32 0, %v219
      %v221 = vrot.slane %v216, %v220
      %v255 = vunpack.c.l.b16 %v175
      %v256 = vunpack.c.l.b16 %v176
      %v257 = vunpack.c.l.b16 %v177
      %v258 = vunpack.c.l.b16 %v178
      %v259 = vunpack.c.l.b16 %v179
      %v260 = vunpack.c.l.b16 %v180
      %v261 = vunpack.c.l.b16 %v181
      %v262 = vunpack.c.l.b16 %v182
      %v263 = vunpack.c.l.b16 %v183
      %v264 = vunpack.c.l.b16 %v184
      %v265 = vunpack.c.l.b16 %v185
      %v266 = vunpack.c.l.b16 %v186
      %v267 = vunpack.c.l.b16 %v187
      %v268 = vunpack.c.l.b16 %v188
      %v269 = vunpack.c.l.b16 %v189
      %v270 = vunpack.c.l.b16 %v190
      %v271 = vunpack.c.l.b16 %v191
      %v272 = vunpack.c.l.b16 %v192
      %v273 = vunpack.c.l.b16 %v193
      %v274 = vunpack.c.l.b16 %v194
      %v275 = vunpack.c.l.b16 %v195
      %v276 = vunpack.c.l.b16 %v196
      %v277 = vunpack.c.l.b16 %v197
      %v278 = vunpack.c.l.b16 %v198
      %v279 = vunpack.c.l.b16 %v199
      %v280 = vunpack.c.l.b16 %v200
      %v281 = vunpack.c.l.b16 %v201
      %v282 = vunpack.c.l.b16 %v202
      %v283 = vunpack.c.l.b16 %v203
      %v284 = vunpack.c.l.b16 %v204
      %v285 = vunpack.c.l.b16 %v205
      %v286 = vunpack.c.l.b16 %v206
      %v287 = vpack.c.b16 %v256, %v255
      %v288 = vpack.c.b16 %v258, %v257
      %v289 = vpack.c.b16 %v260, %v259
      %v290 = vpack.c.b16 %v262, %v261
      %v291 = vpack.c.b16 %v264, %v263
      %v292 = vpack.c.b16 %v266, %v265
      %v293 = vpack.c.b16 %v268, %v267
      %v294 = vpack.c.b16 %v270, %v269
      %v295 = vpack.c.b16 %v272, %v271
      %v296 = vpack.c.b16 %v274, %v273
      %v297 = vpack.c.b16 %v276, %v275
      %v298 = vpack.c.b16 %v278, %v277
      %v299 = vpack.c.b16 %v280, %v279
      %v300 = vpack.c.b16 %v282, %v281
      %v301 = vpack.c.b16 %v284, %v283
      %v302 = vpack.c.b16 %v286, %v285
      %v312 = vunpack.c.l.b16 %v207
      %v313 = vunpack.c.l.b16 %v208
      %v314 = vunpack.c.l.b16 %v209
      %v315 = vunpack.c.l.b16 %v210
      %v316 = vunpack.c.l.b16 %v211
      %v317 = vunpack.c.l.b16 %v212
      %v318 = vunpack.c.l.b16 %v213
      %v319 = vunpack.c.l.b16 %v214
      %v320 = vunpack.c.l.b16 %v215
      %v321 = vpack.c.b16 %v313, %v312
      %v322 = vpack.c.b16 %v315, %v314
      %v323 = vpack.c.b16 %v317, %v316
      %v324 = vpack.c.b16 %v319, %v318
      %v325 = vpack.c.b16 %v320, %v320
      %vm330 = vcmask 588800
      %v332 = vsel %vm330, %v287, 0
      %v335 = vsel %vm330, %v288, 0
      %v338 = vsel %vm330, %v289, 0
      %v341 = vsel %vm330, %v290, 0
      %v344 = vsel %vm330, %v291, 0
      %v347 = vsel %vm330, %v292, 0
      %v350 = vsel %vm330, %v293, 0
      %v353 = vsel %vm330, %v294, 0
      %v356 = vsel %vm330, %v295, 0
      %v359 = vsel %vm330, %v296, 0
      %v362 = vsel %vm330, %v297, 0
      %v365 = vsel %vm330, %v298, 0
      %v368 = vsel %vm330, %v299, 0
      %v371 = vsel %vm330, %v300, 0
      %v374 = vsel %vm330, %v301, 0
      %v377 = vsel %vm330, %v302, 0
      %vm379 = vcmask 1043456
      %v381 = vsel %vm379, %v325, 0
      %383 = vmatprep.subr.bf16.mxu0 0
      %384 = vmatpush1.bf16.msra.mxu0 0
      %385 = vmatprep.subr.bf16.mxu0 0
      %386 = vmatpush1.bf16.msra.mxu0 0
      %387 = vmatprep.subr.bf16.mxu0 0
      %388 = vmatpush1.bf16.msra.mxu0 0
      %389 = vmatprep.subr.bf16.mxu0 0
      %390 = vmatpush1.bf16.msra.mxu0 %v381
      %391 = vmatprep.subr.bf16.mxu0 0
      %392 = vmatpush1.bf16.msra.mxu0 %v324
      %393 = vmatprep.subr.bf16.mxu0 0
      %394 = vmatpush1.bf16.msra.mxu0 %v323
      %395 = vmatprep.subr.bf16.mxu0 0
      %396 = vmatpush1.bf16.msra.mxu0 %v322
      %397 = vmatprep.subr.bf16.mxu0 0
      %398 = vmatpush1.bf16.msra.mxu0 %v321
      %399 = vmatprep.subr.bf16.mxu0 0
      %400 = vmatpush2.bf16.msra.mxu0 0
      %401 = vmatprep.subr.bf16.mxu0 0
      %402 = vmatpush2.bf16.msra.mxu0 0
      %403 = vmatprep.subr.bf16.mxu0 0
      %404 = vmatpush2.bf16.msra.mxu0 0
      %405 = vmatprep.subr.bf16.mxu0 0
      %406 = vmatpush2.bf16.msra.mxu0 0
      %407 = vmatprep.subr.bf16.mxu0 0
      %408 = vmatpush2.bf16.msra.mxu0 0
      %409 = vmatprep.subr.bf16.mxu0 0
      %410 = vmatpush2.bf16.msra.mxu0 0
      %411 = vmatprep.subr.bf16.mxu0 0
      %412 = vmatpush2.bf16.msra.mxu0 0
      %413 = vmatprep.subr.bf16.mxu0 0
      %414 = vmatpush2.bf16.msra.mxu0 0
      %415 = vmatprep.mubr.bf16.mxu0 0
      %416 = vmatmul.mubr.bf16.gmra.mxu0 %v332
      %v417 = vpop.f32.mrf.mxu0
      %v418 = vadd.f32 %v221, %v417
      %v419 = vpop.f32.mrf.mxu0
      %v420 = vpop.f32.mrf.mxu0
      %v421 = vadd.f32 %v221, %v420
      %v422 = vpop.f32.mrf.mxu0
      %423 = vmatprep.mubr.bf16.mxu0 0
      %424 = vmatmul.mubr.bf16.gmra.mxu0 %v335
      %v425 = vpop.f32.mrf.mxu0
      %v426 = vadd.f32 %v221, %v425
      %v427 = vpop.f32.mrf.mxu0
      %v428 = vpop.f32.mrf.mxu0
      %v429 = vadd.f32 %v221, %v428
      %v430 = vpop.f32.mrf.mxu0
      %431 = vmatprep.mubr.bf16.mxu0 0
      %432 = vmatmul.mubr.bf16.gmra.mxu0 %v338
      %v433 = vpop.f32.mrf.mxu0
      %v434 = vadd.f32 %v221, %v433
      %v435 = vpop.f32.mrf.mxu0
      %v436 = vpop.f32.mrf.mxu0
      %v437 = vadd.f32 %v221, %v436
      %v438 = vpop.f32.mrf.mxu0
      %439 = vmatprep.mubr.bf16.mxu0 0
      %440 = vmatmul.mubr.bf16.gmra.mxu0 %v341
      %v441 = vpop.f32.mrf.mxu0
      %v442 = vadd.f32 %v221, %v441
      %v443 = vpop.f32.mrf.mxu0
      %v444 = vpop.f32.mrf.mxu0
      %v445 = vadd.f32 %v221, %v444
      %v446 = vpop.f32.mrf.mxu0
      %447 = vmatprep.mubr.bf16.mxu0 0
      %448 = vmatmul.mubr.bf16.gmra.mxu0 %v344
      %v449 = vpop.f32.mrf.mxu0
      %v450 = vadd.f32 %v221, %v449
      %v451 = vpop.f32.mrf.mxu0
      %v452 = vpop.f32.mrf.mxu0
      %v453 = vadd.f32 %v221, %v452
      %v454 = vpop.f32.mrf.mxu0
      %455 = vmatprep.mubr.bf16.mxu0 0
      %456 = vmatmul.mubr.bf16.gmra.mxu0 %v347
      %v457 = vpop.f32.mrf.mxu0
      %v458 = vadd.f32 %v221, %v457
      %v459 = vpop.f32.mrf.mxu0
      %v460 = vpop.f32.mrf.mxu0
      %v461 = vadd.f32 %v221, %v460
      %v462 = vpop.f32.mrf.mxu0
      %463 = vmatprep.mubr.bf16.mxu0 0
      %464 = vmatmul.mubr.bf16.gmra.mxu0 %v350
      %v465 = vpop.f32.mrf.mxu0
      %v466 = vadd.f32 %v221, %v465
      %v467 = vpop.f32.mrf.mxu0
      %v468 = vpop.f32.mrf.mxu0
      %v469 = vadd.f32 %v221, %v468
      %v470 = vpop.f32.mrf.mxu0
      %471 = vmatprep.mubr.bf16.mxu0 0
      %472 = vmatmul.mubr.bf16.gmra.mxu0 %v353
      %v473 = vpop.f32.mrf.mxu0
      %v474 = vadd.f32 %v221, %v473
      %v475 = vpop.f32.mrf.mxu0
      %v476 = vpop.f32.mrf.mxu0
      %v477 = vadd.f32 %v221, %v476
      %v478 = vpop.f32.mrf.mxu0
      %479 = vmatprep.mubr.bf16.mxu0 0
      %480 = vmatmul.mubr.bf16.gmra.mxu0 %v356
      %v481 = vpop.f32.mrf.mxu0
      %v482 = vadd.f32 %v221, %v481
      %v483 = vpop.f32.mrf.mxu0
      %v484 = vpop.f32.mrf.mxu0
      %v485 = vadd.f32 %v221, %v484
      %v486 = vpop.f32.mrf.mxu0
      %487 = vmatprep.mubr.bf16.mxu0 0
      %488 = vmatmul.mubr.bf16.gmra.mxu0 %v359
      %v489 = vpop.f32.mrf.mxu0
      %v490 = vadd.f32 %v221, %v489
      %v491 = vpop.f32.mrf.mxu0
      %v492 = vpop.f32.mrf.mxu0
      %v493 = vadd.f32 %v221, %v492
      %v494 = vpop.f32.mrf.mxu0
      %495 = vmatprep.mubr.bf16.mxu0 0
      %496 = vmatmul.mubr.bf16.gmra.mxu0 %v362
      %v497 = vpop.f32.mrf.mxu0
      %v498 = vadd.f32 %v221, %v497
      %v499 = vpop.f32.mrf.mxu0
      %v500 = vpop.f32.mrf.mxu0
      %v501 = vadd.f32 %v221, %v500
      %v502 = vpop.f32.mrf.mxu0
      %503 = vmatprep.mubr.bf16.mxu0 0
      %504 = vmatmul.mubr.bf16.gmra.mxu0 %v365
      %v505 = vpop.f32.mrf.mxu0
      %v506 = vadd.f32 %v221, %v505
      %v507 = vpop.f32.mrf.mxu0
      %v508 = vpop.f32.mrf.mxu0
      %v509 = vadd.f32 %v221, %v508
      %v510 = vpop.f32.mrf.mxu0
      %511 = vmatprep.mubr.bf16.mxu0 0
      %512 = vmatmul.mubr.bf16.gmra.mxu0 %v368
      %v513 = vpop.f32.mrf.mxu0
      %v514 = vadd.f32 %v221, %v513
      %v515 = vpop.f32.mrf.mxu0
      %v516 = vpop.f32.mrf.mxu0
      %v517 = vadd.f32 %v221, %v516
      %v518 = vpop.f32.mrf.mxu0
      %519 = vmatprep.mubr.bf16.mxu0 0
      %520 = vmatmul.mubr.bf16.gmra.mxu0 %v371
      %v521 = vpop.f32.mrf.mxu0
      %v522 = vadd.f32 %v221, %v521
      %v523 = vpop.f32.mrf.mxu0
      %v524 = vpop.f32.mrf.mxu0
      %v525 = vadd.f32 %v221, %v524
      %v526 = vpop.f32.mrf.mxu0
      %527 = vmatprep.mubr.bf16.mxu0 0
      %528 = vmatmul.mubr.bf16.gmra.mxu0 %v374
      %v529 = vpop.f32.mrf.mxu0
      %v530 = vadd.f32 %v221, %v529
      %v531 = vpop.f32.mrf.mxu0
      %v532 = vpop.f32.mrf.mxu0
      %v533 = vadd.f32 %v221, %v532
      %v534 = vpop.f32.mrf.mxu0
      %535 = vmatprep.mubr.bf16.mxu0 0
      %536 = vmatmul.mubr.bf16.gmra.mxu0 %v377
      %v537 = vpop.f32.mrf.mxu0
      %v538 = vadd.f32 %v221, %v537
      %v539 = vpop.f32.mrf.mxu0
      %v540 = vpop.f32.mrf.mxu0
      %v541 = vadd.f32 %v221, %v540
      %v542 = vpop.f32.mrf.mxu0
      %543 = vdwg.mxu0
      %v544 = vmax.f32 %v418, 0.0
      %v545 = vmax.f32 %v421, 0.0
      %v546 = vmax.f32 %v426, 0.0
      %v547 = vmax.f32 %v429, 0.0
      %v548 = vmax.f32 %v434, 0.0
      %v549 = vmax.f32 %v437, 0.0
      %v550 = vmax.f32 %v442, 0.0
      %v551 = vmax.f32 %v445, 0.0
      %v552 = vmax.f32 %v450, 0.0
      %v553 = vmax.f32 %v453, 0.0
      %v554 = vmax.f32 %v458, 0.0
      %v555 = vmax.f32 %v461, 0.0
      %v556 = vmax.f32 %v466, 0.0
      %v557 = vmax.f32 %v469, 0.0
      %v558 = vmax.f32 %v474, 0.0
      %v559 = vmax.f32 %v477, 0.0
      %v560 = vmax.f32 %v482, 0.0
      %v561 = vmax.f32 %v485, 0.0
      %v562 = vmax.f32 %v490, 0.0
      %v563 = vmax.f32 %v493, 0.0
      %v564 = vmax.f32 %v498, 0.0
      %v565 = vmax.f32 %v501, 0.0
      %v566 = vmax.f32 %v506, 0.0
      %v567 = vmax.f32 %v509, 0.0
      %v568 = vmax.f32 %v514, 0.0
      %v569 = vmax.f32 %v517, 0.0
      %v570 = vmax.f32 %v522, 0.0
      %v571 = vmax.f32 %v525, 0.0
      %v572 = vmax.f32 %v530, 0.0
      %v573 = vmax.f32 %v533, 0.0
      %v574 = vmax.f32 %v538, 0.0
      %v575 = vmax.f32 %v541, 0.0
      %576 = vst [vmem:[%s172] sm:$0xff] %v544
      %577 = vst [vmem:[%s172 + $0x8] sm:$0xff] %v545
      %578 = vst [vmem:[%s172 + $0x10] sm:$0xff] %v546
      %579 = vst [vmem:[%s172 + $0x18] sm:$0xff] %v547
      %580 = vst [vmem:[%s172 + $0x20] sm:$0xff] %v548
      %581 = vst [vmem:[%s172 + $0x28] sm:$0xff] %v549
      %582 = vst [vmem:[%s172 + $0x30] sm:$0xff] %v550
      %583 = vst [vmem:[%s172 + $0x38] sm:$0xff] %v551
      %584 = vst [vmem:[%s172 + $0x40] sm:$0xff] %v552
      %585 = vst [vmem:[%s172 + $0x48] sm:$0xff] %v553
      %586 = vst [vmem:[%s172 + $0x50] sm:$0xff] %v554
      %587 = vst [vmem:[%s172 + $0x58] sm:$0xff] %v555
      %588 = vst [vmem:[%s172 + $0x60] sm:$0xff] %v556
      %589 = vst [vmem:[%s172 + $0x68] sm:$0xff] %v557
      %590 = vst [vmem:[%s172 + $0x70] sm:$0xff] %v558
      %591 = vst [vmem:[%s172 + $0x78] sm:$0xff] %v559
      %592 = vst [vmem:[%s172 + $0x80] sm:$0xff] %v560
      %593 = vst [vmem:[%s172 + $0x88] sm:$0xff] %v561
      %594 = vst [vmem:[%s172 + $0x90] sm:$0xff] %v562
      %595 = vst [vmem:[%s172 + $0x98] sm:$0xff] %v563
      %596 = vst [vmem:[%s172 + $0xa0] sm:$0xff] %v564
      %597 = vst [vmem:[%s172 + $0xa8] sm:$0xff] %v565
      %598 = vst [vmem:[%s172 + $0xb0] sm:$0xff] %v566
      %599 = vst [vmem:[%s172 + $0xb8] sm:$0xff] %v567
      %600 = vst [vmem:[%s172 + $0xc0] sm:$0xff] %v568
      %601 = vst [vmem:[%s172 + $0xc8] sm:$0xff] %v569
      %602 = vst [vmem:[%s172 + $0xd0] sm:$0xff] %v570
      %603 = vst [vmem:[%s172 + $0xd8] sm:$0xff] %v571
      %604 = vst [vmem:[%s172 + $0xe0] sm:$0xff] %v572
      %605 = vst [vmem:[%s172 + $0xe8] sm:$0xff] %v573
      %606 = vst [vmem:[%s172 + $0xf0] sm:$0xff] %v574
      %607 = vst [vmem:[%s172 + $0xf8] sm:$0xff] %v575
      %s608 = smul.u32 32, %s14
      %p609 = scmp.lt.s32.totalorder %s608, 63
      %s610 = scalar_select %p609, %s608, 63
      %s611 = smul.addr %s610, 8
      %s612 = scalar_lea.vmem %s3, %s611
      // Predicated region
      $region33: #{retinanet_forward.24} parent=31 // pred_check
        %p613 = pneg %p100
      $region34: #{retinanet_forward.24} parent=31 // pred_check_branch
        %615 = sbr.rel (%p613) target = $region36
      $region35: #{retinanet_forward.24} parent=31 // pred_region
        %s616 = smul.u32 32, %s14
      $region36: #{retinanet_forward.24} parent=31 // pred_fallthru
        _
    $region32: #{retinanet_forward.24} parent=5 // pred_fallthru
      _
    %p617 = scmp.le.s32.totalorder 2, %s9
    // Predicated region
    $region37: #{retinanet_forward.24} parent=5 // pred_check
      %p618 = pneg %p617
    $region38: #{retinanet_forward.24} parent=5 // pred_check_branch
      %620 = sbr.rel (%p618) target = $region40
    $region39: #{retinanet_forward.24} parent=5 // pred_region
      %s621 = ssub.s32 %s9, 2
      // Predicated region
      $region41: #{retinanet_forward.24} parent=39 // pred_check
        %p622 = pneg %p106
      $region42: #{retinanet_forward.24} parent=39 // pred_check_branch
        %624 = sbr.rel (%p622) target = $region44
      $region43: #{retinanet_forward.24} parent=39 // pred_region
        %s625 = smul.u32 32, %s15
        %p626 = scmp.lt.s32.totalorder %s625, 63
        %s627 = scalar_select %p626, %s625, 63
        %s628 = smul.addr %s627, 8
        %s629 = scalar_lea.vmem %s3, %s628
      $region44: #{retinanet_forward.24} parent=39 // pred_fallthru
        _
    $region40: #{retinanet_forward.24} parent=5 // pred_fallthru
      _
  $region6: #{retinanet_forward.24} parent=0 // loop_footer
    %s13 = sadd.s32 1, %s9
  $region7: #{retinanet_forward.24} parent=0 // loop_footer_branch
    %8 = sbr.rel target = $region3
  $region8: #{retinanet_forward.24} parent=0 // loop_exit
    _

// kernel: retinanet_forward.25
$region0: #{retinanet_forward.25}
  #allocation0 [shape = 'u32[]', space=smem, size = 0x4, offset = 0x4, fixed_abs, tag = 'smem constant byte address 0x4 - core index']
  #allocation1 [shape = 'u32[144,128]{1,0:T(1,128)}', space=vmem, size = 0x12000, scoped, tag = 'internal scratch']
  %s0 = inlined_call_operand.vmem [shape: bf16[128,72], index: 0, kind: input, shape index: {}]
  %s1 = inlined_call_operand.vmem [shape: bf16[72,128], index: 1, kind: input, shape index: {}]
  %s2 = inlined_call_operand.vmem [shape: f32[1,128], index: 2, kind: input, shape index: {}]
  %s3 = inlined_call_operand.vmem [shape: f32[128,128], index: 3, kind: output, shape index: {}]
  %s4 = sld [smem:[#allocation0]]
  $region22: #{retinanet_forward.25} parent=0
    _
  %s6 = ssub.s32 1, %s4
  %s7 = scalar_select 0, %s6, %s4
  // Predicated region
  $region2: #{retinanet_forward.25} parent=0 // pred_check
    _
  $region3: #{retinanet_forward.25} parent=0 // pred_check_branch
    %9 = sbr.rel (0) target = $region5
  $region4: #{retinanet_forward.25} parent=0 // pred_region
    _
  $region5: #{retinanet_forward.25} parent=0 // pred_fallthru
    _
  // Predicated region
  $region6: #{retinanet_forward.25} parent=0 // pred_check
    _
  $region7: #{retinanet_forward.25} parent=0 // pred_check_branch
    %11 = sbr.rel (0) target = $region9
  $region8: #{retinanet_forward.25} parent=0 // pred_region
    _
  $region9: #{retinanet_forward.25} parent=0 // pred_fallthru
    _
  // Predicated region
  $region10: #{retinanet_forward.25} parent=0 // pred_check
    _
  $region11: #{retinanet_forward.25} parent=0 // pred_check_branch
    %13 = sbr.rel (0) target = $region13
  $region12: #{retinanet_forward.25} parent=0 // pred_region
    _
  $region13: #{retinanet_forward.25} parent=0 // pred_fallthru
    _
  %v15 = vld [vmem:[%s0] sm:$0xf]
  %v16 = vld [vmem:[%s0 + $0x4] sm:$0xf]
  %v17 = vld [vmem:[%s0 + $0x8] sm:$0xf]
  %v18 = vld [vmem:[%s0 + $0xc] sm:$0xf]
  %v19 = vld [vmem:[%s0 + $0x10] sm:$0xf]
  %v20 = vld [vmem:[%s0 + $0x14] sm:$0xf]
  %v21 = vld [vmem:[%s0 + $0x18] sm:$0xf]
  %v22 = vld [vmem:[%s0 + $0x1c] sm:$0xf]
  %v23 = vld [vmem:[%s0 + $0x20] sm:$0xf]
  %v24 = vld [vmem:[%s0 + $0x24] sm:$0xf]
  %v25 = vld [vmem:[%s0 + $0x28] sm:$0xf]
  %v26 = vld [vmem:[%s0 + $0x2c] sm:$0xf]
  %v27 = vld [vmem:[%s0 + $0x30] sm:$0xf]
  %v28 = vld [vmem:[%s0 + $0x34] sm:$0xf]
  %v29 = vld [vmem:[%s0 + $0x38] sm:$0xf]
  %v30 = vld [vmem:[%s0 + $0x3c] sm:$0xf]
  %v31 = vld [vmem:[%s1] sm:$0xf]
  %v32 = vld [vmem:[%s1 + $0x4] sm:$0xf]
  %v33 = vld [vmem:[%s1 + $0x8] sm:$0xf]
  %v34 = vld [vmem:[%s1 + $0xc] sm:$0xf]
  %v35 = vld [vmem:[%s1 + $0x10] sm:$0xf]
  %v36 = vld [vmem:[%s1 + $0x14] sm:$0xf]
  %v37 = vld [vmem:[%s1 + $0x18] sm:$0xf]
  %v38 = vld [vmem:[%s1 + $0x1c] sm:$0xf]
  %v39 = vld [vmem:[%s1 + $0x20] sm:$0xf]
  %v40 = vld [vmem:[%s2] sm:$0x1]
  %v42 = vlaneseq
  %v43 = vshrl.u32 %v42, 7
  %v44 = vsub.s32 0, %v43
  %v45 = vrot.slane %v40, %v44
  %v63 = vunpack.c.l.b16 %v15
  %v64 = vunpack.c.l.b16 %v16
  %v65 = vunpack.c.l.b16 %v17
  %v66 = vunpack.c.l.b16 %v18
  %v67 = vunpack.c.l.b16 %v19
  %v68 = vunpack.c.l.b16 %v20
  %v69 = vunpack.c.l.b16 %v21
  %v70 = vunpack.c.l.b16 %v22
  %v71 = vunpack.c.l.b16 %v23
  %v72 = vunpack.c.l.b16 %v24
  %v73 = vunpack.c.l.b16 %v25
  %v74 = vunpack.c.l.b16 %v26
  %v75 = vunpack.c.l.b16 %v27
  %v76 = vunpack.c.l.b16 %v28
  %v77 = vunpack.c.l.b16 %v29
  %v78 = vunpack.c.l.b16 %v30
  %v79 = vpack.c.b16 %v64, %v63
  %v80 = vpack.c.b16 %v66, %v65
  %v81 = vpack.c.b16 %v68, %v67
  %v82 = vpack.c.b16 %v70, %v69
  %v83 = vpack.c.b16 %v72, %v71
  %v84 = vpack.c.b16 %v74, %v73
  %v85 = vpack.c.b16 %v76, %v75
  %v86 = vpack.c.b16 %v78, %v77
  %v96 = vunpack.c.l.b16 %v31
  %v97 = vunpack.c.l.b16 %v32
  %v98 = vunpack.c.l.b16 %v33
  %v99 = vunpack.c.l.b16 %v34
  %v100 = vunpack.c.l.b16 %v35
  %v101 = vunpack.c.l.b16 %v36
  %v102 = vunpack.c.l.b16 %v37
  %v103 = vunpack.c.l.b16 %v38
  %v104 = vunpack.c.l.b16 %v39
  %v105 = vpack.c.b16 %v97, %v96
  %v106 = vpack.c.b16 %v99, %v98
  %v107 = vpack.c.b16 %v101, %v100
  %v108 = vpack.c.b16 %v103, %v102
  %v109 = vpack.c.b16 %v104, %v104
  %vm114 = vcmask 588800
  %v116 = vsel %vm114, %v79, 0
  %v119 = vsel %vm114, %v80, 0
  %v122 = vsel %vm114, %v81, 0
  %v125 = vsel %vm114, %v82, 0
  %v128 = vsel %vm114, %v83, 0
  %v131 = vsel %vm114, %v84, 0
  %v134 = vsel %vm114, %v85, 0
  %v137 = vsel %vm114, %v86, 0
  %vm139 = vcmask 1043456
  %v141 = vsel %vm139, %v109, 0
  %143 = vmatprep.subr.bf16.mxu0 0
  %144 = vmatpush1.bf16.msra.mxu0 0
  %145 = vmatprep.subr.bf16.mxu0 0
  %146 = vmatpush1.bf16.msra.mxu0 0
  %147 = vmatprep.subr.bf16.mxu0 0
  %148 = vmatpush1.bf16.msra.mxu0 0
  %149 = vmatprep.subr.bf16.mxu0 0
  %150 = vmatpush1.bf16.msra.mxu0 %v141
  %151 = vmatprep.subr.bf16.mxu0 0
  %152 = vmatpush1.bf16.msra.mxu0 %v108
  %153 = vmatprep.subr.bf16.mxu0 0
  %154 = vmatpush1.bf16.msra.mxu0 %v107
  %155 = vmatprep.subr.bf16.mxu0 0
  %156 = vmatpush1.bf16.msra.mxu0 %v106
  %157 = vmatprep.subr.bf16.mxu0 0
  %158 = vmatpush1.bf16.msra.mxu0 %v105
  %159 = vmatprep.subr.bf16.mxu0 0
  %160 = vmatpush2.bf16.msra.mxu0 0
  %161 = vmatprep.subr.bf16.mxu0 0
  %162 = vmatpush2.bf16.msra.mxu0 0
  %163 = vmatprep.subr.bf16.mxu0 0
  %164 = vmatpush2.bf16.msra.mxu0 0
  %165 = vmatprep.subr.bf16.mxu0 0
  %166 = vmatpush2.bf16.msra.mxu0 0
  %167 = vmatprep.subr.bf16.mxu0 0
  %168 = vmatpush2.bf16.msra.mxu0 0
  %169 = vmatprep.subr.bf16.mxu0 0
  %170 = vmatpush2.bf16.msra.mxu0 0
  %171 = vmatprep.subr.bf16.mxu0 0
  %172 = vmatpush2.bf16.msra.mxu0 0
  %173 = vmatprep.subr.bf16.mxu0 0
  %174 = vmatpush2.bf16.msra.mxu0 0
  %175 = vmatprep.mubr.bf16.mxu0 0
  %176 = vmatmul.mubr.bf16.gmra.mxu0 %v116
  %v177 = vpop.f32.mrf.mxu0
  %v178 = vadd.f32 %v45, %v177
  %v179 = vpop.f32.mrf.mxu0
  %v180 = vpop.f32.mrf.mxu0
  %v181 = vadd.f32 %v45, %v180
  %v182 = vpop.f32.mrf.mxu0
  %183 = vmatprep.mubr.bf16.mxu0 0
  %184 = vmatmul.mubr.bf16.gmra.mxu0 %v119
  %v185 = vpop.f32.mrf.mxu0
  %v186 = vadd.f32 %v45, %v185
  %v187 = vpop.f32.mrf.mxu0
  %v188 = vpop.f32.mrf.mxu0
  %v189 = vadd.f32 %v45, %v188
  %v190 = vpop.f32.mrf.mxu0
  %191 = vmatprep.mubr.bf16.mxu0 0
  %192 = vmatmul.mubr.bf16.gmra.mxu0 %v122
  %v193 = vpop.f32.mrf.mxu0
  %v194 = vadd.f32 %v45, %v193
  %v195 = vpop.f32.mrf.mxu0
  %v196 = vpop.f32.mrf.mxu0
  %v197 = vadd.f32 %v45, %v196
  %v198 = vpop.f32.mrf.mxu0
  %199 = vmatprep.mubr.bf16.mxu0 0
  %200 = vmatmul.mubr.bf16.gmra.mxu0 %v125
  %v201 = vpop.f32.mrf.mxu0
  %v202 = vadd.f32 %v45, %v201
  %v203 = vpop.f32.mrf.mxu0
  %v204 = vpop.f32.mrf.mxu0
  %v205 = vadd.f32 %v45, %v204
  %v206 = vpop.f32.mrf.mxu0
  %207 = vmatprep.mubr.bf16.mxu0 0
  %208 = vmatmul.mubr.bf16.gmra.mxu0 %v128
  %v209 = vpop.f32.mrf.mxu0
  %v210 = vadd.f32 %v45, %v209
  %v211 = vpop.f32.mrf.mxu0
  %v212 = vpop.f32.mrf.mxu0
  %v213 = vadd.f32 %v45, %v212
  %v214 = vpop.f32.mrf.mxu0
  %215 = vmatprep.mubr.bf16.mxu0 0
  %216 = vmatmul.mubr.bf16.gmra.mxu0 %v131
  %v217 = vpop.f32.mrf.mxu0
  %v218 = vadd.f32 %v45, %v217
  %v219 = vpop.f32.mrf.mxu0
  %v220 = vpop.f32.mrf.mxu0
  %v221 = vadd.f32 %v45, %v220
  %v222 = vpop.f32.mrf.mxu0
  %223 = vmatprep.mubr.bf16.mxu0 0
  %224 = vmatmul.mubr.bf16.gmra.mxu0 %v134
  %v225 = vpop.f32.mrf.mxu0
  %v226 = vadd.f32 %v45, %v225
  %v227 = vpop.f32.mrf.mxu0
  %v228 = vpop.f32.mrf.mxu0
  %v229 = vadd.f32 %v45, %v228
  %v230 = vpop.f32.mrf.mxu0
  %231 = vmatprep.mubr.bf16.mxu0 0
  %232 = vmatmul.mubr.bf16.gmra.mxu0 %v137
  %v233 = vpop.f32.mrf.mxu0
  %v234 = vadd.f32 %v45, %v233
  %v235 = vpop.f32.mrf.mxu0
  %v236 = vpop.f32.mrf.mxu0
  %v237 = vadd.f32 %v45, %v236
  %v238 = vpop.f32.mrf.mxu0
  %239 = vdwg.mxu0
  %v240 = vmax.f32 %v178, 0.0
  %v241 = vmax.f32 %v181, 0.0
  %v242 = vmax.f32 %v186, 0.0
  %v243 = vmax.f32 %v189, 0.0
  %v244 = vmax.f32 %v194, 0.0
  %v245 = vmax.f32 %v197, 0.0
  %v246 = vmax.f32 %v202, 0.0
  %v247 = vmax.f32 %v205, 0.0
  %v248 = vmax.f32 %v210, 0.0
  %v249 = vmax.f32 %v213, 0.0
  %v250 = vmax.f32 %v218, 0.0
  %v251 = vmax.f32 %v221, 0.0
  %v252 = vmax.f32 %v226, 0.0
  %v253 = vmax.f32 %v229, 0.0
  %v254 = vmax.f32 %v234, 0.0
  %v255 = vmax.f32 %v237, 0.0
  %256 = vst [vmem:[%s3] sm:$0xff] %v240
  %257 = vst [vmem:[%s3 + $0x8] sm:$0xff] %v241
  %258 = vst [vmem:[%s3 + $0x10] sm:$0xff] %v242
  %259 = vst [vmem:[%s3 + $0x18] sm:$0xff] %v243
  %260 = vst [vmem:[%s3 + $0x20] sm:$0xff] %v244
  %261 = vst [vmem:[%s3 + $0x28] sm:$0xff] %v245
  %262 = vst [vmem:[%s3 + $0x30] sm:$0xff] %v246
  %263 = vst [vmem:[%s3 + $0x38] sm:$0xff] %v247
  %264 = vst [vmem:[%s3 + $0x40] sm:$0xff] %v248
  %265 = vst [vmem:[%s3 + $0x48] sm:$0xff] %v249
  %266 = vst [vmem:[%s3 + $0x50] sm:$0xff] %v250
  %267 = vst [vmem:[%s3 + $0x58] sm:$0xff] %v251
  %268 = vst [vmem:[%s3 + $0x60] sm:$0xff] %v252
  %269 = vst [vmem:[%s3 + $0x68] sm:$0xff] %v253
  %270 = vst [vmem:[%s3 + $0x70] sm:$0xff] %v254
  %271 = vst [vmem:[%s3 + $0x78] sm:$0xff] %v255
  // Predicated region
  $region14: #{retinanet_forward.25} parent=0 // pred_check
    _
  $region15: #{retinanet_forward.25} parent=0 // pred_check_branch
    %273 = sbr.rel (0) target = $region17
  $region16: #{retinanet_forward.25} parent=0 // pred_region
    _
  $region17: #{retinanet_forward.25} parent=0 // pred_fallthru
    _
  // Predicated region
  $region18: #{retinanet_forward.25} parent=0 // pred_check
    _
  $region19: #{retinanet_forward.25} parent=0 // pred_check_branch
    %275 = sbr.rel (0) target = $region21
  $region20: #{retinanet_forward.25} parent=0 // pred_region
    _
  $region21: #{retinanet_forward.25} parent=0 // pred_fallthru
    _

// kernel: retinanet_forward.26
$region0: #{retinanet_forward.26}
  #allocation0 [shape = 'u32[]', space=smem, size = 0x4, offset = 0x4, fixed_abs, tag = 'smem constant byte address 0x4 - core index']
  #allocation1 [shape = 'u32[144,128]{1,0:T(1,128)}', space=vmem, size = 0x12000, scoped, tag = 'internal scratch']
  %s0 = inlined_call_operand.vmem [shape: bf16[32,144], index: 0, kind: input, shape index: {}]
  %s1 = inlined_call_operand.vmem [shape: bf16[144,128], index: 1, kind: input, shape index: {}]
  %s2 = inlined_call_operand.vmem [shape: f32[1,128], index: 2, kind: input, shape index: {}]
  %s3 = inlined_call_operand.vmem [shape: f32[32,128], index: 3, kind: output, shape index: {}]
  %s4 = sld [smem:[#allocation0]]
  $region22: #{retinanet_forward.26} parent=0
    _
  %s6 = ssub.s32 1, %s4
  %s7 = scalar_select 0, %s6, %s4
  // Predicated region
  $region2: #{retinanet_forward.26} parent=0 // pred_check
    _
  $region3: #{retinanet_forward.26} parent=0 // pred_check_branch
    %9 = sbr.rel (0) target = $region5
  $region4: #{retinanet_forward.26} parent=0 // pred_region
    _
  $region5: #{retinanet_forward.26} parent=0 // pred_fallthru
    _
  // Predicated region
  $region6: #{retinanet_forward.26} parent=0 // pred_check
    _
  $region7: #{retinanet_forward.26} parent=0 // pred_check_branch
    %11 = sbr.rel (0) target = $region9
  $region8: #{retinanet_forward.26} parent=0 // pred_region
    _
  $region9: #{retinanet_forward.26} parent=0 // pred_fallthru
    _
  // Predicated region
  $region10: #{retinanet_forward.26} parent=0 // pred_check
    _
  $region11: #{retinanet_forward.26} parent=0 // pred_check_branch
    %13 = sbr.rel (0) target = $region13
  $region12: #{retinanet_forward.26} parent=0 // pred_region
    _
  $region13: #{retinanet_forward.26} parent=0 // pred_fallthru
    _
  %v15 = vld [vmem:[%s0] sm:$0xff]
  %v16 = vld [vmem:[%s0 + $0x8] sm:$0xff]
  %v17 = vld [vmem:[%s0 + $0x10] sm:$0xff]
  %v18 = vld [vmem:[%s0 + $0x18] sm:$0xff]
  %v19 = vld [vmem:[%s1] sm:$0xf]
  %v20 = vld [vmem:[%s1 + $0x4] sm:$0xf]
  %v21 = vld [vmem:[%s1 + $0x8] sm:$0xf]
  %v22 = vld [vmem:[%s1 + $0xc] sm:$0xf]
  %v23 = vld [vmem:[%s1 + $0x10] sm:$0xf]
  %v24 = vld [vmem:[%s1 + $0x14] sm:$0xf]
  %v25 = vld [vmem:[%s1 + $0x18] sm:$0xf]
  %v26 = vld [vmem:[%s1 + $0x1c] sm:$0xf]
  %v27 = vld [vmem:[%s1 + $0x20] sm:$0xf]
  %v28 = vld [vmem:[%s1 + $0x24] sm:$0xf]
  %v29 = vld [vmem:[%s1 + $0x28] sm:$0xf]
  %v30 = vld [vmem:[%s1 + $0x2c] sm:$0xf]
  %v31 = vld [vmem:[%s1 + $0x30] sm:$0xf]
  %v32 = vld [vmem:[%s1 + $0x34] sm:$0xf]
  %v33 = vld [vmem:[%s1 + $0x38] sm:$0xf]
  %v34 = vld [vmem:[%s1 + $0x3c] sm:$0xf]
  %v35 = vld [vmem:[%s1 + $0x40] sm:$0xf]
  %v36 = vld [vmem:[%s1 + $0x44] sm:$0xf]
  %v37 = vld [vmem:[%s2] sm:$0x1]
  %v39 = vlaneseq
  %v40 = vshrl.u32 %v39, 7
  %v41 = vsub.s32 0, %v40
  %v42 = vrot.slane %v37, %v41
  %v48 = vunpack.c.l.b16 %v15
  %v49 = vunpack.c.h.b16 %v15
  %v50 = vunpack.c.l.b16 %v16
  %v51 = vunpack.c.h.b16 %v16
  %v52 = vunpack.c.l.b16 %v17
  %v53 = vunpack.c.h.b16 %v17
  %v54 = vunpack.c.l.b16 %v18
  %v55 = vunpack.c.h.b16 %v18
  %v56 = vpack.c.b16 %v50, %v48
  %v57 = vpack.c.b16 %v51, %v49
  %v58 = vpack.c.b16 %v54, %v52
  %v59 = vpack.c.b16 %v55, %v53
  %v80 = vunpack.c.l.b16 %v19
  %v81 = vunpack.c.l.b16 %v20
  %v82 = vunpack.c.l.b16 %v21
  %v83 = vunpack.c.l.b16 %v22
  %v84 = vunpack.c.l.b16 %v23
  %v85 = vunpack.c.l.b16 %v24
  %v86 = vunpack.c.l.b16 %v25
  %v87 = vunpack.c.l.b16 %v26
  %v88 = vunpack.c.l.b16 %v27
  %v89 = vunpack.c.l.b16 %v28
  %v90 = vunpack.c.l.b16 %v29
  %v91 = vunpack.c.l.b16 %v30
  %v92 = vunpack.c.l.b16 %v31
  %v93 = vunpack.c.l.b16 %v32
  %v94 = vunpack.c.l.b16 %v33
  %v95 = vunpack.c.l.b16 %v34
  %v96 = vunpack.c.l.b16 %v35
  %v97 = vunpack.c.l.b16 %v36
  %v98 = vpack.c.b16 %v81, %v80
  %v99 = vpack.c.b16 %v83, %v82
  %v100 = vpack.c.b16 %v85, %v84
  %v101 = vpack.c.b16 %v87, %v86
  %v102 = vpack.c.b16 %v89, %v88
  %v103 = vpack.c.b16 %v91, %v90
  %v104 = vpack.c.b16 %v93, %v92
  %v105 = vpack.c.b16 %v95, %v94
  %v106 = vpack.c.b16 %v97, %v96
  %vm116 = vcmask 130048
  %v118 = vsel %vm116, %v57, 0
  %v121 = vsel %vm116, %v59, 0
  %123 = vmatprep.subr.bf16.mxu0 0
  %124 = vmatpush1.bf16.msra.mxu0 %v105
  %125 = vmatprep.subr.bf16.mxu0 0
  %126 = vmatpush1.bf16.msra.mxu0 %v104
  %127 = vmatprep.subr.bf16.mxu0 0
  %128 = vmatpush1.bf16.msra.mxu0 %v103
  %129 = vmatprep.subr.bf16.mxu0 0
  %130 = vmatpush1.bf16.msra.mxu0 %v102
  %131 = vmatprep.subr.bf16.mxu0 0
  %132 = vmatpush1.bf16.msra.mxu0 %v101
  %133 = vmatprep.subr.bf16.mxu0 0
  %134 = vmatpush1.bf16.msra.mxu0 %v100
  %135 = vmatprep.subr.bf16.mxu0 0
  %136 = vmatpush1.bf16.msra.mxu0 %v99
  %137 = vmatprep.subr.bf16.mxu0 0
  %138 = vmatpush1.bf16.msra.mxu0 %v98
  %139 = vmatprep.subr.bf16.mxu0 0
  %140 = vmatpush2.bf16.msra.mxu0 0
  %141 = vmatprep.subr.bf16.mxu0 0
  %142 = vmatpush2.bf16.msra.mxu0 0
  %143 = vmatprep.subr.bf16.mxu0 0
  %144 = vmatpush2.bf16.msra.mxu0 0
  %145 = vmatprep.subr.bf16.mxu0 0
  %146 = vmatpush2.bf16.msra.mxu0 0
  %147 = vmatprep.subr.bf16.mxu0 0
  %148 = vmatpush2.bf16.msra.mxu0 0
  %149 = vmatprep.subr.bf16.mxu0 0
  %150 = vmatpush2.bf16.msra.mxu0 0
  %151 = vmatprep.subr.bf16.mxu0 0
  %152 = vmatpush2.bf16.msra.mxu0 0
  %153 = vmatprep.subr.bf16.mxu0 0
  %154 = vmatpush2.bf16.msra.mxu0 %v106
  %155 = vmatprep.mubr.bf16.mxu0 %v118
  %156 = vmatmul.mubr.bf16.gmra.mxu0 %v56
  %v157 = vpop.f32.mrf.mxu0
  %v158 = vadd.f32 %v42, %v157
  %v159 = vpop.f32.mrf.mxu0
  %v160 = vpop.f32.mrf.mxu0
  %v161 = vadd.f32 %v42, %v160
  %v162 = vpop.f32.mrf.mxu0
  %163 = vmatprep.mubr.bf16.mxu0 %v121
  %164 = vmatmul.mubr.bf16.gmra.mxu0 %v58
  %v165 = vpop.f32.mrf.mxu0
  %v166 = vadd.f32 %v42, %v165
  %v167 = vpop.f32.mrf.mxu0
  %v168 = vpop.f32.mrf.mxu0
  %v169 = vadd.f32 %v42, %v168
  %v170 = vpop.f32.mrf.mxu0
  %171 = vdwg.mxu0
  %v172 = vmax.f32 %v158, 0.0
  %v173 = vmax.f32 %v161, 0.0
  %v174 = vmax.f32 %v166, 0.0
  %v175 = vmax.f32 %v169, 0.0
  %176 = vst [vmem:[%s3] sm:$0xff] %v172
  %177 = vst [vmem:[%s3 + $0x8] sm:$0xff] %v173
  %178 = vst [vmem:[%s3 + $0x10] sm:$0xff] %v174
  %179 = vst [vmem:[%s3 + $0x18] sm:$0xff] %v175
  // Predicated region
  $region14: #{retinanet_forward.26} parent=0 // pred_check
    _
  $region15: #{retinanet_forward.26} parent=0 // pred_check_branch
    %181 = sbr.rel (0) target = $region17
  $region16: #{retinanet_forward.26} parent=0 // pred_region
    _
  $region17: #{retinanet_forward.26} parent=0 // pred_fallthru
    _
  // Predicated region
  $region18: #{retinanet_forward.26} parent=0 // pred_check
    _
  $region19: #{retinanet_forward.26} parent=0 // pred_check_branch
    %183 = sbr.rel (0) target = $region21
  $region20: #{retinanet_forward.26} parent=0 // pred_region
    _
  $region21: #{retinanet_forward.26} parent=0 // pred_fallthru
    _

// kernel: retinanet_forward.27
$region0: #{retinanet_forward.27}
  #allocation0 [shape = 'u32[]', space=smem, size = 0x4, offset = 0x4, fixed_abs, tag = 'smem constant byte address 0x4 - core index']
  #allocation1 [shape = 'u32[144,128]{1,0:T(1,128)}', space=vmem, size = 0x12000, scoped, tag = 'internal scratch']
  %s0 = inlined_call_operand.vmem [shape: bf16[8,288], index: 0, kind: input, shape index: {}]
  %s1 = inlined_call_operand.vmem [shape: bf16[288,128], index: 1, kind: input, shape index: {}]
  %s2 = inlined_call_operand.vmem [shape: f32[1,128], index: 2, kind: input, shape index: {}]
  %s3 = inlined_call_operand.vmem [shape: f32[8,128], index: 3, kind: output, shape index: {}]
  %s4 = sld [smem:[#allocation0]]
  $region22: #{retinanet_forward.27} parent=0
    _
  %s6 = ssub.s32 1, %s4
  %s7 = scalar_select 0, %s6, %s4
  // Predicated region
  $region2: #{retinanet_forward.27} parent=0 // pred_check
    _
  $region3: #{retinanet_forward.27} parent=0 // pred_check_branch
    %9 = sbr.rel (0) target = $region5
  $region4: #{retinanet_forward.27} parent=0 // pred_region
    _
  $region5: #{retinanet_forward.27} parent=0 // pred_fallthru
    _
  // Predicated region
  $region6: #{retinanet_forward.27} parent=0 // pred_check
    _
  $region7: #{retinanet_forward.27} parent=0 // pred_check_branch
    %11 = sbr.rel (0) target = $region9
  $region8: #{retinanet_forward.27} parent=0 // pred_region
    _
  $region9: #{retinanet_forward.27} parent=0 // pred_fallthru
    _
  // Predicated region
  $region10: #{retinanet_forward.27} parent=0 // pred_check
    _
  $region11: #{retinanet_forward.27} parent=0 // pred_check_branch
    %13 = sbr.rel (0) target = $region13
  $region12: #{retinanet_forward.27} parent=0 // pred_region
    _
  $region13: #{retinanet_forward.27} parent=0 // pred_fallthru
    _
  %v15 = vld [vmem:[%s0] sm:$0xff]
  %v16 = vld [vmem:[%s0 + $0x8] sm:$0xf]
  %v17 = vld [vmem:[%s1] sm:$0xf]
  %v18 = vld [vmem:[%s1 + $0x4] sm:$0xf]
  %v19 = vld [vmem:[%s1 + $0x8] sm:$0xf]
  %v20 = vld [vmem:[%s1 + $0xc] sm:$0xf]
  %v21 = vld [vmem:[%s1 + $0x10] sm:$0xf]
  %v22 = vld [vmem:[%s1 + $0x14] sm:$0xf]
  %v23 = vld [vmem:[%s1 + $0x18] sm:$0xf]
  %v24 = vld [vmem:[%s1 + $0x1c] sm:$0xf]
  %v25 = vld [vmem:[%s1 + $0x20] sm:$0xf]
  %v26 = vld [vmem:[%s1 + $0x24] sm:$0xf]
  %v27 = vld [vmem:[%s1 + $0x28] sm:$0xf]
  %v28 = vld [vmem:[%s1 + $0x2c] sm:$0xf]
  %v29 = vld [vmem:[%s1 + $0x30] sm:$0xf]
  %v30 = vld [vmem:[%s1 + $0x34] sm:$0xf]
  %v31 = vld [vmem:[%s1 + $0x38] sm:$0xf]
  %v32 = vld [vmem:[%s1 + $0x3c] sm:$0xf]
  %v33 = vld [vmem:[%s1 + $0x40] sm:$0xf]
  %v34 = vld [vmem:[%s1 + $0x44] sm:$0xf]
  %v35 = vld [vmem:[%s1 + $0x48] sm:$0xf]
  %v36 = vld [vmem:[%s1 + $0x4c] sm:$0xf]
  %v37 = vld [vmem:[%s1 + $0x50] sm:$0xf]
  %v38 = vld [vmem:[%s1 + $0x54] sm:$0xf]
  %v39 = vld [vmem:[%s1 + $0x58] sm:$0xf]
  %v40 = vld [vmem:[%s1 + $0x5c] sm:$0xf]
  %v41 = vld [vmem:[%s1 + $0x60] sm:$0xf]
  %v42 = vld [vmem:[%s1 + $0x64] sm:$0xf]
  %v43 = vld [vmem:[%s1 + $0x68] sm:$0xf]
  %v44 = vld [vmem:[%s1 + $0x6c] sm:$0xf]
  %v45 = vld [vmem:[%s1 + $0x70] sm:$0xf]
  %v46 = vld [vmem:[%s1 + $0x74] sm:$0xf]
  %v47 = vld [vmem:[%s1 + $0x78] sm:$0xf]
  %v48 = vld [vmem:[%s1 + $0x7c] sm:$0xf]
  %v49 = vld [vmem:[%s1 + $0x80] sm:$0xf]
  %v50 = vld [vmem:[%s1 + $0x84] sm:$0xf]
  %v51 = vld [vmem:[%s1 + $0x88] sm:$0xf]
  %v52 = vld [vmem:[%s1 + $0x8c] sm:$0xf]
  %v53 = vld [vmem:[%s2] sm:$0x1]
  %v55 = vlaneseq
  %v56 = vshrl.u32 %v55, 7
  %v57 = vsub.s32 0, %v56
  %v58 = vrot.slane %v53, %v57
  %v62 = vunpack.c.l.b16 %v15
  %v63 = vunpack.c.h.b16 %v15
  %v64 = vunpack.c.l.b16 %v16
  %v65 = vpack.c.b16 %v62, %v62
  %v66 = vpack.c.b16 %v63, %v63
  %v67 = vpack.c.b16 %v64, %v64
  %v106 = vunpack.c.l.b16 %v17
  %v107 = vunpack.c.l.b16 %v18
  %v108 = vunpack.c.l.b16 %v19
  %v109 = vunpack.c.l.b16 %v20
  %v110 = vunpack.c.l.b16 %v21
  %v111 = vunpack.c.l.b16 %v22
  %v112 = vunpack.c.l.b16 %v23
  %v113 = vunpack.c.l.b16 %v24
  %v114 = vunpack.c.l.b16 %v25
  %v115 = vunpack.c.l.b16 %v26
  %v116 = vunpack.c.l.b16 %v27
  %v117 = vunpack.c.l.b16 %v28
  %v118 = vunpack.c.l.b16 %v29
  %v119 = vunpack.c.l.b16 %v30
  %v120 = vunpack.c.l.b16 %v31
  %v121 = vunpack.c.l.b16 %v32
  %v122 = vunpack.c.l.b16 %v33
  %v123 = vunpack.c.l.b16 %v34
  %v124 = vunpack.c.l.b16 %v35
  %v125 = vunpack.c.l.b16 %v36
  %v126 = vunpack.c.l.b16 %v37
  %v127 = vunpack.c.l.b16 %v38
  %v128 = vunpack.c.l.b16 %v39
  %v129 = vunpack.c.l.b16 %v40
  %v130 = vunpack.c.l.b16 %v41
  %v131 = vunpack.c.l.b16 %v42
  %v132 = vunpack.c.l.b16 %v43
  %v133 = vunpack.c.l.b16 %v44
  %v134 = vunpack.c.l.b16 %v45
  %v135 = vunpack.c.l.b16 %v46
  %v136 = vunpack.c.l.b16 %v47
  %v137 = vunpack.c.l.b16 %v48
  %v138 = vunpack.c.l.b16 %v49
  %v139 = vunpack.c.l.b16 %v50
  %v140 = vunpack.c.l.b16 %v51
  %v141 = vunpack.c.l.b16 %v52
  %v142 = vpack.c.b16 %v107, %v106
  %v143 = vpack.c.b16 %v109, %v108
  %v144 = vpack.c.b16 %v111, %v110
  %v145 = vpack.c.b16 %v113, %v112
  %v146 = vpack.c.b16 %v115, %v114
  %v147 = vpack.c.b16 %v117, %v116
  %v148 = vpack.c.b16 %v119, %v118
  %v149 = vpack.c.b16 %v121, %v120
  %v150 = vpack.c.b16 %v123, %v122
  %v151 = vpack.c.b16 %v125, %v124
  %v152 = vpack.c.b16 %v127, %v126
  %v153 = vpack.c.b16 %v129, %v128
  %v154 = vpack.c.b16 %v131, %v130
  %v155 = vpack.c.b16 %v133, %v132
  %v156 = vpack.c.b16 %v135, %v134
  %v157 = vpack.c.b16 %v137, %v136
  %v158 = vpack.c.b16 %v139, %v138
  %v159 = vpack.c.b16 %v141, %v140
  %vm178 = vcmask 261120
  %v180 = vsel %vm178, %v67, 0
  %182 = vmatprep.subr.bf16.mxu0 0
  %183 = vmatpush1.bf16.msra.mxu0 %v149
  %184 = vmatprep.subr.bf16.mxu0 0
  %185 = vmatpush1.bf16.msra.mxu0 %v148
  %186 = vmatprep.subr.bf16.mxu0 0
  %187 = vmatpush1.bf16.msra.mxu0 %v147
  %188 = vmatprep.subr.bf16.mxu0 0
  %189 = vmatpush1.bf16.msra.mxu0 %v146
  %190 = vmatprep.subr.bf16.mxu0 0
  %191 = vmatpush1.bf16.msra.mxu0 %v145
  %192 = vmatprep.subr.bf16.mxu0 0
  %193 = vmatpush1.bf16.msra.mxu0 %v144
  %194 = vmatprep.subr.bf16.mxu0 0
  %195 = vmatpush1.bf16.msra.mxu0 %v143
  %196 = vmatprep.subr.bf16.mxu0 0
  %197 = vmatpush1.bf16.msra.mxu0 %v142
  %198 = vmatprep.subr.bf16.mxu0 0
  %199 = vmatpush2.bf16.msra.mxu0 %v157
  %200 = vmatprep.subr.bf16.mxu0 0
  %201 = vmatpush2.bf16.msra.mxu0 %v156
  %202 = vmatprep.subr.bf16.mxu0 0
  %203 = vmatpush2.bf16.msra.mxu0 %v155
  %204 = vmatprep.subr.bf16.mxu0 0
  %205 = vmatpush2.bf16.msra.mxu0 %v154
  %206 = vmatprep.subr.bf16.mxu0 0
  %207 = vmatpush2.bf16.msra.mxu0 %v153
  %208 = vmatprep.subr.bf16.mxu0 0
  %209 = vmatpush2.bf16.msra.mxu0 %v152
  %210 = vmatprep.subr.bf16.mxu0 0
  %211 = vmatpush2.bf16.msra.mxu0 %v151
  %212 = vmatprep.subr.bf16.mxu0 0
  %213 = vmatpush2.bf16.msra.mxu0 %v150
  %214 = vmatprep.mubr.bf16.mxu0 %v66
  %215 = vmatmul.mubr.bf16.gmra.mxu0 %v65
  %v216 = vpop.f32.mrf.mxu0
  %v217 = vadd.f32 %v58, %v216
  %v218 = vpop.f32.mrf.mxu0
  %v219 = vpop.f32.mrf.mxu0
  %v220 = vpop.f32.mrf.mxu0
  %221 = vdwg.mxu0
  %222 = vmatprep.subr.bf16.mxu0 0
  %223 = vmatpush1.bf16.msra.mxu0 0
  %224 = vmatprep.subr.bf16.mxu0 0
  %225 = vmatpush1.bf16.msra.mxu0 0
  %226 = vmatprep.subr.bf16.mxu0 0
  %227 = vmatpush1.bf16.msra.mxu0 0
  %228 = vmatprep.subr.bf16.mxu0 0
  %229 = vmatpush1.bf16.msra.mxu0 0
  %230 = vmatprep.subr.bf16.mxu0 0
  %231 = vmatpush1.bf16.msra.mxu0 0
  %232 = vmatprep.subr.bf16.mxu0 0
  %233 = vmatpush1.bf16.msra.mxu0 0
  %234 = vmatprep.subr.bf16.mxu0 0
  %235 = vmatpush1.bf16.msra.mxu0 %v159
  %236 = vmatprep.subr.bf16.mxu0 0
  %237 = vmatpush1.bf16.msra.mxu0 %v158
  %238 = vmatprep.subr.bf16.mxu0 0
  %239 = vmatpush2.bf16.msra.mxu0 0
  %240 = vmatprep.subr.bf16.mxu0 0
  %241 = vmatpush2.bf16.msra.mxu0 0
  %242 = vmatprep.subr.bf16.mxu0 0
  %243 = vmatpush2.bf16.msra.mxu0 0
  %244 = vmatprep.subr.bf16.mxu0 0
  %245 = vmatpush2.bf16.msra.mxu0 0
  %246 = vmatprep.subr.bf16.mxu0 0
  %247 = vmatpush2.bf16.msra.mxu0 0
  %248 = vmatprep.subr.bf16.mxu0 0
  %249 = vmatpush2.bf16.msra.mxu0 0
  %250 = vmatprep.subr.bf16.mxu0 0
  %251 = vmatpush2.bf16.msra.mxu0 0
  %252 = vmatprep.subr.bf16.mxu0 0
  %253 = vmatpush2.bf16.msra.mxu0 0
  %254 = vmatprep.mubr.bf16.mxu0 0
  %255 = vmatmul.mubr.bf16.gmra.mxu0 %v180
  %v256 = vpop.f32.mrf.mxu0
  %v257 = vadd.f32 %v217, %v256
  %v258 = vpop.f32.mrf.mxu0
  %v259 = vpop.f32.mrf.mxu0
  %v260 = vpop.f32.mrf.mxu0
  %261 = vdwg.mxu0
  %v262 = vmax.f32 %v257, 0.0
  %263 = vst [vmem:[%s3] sm:$0xff] %v262
  // Predicated region
  $region14: #{retinanet_forward.27} parent=0 // pred_check
    _
  $region15: #{retinanet_forward.27} parent=0 // pred_check_branch
    %265 = sbr.rel (0) target = $region17
  $region16: #{retinanet_forward.27} parent=0 // pred_region
    _
  $region17: #{retinanet_forward.27} parent=0 // pred_fallthru
    _
  // Predicated region
  $region18: #{retinanet_forward.27} parent=0 // pred_check
    _
  $region19: #{retinanet_forward.27} parent=0 // pred_check_branch
    %267 = sbr.rel (0) target = $region21
  $region20: #{retinanet_forward.27} parent=0 // pred_region
    _
  $region21: #{retinanet_forward.27} parent=0 // pred_fallthru
    _

// kernel: retinanet_forward.34
$region0: #{retinanet_forward.34}
  #allocation0 [shape = 'u32[]', space=smem, size = 0x4, offset = 0x4, fixed_abs, tag = 'smem constant byte address 0x4 - core index']
  #allocation1 [shape = 'u32[144,128]{1,0:T(1,128)}', space=vmem, size = 0x12000, scoped, tag = 'internal scratch']
  %s0 = inlined_call_operand.vmem [shape: bf16[8,576], index: 0, kind: input, shape index: {}]
  %s1 = inlined_call_operand.vmem [shape: bf16[576,128], index: 1, kind: input, shape index: {}]
  %s2 = inlined_call_operand.vmem [shape: f32[1,128], index: 2, kind: input, shape index: {}]
  %s3 = inlined_call_operand.vmem [shape: f32[8,128], index: 3, kind: output, shape index: {}]
  %s4 = sld [smem:[#allocation0]]
  $region22: #{retinanet_forward.34} parent=0
    _
  %s6 = ssub.s32 1, %s4
  %s7 = scalar_select 0, %s6, %s4
  // Predicated region
  $region2: #{retinanet_forward.34} parent=0 // pred_check
    _
  $region3: #{retinanet_forward.34} parent=0 // pred_check_branch
    %9 = sbr.rel (0) target = $region5
  $region4: #{retinanet_forward.34} parent=0 // pred_region
    _
  $region5: #{retinanet_forward.34} parent=0 // pred_fallthru
    _
  // Predicated region
  $region6: #{retinanet_forward.34} parent=0 // pred_check
    _
  $region7: #{retinanet_forward.34} parent=0 // pred_check_branch
    %11 = sbr.rel (0) target = $region9
  $region8: #{retinanet_forward.34} parent=0 // pred_region
    _
  $region9: #{retinanet_forward.34} parent=0 // pred_fallthru
    _
  // Predicated region
  $region10: #{retinanet_forward.34} parent=0 // pred_check
    _
  $region11: #{retinanet_forward.34} parent=0 // pred_check_branch
    %13 = sbr.rel (0) target = $region13
  $region12: #{retinanet_forward.34} parent=0 // pred_region
    _
  $region13: #{retinanet_forward.34} parent=0 // pred_fallthru
    _
  %v15 = vld [vmem:[%s0] sm:$0xff]
  %v16 = vld [vmem:[%s0 + $0x8] sm:$0xff]
  %v17 = vld [vmem:[%s0 + $0x10] sm:$0xf]
  %v18 = vld [vmem:[%s1] sm:$0xf]
  %v19 = vld [vmem:[%s1 + $0x4] sm:$0xf]
  %v20 = vld [vmem:[%s1 + $0x8] sm:$0xf]
  %v21 = vld [vmem:[%s1 + $0xc] sm:$0xf]
  %v22 = vld [vmem:[%s1 + $0x10] sm:$0xf]
  %v23 = vld [vmem:[%s1 + $0x14] sm:$0xf]
  %v24 = vld [vmem:[%s1 + $0x18] sm:$0xf]
  %v25 = vld [vmem:[%s1 + $0x1c] sm:$0xf]
  %v26 = vld [vmem:[%s1 + $0x20] sm:$0xf]
  %v27 = vld [vmem:[%s1 + $0x24] sm:$0xf]
  %v28 = vld [vmem:[%s1 + $0x28] sm:$0xf]
  %v29 = vld [vmem:[%s1 + $0x2c] sm:$0xf]
  %v30 = vld [vmem:[%s1 + $0x30] sm:$0xf]
  %v31 = vld [vmem:[%s1 + $0x34] sm:$0xf]
  %v32 = vld [vmem:[%s1 + $0x38] sm:$0xf]
  %v33 = vld [vmem:[%s1 + $0x3c] sm:$0xf]
  %v34 = vld [vmem:[%s1 + $0x40] sm:$0xf]
  %v35 = vld [vmem:[%s1 + $0x44] sm:$0xf]
  %v36 = vld [vmem:[%s1 + $0x48] sm:$0xf]
  %v37 = vld [vmem:[%s1 + $0x4c] sm:$0xf]
  %v38 = vld [vmem:[%s1 + $0x50] sm:$0xf]
  %v39 = vld [vmem:[%s1 + $0x54] sm:$0xf]
  %v40 = vld [vmem:[%s1 + $0x58] sm:$0xf]
  %v41 = vld [vmem:[%s1 + $0x5c] sm:$0xf]
  %v42 = vld [vmem:[%s1 + $0x60] sm:$0xf]
  %v43 = vld [vmem:[%s1 + $0x64] sm:$0xf]
  %v44 = vld [vmem:[%s1 + $0x68] sm:$0xf]
  %v45 = vld [vmem:[%s1 + $0x6c] sm:$0xf]
  %v46 = vld [vmem:[%s1 + $0x70] sm:$0xf]
  %v47 = vld [vmem:[%s1 + $0x74] sm:$0xf]
  %v48 = vld [vmem:[%s1 + $0x78] sm:$0xf]
  %v49 = vld [vmem:[%s1 + $0x7c] sm:$0xf]
  %v50 = vld [vmem:[%s1 + $0x80] sm:$0xf]
  %v51 = vld [vmem:[%s1 + $0x84] sm:$0xf]
  %v52 = vld [vmem:[%s1 + $0x88] sm:$0xf]
  %v53 = vld [vmem:[%s1 + $0x8c] sm:$0xf]
  %v54 = vld [vmem:[%s1 + $0x90] sm:$0xf]
  %v55 = vld [vmem:[%s1 + $0x94] sm:$0xf]
  %v56 = vld [vmem:[%s1 + $0x98] sm:$0xf]
  %v57 = vld [vmem:[%s1 + $0x9c] sm:$0xf]
  %v58 = vld [vmem:[%s1 + $0xa0] sm:$0xf]
  %v59 = vld [vmem:[%s1 + $0xa4] sm:$0xf]
  %v60 = vld [vmem:[%s1 + $0xa8] sm:$0xf]
  %v61 = vld [vmem:[%s1 + $0xac] sm:$0xf]
  %v62 = vld [vmem:[%s1 + $0xb0] sm:$0xf]
  %v63 = vld [vmem:[%s1 + $0xb4] sm:$0xf]
  %v64 = vld [vmem:[%s1 + $0xb8] sm:$0xf]
  %v65 = vld [vmem:[%s1 + $0xbc] sm:$0xf]
  %v66 = vld [vmem:[%s1 + $0xc0] sm:$0xf]
  %v67 = vld [vmem:[%s1 + $0xc4] sm:$0xf]
  %v68 = vld [vmem:[%s1 + $0xc8] sm:$0xf]
  %v69 = vld [vmem:[%s1 + $0xcc] sm:$0xf]
  %v70 = vld [vmem:[%s1 + $0xd0] sm:$0xf]
  %v71 = vld [vmem:[%s1 + $0xd4] sm:$0xf]
  %v72 = vld [vmem:[%s1 + $0xd8] sm:$0xf]
  %v73 = vld [vmem:[%s1 + $0xdc] sm:$0xf]
  %v74 = vld [vmem:[%s1 + $0xe0] sm:$0xf]
  %v75 = vld [vmem:[%s1 + $0xe4] sm:$0xf]
  %v76 = vld [vmem:[%s1 + $0xe8] sm:$0xf]
  %v77 = vld [vmem:[%s1 + $0xec] sm:$0xf]
  %v78 = vld [vmem:[%s1 + $0xf0] sm:$0xf]
  %v79 = vld [vmem:[%s1 + $0xf4] sm:$0xf]
  %v80 = vld [vmem:[%s1 + $0xf8] sm:$0xf]
  %v81 = vld [vmem:[%s1 + $0xfc] sm:$0xf]
  %v82 = vld [vmem:[%s1 + $0x100] sm:$0xf]
  %v83 = vld [vmem:[%s1 + $0x104] sm:$0xf]
  %v84 = vld [vmem:[%s1 + $0x108] sm:$0xf]
  %v85 = vld [vmem:[%s1 + $0x10c] sm:$0xf]
  %v86 = vld [vmem:[%s1 + $0x110] sm:$0xf]
  %v87 = vld [vmem:[%s1 + $0x114] sm:$0xf]
  %v88 = vld [vmem:[%s1 + $0x118] sm:$0xf]
  %v89 = vld [vmem:[%s1 + $0x11c] sm:$0xf]
  %v90 = vld [vmem:[%s2] sm:$0x1]
  %v92 = vlaneseq
  %v93 = vshrl.u32 %v92, 7
  %v94 = vsub.s32 0, %v93
  %v95 = vrot.slane %v90, %v94
  %v100 = vunpack.c.l.b16 %v15
  %v101 = vunpack.c.h.b16 %v15
  %v102 = vunpack.c.l.b16 %v16
  %v103 = vunpack.c.h.b16 %v16
  %v104 = vunpack.c.l.b16 %v17
  %v105 = vpack.c.b16 %v100, %v100
  %v106 = vpack.c.b16 %v101, %v101
  %v107 = vpack.c.b16 %v102, %v102
  %v108 = vpack.c.b16 %v103, %v103
  %v109 = vpack.c.b16 %v104, %v104
  %v186 = vunpack.c.l.b16 %v18
  %v187 = vunpack.c.l.b16 %v19
  %v188 = vunpack.c.l.b16 %v20
  %v189 = vunpack.c.l.b16 %v21
  %v190 = vunpack.c.l.b16 %v22
  %v191 = vunpack.c.l.b16 %v23
  %v192 = vunpack.c.l.b16 %v24
  %v193 = vunpack.c.l.b16 %v25
  %v194 = vunpack.c.l.b16 %v26
  %v195 = vunpack.c.l.b16 %v27
  %v196 = vunpack.c.l.b16 %v28
  %v197 = vunpack.c.l.b16 %v29
  %v198 = vunpack.c.l.b16 %v30
  %v199 = vunpack.c.l.b16 %v31
  %v200 = vunpack.c.l.b16 %v32
  %v201 = vunpack.c.l.b16 %v33
  %v202 = vunpack.c.l.b16 %v34
  %v203 = vunpack.c.l.b16 %v35
  %v204 = vunpack.c.l.b16 %v36
  %v205 = vunpack.c.l.b16 %v37
  %v206 = vunpack.c.l.b16 %v38
  %v207 = vunpack.c.l.b16 %v39
  %v208 = vunpack.c.l.b16 %v40
  %v209 = vunpack.c.l.b16 %v41
  %v210 = vunpack.c.l.b16 %v42
  %v211 = vunpack.c.l.b16 %v43
  %v212 = vunpack.c.l.b16 %v44
  %v213 = vunpack.c.l.b16 %v45
  %v214 = vunpack.c.l.b16 %v46
  %v215 = vunpack.c.l.b16 %v47
  %v216 = vunpack.c.l.b16 %v48
  %v217 = vunpack.c.l.b16 %v49
  %v218 = vunpack.c.l.b16 %v50
  %v219 = vunpack.c.l.b16 %v51
  %v220 = vunpack.c.l.b16 %v52
  %v221 = vunpack.c.l.b16 %v53
  %v222 = vunpack.c.l.b16 %v54
  %v223 = vunpack.c.l.b16 %v55
  %v224 = vunpack.c.l.b16 %v56
  %v225 = vunpack.c.l.b16 %v57
  %v226 = vunpack.c.l.b16 %v58
  %v227 = vunpack.c.l.b16 %v59
  %v228 = vunpack.c.l.b16 %v60
  %v229 = vunpack.c.l.b16 %v61
  %v230 = vunpack.c.l.b16 %v62
  %v231 = vunpack.c.l.b16 %v63
  %v232 = vunpack.c.l.b16 %v64
  %v233 = vunpack.c.l.b16 %v65
  %v234 = vunpack.c.l.b16 %v66
  %v235 = vunpack.c.l.b16 %v67
  %v236 = vunpack.c.l.b16 %v68
  %v237 = vunpack.c.l.b16 %v69
  %v238 = vunpack.c.l.b16 %v70
  %v239 = vunpack.c.l.b16 %v71
  %v240 = vunpack.c.l.b16 %v72
  %v241 = vunpack.c.l.b16 %v73
  %v242 = vunpack.c.l.b16 %v74
  %v243 = vunpack.c.l.b16 %v75
  %v244 = vunpack.c.l.b16 %v76
  %v245 = vunpack.c.l.b16 %v77
  %v246 = vunpack.c.l.b16 %v78
  %v247 = vunpack.c.l.b16 %v79
  %v248 = vunpack.c.l.b16 %v80
  %v249 = vunpack.c.l.b16 %v81
  %v250 = vunpack.c.l.b16 %v82
  %v251 = vunpack.c.l.b16 %v83
  %v252 = vunpack.c.l.b16 %v84
  %v253 = vunpack.c.l.b16 %v85
  %v254 = vunpack.c.l.b16 %v86
  %v255 = vunpack.c.l.b16 %v87
  %v256 = vunpack.c.l.b16 %v88
  %v257 = vunpack.c.l.b16 %v89
  %v258 = vpack.c.b16 %v187, %v186
  %v259 = vpack.c.b16 %v189, %v188
  %v260 = vpack.c.b16 %v191, %v190
  %v261 = vpack.c.b16 %v193, %v192
  %v262 = vpack.c.b16 %v195, %v194
  %v263 = vpack.c.b16 %v197, %v196
  %v264 = vpack.c.b16 %v199, %v198
  %v265 = vpack.c.b16 %v201, %v200
  %v266 = vpack.c.b16 %v203, %v202
  %v267 = vpack.c.b16 %v205, %v204
  %v268 = vpack.c.b16 %v207, %v206
  %v269 = vpack.c.b16 %v209, %v208
  %v270 = vpack.c.b16 %v211, %v210
  %v271 = vpack.c.b16 %v213, %v212
  %v272 = vpack.c.b16 %v215, %v214
  %v273 = vpack.c.b16 %v217, %v216
  %v274 = vpack.c.b16 %v219, %v218
  %v275 = vpack.c.b16 %v221, %v220
  %v276 = vpack.c.b16 %v223, %v222
  %v277 = vpack.c.b16 %v225, %v224
  %v278 = vpack.c.b16 %v227, %v226
  %v279 = vpack.c.b16 %v229, %v228
  %v280 = vpack.c.b16 %v231, %v230
  %v281 = vpack.c.b16 %v233, %v232
  %v282 = vpack.c.b16 %v235, %v234
  %v283 = vpack.c.b16 %v237, %v236
  %v284 = vpack.c.b16 %v239, %v238
  %v285 = vpack.c.b16 %v241, %v240
  %v286 = vpack.c.b16 %v243, %v242
  %v287 = vpack.c.b16 %v245, %v244
  %v288 = vpack.c.b16 %v247, %v246
  %v289 = vpack.c.b16 %v249, %v248
  %v290 = vpack.c.b16 %v251, %v250
  %v291 = vpack.c.b16 %v253, %v252
  %v292 = vpack.c.b16 %v255, %v254
  %v293 = vpack.c.b16 %v257, %v256
  %vm330 = vcmask 523264
  %v332 = vsel %vm330, %v109, 0
  %334 = vmatprep.subr.bf16.mxu0 0
  %335 = vmatpush1.bf16.msra.mxu0 %v265
  %336 = vmatprep.subr.bf16.mxu0 0
  %337 = vmatpush1.bf16.msra.mxu0 %v264
  %338 = vmatprep.subr.bf16.mxu0 0
  %339 = vmatpush1.bf16.msra.mxu0 %v263
  %340 = vmatprep.subr.bf16.mxu0 0
  %341 = vmatpush1.bf16.msra.mxu0 %v262
  %342 = vmatprep.subr.bf16.mxu0 0
  %343 = vmatpush1.bf16.msra.mxu0 %v261
  %344 = vmatprep.subr.bf16.mxu0 0
  %345 = vmatpush1.bf16.msra.mxu0 %v260
  %346 = vmatprep.subr.bf16.mxu0 0
  %347 = vmatpush1.bf16.msra.mxu0 %v259
  %348 = vmatprep.subr.bf16.mxu0 0
  %349 = vmatpush1.bf16.msra.mxu0 %v258
  %350 = vmatprep.subr.bf16.mxu0 0
  %351 = vmatpush2.bf16.msra.mxu0 %v273
  %352 = vmatprep.subr.bf16.mxu0 0
  %353 = vmatpush2.bf16.msra.mxu0 %v272
  %354 = vmatprep.subr.bf16.mxu0 0
  %355 = vmatpush2.bf16.msra.mxu0 %v271
  %356 = vmatprep.subr.bf16.mxu0 0
  %357 = vmatpush2.bf16.msra.mxu0 %v270
  %358 = vmatprep.subr.bf16.mxu0 0
  %359 = vmatpush2.bf16.msra.mxu0 %v269
  %360 = vmatprep.subr.bf16.mxu0 0
  %361 = vmatpush2.bf16.msra.mxu0 %v268
  %362 = vmatprep.subr.bf16.mxu0 0
  %363 = vmatpush2.bf16.msra.mxu0 %v267
  %364 = vmatprep.subr.bf16.mxu0 0
  %365 = vmatpush2.bf16.msra.mxu0 %v266
  %366 = vmatprep.mubr.bf16.mxu0 %v106
  %367 = vmatmul.mubr.bf16.gmra.mxu0 %v105
  %v368 = vpop.f32.mrf.mxu0
  %v369 = vadd.f32 %v95, %v368
  %v370 = vpop.f32.mrf.mxu0
  %v371 = vpop.f32.mrf.mxu0
  %v372 = vpop.f32.mrf.mxu0
  %373 = vdwg.mxu0
  %374 = vmatprep.subr.bf16.mxu0 0
  %375 = vmatpush1.bf16.msra.mxu0 %v281
  %376 = vmatprep.subr.bf16.mxu0 0
  %377 = vmatpush1.bf16.msra.mxu0 %v280
  %378 = vmatprep.subr.bf16.mxu0 0
  %379 = vmatpush1.bf16.msra.mxu0 %v279
  %380 = vmatprep.subr.bf16.mxu0 0
  %381 = vmatpush1.bf16.msra.mxu0 %v278
  %382 = vmatprep.subr.bf16.mxu0 0
  %383 = vmatpush1.bf16.msra.mxu0 %v277
  %384 = vmatprep.subr.bf16.mxu0 0
  %385 = vmatpush1.bf16.msra.mxu0 %v276
  %386 = vmatprep.subr.bf16.mxu0 0
  %387 = vmatpush1.bf16.msra.mxu0 %v275
  %388 = vmatprep.subr.bf16.mxu0 0
  %389 = vmatpush1.bf16.msra.mxu0 %v274
  %390 = vmatprep.subr.bf16.mxu0 0
  %391 = vmatpush2.bf16.msra.mxu0 %v289
  %392 = vmatprep.subr.bf16.mxu0 0
  %393 = vmatpush2.bf16.msra.mxu0 %v288
  %394 = vmatprep.subr.bf16.mxu0 0
  %395 = vmatpush2.bf16.msra.mxu0 %v287
  %396 = vmatprep.subr.bf16.mxu0 0
  %397 = vmatpush2.bf16.msra.mxu0 %v286
  %398 = vmatprep.subr.bf16.mxu0 0
  %399 = vmatpush2.bf16.msra.mxu0 %v285
  %400 = vmatprep.subr.bf16.mxu0 0
  %401 = vmatpush2.bf16.msra.mxu0 %v284
  %402 = vmatprep.subr.bf16.mxu0 0
  %403 = vmatpush2.bf16.msra.mxu0 %v283
  %404 = vmatprep.subr.bf16.mxu0 0
  %405 = vmatpush2.bf16.msra.mxu0 %v282
  %406 = vmatprep.mubr.bf16.mxu0 %v108
  %407 = vmatmul.mubr.bf16.gmra.mxu0 %v107
  %v408 = vpop.f32.mrf.mxu0
  %v409 = vadd.f32 %v369, %v408
  %v410 = vpop.f32.mrf.mxu0
  %v411 = vpop.f32.mrf.mxu0
  %v412 = vpop.f32.mrf.mxu0
  %413 = vdwg.mxu0
  %414 = vmatprep.subr.bf16.mxu0 0
  %415 = vmatpush1.bf16.msra.mxu0 0
  %416 = vmatprep.subr.bf16.mxu0 0
  %417 = vmatpush1.bf16.msra.mxu0 0
  %418 = vmatprep.subr.bf16.mxu0 0
  %419 = vmatpush1.bf16.msra.mxu0 0
  %420 = vmatprep.subr.bf16.mxu0 0
  %421 = vmatpush1.bf16.msra.mxu0 0
  %422 = vmatprep.subr.bf16.mxu0 0
  %423 = vmatpush1.bf16.msra.mxu0 %v293
  %424 = vmatprep.subr.bf16.mxu0 0
  %425 = vmatpush1.bf16.msra.mxu0 %v292
  %426 = vmatprep.subr.bf16.mxu0 0
  %427 = vmatpush1.bf16.msra.mxu0 %v291
  %428 = vmatprep.subr.bf16.mxu0 0
  %429 = vmatpush1.bf16.msra.mxu0 %v290
  %430 = vmatprep.subr.bf16.mxu0 0
  %431 = vmatpush2.bf16.msra.mxu0 0
  %432 = vmatprep.subr.bf16.mxu0 0
  %433 = vmatpush2.bf16.msra.mxu0 0
  %434 = vmatprep.subr.bf16.mxu0 0
  %435 = vmatpush2.bf16.msra.mxu0 0
  %436 = vmatprep.subr.bf16.mxu0 0
  %437 = vmatpush2.bf16.msra.mxu0 0
  %438 = vmatprep.subr.bf16.mxu0 0
  %439 = vmatpush2.bf16.msra.mxu0 0
  %440 = vmatprep.subr.bf16.mxu0 0
  %441 = vmatpush2.bf16.msra.mxu0 0
  %442 = vmatprep.subr.bf16.mxu0 0
  %443 = vmatpush2.bf16.msra.mxu0 0
  %444 = vmatprep.subr.bf16.mxu0 0
  %445 = vmatpush2.bf16.msra.mxu0 0
  %446 = vmatprep.mubr.bf16.mxu0 0
  %447 = vmatmul.mubr.bf16.gmra.mxu0 %v332
  %v448 = vpop.f32.mrf.mxu0
  %v449 = vadd.f32 %v409, %v448
  %v450 = vpop.f32.mrf.mxu0
  %v451 = vpop.f32.mrf.mxu0
  %v452 = vpop.f32.mrf.mxu0
  %453 = vdwg.mxu0
  %454 = vst [vmem:[%s3] sm:$0xff] %v449
  // Predicated region
  $region14: #{retinanet_forward.34} parent=0 // pred_check
    _
  $region15: #{retinanet_forward.34} parent=0 // pred_check_branch
    %456 = sbr.rel (0) target = $region17
  $region16: #{retinanet_forward.34} parent=0 // pred_region
    _
  $region17: #{retinanet_forward.34} parent=0 // pred_fallthru
    _
  // Predicated region
  $region18: #{retinanet_forward.34} parent=0 // pred_check
    _
  $region19: #{retinanet_forward.34} parent=0 // pred_check_branch
    %458 = sbr.rel (0) target = $region21
  $region20: #{retinanet_forward.34} parent=0 // pred_region
    _
  $region21: #{retinanet_forward.34} parent=0 // pred_fallthru
    _

// kernel: retinanet_forward.35
$region0: #{retinanet_forward.35}
  #allocation0 [shape = 'u32[]', space=smem, size = 0x4, offset = 0x4, fixed_abs, tag = 'smem constant byte address 0x4 - core index']
  #allocation1 [shape = 'u32[144,128]{1,0:T(1,128)}', space=vmem, size = 0x12000, scoped, tag = 'internal scratch']
  %s0 = inlined_call_operand.vmem [shape: bf16[8,288], index: 0, kind: input, shape index: {}]
  %s1 = inlined_call_operand.vmem [shape: bf16[288,128], index: 1, kind: input, shape index: {}]
  %s2 = inlined_call_operand.vmem [shape: f32[1,128], index: 2, kind: input, shape index: {}]
  %s3 = inlined_call_operand.vmem [shape: f32[8,128], index: 3, kind: output, shape index: {}]
  %s4 = sld [smem:[#allocation0]]
  $region22: #{retinanet_forward.35} parent=0
    _
  %s6 = ssub.s32 1, %s4
  %s7 = scalar_select 0, %s6, %s4
  // Predicated region
  $region2: #{retinanet_forward.35} parent=0 // pred_check
    _
  $region3: #{retinanet_forward.35} parent=0 // pred_check_branch
    %9 = sbr.rel (0) target = $region5
  $region4: #{retinanet_forward.35} parent=0 // pred_region
    _
  $region5: #{retinanet_forward.35} parent=0 // pred_fallthru
    _
  // Predicated region
  $region6: #{retinanet_forward.35} parent=0 // pred_check
    _
  $region7: #{retinanet_forward.35} parent=0 // pred_check_branch
    %11 = sbr.rel (0) target = $region9
  $region8: #{retinanet_forward.35} parent=0 // pred_region
    _
  $region9: #{retinanet_forward.35} parent=0 // pred_fallthru
    _
  // Predicated region
  $region10: #{retinanet_forward.35} parent=0 // pred_check
    _
  $region11: #{retinanet_forward.35} parent=0 // pred_check_branch
    %13 = sbr.rel (0) target = $region13
  $region12: #{retinanet_forward.35} parent=0 // pred_region
    _
  $region13: #{retinanet_forward.35} parent=0 // pred_fallthru
    _
  %v15 = vld [vmem:[%s0] sm:$0xff]
  %v16 = vld [vmem:[%s0 + $0x8] sm:$0xf]
  %v17 = vld [vmem:[%s1] sm:$0xf]
  %v18 = vld [vmem:[%s1 + $0x4] sm:$0xf]
  %v19 = vld [vmem:[%s1 + $0x8] sm:$0xf]
  %v20 = vld [vmem:[%s1 + $0xc] sm:$0xf]
  %v21 = vld [vmem:[%s1 + $0x10] sm:$0xf]
  %v22 = vld [vmem:[%s1 + $0x14] sm:$0xf]
  %v23 = vld [vmem:[%s1 + $0x18] sm:$0xf]
  %v24 = vld [vmem:[%s1 + $0x1c] sm:$0xf]
  %v25 = vld [vmem:[%s1 + $0x20] sm:$0xf]
  %v26 = vld [vmem:[%s1 + $0x24] sm:$0xf]
  %v27 = vld [vmem:[%s1 + $0x28] sm:$0xf]
  %v28 = vld [vmem:[%s1 + $0x2c] sm:$0xf]
  %v29 = vld [vmem:[%s1 + $0x30] sm:$0xf]
  %v30 = vld [vmem:[%s1 + $0x34] sm:$0xf]
  %v31 = vld [vmem:[%s1 + $0x38] sm:$0xf]
  %v32 = vld [vmem:[%s1 + $0x3c] sm:$0xf]
  %v33 = vld [vmem:[%s1 + $0x40] sm:$0xf]
  %v34 = vld [vmem:[%s1 + $0x44] sm:$0xf]
  %v35 = vld [vmem:[%s1 + $0x48] sm:$0xf]
  %v36 = vld [vmem:[%s1 + $0x4c] sm:$0xf]
  %v37 = vld [vmem:[%s1 + $0x50] sm:$0xf]
  %v38 = vld [vmem:[%s1 + $0x54] sm:$0xf]
  %v39 = vld [vmem:[%s1 + $0x58] sm:$0xf]
  %v40 = vld [vmem:[%s1 + $0x5c] sm:$0xf]
  %v41 = vld [vmem:[%s1 + $0x60] sm:$0xf]
  %v42 = vld [vmem:[%s1 + $0x64] sm:$0xf]
  %v43 = vld [vmem:[%s1 + $0x68] sm:$0xf]
  %v44 = vld [vmem:[%s1 + $0x6c] sm:$0xf]
  %v45 = vld [vmem:[%s1 + $0x70] sm:$0xf]
  %v46 = vld [vmem:[%s1 + $0x74] sm:$0xf]
  %v47 = vld [vmem:[%s1 + $0x78] sm:$0xf]
  %v48 = vld [vmem:[%s1 + $0x7c] sm:$0xf]
  %v49 = vld [vmem:[%s1 + $0x80] sm:$0xf]
  %v50 = vld [vmem:[%s1 + $0x84] sm:$0xf]
  %v51 = vld [vmem:[%s1 + $0x88] sm:$0xf]
  %v52 = vld [vmem:[%s1 + $0x8c] sm:$0xf]
  %v53 = vld [vmem:[%s2] sm:$0x1]
  %v55 = vlaneseq
  %v56 = vshrl.u32 %v55, 7
  %v57 = vsub.s32 0, %v56
  %v58 = vrot.slane %v53, %v57
  %v62 = vunpack.c.l.b16 %v15
  %v63 = vunpack.c.h.b16 %v15
  %v64 = vunpack.c.l.b16 %v16
  %v65 = vpack.c.b16 %v62, %v62
  %v66 = vpack.c.b16 %v63, %v63
  %v67 = vpack.c.b16 %v64, %v64
  %v106 = vunpack.c.l.b16 %v17
  %v107 = vunpack.c.l.b16 %v18
  %v108 = vunpack.c.l.b16 %v19
  %v109 = vunpack.c.l.b16 %v20
  %v110 = vunpack.c.l.b16 %v21
  %v111 = vunpack.c.l.b16 %v22
  %v112 = vunpack.c.l.b16 %v23
  %v113 = vunpack.c.l.b16 %v24
  %v114 = vunpack.c.l.b16 %v25
  %v115 = vunpack.c.l.b16 %v26
  %v116 = vunpack.c.l.b16 %v27
  %v117 = vunpack.c.l.b16 %v28
  %v118 = vunpack.c.l.b16 %v29
  %v119 = vunpack.c.l.b16 %v30
  %v120 = vunpack.c.l.b16 %v31
  %v121 = vunpack.c.l.b16 %v32
  %v122 = vunpack.c.l.b16 %v33
  %v123 = vunpack.c.l.b16 %v34
  %v124 = vunpack.c.l.b16 %v35
  %v125 = vunpack.c.l.b16 %v36
  %v126 = vunpack.c.l.b16 %v37
  %v127 = vunpack.c.l.b16 %v38
  %v128 = vunpack.c.l.b16 %v39
  %v129 = vunpack.c.l.b16 %v40
  %v130 = vunpack.c.l.b16 %v41
  %v131 = vunpack.c.l.b16 %v42
  %v132 = vunpack.c.l.b16 %v43
  %v133 = vunpack.c.l.b16 %v44
  %v134 = vunpack.c.l.b16 %v45
  %v135 = vunpack.c.l.b16 %v46
  %v136 = vunpack.c.l.b16 %v47
  %v137 = vunpack.c.l.b16 %v48
  %v138 = vunpack.c.l.b16 %v49
  %v139 = vunpack.c.l.b16 %v50
  %v140 = vunpack.c.l.b16 %v51
  %v141 = vunpack.c.l.b16 %v52
  %v142 = vpack.c.b16 %v107, %v106
  %v143 = vpack.c.b16 %v109, %v108
  %v144 = vpack.c.b16 %v111, %v110
  %v145 = vpack.c.b16 %v113, %v112
  %v146 = vpack.c.b16 %v115, %v114
  %v147 = vpack.c.b16 %v117, %v116
  %v148 = vpack.c.b16 %v119, %v118
  %v149 = vpack.c.b16 %v121, %v120
  %v150 = vpack.c.b16 %v123, %v122
  %v151 = vpack.c.b16 %v125, %v124
  %v152 = vpack.c.b16 %v127, %v126
  %v153 = vpack.c.b16 %v129, %v128
  %v154 = vpack.c.b16 %v131, %v130
  %v155 = vpack.c.b16 %v133, %v132
  %v156 = vpack.c.b16 %v135, %v134
  %v157 = vpack.c.b16 %v137, %v136
  %v158 = vpack.c.b16 %v139, %v138
  %v159 = vpack.c.b16 %v141, %v140
  %vm178 = vcmask 261120
  %v180 = vsel %vm178, %v67, 0
  %182 = vmatprep.subr.bf16.mxu0 0
  %183 = vmatpush1.bf16.msra.mxu0 %v149
  %184 = vmatprep.subr.bf16.mxu0 0
  %185 = vmatpush1.bf16.msra.mxu0 %v148
  %186 = vmatprep.subr.bf16.mxu0 0
  %187 = vmatpush1.bf16.msra.mxu0 %v147
  %188 = vmatprep.subr.bf16.mxu0 0
  %189 = vmatpush1.bf16.msra.mxu0 %v146
  %190 = vmatprep.subr.bf16.mxu0 0
  %191 = vmatpush1.bf16.msra.mxu0 %v145
  %192 = vmatprep.subr.bf16.mxu0 0
  %193 = vmatpush1.bf16.msra.mxu0 %v144
  %194 = vmatprep.subr.bf16.mxu0 0
  %195 = vmatpush1.bf16.msra.mxu0 %v143
  %196 = vmatprep.subr.bf16.mxu0 0
  %197 = vmatpush1.bf16.msra.mxu0 %v142
  %198 = vmatprep.subr.bf16.mxu0 0
  %199 = vmatpush2.bf16.msra.mxu0 %v157
  %200 = vmatprep.subr.bf16.mxu0 0
  %201 = vmatpush2.bf16.msra.mxu0 %v156
  %202 = vmatprep.subr.bf16.mxu0 0
  %203 = vmatpush2.bf16.msra.mxu0 %v155
  %204 = vmatprep.subr.bf16.mxu0 0
  %205 = vmatpush2.bf16.msra.mxu0 %v154
  %206 = vmatprep.subr.bf16.mxu0 0
  %207 = vmatpush2.bf16.msra.mxu0 %v153
  %208 = vmatprep.subr.bf16.mxu0 0
  %209 = vmatpush2.bf16.msra.mxu0 %v152
  %210 = vmatprep.subr.bf16.mxu0 0
  %211 = vmatpush2.bf16.msra.mxu0 %v151
  %212 = vmatprep.subr.bf16.mxu0 0
  %213 = vmatpush2.bf16.msra.mxu0 %v150
  %214 = vmatprep.mubr.bf16.mxu0 %v66
  %215 = vmatmul.mubr.bf16.gmra.mxu0 %v65
  %v216 = vpop.f32.mrf.mxu0
  %v217 = vadd.f32 %v58, %v216
  %v218 = vpop.f32.mrf.mxu0
  %v219 = vpop.f32.mrf.mxu0
  %v220 = vpop.f32.mrf.mxu0
  %221 = vdwg.mxu0
  %222 = vmatprep.subr.bf16.mxu0 0
  %223 = vmatpush1.bf16.msra.mxu0 0
  %224 = vmatprep.subr.bf16.mxu0 0
  %225 = vmatpush1.bf16.msra.mxu0 0
  %226 = vmatprep.subr.bf16.mxu0 0
  %227 = vmatpush1.bf16.msra.mxu0 0
  %228 = vmatprep.subr.bf16.mxu0 0
  %229 = vmatpush1.bf16.msra.mxu0 0
  %230 = vmatprep.subr.bf16.mxu0 0
  %231 = vmatpush1.bf16.msra.mxu0 0
  %232 = vmatprep.subr.bf16.mxu0 0
  %233 = vmatpush1.bf16.msra.mxu0 0
  %234 = vmatprep.subr.bf16.mxu0 0
  %235 = vmatpush1.bf16.msra.mxu0 %v159
  %236 = vmatprep.subr.bf16.mxu0 0
  %237 = vmatpush1.bf16.msra.mxu0 %v158
  %238 = vmatprep.subr.bf16.mxu0 0
  %239 = vmatpush2.bf16.msra.mxu0 0
  %240 = vmatprep.subr.bf16.mxu0 0
  %241 = vmatpush2.bf16.msra.mxu0 0
  %242 = vmatprep.subr.bf16.mxu0 0
  %243 = vmatpush2.bf16.msra.mxu0 0
  %244 = vmatprep.subr.bf16.mxu0 0
  %245 = vmatpush2.bf16.msra.mxu0 0
  %246 = vmatprep.subr.bf16.mxu0 0
  %247 = vmatpush2.bf16.msra.mxu0 0
  %248 = vmatprep.subr.bf16.mxu0 0
  %249 = vmatpush2.bf16.msra.mxu0 0
  %250 = vmatprep.subr.bf16.mxu0 0
  %251 = vmatpush2.bf16.msra.mxu0 0
  %252 = vmatprep.subr.bf16.mxu0 0
  %253 = vmatpush2.bf16.msra.mxu0 0
  %254 = vmatprep.mubr.bf16.mxu0 0
  %255 = vmatmul.mubr.bf16.gmra.mxu0 %v180
  %v256 = vpop.f32.mrf.mxu0
  %v257 = vadd.f32 %v217, %v256
  %v258 = vpop.f32.mrf.mxu0
  %v259 = vpop.f32.mrf.mxu0
  %v260 = vpop.f32.mrf.mxu0
  %261 = vdwg.mxu0
  %262 = vst [vmem:[%s3] sm:$0xff] %v257
  // Predicated region
  $region14: #{retinanet_forward.35} parent=0 // pred_check
    _
  $region15: #{retinanet_forward.35} parent=0 // pred_check_branch
    %264 = sbr.rel (0) target = $region17
  $region16: #{retinanet_forward.35} parent=0 // pred_region
    _
  $region17: #{retinanet_forward.35} parent=0 // pred_fallthru
    _
  // Predicated region
  $region18: #{retinanet_forward.35} parent=0 // pred_check
    _
  $region19: #{retinanet_forward.35} parent=0 // pred_check_branch
    %266 = sbr.rel (0) target = $region21
  $region20: #{retinanet_forward.35} parent=0 // pred_region
    _
  $region21: #{retinanet_forward.35} parent=0 // pred_fallthru
    _

// kernel: retinanet_forward.28
$region0: #{retinanet_forward.28}
  #allocation0 [shape = 'u32[]', space=smem, size = 0x4, offset = 0x4, fixed_abs, tag = 'smem constant byte address 0x4 - core index']
  #allocation1 [shape = 'u32[144,128]{1,0:T(1,128)}', space=vmem, size = 0x12000, scoped, tag = 'internal scratch']
  %s0 = inlined_call_operand.vmem [shape: bf16[8,64], index: 0, kind: input, shape index: {}]
  %s1 = inlined_call_operand.vmem [shape: bf16[64,128], index: 1, kind: input, shape index: {}]
  %s2 = inlined_call_operand.vmem [shape: f32[1,128], index: 2, kind: input, shape index: {}]
  %s3 = inlined_call_operand.vmem [shape: f32[8,128], index: 3, kind: output, shape index: {}]
  %s4 = sld [smem:[#allocation0]]
  $region22: #{retinanet_forward.28} parent=0
    _
  %s6 = ssub.s32 1, %s4
  %s7 = scalar_select 0, %s6, %s4
  // Predicated region
  $region2: #{retinanet_forward.28} parent=0 // pred_check
    _
  $region3: #{retinanet_forward.28} parent=0 // pred_check_branch
    %9 = sbr.rel (0) target = $region5
  $region4: #{retinanet_forward.28} parent=0 // pred_region
    _
  $region5: #{retinanet_forward.28} parent=0 // pred_fallthru
    _
  // Predicated region
  $region6: #{retinanet_forward.28} parent=0 // pred_check
    _
  $region7: #{retinanet_forward.28} parent=0 // pred_check_branch
    %11 = sbr.rel (0) target = $region9
  $region8: #{retinanet_forward.28} parent=0 // pred_region
    _
  $region9: #{retinanet_forward.28} parent=0 // pred_fallthru
    _
  // Predicated region
  $region10: #{retinanet_forward.28} parent=0 // pred_check
    _
  $region11: #{retinanet_forward.28} parent=0 // pred_check_branch
    %13 = sbr.rel (0) target = $region13
  $region12: #{retinanet_forward.28} parent=0 // pred_region
    _
  $region13: #{retinanet_forward.28} parent=0 // pred_fallthru
    _
  %v15 = vld [vmem:[%s0] sm:$0xf]
  %v16 = vld [vmem:[%s1] sm:$0xf]
  %v17 = vld [vmem:[%s1 + $0x4] sm:$0xf]
  %v18 = vld [vmem:[%s1 + $0x8] sm:$0xf]
  %v19 = vld [vmem:[%s1 + $0xc] sm:$0xf]
  %v20 = vld [vmem:[%s1 + $0x10] sm:$0xf]
  %v21 = vld [vmem:[%s1 + $0x14] sm:$0xf]
  %v22 = vld [vmem:[%s1 + $0x18] sm:$0xf]
  %v23 = vld [vmem:[%s1 + $0x1c] sm:$0xf]
  %v24 = vld [vmem:[%s2] sm:$0x1]
  %v26 = vlaneseq
  %v27 = vshrl.u32 %v26, 7
  %v28 = vsub.s32 0, %v27
  %v29 = vrot.slane %v24, %v28
  %v39 = vunpack.c.l.b16 %v16
  %v40 = vunpack.c.l.b16 %v17
  %v41 = vunpack.c.l.b16 %v18
  %v42 = vunpack.c.l.b16 %v19
  %v43 = vunpack.c.l.b16 %v20
  %v44 = vunpack.c.l.b16 %v21
  %v45 = vunpack.c.l.b16 %v22
  %v46 = vunpack.c.l.b16 %v23
  %v47 = vpack.c.b16 %v40, %v39
  %v48 = vpack.c.b16 %v42, %v41
  %v49 = vpack.c.b16 %v44, %v43
  %v50 = vpack.c.b16 %v46, %v45
  %vm55 = vcmask 523264
  %v57 = vsel %vm55, %v15, 0
  %59 = vmatprep.subr.bf16.mxu0 0
  %60 = vmatpush1.bf16.msra.mxu0 0
  %61 = vmatprep.subr.bf16.mxu0 0
  %62 = vmatpush1.bf16.msra.mxu0 0
  %63 = vmatprep.subr.bf16.mxu0 0
  %64 = vmatpush1.bf16.msra.mxu0 0
  %65 = vmatprep.subr.bf16.mxu0 0
  %66 = vmatpush1.bf16.msra.mxu0 0
  %67 = vmatprep.subr.bf16.mxu0 0
  %68 = vmatpush1.bf16.msra.mxu0 %v50
  %69 = vmatprep.subr.bf16.mxu0 0
  %70 = vmatpush1.bf16.msra.mxu0 %v49
  %71 = vmatprep.subr.bf16.mxu0 0
  %72 = vmatpush1.bf16.msra.mxu0 %v48
  %73 = vmatprep.subr.bf16.mxu0 0
  %74 = vmatpush1.bf16.msra.mxu0 %v47
  %75 = vmatprep.subr.bf16.mxu0 0
  %76 = vmatpush2.bf16.msra.mxu0 0
  %77 = vmatprep.subr.bf16.mxu0 0
  %78 = vmatpush2.bf16.msra.mxu0 0
  %79 = vmatprep.subr.bf16.mxu0 0
  %80 = vmatpush2.bf16.msra.mxu0 0
  %81 = vmatprep.subr.bf16.mxu0 0
  %82 = vmatpush2.bf16.msra.mxu0 0
  %83 = vmatprep.subr.bf16.mxu0 0
  %84 = vmatpush2.bf16.msra.mxu0 0
  %85 = vmatprep.subr.bf16.mxu0 0
  %86 = vmatpush2.bf16.msra.mxu0 0
  %87 = vmatprep.subr.bf16.mxu0 0
  %88 = vmatpush2.bf16.msra.mxu0 0
  %89 = vmatprep.subr.bf16.mxu0 0
  %90 = vmatpush2.bf16.msra.mxu0 0
  %91 = vmatprep.mubr.bf16.mxu0 0
  %92 = vmatmul.mubr.bf16.gmra.mxu0 %v57
  %v93 = vpop.f32.mrf.mxu0
  %v94 = vadd.f32 %v29, %v93
  %v95 = vpop.f32.mrf.mxu0
  %v96 = vpop.f32.mrf.mxu0
  %v97 = vpop.f32.mrf.mxu0
  %98 = vdwg.mxu0
  %99 = vst [vmem:[%s3] sm:$0xff] %v94
  // Predicated region
  $region14: #{retinanet_forward.28} parent=0 // pred_check
    _
  $region15: #{retinanet_forward.28} parent=0 // pred_check_branch
    %101 = sbr.rel (0) target = $region17
  $region16: #{retinanet_forward.28} parent=0 // pred_region
    _
  $region17: #{retinanet_forward.28} parent=0 // pred_fallthru
    _
  // Predicated region
  $region18: #{retinanet_forward.28} parent=0 // pred_check
    _
  $region19: #{retinanet_forward.28} parent=0 // pred_check_branch
    %103 = sbr.rel (0) target = $region21
  $region20: #{retinanet_forward.28} parent=0 // pred_region
    _
  $region21: #{retinanet_forward.28} parent=0 // pred_fallthru
    _

// kernel: retinanet_forward.29
$region0: #{retinanet_forward.29}
  #allocation0 [shape = 'u32[]', space=smem, size = 0x4, offset = 0x4, fixed_abs, tag = 'smem constant byte address 0x4 - core index']
  #allocation1 [shape = 'u32[144,128]{1,0:T(1,128)}', space=vmem, size = 0x12000, scoped, tag = 'internal scratch']
  %s0 = inlined_call_operand.vmem [shape: bf16[32,32], index: 0, kind: input, shape index: {}]
  %s1 = inlined_call_operand.vmem [shape: bf16[32,128], index: 1, kind: input, shape index: {}]
  %s2 = inlined_call_operand.vmem [shape: f32[1,128], index: 2, kind: input, shape index: {}]
  %s3 = inlined_call_operand.vmem [shape: f32[32,128], index: 3, kind: input, shape index: {}]
  %s4 = inlined_call_operand.vmem [shape: f32[32,128], index: 4, kind: output, shape index: {}]
  %s5 = sld [smem:[#allocation0]]
  $region26: #{retinanet_forward.29} parent=0
    _
  %s7 = ssub.s32 1, %s5
  %s8 = scalar_select 0, %s7, %s5
  // Predicated region
  $region2: #{retinanet_forward.29} parent=0 // pred_check
    _
  $region3: #{retinanet_forward.29} parent=0 // pred_check_branch
    %10 = sbr.rel (0) target = $region5
  $region4: #{retinanet_forward.29} parent=0 // pred_region
    _
  $region5: #{retinanet_forward.29} parent=0 // pred_fallthru
    _
  // Predicated region
  $region6: #{retinanet_forward.29} parent=0 // pred_check
    _
  $region7: #{retinanet_forward.29} parent=0 // pred_check_branch
    %12 = sbr.rel (0) target = $region9
  $region8: #{retinanet_forward.29} parent=0 // pred_region
    _
  $region9: #{retinanet_forward.29} parent=0 // pred_fallthru
    _
  // Predicated region
  $region10: #{retinanet_forward.29} parent=0 // pred_check
    _
  $region11: #{retinanet_forward.29} parent=0 // pred_check_branch
    %14 = sbr.rel (0) target = $region13
  $region12: #{retinanet_forward.29} parent=0 // pred_region
    _
  $region13: #{retinanet_forward.29} parent=0 // pred_fallthru
    _
  // Predicated region
  $region14: #{retinanet_forward.29} parent=0 // pred_check
    _
  $region15: #{retinanet_forward.29} parent=0 // pred_check_branch
    %16 = sbr.rel (0) target = $region17
  $region16: #{retinanet_forward.29} parent=0 // pred_region
    _
  $region17: #{retinanet_forward.29} parent=0 // pred_fallthru
    _
  %v18 = vld [vmem:[%s0] sm:$0xf]
  %v19 = vld [vmem:[%s0 + $0x4] sm:$0xf]
  %v20 = vld [vmem:[%s0 + $0x8] sm:$0xf]
  %v21 = vld [vmem:[%s0 + $0xc] sm:$0xf]
  %v22 = vld [vmem:[%s1] sm:$0xf]
  %v23 = vld [vmem:[%s1 + $0x4] sm:$0xf]
  %v24 = vld [vmem:[%s1 + $0x8] sm:$0xf]
  %v25 = vld [vmem:[%s1 + $0xc] sm:$0xf]
  %v26 = vld [vmem:[%s2] sm:$0x1]
  %v28 = vlaneseq
  %v29 = vshrl.u32 %v28, 7
  %v30 = vsub.s32 0, %v29
  %v31 = vrot.slane %v26, %v30
  %v37 = vunpack.c.l.b16 %v18
  %v38 = vunpack.c.l.b16 %v19
  %v39 = vunpack.c.l.b16 %v20
  %v40 = vunpack.c.l.b16 %v21
  %v41 = vpack.c.b16 %v38, %v37
  %v42 = vpack.c.b16 %v40, %v39
  %v47 = vunpack.c.l.b16 %v22
  %v48 = vunpack.c.l.b16 %v23
  %v49 = vunpack.c.l.b16 %v24
  %v50 = vunpack.c.l.b16 %v25
  %v51 = vpack.c.b16 %v48, %v47
  %v52 = vpack.c.b16 %v50, %v49
  %vm55 = vcmask 261120
  %v57 = vsel %vm55, %v41, 0
  %v60 = vsel %vm55, %v42, 0
  %62 = vmatprep.subr.bf16.mxu0 0
  %63 = vmatpush1.bf16.msra.mxu0 0
  %64 = vmatprep.subr.bf16.mxu0 0
  %65 = vmatpush1.bf16.msra.mxu0 0
  %66 = vmatprep.subr.bf16.mxu0 0
  %67 = vmatpush1.bf16.msra.mxu0 0
  %68 = vmatprep.subr.bf16.mxu0 0
  %69 = vmatpush1.bf16.msra.mxu0 0
  %70 = vmatprep.subr.bf16.mxu0 0
  %71 = vmatpush1.bf16.msra.mxu0 0
  %72 = vmatprep.subr.bf16.mxu0 0
  %73 = vmatpush1.bf16.msra.mxu0 0
  %74 = vmatprep.subr.bf16.mxu0 0
  %75 = vmatpush1.bf16.msra.mxu0 %v52
  %76 = vmatprep.subr.bf16.mxu0 0
  %77 = vmatpush1.bf16.msra.mxu0 %v51
  %78 = vmatprep.subr.bf16.mxu0 0
  %79 = vmatpush2.bf16.msra.mxu0 0
  %80 = vmatprep.subr.bf16.mxu0 0
  %81 = vmatpush2.bf16.msra.mxu0 0
  %82 = vmatprep.subr.bf16.mxu0 0
  %83 = vmatpush2.bf16.msra.mxu0 0
  %84 = vmatprep.subr.bf16.mxu0 0
  %85 = vmatpush2.bf16.msra.mxu0 0
  %86 = vmatprep.subr.bf16.mxu0 0
  %87 = vmatpush2.bf16.msra.mxu0 0
  %88 = vmatprep.subr.bf16.mxu0 0
  %89 = vmatpush2.bf16.msra.mxu0 0
  %90 = vmatprep.subr.bf16.mxu0 0
  %91 = vmatpush2.bf16.msra.mxu0 0
  %92 = vmatprep.subr.bf16.mxu0 0
  %93 = vmatpush2.bf16.msra.mxu0 0
  %94 = vmatprep.mubr.bf16.mxu0 0
  %95 = vmatmul.mubr.bf16.gmra.mxu0 %v57
  %v96 = vpop.f32.mrf.mxu0
  %v97 = vadd.f32 %v31, %v96
  %v98 = vpop.f32.mrf.mxu0
  %v99 = vpop.f32.mrf.mxu0
  %v100 = vadd.f32 %v31, %v99
  %v101 = vpop.f32.mrf.mxu0
  %102 = vmatprep.mubr.bf16.mxu0 0
  %103 = vmatmul.mubr.bf16.gmra.mxu0 %v60
  %v104 = vpop.f32.mrf.mxu0
  %v105 = vadd.f32 %v31, %v104
  %v106 = vpop.f32.mrf.mxu0
  %v107 = vpop.f32.mrf.mxu0
  %v108 = vadd.f32 %v31, %v107
  %v109 = vpop.f32.mrf.mxu0
  %110 = vdwg.mxu0
  %v111 = vld [vmem:[%s3] sm:$0xff]
  %v112 = vld [vmem:[%s3 + $0x8] sm:$0xff]
  %v113 = vld [vmem:[%s3 + $0x10] sm:$0xff]
  %v114 = vld [vmem:[%s3 + $0x18] sm:$0xff]
  %v115 = vadd.f32 %v97, %v111
  %v116 = vadd.f32 %v100, %v112
  %v117 = vadd.f32 %v105, %v113
  %v118 = vadd.f32 %v108, %v114
  %119 = vst [vmem:[%s4] sm:$0xff] %v115
  %120 = vst [vmem:[%s4 + $0x8] sm:$0xff] %v116
  %121 = vst [vmem:[%s4 + $0x10] sm:$0xff] %v117
  %122 = vst [vmem:[%s4 + $0x18] sm:$0xff] %v118
  // Predicated region
  $region18: #{retinanet_forward.29} parent=0 // pred_check
    _
  $region19: #{retinanet_forward.29} parent=0 // pred_check_branch
    %124 = sbr.rel (0) target = $region21
  $region20: #{retinanet_forward.29} parent=0 // pred_region
    _
  $region21: #{retinanet_forward.29} parent=0 // pred_fallthru
    _
  // Predicated region
  $region22: #{retinanet_forward.29} parent=0 // pred_check
    _
  $region23: #{retinanet_forward.29} parent=0 // pred_check_branch
    %126 = sbr.rel (0) target = $region25
  $region24: #{retinanet_forward.29} parent=0 // pred_region
    _
  $region25: #{retinanet_forward.29} parent=0 // pred_fallthru
    _

// kernel: retinanet_forward.32
$region0: #{retinanet_forward.32}
  #allocation0 [shape = 'u32[]', space=smem, size = 0x4, offset = 0x4, fixed_abs, tag = 'smem constant byte address 0x4 - core index']
  #allocation1 [shape = 'u32[144,128]{1,0:T(1,128)}', space=vmem, size = 0x12000, scoped, tag = 'internal scratch']
  %s0 = inlined_call_operand.vmem [shape: bf16[32,288], index: 0, kind: input, shape index: {}]
  %s1 = inlined_call_operand.vmem [shape: bf16[288,128], index: 1, kind: input, shape index: {}]
  %s2 = inlined_call_operand.vmem [shape: f32[1,128], index: 2, kind: input, shape index: {}]
  %s3 = inlined_call_operand.vmem [shape: f32[32,128], index: 3, kind: output, shape index: {}]
  %s4 = sld [smem:[#allocation0]]
  $region22: #{retinanet_forward.32} parent=0
    _
  %s6 = ssub.s32 1, %s4
  %s7 = scalar_select 0, %s6, %s4
  // Predicated region
  $region2: #{retinanet_forward.32} parent=0 // pred_check
    _
  $region3: #{retinanet_forward.32} parent=0 // pred_check_branch
    %9 = sbr.rel (0) target = $region5
  $region4: #{retinanet_forward.32} parent=0 // pred_region
    _
  $region5: #{retinanet_forward.32} parent=0 // pred_fallthru
    _
  // Predicated region
  $region6: #{retinanet_forward.32} parent=0 // pred_check
    _
  $region7: #{retinanet_forward.32} parent=0 // pred_check_branch
    %11 = sbr.rel (0) target = $region9
  $region8: #{retinanet_forward.32} parent=0 // pred_region
    _
  $region9: #{retinanet_forward.32} parent=0 // pred_fallthru
    _
  // Predicated region
  $region10: #{retinanet_forward.32} parent=0 // pred_check
    _
  $region11: #{retinanet_forward.32} parent=0 // pred_check_branch
    %13 = sbr.rel (0) target = $region13
  $region12: #{retinanet_forward.32} parent=0 // pred_region
    _
  $region13: #{retinanet_forward.32} parent=0 // pred_fallthru
    _
  %v15 = vld [vmem:[%s0] sm:$0xff]
  %v16 = vld [vmem:[%s0 + $0x8] sm:$0xf]
  %v17 = vld [vmem:[%s0 + $0xc] sm:$0xff]
  %v18 = vld [vmem:[%s0 + $0x14] sm:$0xf]
  %v19 = vld [vmem:[%s0 + $0x18] sm:$0xff]
  %v20 = vld [vmem:[%s0 + $0x20] sm:$0xf]
  %v21 = vld [vmem:[%s0 + $0x24] sm:$0xff]
  %v22 = vld [vmem:[%s0 + $0x2c] sm:$0xf]
  %v23 = vld [vmem:[%s1] sm:$0xf]
  %v24 = vld [vmem:[%s1 + $0x4] sm:$0xf]
  %v25 = vld [vmem:[%s1 + $0x8] sm:$0xf]
  %v26 = vld [vmem:[%s1 + $0xc] sm:$0xf]
  %v27 = vld [vmem:[%s1 + $0x10] sm:$0xf]
  %v28 = vld [vmem:[%s1 + $0x14] sm:$0xf]
  %v29 = vld [vmem:[%s1 + $0x18] sm:$0xf]
  %v30 = vld [vmem:[%s1 + $0x1c] sm:$0xf]
  %v31 = vld [vmem:[%s1 + $0x20] sm:$0xf]
  %v32 = vld [vmem:[%s1 + $0x24] sm:$0xf]
  %v33 = vld [vmem:[%s1 + $0x28] sm:$0xf]
  %v34 = vld [vmem:[%s1 + $0x2c] sm:$0xf]
  %v35 = vld [vmem:[%s1 + $0x30] sm:$0xf]
  %v36 = vld [vmem:[%s1 + $0x34] sm:$0xf]
  %v37 = vld [vmem:[%s1 + $0x38] sm:$0xf]
  %v38 = vld [vmem:[%s1 + $0x3c] sm:$0xf]
  %v39 = vld [vmem:[%s1 + $0x40] sm:$0xf]
  %v40 = vld [vmem:[%s1 + $0x44] sm:$0xf]
  %v41 = vld [vmem:[%s1 + $0x48] sm:$0xf]
  %v42 = vld [vmem:[%s1 + $0x4c] sm:$0xf]
  %v43 = vld [vmem:[%s1 + $0x50] sm:$0xf]
  %v44 = vld [vmem:[%s1 + $0x54] sm:$0xf]
  %v45 = vld [vmem:[%s1 + $0x58] sm:$0xf]
  %v46 = vld [vmem:[%s1 + $0x5c] sm:$0xf]
  %v47 = vld [vmem:[%s1 + $0x60] sm:$0xf]
  %v48 = vld [vmem:[%s1 + $0x64] sm:$0xf]
  %v49 = vld [vmem:[%s1 + $0x68] sm:$0xf]
  %v50 = vld [vmem:[%s1 + $0x6c] sm:$0xf]
  %v51 = vld [vmem:[%s1 + $0x70] sm:$0xf]
  %v52 = vld [vmem:[%s1 + $0x74] sm:$0xf]
  %v53 = vld [vmem:[%s1 + $0x78] sm:$0xf]
  %v54 = vld [vmem:[%s1 + $0x7c] sm:$0xf]
  %v55 = vld [vmem:[%s1 + $0x80] sm:$0xf]
  %v56 = vld [vmem:[%s1 + $0x84] sm:$0xf]
  %v57 = vld [vmem:[%s1 + $0x88] sm:$0xf]
  %v58 = vld [vmem:[%s1 + $0x8c] sm:$0xf]
  %v59 = vld [vmem:[%s2] sm:$0x1]
  %v61 = vlaneseq
  %v62 = vshrl.u32 %v61, 7
  %v63 = vsub.s32 0, %v62
  %v64 = vrot.slane %v59, %v63
  %v74 = vunpack.c.l.b16 %v15
  %v75 = vunpack.c.h.b16 %v15
  %v76 = vunpack.c.l.b16 %v16
  %v77 = vunpack.c.l.b16 %v17
  %v78 = vunpack.c.h.b16 %v17
  %v79 = vunpack.c.l.b16 %v18
  %v80 = vunpack.c.l.b16 %v19
  %v81 = vunpack.c.h.b16 %v19
  %v82 = vunpack.c.l.b16 %v20
  %v83 = vunpack.c.l.b16 %v21
  %v84 = vunpack.c.h.b16 %v21
  %v85 = vunpack.c.l.b16 %v22
  %v86 = vpack.c.b16 %v77, %v74
  %v87 = vpack.c.b16 %v78, %v75
  %v88 = vpack.c.b16 %v79, %v76
  %v89 = vpack.c.b16 %v83, %v80
  %v90 = vpack.c.b16 %v84, %v81
  %v91 = vpack.c.b16 %v85, %v82
  %v132 = vunpack.c.l.b16 %v23
  %v133 = vunpack.c.l.b16 %v24
  %v134 = vunpack.c.l.b16 %v25
  %v135 = vunpack.c.l.b16 %v26
  %v136 = vunpack.c.l.b16 %v27
  %v137 = vunpack.c.l.b16 %v28
  %v138 = vunpack.c.l.b16 %v29
  %v139 = vunpack.c.l.b16 %v30
  %v140 = vunpack.c.l.b16 %v31
  %v141 = vunpack.c.l.b16 %v32
  %v142 = vunpack.c.l.b16 %v33
  %v143 = vunpack.c.l.b16 %v34
  %v144 = vunpack.c.l.b16 %v35
  %v145 = vunpack.c.l.b16 %v36
  %v146 = vunpack.c.l.b16 %v37
  %v147 = vunpack.c.l.b16 %v38
  %v148 = vunpack.c.l.b16 %v39
  %v149 = vunpack.c.l.b16 %v40
  %v150 = vunpack.c.l.b16 %v41
  %v151 = vunpack.c.l.b16 %v42
  %v152 = vunpack.c.l.b16 %v43
  %v153 = vunpack.c.l.b16 %v44
  %v154 = vunpack.c.l.b16 %v45
  %v155 = vunpack.c.l.b16 %v46
  %v156 = vunpack.c.l.b16 %v47
  %v157 = vunpack.c.l.b16 %v48
  %v158 = vunpack.c.l.b16 %v49
  %v159 = vunpack.c.l.b16 %v50
  %v160 = vunpack.c.l.b16 %v51
  %v161 = vunpack.c.l.b16 %v52
  %v162 = vunpack.c.l.b16 %v53
  %v163 = vunpack.c.l.b16 %v54
  %v164 = vunpack.c.l.b16 %v55
  %v165 = vunpack.c.l.b16 %v56
  %v166 = vunpack.c.l.b16 %v57
  %v167 = vunpack.c.l.b16 %v58
  %v168 = vpack.c.b16 %v133, %v132
  %v169 = vpack.c.b16 %v135, %v134
  %v170 = vpack.c.b16 %v137, %v136
  %v171 = vpack.c.b16 %v139, %v138
  %v172 = vpack.c.b16 %v141, %v140
  %v173 = vpack.c.b16 %v143, %v142
  %v174 = vpack.c.b16 %v145, %v144
  %v175 = vpack.c.b16 %v147, %v146
  %v176 = vpack.c.b16 %v149, %v148
  %v177 = vpack.c.b16 %v151, %v150
  %v178 = vpack.c.b16 %v153, %v152
  %v179 = vpack.c.b16 %v155, %v154
  %v180 = vpack.c.b16 %v157, %v156
  %v181 = vpack.c.b16 %v159, %v158
  %v182 = vpack.c.b16 %v161, %v160
  %v183 = vpack.c.b16 %v163, %v162
  %v184 = vpack.c.b16 %v165, %v164
  %v185 = vpack.c.b16 %v167, %v166
  %vm204 = vcmask 261120
  %v206 = vsel %vm204, %v88, 0
  %v209 = vsel %vm204, %v91, 0
  %211 = vmatprep.subr.bf16.mxu0 0
  %212 = vmatpush1.bf16.msra.mxu0 %v175
  %213 = vmatprep.subr.bf16.mxu0 0
  %214 = vmatpush1.bf16.msra.mxu0 %v174
  %215 = vmatprep.subr.bf16.mxu0 0
  %216 = vmatpush1.bf16.msra.mxu0 %v173
  %217 = vmatprep.subr.bf16.mxu0 0
  %218 = vmatpush1.bf16.msra.mxu0 %v172
  %219 = vmatprep.subr.bf16.mxu0 0
  %220 = vmatpush1.bf16.msra.mxu0 %v171
  %221 = vmatprep.subr.bf16.mxu0 0
  %222 = vmatpush1.bf16.msra.mxu0 %v170
  %223 = vmatprep.subr.bf16.mxu0 0
  %224 = vmatpush1.bf16.msra.mxu0 %v169
  %225 = vmatprep.subr.bf16.mxu0 0
  %226 = vmatpush1.bf16.msra.mxu0 %v168
  %227 = vmatprep.subr.bf16.mxu0 0
  %228 = vmatpush2.bf16.msra.mxu0 %v183
  %229 = vmatprep.subr.bf16.mxu0 0
  %230 = vmatpush2.bf16.msra.mxu0 %v182
  %231 = vmatprep.subr.bf16.mxu0 0
  %232 = vmatpush2.bf16.msra.mxu0 %v181
  %233 = vmatprep.subr.bf16.mxu0 0
  %234 = vmatpush2.bf16.msra.mxu0 %v180
  %235 = vmatprep.subr.bf16.mxu0 0
  %236 = vmatpush2.bf16.msra.mxu0 %v179
  %237 = vmatprep.subr.bf16.mxu0 0
  %238 = vmatpush2.bf16.msra.mxu0 %v178
  %239 = vmatprep.subr.bf16.mxu0 0
  %240 = vmatpush2.bf16.msra.mxu0 %v177
  %241 = vmatprep.subr.bf16.mxu0 0
  %242 = vmatpush2.bf16.msra.mxu0 %v176
  %243 = vmatprep.mubr.bf16.mxu0 %v87
  %244 = vmatmul.mubr.bf16.gmra.mxu0 %v86
  %v245 = vpop.f32.mrf.mxu0
  %v246 = vadd.f32 %v64, %v245
  %v247 = vpop.f32.mrf.mxu0
  %v248 = vpop.f32.mrf.mxu0
  %v249 = vadd.f32 %v64, %v248
  %v250 = vpop.f32.mrf.mxu0
  %251 = vmatprep.mubr.bf16.mxu0 %v90
  %252 = vmatmul.mubr.bf16.gmra.mxu0 %v89
  %v253 = vpop.f32.mrf.mxu0
  %v254 = vadd.f32 %v64, %v253
  %v255 = vpop.f32.mrf.mxu0
  %v256 = vpop.f32.mrf.mxu0
  %v257 = vadd.f32 %v64, %v256
  %v258 = vpop.f32.mrf.mxu0
  %259 = vdwg.mxu0
  %260 = vmatprep.subr.bf16.mxu0 0
  %261 = vmatpush1.bf16.msra.mxu0 0
  %262 = vmatprep.subr.bf16.mxu0 0
  %263 = vmatpush1.bf16.msra.mxu0 0
  %264 = vmatprep.subr.bf16.mxu0 0
  %265 = vmatpush1.bf16.msra.mxu0 0
  %266 = vmatprep.subr.bf16.mxu0 0
  %267 = vmatpush1.bf16.msra.mxu0 0
  %268 = vmatprep.subr.bf16.mxu0 0
  %269 = vmatpush1.bf16.msra.mxu0 0
  %270 = vmatprep.subr.bf16.mxu0 0
  %271 = vmatpush1.bf16.msra.mxu0 0
  %272 = vmatprep.subr.bf16.mxu0 0
  %273 = vmatpush1.bf16.msra.mxu0 %v185
  %274 = vmatprep.subr.bf16.mxu0 0
  %275 = vmatpush1.bf16.msra.mxu0 %v184
  %276 = vmatprep.subr.bf16.mxu0 0
  %277 = vmatpush2.bf16.msra.mxu0 0
  %278 = vmatprep.subr.bf16.mxu0 0
  %279 = vmatpush2.bf16.msra.mxu0 0
  %280 = vmatprep.subr.bf16.mxu0 0
  %281 = vmatpush2.bf16.msra.mxu0 0
  %282 = vmatprep.subr.bf16.mxu0 0
  %283 = vmatpush2.bf16.msra.mxu0 0
  %284 = vmatprep.subr.bf16.mxu0 0
  %285 = vmatpush2.bf16.msra.mxu0 0
  %286 = vmatprep.subr.bf16.mxu0 0
  %287 = vmatpush2.bf16.msra.mxu0 0
  %288 = vmatprep.subr.bf16.mxu0 0
  %289 = vmatpush2.bf16.msra.mxu0 0
  %290 = vmatprep.subr.bf16.mxu0 0
  %291 = vmatpush2.bf16.msra.mxu0 0
  %292 = vmatprep.mubr.bf16.mxu0 0
  %293 = vmatmul.mubr.bf16.gmra.mxu0 %v206
  %v294 = vpop.f32.mrf.mxu0
  %v295 = vadd.f32 %v246, %v294
  %v296 = vpop.f32.mrf.mxu0
  %v297 = vpop.f32.mrf.mxu0
  %v298 = vadd.f32 %v249, %v297
  %v299 = vpop.f32.mrf.mxu0
  %300 = vmatprep.mubr.bf16.mxu0 0
  %301 = vmatmul.mubr.bf16.gmra.mxu0 %v209
  %v302 = vpop.f32.mrf.mxu0
  %v303 = vadd.f32 %v254, %v302
  %v304 = vpop.f32.mrf.mxu0
  %v305 = vpop.f32.mrf.mxu0
  %v306 = vadd.f32 %v257, %v305
  %v307 = vpop.f32.mrf.mxu0
  %308 = vdwg.mxu0
  %309 = vst [vmem:[%s3] sm:$0xff] %v295
  %310 = vst [vmem:[%s3 + $0x8] sm:$0xff] %v298
  %311 = vst [vmem:[%s3 + $0x10] sm:$0xff] %v303
  %312 = vst [vmem:[%s3 + $0x18] sm:$0xff] %v306
  // Predicated region
  $region14: #{retinanet_forward.32} parent=0 // pred_check
    _
  $region15: #{retinanet_forward.32} parent=0 // pred_check_branch
    %314 = sbr.rel (0) target = $region17
  $region16: #{retinanet_forward.32} parent=0 // pred_region
    _
  $region17: #{retinanet_forward.32} parent=0 // pred_fallthru
    _
  // Predicated region
  $region18: #{retinanet_forward.32} parent=0 // pred_check
    _
  $region19: #{retinanet_forward.32} parent=0 // pred_check_branch
    %316 = sbr.rel (0) target = $region21
  $region20: #{retinanet_forward.32} parent=0 // pred_region
    _
  $region21: #{retinanet_forward.32} parent=0 // pred_fallthru
    _

// kernel: retinanet_forward.30
$region0: #{retinanet_forward.30}
  #allocation0 [shape = 'u32[]', space=smem, size = 0x4, offset = 0x4, fixed_abs, tag = 'smem constant byte address 0x4 - core index']
  #allocation1 [shape = 'u32[144,128]{1,0:T(1,128)}', space=vmem, size = 0x12000, scoped, tag = 'internal scratch']
  %s0 = inlined_call_operand.vmem [shape: bf16[128,16], index: 0, kind: input, shape index: {}]
  %s1 = inlined_call_operand.vmem [shape: bf16[16,128], index: 1, kind: input, shape index: {}]
  %s2 = inlined_call_operand.vmem [shape: f32[1,128], index: 2, kind: input, shape index: {}]
  %s3 = inlined_call_operand.vmem [shape: f32[128,128], index: 3, kind: input, shape index: {}]
  %s4 = inlined_call_operand.vmem [shape: f32[128,128], index: 4, kind: output, shape index: {}]
  %s5 = sld [smem:[#allocation0]]
  $region26: #{retinanet_forward.30} parent=0
    _
  %s7 = ssub.s32 1, %s5
  %s8 = scalar_select 0, %s7, %s5
  // Predicated region
  $region2: #{retinanet_forward.30} parent=0 // pred_check
    _
  $region3: #{retinanet_forward.30} parent=0 // pred_check_branch
    %10 = sbr.rel (0) target = $region5
  $region4: #{retinanet_forward.30} parent=0 // pred_region
    _
  $region5: #{retinanet_forward.30} parent=0 // pred_fallthru
    _
  // Predicated region
  $region6: #{retinanet_forward.30} parent=0 // pred_check
    _
  $region7: #{retinanet_forward.30} parent=0 // pred_check_branch
    %12 = sbr.rel (0) target = $region9
  $region8: #{retinanet_forward.30} parent=0 // pred_region
    _
  $region9: #{retinanet_forward.30} parent=0 // pred_fallthru
    _
  // Predicated region
  $region10: #{retinanet_forward.30} parent=0 // pred_check
    _
  $region11: #{retinanet_forward.30} parent=0 // pred_check_branch
    %14 = sbr.rel (0) target = $region13
  $region12: #{retinanet_forward.30} parent=0 // pred_region
    _
  $region13: #{retinanet_forward.30} parent=0 // pred_fallthru
    _
  // Predicated region
  $region14: #{retinanet_forward.30} parent=0 // pred_check
    _
  $region15: #{retinanet_forward.30} parent=0 // pred_check_branch
    %16 = sbr.rel (0) target = $region17
  $region16: #{retinanet_forward.30} parent=0 // pred_region
    _
  $region17: #{retinanet_forward.30} parent=0 // pred_fallthru
    _
  %v18 = vld [vmem:[%s0] sm:$0xf]
  %v19 = vld [vmem:[%s0 + $0x4] sm:$0xf]
  %v20 = vld [vmem:[%s0 + $0x8] sm:$0xf]
  %v21 = vld [vmem:[%s0 + $0xc] sm:$0xf]
  %v22 = vld [vmem:[%s0 + $0x10] sm:$0xf]
  %v23 = vld [vmem:[%s0 + $0x14] sm:$0xf]
  %v24 = vld [vmem:[%s0 + $0x18] sm:$0xf]
  %v25 = vld [vmem:[%s0 + $0x1c] sm:$0xf]
  %v26 = vld [vmem:[%s0 + $0x20] sm:$0xf]
  %v27 = vld [vmem:[%s0 + $0x24] sm:$0xf]
  %v28 = vld [vmem:[%s0 + $0x28] sm:$0xf]
  %v29 = vld [vmem:[%s0 + $0x2c] sm:$0xf]
  %v30 = vld [vmem:[%s0 + $0x30] sm:$0xf]
  %v31 = vld [vmem:[%s0 + $0x34] sm:$0xf]
  %v32 = vld [vmem:[%s0 + $0x38] sm:$0xf]
  %v33 = vld [vmem:[%s0 + $0x3c] sm:$0xf]
  %v34 = vld [vmem:[%s1] sm:$0xf]
  %v35 = vld [vmem:[%s1 + $0x4] sm:$0xf]
  %v36 = vld [vmem:[%s2] sm:$0x1]
  %v38 = vlaneseq
  %v39 = vshrl.u32 %v38, 7
  %v40 = vsub.s32 0, %v39
  %v41 = vrot.slane %v36, %v40
  %v59 = vunpack.c.l.b16 %v18
  %v60 = vunpack.c.l.b16 %v19
  %v61 = vunpack.c.l.b16 %v20
  %v62 = vunpack.c.l.b16 %v21
  %v63 = vunpack.c.l.b16 %v22
  %v64 = vunpack.c.l.b16 %v23
  %v65 = vunpack.c.l.b16 %v24
  %v66 = vunpack.c.l.b16 %v25
  %v67 = vunpack.c.l.b16 %v26
  %v68 = vunpack.c.l.b16 %v27
  %v69 = vunpack.c.l.b16 %v28
  %v70 = vunpack.c.l.b16 %v29
  %v71 = vunpack.c.l.b16 %v30
  %v72 = vunpack.c.l.b16 %v31
  %v73 = vunpack.c.l.b16 %v32
  %v74 = vunpack.c.l.b16 %v33
  %v75 = vpack.c.b16 %v60, %v59
  %v76 = vpack.c.b16 %v62, %v61
  %v77 = vpack.c.b16 %v64, %v63
  %v78 = vpack.c.b16 %v66, %v65
  %v79 = vpack.c.b16 %v68, %v67
  %v80 = vpack.c.b16 %v70, %v69
  %v81 = vpack.c.b16 %v72, %v71
  %v82 = vpack.c.b16 %v74, %v73
  %v85 = vunpack.c.l.b16 %v34
  %v86 = vunpack.c.l.b16 %v35
  %v87 = vpack.c.b16 %v86, %v85
  %vm89 = vcmask 130048
  %v91 = vsel %vm89, %v75, 0
  %v94 = vsel %vm89, %v76, 0
  %v97 = vsel %vm89, %v77, 0
  %v100 = vsel %vm89, %v78, 0
  %v103 = vsel %vm89, %v79, 0
  %v106 = vsel %vm89, %v80, 0
  %v109 = vsel %vm89, %v81, 0
  %v112 = vsel %vm89, %v82, 0
  %114 = vmatprep.subr.bf16.mxu0 0
  %115 = vmatpush1.bf16.msra.mxu0 0
  %116 = vmatprep.subr.bf16.mxu0 0
  %117 = vmatpush1.bf16.msra.mxu0 0
  %118 = vmatprep.subr.bf16.mxu0 0
  %119 = vmatpush1.bf16.msra.mxu0 0
  %120 = vmatprep.subr.bf16.mxu0 0
  %121 = vmatpush1.bf16.msra.mxu0 0
  %122 = vmatprep.subr.bf16.mxu0 0
  %123 = vmatpush1.bf16.msra.mxu0 0
  %124 = vmatprep.subr.bf16.mxu0 0
  %125 = vmatpush1.bf16.msra.mxu0 0
  %126 = vmatprep.subr.bf16.mxu0 0
  %127 = vmatpush1.bf16.msra.mxu0 0
  %128 = vmatprep.subr.bf16.mxu0 0
  %129 = vmatpush1.bf16.msra.mxu0 %v87
  %130 = vmatprep.subr.bf16.mxu0 0
  %131 = vmatpush2.bf16.msra.mxu0 0
  %132 = vmatprep.subr.bf16.mxu0 0
  %133 = vmatpush2.bf16.msra.mxu0 0
  %134 = vmatprep.subr.bf16.mxu0 0
  %135 = vmatpush2.bf16.msra.mxu0 0
  %136 = vmatprep.subr.bf16.mxu0 0
  %137 = vmatpush2.bf16.msra.mxu0 0
  %138 = vmatprep.subr.bf16.mxu0 0
  %139 = vmatpush2.bf16.msra.mxu0 0
  %140 = vmatprep.subr.bf16.mxu0 0
  %141 = vmatpush2.bf16.msra.mxu0 0
  %142 = vmatprep.subr.bf16.mxu0 0
  %143 = vmatpush2.bf16.msra.mxu0 0
  %144 = vmatprep.subr.bf16.mxu0 0
  %145 = vmatpush2.bf16.msra.mxu0 0
  %146 = vmatprep.mubr.bf16.mxu0 0
  %147 = vmatmul.mubr.bf16.gmra.mxu0 %v91
  %v148 = vpop.f32.mrf.mxu0
  %v149 = vadd.f32 %v41, %v148
  %v150 = vpop.f32.mrf.mxu0
  %v151 = vpop.f32.mrf.mxu0
  %v152 = vadd.f32 %v41, %v151
  %v153 = vpop.f32.mrf.mxu0
  %154 = vmatprep.mubr.bf16.mxu0 0
  %155 = vmatmul.mubr.bf16.gmra.mxu0 %v94
  %v156 = vpop.f32.mrf.mxu0
  %v157 = vadd.f32 %v41, %v156
  %v158 = vpop.f32.mrf.mxu0
  %v159 = vpop.f32.mrf.mxu0
  %v160 = vadd.f32 %v41, %v159
  %v161 = vpop.f32.mrf.mxu0
  %162 = vmatprep.mubr.bf16.mxu0 0
  %163 = vmatmul.mubr.bf16.gmra.mxu0 %v97
  %v164 = vpop.f32.mrf.mxu0
  %v165 = vadd.f32 %v41, %v164
  %v166 = vpop.f32.mrf.mxu0
  %v167 = vpop.f32.mrf.mxu0
  %v168 = vadd.f32 %v41, %v167
  %v169 = vpop.f32.mrf.mxu0
  %170 = vmatprep.mubr.bf16.mxu0 0
  %171 = vmatmul.mubr.bf16.gmra.mxu0 %v100
  %v172 = vpop.f32.mrf.mxu0
  %v173 = vadd.f32 %v41, %v172
  %v174 = vpop.f32.mrf.mxu0
  %v175 = vpop.f32.mrf.mxu0
  %v176 = vadd.f32 %v41, %v175
  %v177 = vpop.f32.mrf.mxu0
  %178 = vmatprep.mubr.bf16.mxu0 0
  %179 = vmatmul.mubr.bf16.gmra.mxu0 %v103
  %v180 = vpop.f32.mrf.mxu0
  %v181 = vadd.f32 %v41, %v180
  %v182 = vpop.f32.mrf.mxu0
  %v183 = vpop.f32.mrf.mxu0
  %v184 = vadd.f32 %v41, %v183
  %v185 = vpop.f32.mrf.mxu0
  %186 = vmatprep.mubr.bf16.mxu0 0
  %187 = vmatmul.mubr.bf16.gmra.mxu0 %v106
  %v188 = vpop.f32.mrf.mxu0
  %v189 = vadd.f32 %v41, %v188
  %v190 = vpop.f32.mrf.mxu0
  %v191 = vpop.f32.mrf.mxu0
  %v192 = vadd.f32 %v41, %v191
  %v193 = vpop.f32.mrf.mxu0
  %194 = vmatprep.mubr.bf16.mxu0 0
  %195 = vmatmul.mubr.bf16.gmra.mxu0 %v109
  %v196 = vpop.f32.mrf.mxu0
  %v197 = vadd.f32 %v41, %v196
  %v198 = vpop.f32.mrf.mxu0
  %v199 = vpop.f32.mrf.mxu0
  %v200 = vadd.f32 %v41, %v199
  %v201 = vpop.f32.mrf.mxu0
  %202 = vmatprep.mubr.bf16.mxu0 0
  %203 = vmatmul.mubr.bf16.gmra.mxu0 %v112
  %v204 = vpop.f32.mrf.mxu0
  %v205 = vadd.f32 %v41, %v204
  %v206 = vpop.f32.mrf.mxu0
  %v207 = vpop.f32.mrf.mxu0
  %v208 = vadd.f32 %v41, %v207
  %v209 = vpop.f32.mrf.mxu0
  %210 = vdwg.mxu0
  %v211 = vld [vmem:[%s3] sm:$0xff]
  %v212 = vld [vmem:[%s3 + $0x8] sm:$0xff]
  %v213 = vld [vmem:[%s3 + $0x10] sm:$0xff]
  %v214 = vld [vmem:[%s3 + $0x18] sm:$0xff]
  %v215 = vld [vmem:[%s3 + $0x20] sm:$0xff]
  %v216 = vld [vmem:[%s3 + $0x28] sm:$0xff]
  %v217 = vld [vmem:[%s3 + $0x30] sm:$0xff]
  %v218 = vld [vmem:[%s3 + $0x38] sm:$0xff]
  %v219 = vld [vmem:[%s3 + $0x40] sm:$0xff]
  %v220 = vld [vmem:[%s3 + $0x48] sm:$0xff]
  %v221 = vld [vmem:[%s3 + $0x50] sm:$0xff]
  %v222 = vld [vmem:[%s3 + $0x58] sm:$0xff]
  %v223 = vld [vmem:[%s3 + $0x60] sm:$0xff]
  %v224 = vld [vmem:[%s3 + $0x68] sm:$0xff]
  %v225 = vld [vmem:[%s3 + $0x70] sm:$0xff]
  %v226 = vld [vmem:[%s3 + $0x78] sm:$0xff]
  %v227 = vadd.f32 %v149, %v211
  %v228 = vadd.f32 %v152, %v212
  %v229 = vadd.f32 %v157, %v213
  %v230 = vadd.f32 %v160, %v214
  %v231 = vadd.f32 %v165, %v215
  %v232 = vadd.f32 %v168, %v216
  %v233 = vadd.f32 %v173, %v217
  %v234 = vadd.f32 %v176, %v218
  %v235 = vadd.f32 %v181, %v219
  %v236 = vadd.f32 %v184, %v220
  %v237 = vadd.f32 %v189, %v221
  %v238 = vadd.f32 %v192, %v222
  %v239 = vadd.f32 %v197, %v223
  %v240 = vadd.f32 %v200, %v224
  %v241 = vadd.f32 %v205, %v225
  %v242 = vadd.f32 %v208, %v226
  %243 = vst [vmem:[%s4] sm:$0xff] %v227
  %244 = vst [vmem:[%s4 + $0x8] sm:$0xff] %v228
  %245 = vst [vmem:[%s4 + $0x10] sm:$0xff] %v229
  %246 = vst [vmem:[%s4 + $0x18] sm:$0xff] %v230
  %247 = vst [vmem:[%s4 + $0x20] sm:$0xff] %v231
  %248 = vst [vmem:[%s4 + $0x28] sm:$0xff] %v232
  %249 = vst [vmem:[%s4 + $0x30] sm:$0xff] %v233
  %250 = vst [vmem:[%s4 + $0x38] sm:$0xff] %v234
  %251 = vst [vmem:[%s4 + $0x40] sm:$0xff] %v235
  %252 = vst [vmem:[%s4 + $0x48] sm:$0xff] %v236
  %253 = vst [vmem:[%s4 + $0x50] sm:$0xff] %v237
  %254 = vst [vmem:[%s4 + $0x58] sm:$0xff] %v238
  %255 = vst [vmem:[%s4 + $0x60] sm:$0xff] %v239
  %256 = vst [vmem:[%s4 + $0x68] sm:$0xff] %v240
  %257 = vst [vmem:[%s4 + $0x70] sm:$0xff] %v241
  %258 = vst [vmem:[%s4 + $0x78] sm:$0xff] %v242
  // Predicated region
  $region18: #{retinanet_forward.30} parent=0 // pred_check
    _
  $region19: #{retinanet_forward.30} parent=0 // pred_check_branch
    %260 = sbr.rel (0) target = $region21
  $region20: #{retinanet_forward.30} parent=0 // pred_region
    _
  $region21: #{retinanet_forward.30} parent=0 // pred_fallthru
    _
  // Predicated region
  $region22: #{retinanet_forward.30} parent=0 // pred_check
    _
  $region23: #{retinanet_forward.30} parent=0 // pred_check_branch
    %262 = sbr.rel (0) target = $region25
  $region24: #{retinanet_forward.30} parent=0 // pred_region
    _
  $region25: #{retinanet_forward.30} parent=0 // pred_fallthru
    _

// kernel: retinanet_forward.31
$region0: #{retinanet_forward.31}
  #allocation0 [shape = 'u32[]', space=smem, size = 0x4, offset = 0x4, fixed_abs, tag = 'smem constant byte address 0x4 - core index']
  #allocation1 [shape = 'u32[144,128]{1,0:T(1,128)}', space=vmem, size = 0x12000, scoped, tag = 'internal scratch']
  %s0 = inlined_call_operand.vmem [shape: bf16[128,288], index: 0, kind: input, shape index: {}]
  %s1 = inlined_call_operand.vmem [shape: bf16[288,128], index: 1, kind: input, shape index: {}]
  %s2 = inlined_call_operand.vmem [shape: f32[1,128], index: 2, kind: input, shape index: {}]
  %s3 = inlined_call_operand.vmem [shape: f32[128,128], index: 3, kind: output, shape index: {}]
  %s4 = sld [smem:[#allocation0]]
  $region22: #{retinanet_forward.31} parent=0
    _
  %s6 = ssub.s32 1, %s4
  %s7 = scalar_select 0, %s6, %s4
  // Predicated region
  $region2: #{retinanet_forward.31} parent=0 // pred_check
    _
  $region3: #{retinanet_forward.31} parent=0 // pred_check_branch
    %9 = sbr.rel (0) target = $region5
  $region4: #{retinanet_forward.31} parent=0 // pred_region
    _
  $region5: #{retinanet_forward.31} parent=0 // pred_fallthru
    _
  // Predicated region
  $region6: #{retinanet_forward.31} parent=0 // pred_check
    _
  $region7: #{retinanet_forward.31} parent=0 // pred_check_branch
    %11 = sbr.rel (0) target = $region9
  $region8: #{retinanet_forward.31} parent=0 // pred_region
    _
  $region9: #{retinanet_forward.31} parent=0 // pred_fallthru
    _
  // Predicated region
  $region10: #{retinanet_forward.31} parent=0 // pred_check
    _
  $region11: #{retinanet_forward.31} parent=0 // pred_check_branch
    %13 = sbr.rel (0) target = $region13
  $region12: #{retinanet_forward.31} parent=0 // pred_region
    _
  $region13: #{retinanet_forward.31} parent=0 // pred_fallthru
    _
  %v15 = vld [vmem:[%s0] sm:$0xff]
  %v16 = vld [vmem:[%s0 + $0x8] sm:$0xf]
  %v17 = vld [vmem:[%s0 + $0xc] sm:$0xff]
  %v18 = vld [vmem:[%s0 + $0x14] sm:$0xf]
  %v19 = vld [vmem:[%s0 + $0x18] sm:$0xff]
  %v20 = vld [vmem:[%s0 + $0x20] sm:$0xf]
  %v21 = vld [vmem:[%s0 + $0x24] sm:$0xff]
  %v22 = vld [vmem:[%s0 + $0x2c] sm:$0xf]
  %v23 = vld [vmem:[%s0 + $0x30] sm:$0xff]
  %v24 = vld [vmem:[%s0 + $0x38] sm:$0xf]
  %v25 = vld [vmem:[%s0 + $0x3c] sm:$0xff]
  %v26 = vld [vmem:[%s0 + $0x44] sm:$0xf]
  %v27 = vld [vmem:[%s0 + $0x48] sm:$0xff]
  %v28 = vld [vmem:[%s0 + $0x50] sm:$0xf]
  %v29 = vld [vmem:[%s0 + $0x54] sm:$0xff]
  %v30 = vld [vmem:[%s0 + $0x5c] sm:$0xf]
  %v31 = vld [vmem:[%s0 + $0x60] sm:$0xff]
  %v32 = vld [vmem:[%s0 + $0x68] sm:$0xf]
  %v33 = vld [vmem:[%s0 + $0x6c] sm:$0xff]
  %v34 = vld [vmem:[%s0 + $0x74] sm:$0xf]
  %v35 = vld [vmem:[%s0 + $0x78] sm:$0xff]
  %v36 = vld [vmem:[%s0 + $0x80] sm:$0xf]
  %v37 = vld [vmem:[%s0 + $0x84] sm:$0xff]
  %v38 = vld [vmem:[%s0 + $0x8c] sm:$0xf]
  %v39 = vld [vmem:[%s0 + $0x90] sm:$0xff]
  %v40 = vld [vmem:[%s0 + $0x98] sm:$0xf]
  %v41 = vld [vmem:[%s0 + $0x9c] sm:$0xff]
  %v42 = vld [vmem:[%s0 + $0xa4] sm:$0xf]
  %v43 = vld [vmem:[%s0 + $0xa8] sm:$0xff]
  %v44 = vld [vmem:[%s0 + $0xb0] sm:$0xf]
  %v45 = vld [vmem:[%s0 + $0xb4] sm:$0xff]
  %v46 = vld [vmem:[%s0 + $0xbc] sm:$0xf]
  %v47 = vld [vmem:[%s1] sm:$0xf]
  %v48 = vld [vmem:[%s1 + $0x4] sm:$0xf]
  %v49 = vld [vmem:[%s1 + $0x8] sm:$0xf]
  %v50 = vld [vmem:[%s1 + $0xc] sm:$0xf]
  %v51 = vld [vmem:[%s1 + $0x10] sm:$0xf]
  %v52 = vld [vmem:[%s1 + $0x14] sm:$0xf]
  %v53 = vld [vmem:[%s1 + $0x18] sm:$0xf]
  %v54 = vld [vmem:[%s1 + $0x1c] sm:$0xf]
  %v55 = vld [vmem:[%s1 + $0x20] sm:$0xf]
  %v56 = vld [vmem:[%s1 + $0x24] sm:$0xf]
  %v57 = vld [vmem:[%s1 + $0x28] sm:$0xf]
  %v58 = vld [vmem:[%s1 + $0x2c] sm:$0xf]
  %v59 = vld [vmem:[%s1 + $0x30] sm:$0xf]
  %v60 = vld [vmem:[%s1 + $0x34] sm:$0xf]
  %v61 = vld [vmem:[%s1 + $0x38] sm:$0xf]
  %v62 = vld [vmem:[%s1 + $0x3c] sm:$0xf]
  %v63 = vld [vmem:[%s1 + $0x40] sm:$0xf]
  %v64 = vld [vmem:[%s1 + $0x44] sm:$0xf]
  %v65 = vld [vmem:[%s1 + $0x48] sm:$0xf]
  %v66 = vld [vmem:[%s1 + $0x4c] sm:$0xf]
  %v67 = vld [vmem:[%s1 + $0x50] sm:$0xf]
  %v68 = vld [vmem:[%s1 + $0x54] sm:$0xf]
  %v69 = vld [vmem:[%s1 + $0x58] sm:$0xf]
  %v70 = vld [vmem:[%s1 + $0x5c] sm:$0xf]
  %v71 = vld [vmem:[%s1 + $0x60] sm:$0xf]
  %v72 = vld [vmem:[%s1 + $0x64] sm:$0xf]
  %v73 = vld [vmem:[%s1 + $0x68] sm:$0xf]
  %v74 = vld [vmem:[%s1 + $0x6c] sm:$0xf]
  %v75 = vld [vmem:[%s1 + $0x70] sm:$0xf]
  %v76 = vld [vmem:[%s1 + $0x74] sm:$0xf]
  %v77 = vld [vmem:[%s1 + $0x78] sm:$0xf]
  %v78 = vld [vmem:[%s1 + $0x7c] sm:$0xf]
  %v79 = vld [vmem:[%s1 + $0x80] sm:$0xf]
  %v80 = vld [vmem:[%s1 + $0x84] sm:$0xf]
  %v81 = vld [vmem:[%s1 + $0x88] sm:$0xf]
  %v82 = vld [vmem:[%s1 + $0x8c] sm:$0xf]
  %v83 = vld [vmem:[%s2] sm:$0x1]
  %v85 = vlaneseq
  %v86 = vshrl.u32 %v85, 7
  %v87 = vsub.s32 0, %v86
  %v88 = vrot.slane %v83, %v87
  %v122 = vunpack.c.l.b16 %v15
  %v123 = vunpack.c.h.b16 %v15
  %v124 = vunpack.c.l.b16 %v16
  %v125 = vunpack.c.l.b16 %v17
  %v126 = vunpack.c.h.b16 %v17
  %v127 = vunpack.c.l.b16 %v18
  %v128 = vunpack.c.l.b16 %v19
  %v129 = vunpack.c.h.b16 %v19
  %v130 = vunpack.c.l.b16 %v20
  %v131 = vunpack.c.l.b16 %v21
  %v132 = vunpack.c.h.b16 %v21
  %v133 = vunpack.c.l.b16 %v22
  %v134 = vunpack.c.l.b16 %v23
  %v135 = vunpack.c.h.b16 %v23
  %v136 = vunpack.c.l.b16 %v24
  %v137 = vunpack.c.l.b16 %v25
  %v138 = vunpack.c.h.b16 %v25
  %v139 = vunpack.c.l.b16 %v26
  %v140 = vunpack.c.l.b16 %v27
  %v141 = vunpack.c.h.b16 %v27
  %v142 = vunpack.c.l.b16 %v28
  %v143 = vunpack.c.l.b16 %v29
  %v144 = vunpack.c.h.b16 %v29
  %v145 = vunpack.c.l.b16 %v30
  %v146 = vunpack.c.l.b16 %v31
  %v147 = vunpack.c.h.b16 %v31
  %v148 = vunpack.c.l.b16 %v32
  %v149 = vunpack.c.l.b16 %v33
  %v150 = vunpack.c.h.b16 %v33
  %v151 = vunpack.c.l.b16 %v34
  %v152 = vunpack.c.l.b16 %v35
  %v153 = vunpack.c.h.b16 %v35
  %v154 = vunpack.c.l.b16 %v36
  %v155 = vunpack.c.l.b16 %v37
  %v156 = vunpack.c.h.b16 %v37
  %v157 = vunpack.c.l.b16 %v38
  %v158 = vunpack.c.l.b16 %v39
  %v159 = vunpack.c.h.b16 %v39
  %v160 = vunpack.c.l.b16 %v40
  %v161 = vunpack.c.l.b16 %v41
  %v162 = vunpack.c.h.b16 %v41
  %v163 = vunpack.c.l.b16 %v42
  %v164 = vunpack.c.l.b16 %v43
  %v165 = vunpack.c.h.b16 %v43
  %v166 = vunpack.c.l.b16 %v44
  %v167 = vunpack.c.l.b16 %v45
  %v168 = vunpack.c.h.b16 %v45
  %v169 = vunpack.c.l.b16 %v46
  %v170 = vpack.c.b16 %v125, %v122
  %v171 = vpack.c.b16 %v126, %v123
  %v172 = vpack.c.b16 %v127, %v124
  %v173 = vpack.c.b16 %v131, %v128
  %v174 = vpack.c.b16 %v132, %v129
  %v175 = vpack.c.b16 %v133, %v130
  %v176 = vpack.c.b16 %v137, %v134
  %v177 = vpack.c.b16 %v138, %v135
  %v178 = vpack.c.b16 %v139, %v136
  %v179 = vpack.c.b16 %v143, %v140
  %v180 = vpack.c.b16 %v144, %v141
  %v181 = vpack.c.b16 %v145, %v142
  %v182 = vpack.c.b16 %v149, %v146
  %v183 = vpack.c.b16 %v150, %v147
  %v184 = vpack.c.b16 %v151, %v148
  %v185 = vpack.c.b16 %v155, %v152
  %v186 = vpack.c.b16 %v156, %v153
  %v187 = vpack.c.b16 %v157, %v154
  %v188 = vpack.c.b16 %v161, %v158
  %v189 = vpack.c.b16 %v162, %v159
  %v190 = vpack.c.b16 %v163, %v160
  %v191 = vpack.c.b16 %v167, %v164
  %v192 = vpack.c.b16 %v168, %v165
  %v193 = vpack.c.b16 %v169, %v166
  %v246 = vunpack.c.l.b16 %v47
  %v247 = vunpack.c.l.b16 %v48
  %v248 = vunpack.c.l.b16 %v49
  %v249 = vunpack.c.l.b16 %v50
  %v250 = vunpack.c.l.b16 %v51
  %v251 = vunpack.c.l.b16 %v52
  %v252 = vunpack.c.l.b16 %v53
  %v253 = vunpack.c.l.b16 %v54
  %v254 = vunpack.c.l.b16 %v55
  %v255 = vunpack.c.l.b16 %v56
  %v256 = vunpack.c.l.b16 %v57
  %v257 = vunpack.c.l.b16 %v58
  %v258 = vunpack.c.l.b16 %v59
  %v259 = vunpack.c.l.b16 %v60
  %v260 = vunpack.c.l.b16 %v61
  %v261 = vunpack.c.l.b16 %v62
  %v262 = vunpack.c.l.b16 %v63
  %v263 = vunpack.c.l.b16 %v64
  %v264 = vunpack.c.l.b16 %v65
  %v265 = vunpack.c.l.b16 %v66
  %v266 = vunpack.c.l.b16 %v67
  %v267 = vunpack.c.l.b16 %v68
  %v268 = vunpack.c.l.b16 %v69
  %v269 = vunpack.c.l.b16 %v70
  %v270 = vunpack.c.l.b16 %v71
  %v271 = vunpack.c.l.b16 %v72
  %v272 = vunpack.c.l.b16 %v73
  %v273 = vunpack.c.l.b16 %v74
  %v274 = vunpack.c.l.b16 %v75
  %v275 = vunpack.c.l.b16 %v76
  %v276 = vunpack.c.l.b16 %v77
  %v277 = vunpack.c.l.b16 %v78
  %v278 = vunpack.c.l.b16 %v79
  %v279 = vunpack.c.l.b16 %v80
  %v280 = vunpack.c.l.b16 %v81
  %v281 = vunpack.c.l.b16 %v82
  %v282 = vpack.c.b16 %v247, %v246
  %v283 = vpack.c.b16 %v249, %v248
  %v284 = vpack.c.b16 %v251, %v250
  %v285 = vpack.c.b16 %v253, %v252
  %v286 = vpack.c.b16 %v255, %v254
  %v287 = vpack.c.b16 %v257, %v256
  %v288 = vpack.c.b16 %v259, %v258
  %v289 = vpack.c.b16 %v261, %v260
  %v290 = vpack.c.b16 %v263, %v262
  %v291 = vpack.c.b16 %v265, %v264
  %v292 = vpack.c.b16 %v267, %v266
  %v293 = vpack.c.b16 %v269, %v268
  %v294 = vpack.c.b16 %v271, %v270
  %v295 = vpack.c.b16 %v273, %v272
  %v296 = vpack.c.b16 %v275, %v274
  %v297 = vpack.c.b16 %v277, %v276
  %v298 = vpack.c.b16 %v279, %v278
  %v299 = vpack.c.b16 %v281, %v280
  %vm318 = vcmask 261120
  %v320 = vsel %vm318, %v172, 0
  %v323 = vsel %vm318, %v175, 0
  %v326 = vsel %vm318, %v178, 0
  %v329 = vsel %vm318, %v181, 0
  %v332 = vsel %vm318, %v184, 0
  %v335 = vsel %vm318, %v187, 0
  %v338 = vsel %vm318, %v190, 0
  %v341 = vsel %vm318, %v193, 0
  %343 = vmatprep.subr.bf16.mxu0 0
  %344 = vmatpush1.bf16.msra.mxu0 %v289
  %345 = vmatprep.subr.bf16.mxu0 0
  %346 = vmatpush1.bf16.msra.mxu0 %v288
  %347 = vmatprep.subr.bf16.mxu0 0
  %348 = vmatpush1.bf16.msra.mxu0 %v287
  %349 = vmatprep.subr.bf16.mxu0 0
  %350 = vmatpush1.bf16.msra.mxu0 %v286
  %351 = vmatprep.subr.bf16.mxu0 0
  %352 = vmatpush1.bf16.msra.mxu0 %v285
  %353 = vmatprep.subr.bf16.mxu0 0
  %354 = vmatpush1.bf16.msra.mxu0 %v284
  %355 = vmatprep.subr.bf16.mxu0 0
  %356 = vmatpush1.bf16.msra.mxu0 %v283
  %357 = vmatprep.subr.bf16.mxu0 0
  %358 = vmatpush1.bf16.msra.mxu0 %v282
  %359 = vmatprep.subr.bf16.mxu0 0
  %360 = vmatpush2.bf16.msra.mxu0 %v297
  %361 = vmatprep.subr.bf16.mxu0 0
  %362 = vmatpush2.bf16.msra.mxu0 %v296
  %363 = vmatprep.subr.bf16.mxu0 0
  %364 = vmatpush2.bf16.msra.mxu0 %v295
  %365 = vmatprep.subr.bf16.mxu0 0
  %366 = vmatpush2.bf16.msra.mxu0 %v294
  %367 = vmatprep.subr.bf16.mxu0 0
  %368 = vmatpush2.bf16.msra.mxu0 %v293
  %369 = vmatprep.subr.bf16.mxu0 0
  %370 = vmatpush2.bf16.msra.mxu0 %v292
  %371 = vmatprep.subr.bf16.mxu0 0
  %372 = vmatpush2.bf16.msra.mxu0 %v291
  %373 = vmatprep.subr.bf16.mxu0 0
  %374 = vmatpush2.bf16.msra.mxu0 %v290
  %375 = vmatprep.mubr.bf16.mxu0 %v171
  %376 = vmatmul.mubr.bf16.gmra.mxu0 %v170
  %v377 = vpop.f32.mrf.mxu0
  %v378 = vadd.f32 %v88, %v377
  %v379 = vpop.f32.mrf.mxu0
  %v380 = vpop.f32.mrf.mxu0
  %v381 = vadd.f32 %v88, %v380
  %v382 = vpop.f32.mrf.mxu0
  %383 = vmatprep.mubr.bf16.mxu0 %v174
  %384 = vmatmul.mubr.bf16.gmra.mxu0 %v173
  %v385 = vpop.f32.mrf.mxu0
  %v386 = vadd.f32 %v88, %v385
  %v387 = vpop.f32.mrf.mxu0
  %v388 = vpop.f32.mrf.mxu0
  %v389 = vadd.f32 %v88, %v388
  %v390 = vpop.f32.mrf.mxu0
  %391 = vmatprep.mubr.bf16.mxu0 %v177
  %392 = vmatmul.mubr.bf16.gmra.mxu0 %v176
  %v393 = vpop.f32.mrf.mxu0
  %v394 = vadd.f32 %v88, %v393
  %v395 = vpop.f32.mrf.mxu0
  %v396 = vpop.f32.mrf.mxu0
  %v397 = vadd.f32 %v88, %v396
  %v398 = vpop.f32.mrf.mxu0
  %399 = vmatprep.mubr.bf16.mxu0 %v180
  %400 = vmatmul.mubr.bf16.gmra.mxu0 %v179
  %v401 = vpop.f32.mrf.mxu0
  %v402 = vadd.f32 %v88, %v401
  %v403 = vpop.f32.mrf.mxu0
  %v404 = vpop.f32.mrf.mxu0
  %v405 = vadd.f32 %v88, %v404
  %v406 = vpop.f32.mrf.mxu0
  %407 = vmatprep.mubr.bf16.mxu0 %v183
  %408 = vmatmul.mubr.bf16.gmra.mxu0 %v182
  %v409 = vpop.f32.mrf.mxu0
  %v410 = vadd.f32 %v88, %v409
  %v411 = vpop.f32.mrf.mxu0
  %v412 = vpop.f32.mrf.mxu0
  %v413 = vadd.f32 %v88, %v412
  %v414 = vpop.f32.mrf.mxu0
  %415 = vmatprep.mubr.bf16.mxu0 %v186
  %416 = vmatmul.mubr.bf16.gmra.mxu0 %v185
  %v417 = vpop.f32.mrf.mxu0
  %v418 = vadd.f32 %v88, %v417
  %v419 = vpop.f32.mrf.mxu0
  %v420 = vpop.f32.mrf.mxu0
  %v421 = vadd.f32 %v88, %v420
  %v422 = vpop.f32.mrf.mxu0
  %423 = vmatprep.mubr.bf16.mxu0 %v189
  %424 = vmatmul.mubr.bf16.gmra.mxu0 %v188
  %v425 = vpop.f32.mrf.mxu0
  %v426 = vadd.f32 %v88, %v425
  %v427 = vpop.f32.mrf.mxu0
  %v428 = vpop.f32.mrf.mxu0
  %v429 = vadd.f32 %v88, %v428
  %v430 = vpop.f32.mrf.mxu0
  %431 = vmatprep.mubr.bf16.mxu0 %v192
  %432 = vmatmul.mubr.bf16.gmra.mxu0 %v191
  %v433 = vpop.f32.mrf.mxu0
  %v434 = vadd.f32 %v88, %v433
  %v435 = vpop.f32.mrf.mxu0
  %v436 = vpop.f32.mrf.mxu0
  %v437 = vadd.f32 %v88, %v436
  %v438 = vpop.f32.mrf.mxu0
  %439 = vdwg.mxu0
  %440 = vmatprep.subr.bf16.mxu0 0
  %441 = vmatpush1.bf16.msra.mxu0 0
  %442 = vmatprep.subr.bf16.mxu0 0
  %443 = vmatpush1.bf16.msra.mxu0 0
  %444 = vmatprep.subr.bf16.mxu0 0
  %445 = vmatpush1.bf16.msra.mxu0 0
  %446 = vmatprep.subr.bf16.mxu0 0
  %447 = vmatpush1.bf16.msra.mxu0 0
  %448 = vmatprep.subr.bf16.mxu0 0
  %449 = vmatpush1.bf16.msra.mxu0 0
  %450 = vmatprep.subr.bf16.mxu0 0
  %451 = vmatpush1.bf16.msra.mxu0 0
  %452 = vmatprep.subr.bf16.mxu0 0
  %453 = vmatpush1.bf16.msra.mxu0 %v299
  %454 = vmatprep.subr.bf16.mxu0 0
  %455 = vmatpush1.bf16.msra.mxu0 %v298
  %456 = vmatprep.subr.bf16.mxu0 0
  %457 = vmatpush2.bf16.msra.mxu0 0
  %458 = vmatprep.subr.bf16.mxu0 0
  %459 = vmatpush2.bf16.msra.mxu0 0
  %460 = vmatprep.subr.bf16.mxu0 0
  %461 = vmatpush2.bf16.msra.mxu0 0
  %462 = vmatprep.subr.bf16.mxu0 0
  %463 = vmatpush2.bf16.msra.mxu0 0
  %464 = vmatprep.subr.bf16.mxu0 0
  %465 = vmatpush2.bf16.msra.mxu0 0
  %466 = vmatprep.subr.bf16.mxu0 0
  %467 = vmatpush2.bf16.msra.mxu0 0
  %468 = vmatprep.subr.bf16.mxu0 0
  %469 = vmatpush2.bf16.msra.mxu0 0
  %470 = vmatprep.subr.bf16.mxu0 0
  %471 = vmatpush2.bf16.msra.mxu0 0
  %472 = vmatprep.mubr.bf16.mxu0 0
  %473 = vmatmul.mubr.bf16.gmra.mxu0 %v320
  %v474 = vpop.f32.mrf.mxu0
  %v475 = vadd.f32 %v378, %v474
  %v476 = vpop.f32.mrf.mxu0
  %v477 = vpop.f32.mrf.mxu0
  %v478 = vadd.f32 %v381, %v477
  %v479 = vpop.f32.mrf.mxu0
  %480 = vmatprep.mubr.bf16.mxu0 0
  %481 = vmatmul.mubr.bf16.gmra.mxu0 %v323
  %v482 = vpop.f32.mrf.mxu0
  %v483 = vadd.f32 %v386, %v482
  %v484 = vpop.f32.mrf.mxu0
  %v485 = vpop.f32.mrf.mxu0
  %v486 = vadd.f32 %v389, %v485
  %v487 = vpop.f32.mrf.mxu0
  %488 = vmatprep.mubr.bf16.mxu0 0
  %489 = vmatmul.mubr.bf16.gmra.mxu0 %v326
  %v490 = vpop.f32.mrf.mxu0
  %v491 = vadd.f32 %v394, %v490
  %v492 = vpop.f32.mrf.mxu0
  %v493 = vpop.f32.mrf.mxu0
  %v494 = vadd.f32 %v397, %v493
  %v495 = vpop.f32.mrf.mxu0
  %496 = vmatprep.mubr.bf16.mxu0 0
  %497 = vmatmul.mubr.bf16.gmra.mxu0 %v329
  %v498 = vpop.f32.mrf.mxu0
  %v499 = vadd.f32 %v402, %v498
  %v500 = vpop.f32.mrf.mxu0
  %v501 = vpop.f32.mrf.mxu0
  %v502 = vadd.f32 %v405, %v501
  %v503 = vpop.f32.mrf.mxu0
  %504 = vmatprep.mubr.bf16.mxu0 0
  %505 = vmatmul.mubr.bf16.gmra.mxu0 %v332
  %v506 = vpop.f32.mrf.mxu0
  %v507 = vadd.f32 %v410, %v506
  %v508 = vpop.f32.mrf.mxu0
  %v509 = vpop.f32.mrf.mxu0
  %v510 = vadd.f32 %v413, %v509
  %v511 = vpop.f32.mrf.mxu0
  %512 = vmatprep.mubr.bf16.mxu0 0
  %513 = vmatmul.mubr.bf16.gmra.mxu0 %v335
  %v514 = vpop.f32.mrf.mxu0
  %v515 = vadd.f32 %v418, %v514
  %v516 = vpop.f32.mrf.mxu0
  %v517 = vpop.f32.mrf.mxu0
  %v518 = vadd.f32 %v421, %v517
  %v519 = vpop.f32.mrf.mxu0
  %520 = vmatprep.mubr.bf16.mxu0 0
  %521 = vmatmul.mubr.bf16.gmra.mxu0 %v338
  %v522 = vpop.f32.mrf.mxu0
  %v523 = vadd.f32 %v426, %v522
  %v524 = vpop.f32.mrf.mxu0
  %v525 = vpop.f32.mrf.mxu0
  %v526 = vadd.f32 %v429, %v525
  %v527 = vpop.f32.mrf.mxu0
  %528 = vmatprep.mubr.bf16.mxu0 0
  %529 = vmatmul.mubr.bf16.gmra.mxu0 %v341
  %v530 = vpop.f32.mrf.mxu0
  %v531 = vadd.f32 %v434, %v530
  %v532 = vpop.f32.mrf.mxu0
  %v533 = vpop.f32.mrf.mxu0
  %v534 = vadd.f32 %v437, %v533
  %v535 = vpop.f32.mrf.mxu0
  %536 = vdwg.mxu0
  %537 = vst [vmem:[%s3] sm:$0xff] %v475
  %538 = vst [vmem:[%s3 + $0x8] sm:$0xff] %v478
  %539 = vst [vmem:[%s3 + $0x10] sm:$0xff] %v483
  %540 = vst [vmem:[%s3 + $0x18] sm:$0xff] %v486
  %541 = vst [vmem:[%s3 + $0x20] sm:$0xff] %v491
  %542 = vst [vmem:[%s3 + $0x28] sm:$0xff] %v494
  %543 = vst [vmem:[%s3 + $0x30] sm:$0xff] %v499
  %544 = vst [vmem:[%s3 + $0x38] sm:$0xff] %v502
  %545 = vst [vmem:[%s3 + $0x40] sm:$0xff] %v507
  %546 = vst [vmem:[%s3 + $0x48] sm:$0xff] %v510
  %547 = vst [vmem:[%s3 + $0x50] sm:$0xff] %v515
  %548 = vst [vmem:[%s3 + $0x58] sm:$0xff] %v518
  %549 = vst [vmem:[%s3 + $0x60] sm:$0xff] %v523
  %550 = vst [vmem:[%s3 + $0x68] sm:$0xff] %v526
  %551 = vst [vmem:[%s3 + $0x70] sm:$0xff] %v531
  %552 = vst [vmem:[%s3 + $0x78] sm:$0xff] %v534
  // Predicated region
  $region14: #{retinanet_forward.31} parent=0 // pred_check
    _
  $region15: #{retinanet_forward.31} parent=0 // pred_check_branch
    %554 = sbr.rel (0) target = $region17
  $region16: #{retinanet_forward.31} parent=0 // pred_region
    _
  $region17: #{retinanet_forward.31} parent=0 // pred_fallthru
    _
  // Predicated region
  $region18: #{retinanet_forward.31} parent=0 // pred_check
    _
  $region19: #{retinanet_forward.31} parent=0 // pred_check_branch
    %556 = sbr.rel (0) target = $region21
  $region20: #{retinanet_forward.31} parent=0 // pred_region
    _
  $region21: #{retinanet_forward.31} parent=0 // pred_fallthru
    _

// kernel: retinanet_forward.36
$region0: #{retinanet_forward.36}
  #allocation0 [shape = 'u32[]', space=smem, size = 0x4, offset = 0x4, fixed_abs, tag = 'smem constant byte address 0x4 - core index']
  #allocation1 [shape = 'u32[144,128]{1,0:T(1,128)}', space=vmem, size = 0x12000, scoped, tag = 'internal scratch']
  %s0 = inlined_call_operand.vmem [shape: bf16[176,288], index: 0, kind: input, shape index: {}]
  %s1 = inlined_call_operand.vmem [shape: bf16[288,128], index: 1, kind: input, shape index: {}]
  %s2 = inlined_call_operand.vmem [shape: f32[1,128], index: 2, kind: input, shape index: {}]
  %s3 = inlined_call_operand.vmem [shape: f32[176,128], index: 3, kind: output, shape index: {}]
  %s4 = sld [smem:[#allocation0]]
  $region22: #{retinanet_forward.36} parent=0
    _
  %s6 = ssub.s32 1, %s4
  %s7 = scalar_select 0, %s6, %s4
  // Predicated region
  $region2: #{retinanet_forward.36} parent=0 // pred_check
    _
  $region3: #{retinanet_forward.36} parent=0 // pred_check_branch
    %9 = sbr.rel (0) target = $region5
  $region4: #{retinanet_forward.36} parent=0 // pred_region
    _
  $region5: #{retinanet_forward.36} parent=0 // pred_fallthru
    _
  // Predicated region
  $region6: #{retinanet_forward.36} parent=0 // pred_check
    _
  $region7: #{retinanet_forward.36} parent=0 // pred_check_branch
    %11 = sbr.rel (0) target = $region9
  $region8: #{retinanet_forward.36} parent=0 // pred_region
    _
  $region9: #{retinanet_forward.36} parent=0 // pred_fallthru
    _
  // Predicated region
  $region10: #{retinanet_forward.36} parent=0 // pred_check
    _
  $region11: #{retinanet_forward.36} parent=0 // pred_check_branch
    %13 = sbr.rel (0) target = $region13
  $region12: #{retinanet_forward.36} parent=0 // pred_region
    _
  $region13: #{retinanet_forward.36} parent=0 // pred_fallthru
    _
  %v15 = vld [vmem:[%s0] sm:$0xff]
  %v16 = vld [vmem:[%s0 + $0x8] sm:$0xf]
  %v17 = vld [vmem:[%s0 + $0xc] sm:$0xff]
  %v18 = vld [vmem:[%s0 + $0x14] sm:$0xf]
  %v19 = vld [vmem:[%s0 + $0x18] sm:$0xff]
  %v20 = vld [vmem:[%s0 + $0x20] sm:$0xf]
  %v21 = vld [vmem:[%s0 + $0x24] sm:$0xff]
  %v22 = vld [vmem:[%s0 + $0x2c] sm:$0xf]
  %v23 = vld [vmem:[%s0 + $0x30] sm:$0xff]
  %v24 = vld [vmem:[%s0 + $0x38] sm:$0xf]
  %v25 = vld [vmem:[%s0 + $0x3c] sm:$0xff]
  %v26 = vld [vmem:[%s0 + $0x44] sm:$0xf]
  %v27 = vld [vmem:[%s0 + $0x48] sm:$0xff]
  %v28 = vld [vmem:[%s0 + $0x50] sm:$0xf]
  %v29 = vld [vmem:[%s0 + $0x54] sm:$0xff]
  %v30 = vld [vmem:[%s0 + $0x5c] sm:$0xf]
  %v31 = vld [vmem:[%s0 + $0x60] sm:$0xff]
  %v32 = vld [vmem:[%s0 + $0x68] sm:$0xf]
  %v33 = vld [vmem:[%s0 + $0x6c] sm:$0xff]
  %v34 = vld [vmem:[%s0 + $0x74] sm:$0xf]
  %v35 = vld [vmem:[%s0 + $0x78] sm:$0xff]
  %v36 = vld [vmem:[%s0 + $0x80] sm:$0xf]
  %v37 = vld [vmem:[%s0 + $0x84] sm:$0xff]
  %v38 = vld [vmem:[%s0 + $0x8c] sm:$0xf]
  %v39 = vld [vmem:[%s0 + $0x90] sm:$0xff]
  %v40 = vld [vmem:[%s0 + $0x98] sm:$0xf]
  %v41 = vld [vmem:[%s0 + $0x9c] sm:$0xff]
  %v42 = vld [vmem:[%s0 + $0xa4] sm:$0xf]
  %v43 = vld [vmem:[%s0 + $0xa8] sm:$0xff]
  %v44 = vld [vmem:[%s0 + $0xb0] sm:$0xf]
  %v45 = vld [vmem:[%s0 + $0xb4] sm:$0xff]
  %v46 = vld [vmem:[%s0 + $0xbc] sm:$0xf]
  %v47 = vld [vmem:[%s0 + $0xc0] sm:$0xff]
  %v48 = vld [vmem:[%s0 + $0xc8] sm:$0xf]
  %v49 = vld [vmem:[%s0 + $0xcc] sm:$0xff]
  %v50 = vld [vmem:[%s0 + $0xd4] sm:$0xf]
  %v51 = vld [vmem:[%s0 + $0xd8] sm:$0xff]
  %v52 = vld [vmem:[%s0 + $0xe0] sm:$0xf]
  %v53 = vld [vmem:[%s0 + $0xe4] sm:$0xff]
  %v54 = vld [vmem:[%s0 + $0xec] sm:$0xf]
  %v55 = vld [vmem:[%s0 + $0xf0] sm:$0xff]
  %v56 = vld [vmem:[%s0 + $0xf8] sm:$0xf]
  %v57 = vld [vmem:[%s0 + $0xfc] sm:$0xff]
  %v58 = vld [vmem:[%s0 + $0x104] sm:$0xf]
  %v59 = vld [vmem:[%s1] sm:$0xf]
  %v60 = vld [vmem:[%s1 + $0x4] sm:$0xf]
  %v61 = vld [vmem:[%s1 + $0x8] sm:$0xf]
  %v62 = vld [vmem:[%s1 + $0xc] sm:$0xf]
  %v63 = vld [vmem:[%s1 + $0x10] sm:$0xf]
  %v64 = vld [vmem:[%s1 + $0x14] sm:$0xf]
  %v65 = vld [vmem:[%s1 + $0x18] sm:$0xf]
  %v66 = vld [vmem:[%s1 + $0x1c] sm:$0xf]
  %v67 = vld [vmem:[%s1 + $0x20] sm:$0xf]
  %v68 = vld [vmem:[%s1 + $0x24] sm:$0xf]
  %v69 = vld [vmem:[%s1 + $0x28] sm:$0xf]
  %v70 = vld [vmem:[%s1 + $0x2c] sm:$0xf]
  %v71 = vld [vmem:[%s1 + $0x30] sm:$0xf]
  %v72 = vld [vmem:[%s1 + $0x34] sm:$0xf]
  %v73 = vld [vmem:[%s1 + $0x38] sm:$0xf]
  %v74 = vld [vmem:[%s1 + $0x3c] sm:$0xf]
  %v75 = vld [vmem:[%s1 + $0x40] sm:$0xf]
  %v76 = vld [vmem:[%s1 + $0x44] sm:$0xf]
  %v77 = vld [vmem:[%s1 + $0x48] sm:$0xf]
  %v78 = vld [vmem:[%s1 + $0x4c] sm:$0xf]
  %v79 = vld [vmem:[%s1 + $0x50] sm:$0xf]
  %v80 = vld [vmem:[%s1 + $0x54] sm:$0xf]
  %v81 = vld [vmem:[%s1 + $0x58] sm:$0xf]
  %v82 = vld [vmem:[%s1 + $0x5c] sm:$0xf]
  %v83 = vld [vmem:[%s1 + $0x60] sm:$0xf]
  %v84 = vld [vmem:[%s1 + $0x64] sm:$0xf]
  %v85 = vld [vmem:[%s1 + $0x68] sm:$0xf]
  %v86 = vld [vmem:[%s1 + $0x6c] sm:$0xf]
  %v87 = vld [vmem:[%s1 + $0x70] sm:$0xf]
  %v88 = vld [vmem:[%s1 + $0x74] sm:$0xf]
  %v89 = vld [vmem:[%s1 + $0x78] sm:$0xf]
  %v90 = vld [vmem:[%s1 + $0x7c] sm:$0xf]
  %v91 = vld [vmem:[%s1 + $0x80] sm:$0xf]
  %v92 = vld [vmem:[%s1 + $0x84] sm:$0xf]
  %v93 = vld [vmem:[%s1 + $0x88] sm:$0xf]
  %v94 = vld [vmem:[%s1 + $0x8c] sm:$0xf]
  %v95 = vld [vmem:[%s2] sm:$0x1]
  %v97 = vlaneseq
  %v98 = vshrl.u32 %v97, 7
  %v99 = vsub.s32 0, %v98
  %v100 = vrot.slane %v95, %v99
  %v146 = vunpack.c.l.b16 %v15
  %v147 = vunpack.c.h.b16 %v15
  %v148 = vunpack.c.l.b16 %v16
  %v149 = vunpack.c.l.b16 %v17
  %v150 = vunpack.c.h.b16 %v17
  %v151 = vunpack.c.l.b16 %v18
  %v152 = vunpack.c.l.b16 %v19
  %v153 = vunpack.c.h.b16 %v19
  %v154 = vunpack.c.l.b16 %v20
  %v155 = vunpack.c.l.b16 %v21
  %v156 = vunpack.c.h.b16 %v21
  %v157 = vunpack.c.l.b16 %v22
  %v158 = vunpack.c.l.b16 %v23
  %v159 = vunpack.c.h.b16 %v23
  %v160 = vunpack.c.l.b16 %v24
  %v161 = vunpack.c.l.b16 %v25
  %v162 = vunpack.c.h.b16 %v25
  %v163 = vunpack.c.l.b16 %v26
  %v164 = vunpack.c.l.b16 %v27
  %v165 = vunpack.c.h.b16 %v27
  %v166 = vunpack.c.l.b16 %v28
  %v167 = vunpack.c.l.b16 %v29
  %v168 = vunpack.c.h.b16 %v29
  %v169 = vunpack.c.l.b16 %v30
  %v170 = vunpack.c.l.b16 %v31
  %v171 = vunpack.c.h.b16 %v31
  %v172 = vunpack.c.l.b16 %v32
  %v173 = vunpack.c.l.b16 %v33
  %v174 = vunpack.c.h.b16 %v33
  %v175 = vunpack.c.l.b16 %v34
  %v176 = vunpack.c.l.b16 %v35
  %v177 = vunpack.c.h.b16 %v35
  %v178 = vunpack.c.l.b16 %v36
  %v179 = vunpack.c.l.b16 %v37
  %v180 = vunpack.c.h.b16 %v37
  %v181 = vunpack.c.l.b16 %v38
  %v182 = vunpack.c.l.b16 %v39
  %v183 = vunpack.c.h.b16 %v39
  %v184 = vunpack.c.l.b16 %v40
  %v185 = vunpack.c.l.b16 %v41
  %v186 = vunpack.c.h.b16 %v41
  %v187 = vunpack.c.l.b16 %v42
  %v188 = vunpack.c.l.b16 %v43
  %v189 = vunpack.c.h.b16 %v43
  %v190 = vunpack.c.l.b16 %v44
  %v191 = vunpack.c.l.b16 %v45
  %v192 = vunpack.c.h.b16 %v45
  %v193 = vunpack.c.l.b16 %v46
  %v194 = vunpack.c.l.b16 %v47
  %v195 = vunpack.c.h.b16 %v47
  %v196 = vunpack.c.l.b16 %v48
  %v197 = vunpack.c.l.b16 %v49
  %v198 = vunpack.c.h.b16 %v49
  %v199 = vunpack.c.l.b16 %v50
  %v200 = vunpack.c.l.b16 %v51
  %v201 = vunpack.c.h.b16 %v51
  %v202 = vunpack.c.l.b16 %v52
  %v203 = vunpack.c.l.b16 %v53
  %v204 = vunpack.c.h.b16 %v53
  %v205 = vunpack.c.l.b16 %v54
  %v206 = vunpack.c.l.b16 %v55
  %v207 = vunpack.c.h.b16 %v55
  %v208 = vunpack.c.l.b16 %v56
  %v209 = vunpack.c.l.b16 %v57
  %v210 = vunpack.c.h.b16 %v57
  %v211 = vunpack.c.l.b16 %v58
  %v212 = vpack.c.b16 %v149, %v146
  %v213 = vpack.c.b16 %v150, %v147
  %v214 = vpack.c.b16 %v151, %v148
  %v215 = vpack.c.b16 %v155, %v152
  %v216 = vpack.c.b16 %v156, %v153
  %v217 = vpack.c.b16 %v157, %v154
  %v218 = vpack.c.b16 %v161, %v158
  %v219 = vpack.c.b16 %v162, %v159
  %v220 = vpack.c.b16 %v163, %v160
  %v221 = vpack.c.b16 %v167, %v164
  %v222 = vpack.c.b16 %v168, %v165
  %v223 = vpack.c.b16 %v169, %v166
  %v224 = vpack.c.b16 %v173, %v170
  %v225 = vpack.c.b16 %v174, %v171
  %v226 = vpack.c.b16 %v175, %v172
  %v227 = vpack.c.b16 %v179, %v176
  %v228 = vpack.c.b16 %v180, %v177
  %v229 = vpack.c.b16 %v181, %v178
  %v230 = vpack.c.b16 %v185, %v182
  %v231 = vpack.c.b16 %v186, %v183
  %v232 = vpack.c.b16 %v187, %v184
  %v233 = vpack.c.b16 %v191, %v188
  %v234 = vpack.c.b16 %v192, %v189
  %v235 = vpack.c.b16 %v193, %v190
  %v236 = vpack.c.b16 %v197, %v194
  %v237 = vpack.c.b16 %v198, %v195
  %v238 = vpack.c.b16 %v199, %v196
  %v239 = vpack.c.b16 %v203, %v200
  %v240 = vpack.c.b16 %v204, %v201
  %v241 = vpack.c.b16 %v205, %v202
  %v242 = vpack.c.b16 %v209, %v206
  %v243 = vpack.c.b16 %v210, %v207
  %v244 = vpack.c.b16 %v211, %v208
  %v303 = vunpack.c.l.b16 %v59
  %v304 = vunpack.c.l.b16 %v60
  %v305 = vunpack.c.l.b16 %v61
  %v306 = vunpack.c.l.b16 %v62
  %v307 = vunpack.c.l.b16 %v63
  %v308 = vunpack.c.l.b16 %v64
  %v309 = vunpack.c.l.b16 %v65
  %v310 = vunpack.c.l.b16 %v66
  %v311 = vunpack.c.l.b16 %v67
  %v312 = vunpack.c.l.b16 %v68
  %v313 = vunpack.c.l.b16 %v69
  %v314 = vunpack.c.l.b16 %v70
  %v315 = vunpack.c.l.b16 %v71
  %v316 = vunpack.c.l.b16 %v72
  %v317 = vunpack.c.l.b16 %v73
  %v318 = vunpack.c.l.b16 %v74
  %v319 = vunpack.c.l.b16 %v75
  %v320 = vunpack.c.l.b16 %v76
  %v321 = vunpack.c.l.b16 %v77
  %v322 = vunpack.c.l.b16 %v78
  %v323 = vunpack.c.l.b16 %v79
  %v324 = vunpack.c.l.b16 %v80
  %v325 = vunpack.c.l.b16 %v81
  %v326 = vunpack.c.l.b16 %v82
  %v327 = vunpack.c.l.b16 %v83
  %v328 = vunpack.c.l.b16 %v84
  %v329 = vunpack.c.l.b16 %v85
  %v330 = vunpack.c.l.b16 %v86
  %v331 = vunpack.c.l.b16 %v87
  %v332 = vunpack.c.l.b16 %v88
  %v333 = vunpack.c.l.b16 %v89
  %v334 = vunpack.c.l.b16 %v90
  %v335 = vunpack.c.l.b16 %v91
  %v336 = vunpack.c.l.b16 %v92
  %v337 = vunpack.c.l.b16 %v93
  %v338 = vunpack.c.l.b16 %v94
  %v339 = vpack.c.b16 %v304, %v303
  %v340 = vpack.c.b16 %v306, %v305
  %v341 = vpack.c.b16 %v308, %v307
  %v342 = vpack.c.b16 %v310, %v309
  %v343 = vpack.c.b16 %v312, %v311
  %v344 = vpack.c.b16 %v314, %v313
  %v345 = vpack.c.b16 %v316, %v315
  %v346 = vpack.c.b16 %v318, %v317
  %v347 = vpack.c.b16 %v320, %v319
  %v348 = vpack.c.b16 %v322, %v321
  %v349 = vpack.c.b16 %v324, %v323
  %v350 = vpack.c.b16 %v326, %v325
  %v351 = vpack.c.b16 %v328, %v327
  %v352 = vpack.c.b16 %v330, %v329
  %v353 = vpack.c.b16 %v332, %v331
  %v354 = vpack.c.b16 %v334, %v333
  %v355 = vpack.c.b16 %v336, %v335
  %v356 = vpack.c.b16 %v338, %v337
  %vm375 = vcmask 261120
  %v377 = vsel %vm375, %v214, 0
  %v380 = vsel %vm375, %v217, 0
  %v383 = vsel %vm375, %v220, 0
  %v386 = vsel %vm375, %v223, 0
  %v389 = vsel %vm375, %v226, 0
  %v392 = vsel %vm375, %v229, 0
  %v395 = vsel %vm375, %v232, 0
  %v398 = vsel %vm375, %v235, 0
  %v401 = vsel %vm375, %v238, 0
  %v404 = vsel %vm375, %v241, 0
  %v407 = vsel %vm375, %v244, 0
  %409 = vmatprep.subr.bf16.mxu0 0
  %410 = vmatpush1.bf16.msra.mxu0 %v346
  %411 = vmatprep.subr.bf16.mxu0 0
  %412 = vmatpush1.bf16.msra.mxu0 %v345
  %413 = vmatprep.subr.bf16.mxu0 0
  %414 = vmatpush1.bf16.msra.mxu0 %v344
  %415 = vmatprep.subr.bf16.mxu0 0
  %416 = vmatpush1.bf16.msra.mxu0 %v343
  %417 = vmatprep.subr.bf16.mxu0 0
  %418 = vmatpush1.bf16.msra.mxu0 %v342
  %419 = vmatprep.subr.bf16.mxu0 0
  %420 = vmatpush1.bf16.msra.mxu0 %v341
  %421 = vmatprep.subr.bf16.mxu0 0
  %422 = vmatpush1.bf16.msra.mxu0 %v340
  %423 = vmatprep.subr.bf16.mxu0 0
  %424 = vmatpush1.bf16.msra.mxu0 %v339
  %425 = vmatprep.subr.bf16.mxu0 0
  %426 = vmatpush2.bf16.msra.mxu0 %v354
  %427 = vmatprep.subr.bf16.mxu0 0
  %428 = vmatpush2.bf16.msra.mxu0 %v353
  %429 = vmatprep.subr.bf16.mxu0 0
  %430 = vmatpush2.bf16.msra.mxu0 %v352
  %431 = vmatprep.subr.bf16.mxu0 0
  %432 = vmatpush2.bf16.msra.mxu0 %v351
  %433 = vmatprep.subr.bf16.mxu0 0
  %434 = vmatpush2.bf16.msra.mxu0 %v350
  %435 = vmatprep.subr.bf16.mxu0 0
  %436 = vmatpush2.bf16.msra.mxu0 %v349
  %437 = vmatprep.subr.bf16.mxu0 0
  %438 = vmatpush2.bf16.msra.mxu0 %v348
  %439 = vmatprep.subr.bf16.mxu0 0
  %440 = vmatpush2.bf16.msra.mxu0 %v347
  %441 = vmatprep.mubr.bf16.mxu0 %v213
  %442 = vmatmul.mubr.bf16.gmra.mxu0 %v212
  %v443 = vpop.f32.mrf.mxu0
  %v444 = vadd.f32 %v100, %v443
  %v445 = vpop.f32.mrf.mxu0
  %v446 = vpop.f32.mrf.mxu0
  %v447 = vadd.f32 %v100, %v446
  %v448 = vpop.f32.mrf.mxu0
  %449 = vmatprep.mubr.bf16.mxu0 %v216
  %450 = vmatmul.mubr.bf16.gmra.mxu0 %v215
  %v451 = vpop.f32.mrf.mxu0
  %v452 = vadd.f32 %v100, %v451
  %v453 = vpop.f32.mrf.mxu0
  %v454 = vpop.f32.mrf.mxu0
  %v455 = vadd.f32 %v100, %v454
  %v456 = vpop.f32.mrf.mxu0
  %457 = vmatprep.mubr.bf16.mxu0 %v219
  %458 = vmatmul.mubr.bf16.gmra.mxu0 %v218
  %v459 = vpop.f32.mrf.mxu0
  %v460 = vadd.f32 %v100, %v459
  %v461 = vpop.f32.mrf.mxu0
  %v462 = vpop.f32.mrf.mxu0
  %v463 = vadd.f32 %v100, %v462
  %v464 = vpop.f32.mrf.mxu0
  %465 = vmatprep.mubr.bf16.mxu0 %v222
  %466 = vmatmul.mubr.bf16.gmra.mxu0 %v221
  %v467 = vpop.f32.mrf.mxu0
  %v468 = vadd.f32 %v100, %v467
  %v469 = vpop.f32.mrf.mxu0
  %v470 = vpop.f32.mrf.mxu0
  %v471 = vadd.f32 %v100, %v470
  %v472 = vpop.f32.mrf.mxu0
  %473 = vmatprep.mubr.bf16.mxu0 %v225
  %474 = vmatmul.mubr.bf16.gmra.mxu0 %v224
  %v475 = vpop.f32.mrf.mxu0
  %v476 = vadd.f32 %v100, %v475
  %v477 = vpop.f32.mrf.mxu0
  %v478 = vpop.f32.mrf.mxu0
  %v479 = vadd.f32 %v100, %v478
  %v480 = vpop.f32.mrf.mxu0
  %481 = vmatprep.mubr.bf16.mxu0 %v228
  %482 = vmatmul.mubr.bf16.gmra.mxu0 %v227
  %v483 = vpop.f32.mrf.mxu0
  %v484 = vadd.f32 %v100, %v483
  %v485 = vpop.f32.mrf.mxu0
  %v486 = vpop.f32.mrf.mxu0
  %v487 = vadd.f32 %v100, %v486
  %v488 = vpop.f32.mrf.mxu0
  %489 = vmatprep.mubr.bf16.mxu0 %v231
  %490 = vmatmul.mubr.bf16.gmra.mxu0 %v230
  %v491 = vpop.f32.mrf.mxu0
  %v492 = vadd.f32 %v100, %v491
  %v493 = vpop.f32.mrf.mxu0
  %v494 = vpop.f32.mrf.mxu0
  %v495 = vadd.f32 %v100, %v494
  %v496 = vpop.f32.mrf.mxu0
  %497 = vmatprep.mubr.bf16.mxu0 %v234
  %498 = vmatmul.mubr.bf16.gmra.mxu0 %v233
  %v499 = vpop.f32.mrf.mxu0
  %v500 = vadd.f32 %v100, %v499
  %v501 = vpop.f32.mrf.mxu0
  %v502 = vpop.f32.mrf.mxu0
  %v503 = vadd.f32 %v100, %v502
  %v504 = vpop.f32.mrf.mxu0
  %505 = vmatprep.mubr.bf16.mxu0 %v237
  %506 = vmatmul.mubr.bf16.gmra.mxu0 %v236
  %v507 = vpop.f32.mrf.mxu0
  %v508 = vadd.f32 %v100, %v507
  %v509 = vpop.f32.mrf.mxu0
  %v510 = vpop.f32.mrf.mxu0
  %v511 = vadd.f32 %v100, %v510
  %v512 = vpop.f32.mrf.mxu0
  %513 = vmatprep.mubr.bf16.mxu0 %v240
  %514 = vmatmul.mubr.bf16.gmra.mxu0 %v239
  %v515 = vpop.f32.mrf.mxu0
  %v516 = vadd.f32 %v100, %v515
  %v517 = vpop.f32.mrf.mxu0
  %v518 = vpop.f32.mrf.mxu0
  %v519 = vadd.f32 %v100, %v518
  %v520 = vpop.f32.mrf.mxu0
  %521 = vmatprep.mubr.bf16.mxu0 %v243
  %522 = vmatmul.mubr.bf16.gmra.mxu0 %v242
  %v523 = vpop.f32.mrf.mxu0
  %v524 = vadd.f32 %v100, %v523
  %v525 = vpop.f32.mrf.mxu0
  %v526 = vpop.f32.mrf.mxu0
  %v527 = vadd.f32 %v100, %v526
  %v528 = vpop.f32.mrf.mxu0
  %529 = vdwg.mxu0
  %530 = vmatprep.subr.bf16.mxu0 0
  %531 = vmatpush1.bf16.msra.mxu0 0
  %532 = vmatprep.subr.bf16.mxu0 0
  %533 = vmatpush1.bf16.msra.mxu0 0
  %534 = vmatprep.subr.bf16.mxu0 0
  %535 = vmatpush1.bf16.msra.mxu0 0
  %536 = vmatprep.subr.bf16.mxu0 0
  %537 = vmatpush1.bf16.msra.mxu0 0
  %538 = vmatprep.subr.bf16.mxu0 0
  %539 = vmatpush1.bf16.msra.mxu0 0
  %540 = vmatprep.subr.bf16.mxu0 0
  %541 = vmatpush1.bf16.msra.mxu0 0
  %542 = vmatprep.subr.bf16.mxu0 0
  %543 = vmatpush1.bf16.msra.mxu0 %v356
  %544 = vmatprep.subr.bf16.mxu0 0
  %545 = vmatpush1.bf16.msra.mxu0 %v355
  %546 = vmatprep.subr.bf16.mxu0 0
  %547 = vmatpush2.bf16.msra.mxu0 0
  %548 = vmatprep.subr.bf16.mxu0 0
  %549 = vmatpush2.bf16.msra.mxu0 0
  %550 = vmatprep.subr.bf16.mxu0 0
  %551 = vmatpush2.bf16.msra.mxu0 0
  %552 = vmatprep.subr.bf16.mxu0 0
  %553 = vmatpush2.bf16.msra.mxu0 0
  %554 = vmatprep.subr.bf16.mxu0 0
  %555 = vmatpush2.bf16.msra.mxu0 0
  %556 = vmatprep.subr.bf16.mxu0 0
  %557 = vmatpush2.bf16.msra.mxu0 0
  %558 = vmatprep.subr.bf16.mxu0 0
  %559 = vmatpush2.bf16.msra.mxu0 0
  %560 = vmatprep.subr.bf16.mxu0 0
  %561 = vmatpush2.bf16.msra.mxu0 0
  %562 = vmatprep.mubr.bf16.mxu0 0
  %563 = vmatmul.mubr.bf16.gmra.mxu0 %v377
  %v564 = vpop.f32.mrf.mxu0
  %v565 = vadd.f32 %v444, %v564
  %v566 = vpop.f32.mrf.mxu0
  %v567 = vpop.f32.mrf.mxu0
  %v568 = vadd.f32 %v447, %v567
  %v569 = vpop.f32.mrf.mxu0
  %570 = vmatprep.mubr.bf16.mxu0 0
  %571 = vmatmul.mubr.bf16.gmra.mxu0 %v380
  %v572 = vpop.f32.mrf.mxu0
  %v573 = vadd.f32 %v452, %v572
  %v574 = vpop.f32.mrf.mxu0
  %v575 = vpop.f32.mrf.mxu0
  %v576 = vadd.f32 %v455, %v575
  %v577 = vpop.f32.mrf.mxu0
  %578 = vmatprep.mubr.bf16.mxu0 0
  %579 = vmatmul.mubr.bf16.gmra.mxu0 %v383
  %v580 = vpop.f32.mrf.mxu0
  %v581 = vadd.f32 %v460, %v580
  %v582 = vpop.f32.mrf.mxu0
  %v583 = vpop.f32.mrf.mxu0
  %v584 = vadd.f32 %v463, %v583
  %v585 = vpop.f32.mrf.mxu0
  %586 = vmatprep.mubr.bf16.mxu0 0
  %587 = vmatmul.mubr.bf16.gmra.mxu0 %v386
  %v588 = vpop.f32.mrf.mxu0
  %v589 = vadd.f32 %v468, %v588
  %v590 = vpop.f32.mrf.mxu0
  %v591 = vpop.f32.mrf.mxu0
  %v592 = vadd.f32 %v471, %v591
  %v593 = vpop.f32.mrf.mxu0
  %594 = vmatprep.mubr.bf16.mxu0 0
  %595 = vmatmul.mubr.bf16.gmra.mxu0 %v389
  %v596 = vpop.f32.mrf.mxu0
  %v597 = vadd.f32 %v476, %v596
  %v598 = vpop.f32.mrf.mxu0
  %v599 = vpop.f32.mrf.mxu0
  %v600 = vadd.f32 %v479, %v599
  %v601 = vpop.f32.mrf.mxu0
  %602 = vmatprep.mubr.bf16.mxu0 0
  %603 = vmatmul.mubr.bf16.gmra.mxu0 %v392
  %v604 = vpop.f32.mrf.mxu0
  %v605 = vadd.f32 %v484, %v604
  %v606 = vpop.f32.mrf.mxu0
  %v607 = vpop.f32.mrf.mxu0
  %v608 = vadd.f32 %v487, %v607
  %v609 = vpop.f32.mrf.mxu0
  %610 = vmatprep.mubr.bf16.mxu0 0
  %611 = vmatmul.mubr.bf16.gmra.mxu0 %v395
  %v612 = vpop.f32.mrf.mxu0
  %v613 = vadd.f32 %v492, %v612
  %v614 = vpop.f32.mrf.mxu0
  %v615 = vpop.f32.mrf.mxu0
  %v616 = vadd.f32 %v495, %v615
  %v617 = vpop.f32.mrf.mxu0
  %618 = vmatprep.mubr.bf16.mxu0 0
  %619 = vmatmul.mubr.bf16.gmra.mxu0 %v398
  %v620 = vpop.f32.mrf.mxu0
  %v621 = vadd.f32 %v500, %v620
  %v622 = vpop.f32.mrf.mxu0
  %v623 = vpop.f32.mrf.mxu0
  %v624 = vadd.f32 %v503, %v623
  %v625 = vpop.f32.mrf.mxu0
  %626 = vmatprep.mubr.bf16.mxu0 0
  %627 = vmatmul.mubr.bf16.gmra.mxu0 %v401
  %v628 = vpop.f32.mrf.mxu0
  %v629 = vadd.f32 %v508, %v628
  %v630 = vpop.f32.mrf.mxu0
  %v631 = vpop.f32.mrf.mxu0
  %v632 = vadd.f32 %v511, %v631
  %v633 = vpop.f32.mrf.mxu0
  %634 = vmatprep.mubr.bf16.mxu0 0
  %635 = vmatmul.mubr.bf16.gmra.mxu0 %v404
  %v636 = vpop.f32.mrf.mxu0
  %v637 = vadd.f32 %v516, %v636
  %v638 = vpop.f32.mrf.mxu0
  %v639 = vpop.f32.mrf.mxu0
  %v640 = vadd.f32 %v519, %v639
  %v641 = vpop.f32.mrf.mxu0
  %642 = vmatprep.mubr.bf16.mxu0 0
  %643 = vmatmul.mubr.bf16.gmra.mxu0 %v407
  %v644 = vpop.f32.mrf.mxu0
  %v645 = vadd.f32 %v524, %v644
  %v646 = vpop.f32.mrf.mxu0
  %v647 = vpop.f32.mrf.mxu0
  %v648 = vadd.f32 %v527, %v647
  %v649 = vpop.f32.mrf.mxu0
  %650 = vdwg.mxu0
  %v651 = vmax.f32 %v565, 0.0
  %v652 = vmax.f32 %v568, 0.0
  %v653 = vmax.f32 %v573, 0.0
  %v654 = vmax.f32 %v576, 0.0
  %v655 = vmax.f32 %v581, 0.0
  %v656 = vmax.f32 %v584, 0.0
  %v657 = vmax.f32 %v589, 0.0
  %v658 = vmax.f32 %v592, 0.0
  %v659 = vmax.f32 %v597, 0.0
  %v660 = vmax.f32 %v600, 0.0
  %v661 = vmax.f32 %v605, 0.0
  %v662 = vmax.f32 %v608, 0.0
  %v663 = vmax.f32 %v613, 0.0
  %v664 = vmax.f32 %v616, 0.0
  %v665 = vmax.f32 %v621, 0.0
  %v666 = vmax.f32 %v624, 0.0
  %v667 = vmax.f32 %v629, 0.0
  %v668 = vmax.f32 %v632, 0.0
  %v669 = vmax.f32 %v637, 0.0
  %v670 = vmax.f32 %v640, 0.0
  %v671 = vmax.f32 %v645, 0.0
  %v672 = vmax.f32 %v648, 0.0
  %673 = vst [vmem:[%s3] sm:$0xff] %v651
  %674 = vst [vmem:[%s3 + $0x8] sm:$0xff] %v652
  %675 = vst [vmem:[%s3 + $0x10] sm:$0xff] %v653
  %676 = vst [vmem:[%s3 + $0x18] sm:$0xff] %v654
  %677 = vst [vmem:[%s3 + $0x20] sm:$0xff] %v655
  %678 = vst [vmem:[%s3 + $0x28] sm:$0xff] %v656
  %679 = vst [vmem:[%s3 + $0x30] sm:$0xff] %v657
  %680 = vst [vmem:[%s3 + $0x38] sm:$0xff] %v658
  %681 = vst [vmem:[%s3 + $0x40] sm:$0xff] %v659
  %682 = vst [vmem:[%s3 + $0x48] sm:$0xff] %v660
  %683 = vst [vmem:[%s3 + $0x50] sm:$0xff] %v661
  %684 = vst [vmem:[%s3 + $0x58] sm:$0xff] %v662
  %685 = vst [vmem:[%s3 + $0x60] sm:$0xff] %v663
  %686 = vst [vmem:[%s3 + $0x68] sm:$0xff] %v664
  %687 = vst [vmem:[%s3 + $0x70] sm:$0xff] %v665
  %688 = vst [vmem:[%s3 + $0x78] sm:$0xff] %v666
  %689 = vst [vmem:[%s3 + $0x80] sm:$0xff] %v667
  %690 = vst [vmem:[%s3 + $0x88] sm:$0xff] %v668
  %691 = vst [vmem:[%s3 + $0x90] sm:$0xff] %v669
  %692 = vst [vmem:[%s3 + $0x98] sm:$0xff] %v670
  %693 = vst [vmem:[%s3 + $0xa0] sm:$0xff] %v671
  %694 = vst [vmem:[%s3 + $0xa8] sm:$0xff] %v672
  // Predicated region
  $region14: #{retinanet_forward.36} parent=0 // pred_check
    _
  $region15: #{retinanet_forward.36} parent=0 // pred_check_branch
    %696 = sbr.rel (0) target = $region17
  $region16: #{retinanet_forward.36} parent=0 // pred_region
    _
  $region17: #{retinanet_forward.36} parent=0 // pred_fallthru
    _
  // Predicated region
  $region18: #{retinanet_forward.36} parent=0 // pred_check
    _
  $region19: #{retinanet_forward.36} parent=0 // pred_check_branch
    %698 = sbr.rel (0) target = $region21
  $region20: #{retinanet_forward.36} parent=0 // pred_region
    _
  $region21: #{retinanet_forward.36} parent=0 // pred_fallthru
    _

// kernel: retinanet_forward.40
$region0: #{retinanet_forward.40}
  #allocation0 [shape = 'u32[]', space=smem, size = 0x4, offset = 0x4, fixed_abs, tag = 'smem constant byte address 0x4 - core index']
  #allocation1 [shape = 'u32[144,128]{1,0:T(1,128)}', space=vmem, size = 0x12000, scoped, tag = 'internal scratch']
  %s0 = inlined_call_operand.vmem [shape: bf16[176,288], index: 0, kind: input, shape index: {}]
  %s1 = inlined_call_operand.vmem [shape: bf16[288,128], index: 1, kind: input, shape index: {}]
  %s2 = inlined_call_operand.vmem [shape: f32[1,128], index: 2, kind: input, shape index: {}]
  %s3 = inlined_call_operand.vmem [shape: f32[176,128], index: 3, kind: output, shape index: {}]
  %s4 = sld [smem:[#allocation0]]
  $region22: #{retinanet_forward.40} parent=0
    _
  %s6 = ssub.s32 1, %s4
  %s7 = scalar_select 0, %s6, %s4
  // Predicated region
  $region2: #{retinanet_forward.40} parent=0 // pred_check
    _
  $region3: #{retinanet_forward.40} parent=0 // pred_check_branch
    %9 = sbr.rel (0) target = $region5
  $region4: #{retinanet_forward.40} parent=0 // pred_region
    _
  $region5: #{retinanet_forward.40} parent=0 // pred_fallthru
    _
  // Predicated region
  $region6: #{retinanet_forward.40} parent=0 // pred_check
    _
  $region7: #{retinanet_forward.40} parent=0 // pred_check_branch
    %11 = sbr.rel (0) target = $region9
  $region8: #{retinanet_forward.40} parent=0 // pred_region
    _
  $region9: #{retinanet_forward.40} parent=0 // pred_fallthru
    _
  // Predicated region
  $region10: #{retinanet_forward.40} parent=0 // pred_check
    _
  $region11: #{retinanet_forward.40} parent=0 // pred_check_branch
    %13 = sbr.rel (0) target = $region13
  $region12: #{retinanet_forward.40} parent=0 // pred_region
    _
  $region13: #{retinanet_forward.40} parent=0 // pred_fallthru
    _
  %v15 = vld [vmem:[%s0] sm:$0xff]
  %v16 = vld [vmem:[%s0 + $0x8] sm:$0xf]
  %v17 = vld [vmem:[%s0 + $0xc] sm:$0xff]
  %v18 = vld [vmem:[%s0 + $0x14] sm:$0xf]
  %v19 = vld [vmem:[%s0 + $0x18] sm:$0xff]
  %v20 = vld [vmem:[%s0 + $0x20] sm:$0xf]
  %v21 = vld [vmem:[%s0 + $0x24] sm:$0xff]
  %v22 = vld [vmem:[%s0 + $0x2c] sm:$0xf]
  %v23 = vld [vmem:[%s0 + $0x30] sm:$0xff]
  %v24 = vld [vmem:[%s0 + $0x38] sm:$0xf]
  %v25 = vld [vmem:[%s0 + $0x3c] sm:$0xff]
  %v26 = vld [vmem:[%s0 + $0x44] sm:$0xf]
  %v27 = vld [vmem:[%s0 + $0x48] sm:$0xff]
  %v28 = vld [vmem:[%s0 + $0x50] sm:$0xf]
  %v29 = vld [vmem:[%s0 + $0x54] sm:$0xff]
  %v30 = vld [vmem:[%s0 + $0x5c] sm:$0xf]
  %v31 = vld [vmem:[%s0 + $0x60] sm:$0xff]
  %v32 = vld [vmem:[%s0 + $0x68] sm:$0xf]
  %v33 = vld [vmem:[%s0 + $0x6c] sm:$0xff]
  %v34 = vld [vmem:[%s0 + $0x74] sm:$0xf]
  %v35 = vld [vmem:[%s0 + $0x78] sm:$0xff]
  %v36 = vld [vmem:[%s0 + $0x80] sm:$0xf]
  %v37 = vld [vmem:[%s0 + $0x84] sm:$0xff]
  %v38 = vld [vmem:[%s0 + $0x8c] sm:$0xf]
  %v39 = vld [vmem:[%s0 + $0x90] sm:$0xff]
  %v40 = vld [vmem:[%s0 + $0x98] sm:$0xf]
  %v41 = vld [vmem:[%s0 + $0x9c] sm:$0xff]
  %v42 = vld [vmem:[%s0 + $0xa4] sm:$0xf]
  %v43 = vld [vmem:[%s0 + $0xa8] sm:$0xff]
  %v44 = vld [vmem:[%s0 + $0xb0] sm:$0xf]
  %v45 = vld [vmem:[%s0 + $0xb4] sm:$0xff]
  %v46 = vld [vmem:[%s0 + $0xbc] sm:$0xf]
  %v47 = vld [vmem:[%s0 + $0xc0] sm:$0xff]
  %v48 = vld [vmem:[%s0 + $0xc8] sm:$0xf]
  %v49 = vld [vmem:[%s0 + $0xcc] sm:$0xff]
  %v50 = vld [vmem:[%s0 + $0xd4] sm:$0xf]
  %v51 = vld [vmem:[%s0 + $0xd8] sm:$0xff]
  %v52 = vld [vmem:[%s0 + $0xe0] sm:$0xf]
  %v53 = vld [vmem:[%s0 + $0xe4] sm:$0xff]
  %v54 = vld [vmem:[%s0 + $0xec] sm:$0xf]
  %v55 = vld [vmem:[%s0 + $0xf0] sm:$0xff]
  %v56 = vld [vmem:[%s0 + $0xf8] sm:$0xf]
  %v57 = vld [vmem:[%s0 + $0xfc] sm:$0xff]
  %v58 = vld [vmem:[%s0 + $0x104] sm:$0xf]
  %v59 = vld [vmem:[%s1] sm:$0xf]
  %v60 = vld [vmem:[%s1 + $0x4] sm:$0xf]
  %v61 = vld [vmem:[%s1 + $0x8] sm:$0xf]
  %v62 = vld [vmem:[%s1 + $0xc] sm:$0xf]
  %v63 = vld [vmem:[%s1 + $0x10] sm:$0xf]
  %v64 = vld [vmem:[%s1 + $0x14] sm:$0xf]
  %v65 = vld [vmem:[%s1 + $0x18] sm:$0xf]
  %v66 = vld [vmem:[%s1 + $0x1c] sm:$0xf]
  %v67 = vld [vmem:[%s1 + $0x20] sm:$0xf]
  %v68 = vld [vmem:[%s1 + $0x24] sm:$0xf]
  %v69 = vld [vmem:[%s1 + $0x28] sm:$0xf]
  %v70 = vld [vmem:[%s1 + $0x2c] sm:$0xf]
  %v71 = vld [vmem:[%s1 + $0x30] sm:$0xf]
  %v72 = vld [vmem:[%s1 + $0x34] sm:$0xf]
  %v73 = vld [vmem:[%s1 + $0x38] sm:$0xf]
  %v74 = vld [vmem:[%s1 + $0x3c] sm:$0xf]
  %v75 = vld [vmem:[%s1 + $0x40] sm:$0xf]
  %v76 = vld [vmem:[%s1 + $0x44] sm:$0xf]
  %v77 = vld [vmem:[%s1 + $0x48] sm:$0xf]
  %v78 = vld [vmem:[%s1 + $0x4c] sm:$0xf]
  %v79 = vld [vmem:[%s1 + $0x50] sm:$0xf]
  %v80 = vld [vmem:[%s1 + $0x54] sm:$0xf]
  %v81 = vld [vmem:[%s1 + $0x58] sm:$0xf]
  %v82 = vld [vmem:[%s1 + $0x5c] sm:$0xf]
  %v83 = vld [vmem:[%s1 + $0x60] sm:$0xf]
  %v84 = vld [vmem:[%s1 + $0x64] sm:$0xf]
  %v85 = vld [vmem:[%s1 + $0x68] sm:$0xf]
  %v86 = vld [vmem:[%s1 + $0x6c] sm:$0xf]
  %v87 = vld [vmem:[%s1 + $0x70] sm:$0xf]
  %v88 = vld [vmem:[%s1 + $0x74] sm:$0xf]
  %v89 = vld [vmem:[%s1 + $0x78] sm:$0xf]
  %v90 = vld [vmem:[%s1 + $0x7c] sm:$0xf]
  %v91 = vld [vmem:[%s1 + $0x80] sm:$0xf]
  %v92 = vld [vmem:[%s1 + $0x84] sm:$0xf]
  %v93 = vld [vmem:[%s1 + $0x88] sm:$0xf]
  %v94 = vld [vmem:[%s1 + $0x8c] sm:$0xf]
  %v95 = vld [vmem:[%s2] sm:$0x1]
  %v97 = vlaneseq
  %v98 = vshrl.u32 %v97, 7
  %v99 = vsub.s32 0, %v98
  %v100 = vrot.slane %v95, %v99
  %v146 = vunpack.c.l.b16 %v15
  %v147 = vunpack.c.h.b16 %v15
  %v148 = vunpack.c.l.b16 %v16
  %v149 = vunpack.c.l.b16 %v17
  %v150 = vunpack.c.h.b16 %v17
  %v151 = vunpack.c.l.b16 %v18
  %v152 = vunpack.c.l.b16 %v19
  %v153 = vunpack.c.h.b16 %v19
  %v154 = vunpack.c.l.b16 %v20
  %v155 = vunpack.c.l.b16 %v21
  %v156 = vunpack.c.h.b16 %v21
  %v157 = vunpack.c.l.b16 %v22
  %v158 = vunpack.c.l.b16 %v23
  %v159 = vunpack.c.h.b16 %v23
  %v160 = vunpack.c.l.b16 %v24
  %v161 = vunpack.c.l.b16 %v25
  %v162 = vunpack.c.h.b16 %v25
  %v163 = vunpack.c.l.b16 %v26
  %v164 = vunpack.c.l.b16 %v27
  %v165 = vunpack.c.h.b16 %v27
  %v166 = vunpack.c.l.b16 %v28
  %v167 = vunpack.c.l.b16 %v29
  %v168 = vunpack.c.h.b16 %v29
  %v169 = vunpack.c.l.b16 %v30
  %v170 = vunpack.c.l.b16 %v31
  %v171 = vunpack.c.h.b16 %v31
  %v172 = vunpack.c.l.b16 %v32
  %v173 = vunpack.c.l.b16 %v33
  %v174 = vunpack.c.h.b16 %v33
  %v175 = vunpack.c.l.b16 %v34
  %v176 = vunpack.c.l.b16 %v35
  %v177 = vunpack.c.h.b16 %v35
  %v178 = vunpack.c.l.b16 %v36
  %v179 = vunpack.c.l.b16 %v37
  %v180 = vunpack.c.h.b16 %v37
  %v181 = vunpack.c.l.b16 %v38
  %v182 = vunpack.c.l.b16 %v39
  %v183 = vunpack.c.h.b16 %v39
  %v184 = vunpack.c.l.b16 %v40
  %v185 = vunpack.c.l.b16 %v41
  %v186 = vunpack.c.h.b16 %v41
  %v187 = vunpack.c.l.b16 %v42
  %v188 = vunpack.c.l.b16 %v43
  %v189 = vunpack.c.h.b16 %v43
  %v190 = vunpack.c.l.b16 %v44
  %v191 = vunpack.c.l.b16 %v45
  %v192 = vunpack.c.h.b16 %v45
  %v193 = vunpack.c.l.b16 %v46
  %v194 = vunpack.c.l.b16 %v47
  %v195 = vunpack.c.h.b16 %v47
  %v196 = vunpack.c.l.b16 %v48
  %v197 = vunpack.c.l.b16 %v49
  %v198 = vunpack.c.h.b16 %v49
  %v199 = vunpack.c.l.b16 %v50
  %v200 = vunpack.c.l.b16 %v51
  %v201 = vunpack.c.h.b16 %v51
  %v202 = vunpack.c.l.b16 %v52
  %v203 = vunpack.c.l.b16 %v53
  %v204 = vunpack.c.h.b16 %v53
  %v205 = vunpack.c.l.b16 %v54
  %v206 = vunpack.c.l.b16 %v55
  %v207 = vunpack.c.h.b16 %v55
  %v208 = vunpack.c.l.b16 %v56
  %v209 = vunpack.c.l.b16 %v57
  %v210 = vunpack.c.h.b16 %v57
  %v211 = vunpack.c.l.b16 %v58
  %v212 = vpack.c.b16 %v149, %v146
  %v213 = vpack.c.b16 %v150, %v147
  %v214 = vpack.c.b16 %v151, %v148
  %v215 = vpack.c.b16 %v155, %v152
  %v216 = vpack.c.b16 %v156, %v153
  %v217 = vpack.c.b16 %v157, %v154
  %v218 = vpack.c.b16 %v161, %v158
  %v219 = vpack.c.b16 %v162, %v159
  %v220 = vpack.c.b16 %v163, %v160
  %v221 = vpack.c.b16 %v167, %v164
  %v222 = vpack.c.b16 %v168, %v165
  %v223 = vpack.c.b16 %v169, %v166
  %v224 = vpack.c.b16 %v173, %v170
  %v225 = vpack.c.b16 %v174, %v171
  %v226 = vpack.c.b16 %v175, %v172
  %v227 = vpack.c.b16 %v179, %v176
  %v228 = vpack.c.b16 %v180, %v177
  %v229 = vpack.c.b16 %v181, %v178
  %v230 = vpack.c.b16 %v185, %v182
  %v231 = vpack.c.b16 %v186, %v183
  %v232 = vpack.c.b16 %v187, %v184
  %v233 = vpack.c.b16 %v191, %v188
  %v234 = vpack.c.b16 %v192, %v189
  %v235 = vpack.c.b16 %v193, %v190
  %v236 = vpack.c.b16 %v197, %v194
  %v237 = vpack.c.b16 %v198, %v195
  %v238 = vpack.c.b16 %v199, %v196
  %v239 = vpack.c.b16 %v203, %v200
  %v240 = vpack.c.b16 %v204, %v201
  %v241 = vpack.c.b16 %v205, %v202
  %v242 = vpack.c.b16 %v209, %v206
  %v243 = vpack.c.b16 %v210, %v207
  %v244 = vpack.c.b16 %v211, %v208
  %v303 = vunpack.c.l.b16 %v59
  %v304 = vunpack.c.l.b16 %v60
  %v305 = vunpack.c.l.b16 %v61
  %v306 = vunpack.c.l.b16 %v62
  %v307 = vunpack.c.l.b16 %v63
  %v308 = vunpack.c.l.b16 %v64
  %v309 = vunpack.c.l.b16 %v65
  %v310 = vunpack.c.l.b16 %v66
  %v311 = vunpack.c.l.b16 %v67
  %v312 = vunpack.c.l.b16 %v68
  %v313 = vunpack.c.l.b16 %v69
  %v314 = vunpack.c.l.b16 %v70
  %v315 = vunpack.c.l.b16 %v71
  %v316 = vunpack.c.l.b16 %v72
  %v317 = vunpack.c.l.b16 %v73
  %v318 = vunpack.c.l.b16 %v74
  %v319 = vunpack.c.l.b16 %v75
  %v320 = vunpack.c.l.b16 %v76
  %v321 = vunpack.c.l.b16 %v77
  %v322 = vunpack.c.l.b16 %v78
  %v323 = vunpack.c.l.b16 %v79
  %v324 = vunpack.c.l.b16 %v80
  %v325 = vunpack.c.l.b16 %v81
  %v326 = vunpack.c.l.b16 %v82
  %v327 = vunpack.c.l.b16 %v83
  %v328 = vunpack.c.l.b16 %v84
  %v329 = vunpack.c.l.b16 %v85
  %v330 = vunpack.c.l.b16 %v86
  %v331 = vunpack.c.l.b16 %v87
  %v332 = vunpack.c.l.b16 %v88
  %v333 = vunpack.c.l.b16 %v89
  %v334 = vunpack.c.l.b16 %v90
  %v335 = vunpack.c.l.b16 %v91
  %v336 = vunpack.c.l.b16 %v92
  %v337 = vunpack.c.l.b16 %v93
  %v338 = vunpack.c.l.b16 %v94
  %v339 = vpack.c.b16 %v304, %v303
  %v340 = vpack.c.b16 %v306, %v305
  %v341 = vpack.c.b16 %v308, %v307
  %v342 = vpack.c.b16 %v310, %v309
  %v343 = vpack.c.b16 %v312, %v311
  %v344 = vpack.c.b16 %v314, %v313
  %v345 = vpack.c.b16 %v316, %v315
  %v346 = vpack.c.b16 %v318, %v317
  %v347 = vpack.c.b16 %v320, %v319
  %v348 = vpack.c.b16 %v322, %v321
  %v349 = vpack.c.b16 %v324, %v323
  %v350 = vpack.c.b16 %v326, %v325
  %v351 = vpack.c.b16 %v328, %v327
  %v352 = vpack.c.b16 %v330, %v329
  %v353 = vpack.c.b16 %v332, %v331
  %v354 = vpack.c.b16 %v334, %v333
  %v355 = vpack.c.b16 %v336, %v335
  %v356 = vpack.c.b16 %v338, %v337
  %vm375 = vcmask 261120
  %v377 = vsel %vm375, %v214, 0
  %v380 = vsel %vm375, %v217, 0
  %v383 = vsel %vm375, %v220, 0
  %v386 = vsel %vm375, %v223, 0
  %v389 = vsel %vm375, %v226, 0
  %v392 = vsel %vm375, %v229, 0
  %v395 = vsel %vm375, %v232, 0
  %v398 = vsel %vm375, %v235, 0
  %v401 = vsel %vm375, %v238, 0
  %v404 = vsel %vm375, %v241, 0
  %v407 = vsel %vm375, %v244, 0
  %409 = vmatprep.subr.bf16.mxu0 0
  %410 = vmatpush1.bf16.msra.mxu0 %v346
  %411 = vmatprep.subr.bf16.mxu0 0
  %412 = vmatpush1.bf16.msra.mxu0 %v345
  %413 = vmatprep.subr.bf16.mxu0 0
  %414 = vmatpush1.bf16.msra.mxu0 %v344
  %415 = vmatprep.subr.bf16.mxu0 0
  %416 = vmatpush1.bf16.msra.mxu0 %v343
  %417 = vmatprep.subr.bf16.mxu0 0
  %418 = vmatpush1.bf16.msra.mxu0 %v342
  %419 = vmatprep.subr.bf16.mxu0 0
  %420 = vmatpush1.bf16.msra.mxu0 %v341
  %421 = vmatprep.subr.bf16.mxu0 0
  %422 = vmatpush1.bf16.msra.mxu0 %v340
  %423 = vmatprep.subr.bf16.mxu0 0
  %424 = vmatpush1.bf16.msra.mxu0 %v339
  %425 = vmatprep.subr.bf16.mxu0 0
  %426 = vmatpush2.bf16.msra.mxu0 %v354
  %427 = vmatprep.subr.bf16.mxu0 0
  %428 = vmatpush2.bf16.msra.mxu0 %v353
  %429 = vmatprep.subr.bf16.mxu0 0
  %430 = vmatpush2.bf16.msra.mxu0 %v352
  %431 = vmatprep.subr.bf16.mxu0 0
  %432 = vmatpush2.bf16.msra.mxu0 %v351
  %433 = vmatprep.subr.bf16.mxu0 0
  %434 = vmatpush2.bf16.msra.mxu0 %v350
  %435 = vmatprep.subr.bf16.mxu0 0
  %436 = vmatpush2.bf16.msra.mxu0 %v349
  %437 = vmatprep.subr.bf16.mxu0 0
  %438 = vmatpush2.bf16.msra.mxu0 %v348
  %439 = vmatprep.subr.bf16.mxu0 0
  %440 = vmatpush2.bf16.msra.mxu0 %v347
  %441 = vmatprep.mubr.bf16.mxu0 %v213
  %442 = vmatmul.mubr.bf16.gmra.mxu0 %v212
  %v443 = vpop.f32.mrf.mxu0
  %v444 = vadd.f32 %v100, %v443
  %v445 = vpop.f32.mrf.mxu0
  %v446 = vpop.f32.mrf.mxu0
  %v447 = vadd.f32 %v100, %v446
  %v448 = vpop.f32.mrf.mxu0
  %449 = vmatprep.mubr.bf16.mxu0 %v216
  %450 = vmatmul.mubr.bf16.gmra.mxu0 %v215
  %v451 = vpop.f32.mrf.mxu0
  %v452 = vadd.f32 %v100, %v451
  %v453 = vpop.f32.mrf.mxu0
  %v454 = vpop.f32.mrf.mxu0
  %v455 = vadd.f32 %v100, %v454
  %v456 = vpop.f32.mrf.mxu0
  %457 = vmatprep.mubr.bf16.mxu0 %v219
  %458 = vmatmul.mubr.bf16.gmra.mxu0 %v218
  %v459 = vpop.f32.mrf.mxu0
  %v460 = vadd.f32 %v100, %v459
  %v461 = vpop.f32.mrf.mxu0
  %v462 = vpop.f32.mrf.mxu0
  %v463 = vadd.f32 %v100, %v462
  %v464 = vpop.f32.mrf.mxu0
  %465 = vmatprep.mubr.bf16.mxu0 %v222
  %466 = vmatmul.mubr.bf16.gmra.mxu0 %v221
  %v467 = vpop.f32.mrf.mxu0
  %v468 = vadd.f32 %v100, %v467
  %v469 = vpop.f32.mrf.mxu0
  %v470 = vpop.f32.mrf.mxu0
  %v471 = vadd.f32 %v100, %v470
  %v472 = vpop.f32.mrf.mxu0
  %473 = vmatprep.mubr.bf16.mxu0 %v225
  %474 = vmatmul.mubr.bf16.gmra.mxu0 %v224
  %v475 = vpop.f32.mrf.mxu0
  %v476 = vadd.f32 %v100, %v475
  %v477 = vpop.f32.mrf.mxu0
  %v478 = vpop.f32.mrf.mxu0
  %v479 = vadd.f32 %v100, %v478
  %v480 = vpop.f32.mrf.mxu0
  %481 = vmatprep.mubr.bf16.mxu0 %v228
  %482 = vmatmul.mubr.bf16.gmra.mxu0 %v227
  %v483 = vpop.f32.mrf.mxu0
  %v484 = vadd.f32 %v100, %v483
  %v485 = vpop.f32.mrf.mxu0
  %v486 = vpop.f32.mrf.mxu0
  %v487 = vadd.f32 %v100, %v486
  %v488 = vpop.f32.mrf.mxu0
  %489 = vmatprep.mubr.bf16.mxu0 %v231
  %490 = vmatmul.mubr.bf16.gmra.mxu0 %v230
  %v491 = vpop.f32.mrf.mxu0
  %v492 = vadd.f32 %v100, %v491
  %v493 = vpop.f32.mrf.mxu0
  %v494 = vpop.f32.mrf.mxu0
  %v495 = vadd.f32 %v100, %v494
  %v496 = vpop.f32.mrf.mxu0
  %497 = vmatprep.mubr.bf16.mxu0 %v234
  %498 = vmatmul.mubr.bf16.gmra.mxu0 %v233
  %v499 = vpop.f32.mrf.mxu0
  %v500 = vadd.f32 %v100, %v499
  %v501 = vpop.f32.mrf.mxu0
  %v502 = vpop.f32.mrf.mxu0
  %v503 = vadd.f32 %v100, %v502
  %v504 = vpop.f32.mrf.mxu0
  %505 = vmatprep.mubr.bf16.mxu0 %v237
  %506 = vmatmul.mubr.bf16.gmra.mxu0 %v236
  %v507 = vpop.f32.mrf.mxu0
  %v508 = vadd.f32 %v100, %v507
  %v509 = vpop.f32.mrf.mxu0
  %v510 = vpop.f32.mrf.mxu0
  %v511 = vadd.f32 %v100, %v510
  %v512 = vpop.f32.mrf.mxu0
  %513 = vmatprep.mubr.bf16.mxu0 %v240
  %514 = vmatmul.mubr.bf16.gmra.mxu0 %v239
  %v515 = vpop.f32.mrf.mxu0
  %v516 = vadd.f32 %v100, %v515
  %v517 = vpop.f32.mrf.mxu0
  %v518 = vpop.f32.mrf.mxu0
  %v519 = vadd.f32 %v100, %v518
  %v520 = vpop.f32.mrf.mxu0
  %521 = vmatprep.mubr.bf16.mxu0 %v243
  %522 = vmatmul.mubr.bf16.gmra.mxu0 %v242
  %v523 = vpop.f32.mrf.mxu0
  %v524 = vadd.f32 %v100, %v523
  %v525 = vpop.f32.mrf.mxu0
  %v526 = vpop.f32.mrf.mxu0
  %v527 = vadd.f32 %v100, %v526
  %v528 = vpop.f32.mrf.mxu0
  %529 = vdwg.mxu0
  %530 = vmatprep.subr.bf16.mxu0 0
  %531 = vmatpush1.bf16.msra.mxu0 0
  %532 = vmatprep.subr.bf16.mxu0 0
  %533 = vmatpush1.bf16.msra.mxu0 0
  %534 = vmatprep.subr.bf16.mxu0 0
  %535 = vmatpush1.bf16.msra.mxu0 0
  %536 = vmatprep.subr.bf16.mxu0 0
  %537 = vmatpush1.bf16.msra.mxu0 0
  %538 = vmatprep.subr.bf16.mxu0 0
  %539 = vmatpush1.bf16.msra.mxu0 0
  %540 = vmatprep.subr.bf16.mxu0 0
  %541 = vmatpush1.bf16.msra.mxu0 0
  %542 = vmatprep.subr.bf16.mxu0 0
  %543 = vmatpush1.bf16.msra.mxu0 %v356
  %544 = vmatprep.subr.bf16.mxu0 0
  %545 = vmatpush1.bf16.msra.mxu0 %v355
  %546 = vmatprep.subr.bf16.mxu0 0
  %547 = vmatpush2.bf16.msra.mxu0 0
  %548 = vmatprep.subr.bf16.mxu0 0
  %549 = vmatpush2.bf16.msra.mxu0 0
  %550 = vmatprep.subr.bf16.mxu0 0
  %551 = vmatpush2.bf16.msra.mxu0 0
  %552 = vmatprep.subr.bf16.mxu0 0
  %553 = vmatpush2.bf16.msra.mxu0 0
  %554 = vmatprep.subr.bf16.mxu0 0
  %555 = vmatpush2.bf16.msra.mxu0 0
  %556 = vmatprep.subr.bf16.mxu0 0
  %557 = vmatpush2.bf16.msra.mxu0 0
  %558 = vmatprep.subr.bf16.mxu0 0
  %559 = vmatpush2.bf16.msra.mxu0 0
  %560 = vmatprep.subr.bf16.mxu0 0
  %561 = vmatpush2.bf16.msra.mxu0 0
  %562 = vmatprep.mubr.bf16.mxu0 0
  %563 = vmatmul.mubr.bf16.gmra.mxu0 %v377
  %v564 = vpop.f32.mrf.mxu0
  %v565 = vadd.f32 %v444, %v564
  %v566 = vpop.f32.mrf.mxu0
  %v567 = vpop.f32.mrf.mxu0
  %v568 = vadd.f32 %v447, %v567
  %v569 = vpop.f32.mrf.mxu0
  %570 = vmatprep.mubr.bf16.mxu0 0
  %571 = vmatmul.mubr.bf16.gmra.mxu0 %v380
  %v572 = vpop.f32.mrf.mxu0
  %v573 = vadd.f32 %v452, %v572
  %v574 = vpop.f32.mrf.mxu0
  %v575 = vpop.f32.mrf.mxu0
  %v576 = vadd.f32 %v455, %v575
  %v577 = vpop.f32.mrf.mxu0
  %578 = vmatprep.mubr.bf16.mxu0 0
  %579 = vmatmul.mubr.bf16.gmra.mxu0 %v383
  %v580 = vpop.f32.mrf.mxu0
  %v581 = vadd.f32 %v460, %v580
  %v582 = vpop.f32.mrf.mxu0
  %v583 = vpop.f32.mrf.mxu0
  %v584 = vadd.f32 %v463, %v583
  %v585 = vpop.f32.mrf.mxu0
  %586 = vmatprep.mubr.bf16.mxu0 0
  %587 = vmatmul.mubr.bf16.gmra.mxu0 %v386
  %v588 = vpop.f32.mrf.mxu0
  %v589 = vadd.f32 %v468, %v588
  %v590 = vpop.f32.mrf.mxu0
  %v591 = vpop.f32.mrf.mxu0
  %v592 = vadd.f32 %v471, %v591
  %v593 = vpop.f32.mrf.mxu0
  %594 = vmatprep.mubr.bf16.mxu0 0
  %595 = vmatmul.mubr.bf16.gmra.mxu0 %v389
  %v596 = vpop.f32.mrf.mxu0
  %v597 = vadd.f32 %v476, %v596
  %v598 = vpop.f32.mrf.mxu0
  %v599 = vpop.f32.mrf.mxu0
  %v600 = vadd.f32 %v479, %v599
  %v601 = vpop.f32.mrf.mxu0
  %602 = vmatprep.mubr.bf16.mxu0 0
  %603 = vmatmul.mubr.bf16.gmra.mxu0 %v392
  %v604 = vpop.f32.mrf.mxu0
  %v605 = vadd.f32 %v484, %v604
  %v606 = vpop.f32.mrf.mxu0
  %v607 = vpop.f32.mrf.mxu0
  %v608 = vadd.f32 %v487, %v607
  %v609 = vpop.f32.mrf.mxu0
  %610 = vmatprep.mubr.bf16.mxu0 0
  %611 = vmatmul.mubr.bf16.gmra.mxu0 %v395
  %v612 = vpop.f32.mrf.mxu0
  %v613 = vadd.f32 %v492, %v612
  %v614 = vpop.f32.mrf.mxu0
  %v615 = vpop.f32.mrf.mxu0
  %v616 = vadd.f32 %v495, %v615
  %v617 = vpop.f32.mrf.mxu0
  %618 = vmatprep.mubr.bf16.mxu0 0
  %619 = vmatmul.mubr.bf16.gmra.mxu0 %v398
  %v620 = vpop.f32.mrf.mxu0
  %v621 = vadd.f32 %v500, %v620
  %v622 = vpop.f32.mrf.mxu0
  %v623 = vpop.f32.mrf.mxu0
  %v624 = vadd.f32 %v503, %v623
  %v625 = vpop.f32.mrf.mxu0
  %626 = vmatprep.mubr.bf16.mxu0 0
  %627 = vmatmul.mubr.bf16.gmra.mxu0 %v401
  %v628 = vpop.f32.mrf.mxu0
  %v629 = vadd.f32 %v508, %v628
  %v630 = vpop.f32.mrf.mxu0
  %v631 = vpop.f32.mrf.mxu0
  %v632 = vadd.f32 %v511, %v631
  %v633 = vpop.f32.mrf.mxu0
  %634 = vmatprep.mubr.bf16.mxu0 0
  %635 = vmatmul.mubr.bf16.gmra.mxu0 %v404
  %v636 = vpop.f32.mrf.mxu0
  %v637 = vadd.f32 %v516, %v636
  %v638 = vpop.f32.mrf.mxu0
  %v639 = vpop.f32.mrf.mxu0
  %v640 = vadd.f32 %v519, %v639
  %v641 = vpop.f32.mrf.mxu0
  %642 = vmatprep.mubr.bf16.mxu0 0
  %643 = vmatmul.mubr.bf16.gmra.mxu0 %v407
  %v644 = vpop.f32.mrf.mxu0
  %v645 = vadd.f32 %v524, %v644
  %v646 = vpop.f32.mrf.mxu0
  %v647 = vpop.f32.mrf.mxu0
  %v648 = vadd.f32 %v527, %v647
  %v649 = vpop.f32.mrf.mxu0
  %650 = vdwg.mxu0
  %651 = vst [vmem:[%s3] sm:$0xff] %v565
  %652 = vst [vmem:[%s3 + $0x8] sm:$0xff] %v568
  %653 = vst [vmem:[%s3 + $0x10] sm:$0xff] %v573
  %654 = vst [vmem:[%s3 + $0x18] sm:$0xff] %v576
  %655 = vst [vmem:[%s3 + $0x20] sm:$0xff] %v581
  %656 = vst [vmem:[%s3 + $0x28] sm:$0xff] %v584
  %657 = vst [vmem:[%s3 + $0x30] sm:$0xff] %v589
  %658 = vst [vmem:[%s3 + $0x38] sm:$0xff] %v592
  %659 = vst [vmem:[%s3 + $0x40] sm:$0xff] %v597
  %660 = vst [vmem:[%s3 + $0x48] sm:$0xff] %v600
  %661 = vst [vmem:[%s3 + $0x50] sm:$0xff] %v605
  %662 = vst [vmem:[%s3 + $0x58] sm:$0xff] %v608
  %663 = vst [vmem:[%s3 + $0x60] sm:$0xff] %v613
  %664 = vst [vmem:[%s3 + $0x68] sm:$0xff] %v616
  %665 = vst [vmem:[%s3 + $0x70] sm:$0xff] %v621
  %666 = vst [vmem:[%s3 + $0x78] sm:$0xff] %v624
  %667 = vst [vmem:[%s3 + $0x80] sm:$0xff] %v629
  %668 = vst [vmem:[%s3 + $0x88] sm:$0xff] %v632
  %669 = vst [vmem:[%s3 + $0x90] sm:$0xff] %v637
  %670 = vst [vmem:[%s3 + $0x98] sm:$0xff] %v640
  %671 = vst [vmem:[%s3 + $0xa0] sm:$0xff] %v645
  %672 = vst [vmem:[%s3 + $0xa8] sm:$0xff] %v648
  // Predicated region
  $region14: #{retinanet_forward.40} parent=0 // pred_check
    _
  $region15: #{retinanet_forward.40} parent=0 // pred_check_branch
    %674 = sbr.rel (0) target = $region17
  $region16: #{retinanet_forward.40} parent=0 // pred_region
    _
  $region17: #{retinanet_forward.40} parent=0 // pred_fallthru
    _
  // Predicated region
  $region18: #{retinanet_forward.40} parent=0 // pred_check
    _
  $region19: #{retinanet_forward.40} parent=0 // pred_check_branch
    %676 = sbr.rel (0) target = $region21
  $region20: #{retinanet_forward.40} parent=0 // pred_region
    _
  $region21: #{retinanet_forward.40} parent=0 // pred_fallthru
    _

// kernel: retinanet_forward.45
$region0: #{retinanet_forward.45}
  #allocation0 [shape = 'u32[]', space=smem, size = 0x4, offset = 0x4, fixed_abs, tag = 'smem constant byte address 0x4 - core index']
  #allocation1 [shape = 'u32[144,128]{1,0:T(1,128)}', space=vmem, size = 0x12000, scoped, tag = 'internal scratch']
  %s0 = inlined_call_operand.vmem [shape: bf16[176,288], index: 0, kind: input, shape index: {}]
  %s1 = inlined_call_operand.vmem [shape: bf16[288,128], index: 1, kind: input, shape index: {}]
  %s2 = inlined_call_operand.vmem [shape: f32[1,128], index: 2, kind: input, shape index: {}]
  %s3 = inlined_call_operand.vmem [shape: f32[176,128], index: 3, kind: output, shape index: {}]
  %s4 = sld [smem:[#allocation0]]
  $region22: #{retinanet_forward.45} parent=0
    _
  %s6 = ssub.s32 1, %s4
  %s7 = scalar_select 0, %s6, %s4
  // Predicated region
  $region2: #{retinanet_forward.45} parent=0 // pred_check
    _
  $region3: #{retinanet_forward.45} parent=0 // pred_check_branch
    %9 = sbr.rel (0) target = $region5
  $region4: #{retinanet_forward.45} parent=0 // pred_region
    _
  $region5: #{retinanet_forward.45} parent=0 // pred_fallthru
    _
  // Predicated region
  $region6: #{retinanet_forward.45} parent=0 // pred_check
    _
  $region7: #{retinanet_forward.45} parent=0 // pred_check_branch
    %11 = sbr.rel (0) target = $region9
  $region8: #{retinanet_forward.45} parent=0 // pred_region
    _
  $region9: #{retinanet_forward.45} parent=0 // pred_fallthru
    _
  // Predicated region
  $region10: #{retinanet_forward.45} parent=0 // pred_check
    _
  $region11: #{retinanet_forward.45} parent=0 // pred_check_branch
    %13 = sbr.rel (0) target = $region13
  $region12: #{retinanet_forward.45} parent=0 // pred_region
    _
  $region13: #{retinanet_forward.45} parent=0 // pred_fallthru
    _
  %v15 = vld [vmem:[%s0] sm:$0xff]
  %v16 = vld [vmem:[%s0 + $0x8] sm:$0xf]
  %v17 = vld [vmem:[%s0 + $0xc] sm:$0xff]
  %v18 = vld [vmem:[%s0 + $0x14] sm:$0xf]
  %v19 = vld [vmem:[%s0 + $0x18] sm:$0xff]
  %v20 = vld [vmem:[%s0 + $0x20] sm:$0xf]
  %v21 = vld [vmem:[%s0 + $0x24] sm:$0xff]
  %v22 = vld [vmem:[%s0 + $0x2c] sm:$0xf]
  %v23 = vld [vmem:[%s0 + $0x30] sm:$0xff]
  %v24 = vld [vmem:[%s0 + $0x38] sm:$0xf]
  %v25 = vld [vmem:[%s0 + $0x3c] sm:$0xff]
  %v26 = vld [vmem:[%s0 + $0x44] sm:$0xf]
  %v27 = vld [vmem:[%s0 + $0x48] sm:$0xff]
  %v28 = vld [vmem:[%s0 + $0x50] sm:$0xf]
  %v29 = vld [vmem:[%s0 + $0x54] sm:$0xff]
  %v30 = vld [vmem:[%s0 + $0x5c] sm:$0xf]
  %v31 = vld [vmem:[%s0 + $0x60] sm:$0xff]
  %v32 = vld [vmem:[%s0 + $0x68] sm:$0xf]
  %v33 = vld [vmem:[%s0 + $0x6c] sm:$0xff]
  %v34 = vld [vmem:[%s0 + $0x74] sm:$0xf]
  %v35 = vld [vmem:[%s0 + $0x78] sm:$0xff]
  %v36 = vld [vmem:[%s0 + $0x80] sm:$0xf]
  %v37 = vld [vmem:[%s0 + $0x84] sm:$0xff]
  %v38 = vld [vmem:[%s0 + $0x8c] sm:$0xf]
  %v39 = vld [vmem:[%s0 + $0x90] sm:$0xff]
  %v40 = vld [vmem:[%s0 + $0x98] sm:$0xf]
  %v41 = vld [vmem:[%s0 + $0x9c] sm:$0xff]
  %v42 = vld [vmem:[%s0 + $0xa4] sm:$0xf]
  %v43 = vld [vmem:[%s0 + $0xa8] sm:$0xff]
  %v44 = vld [vmem:[%s0 + $0xb0] sm:$0xf]
  %v45 = vld [vmem:[%s0 + $0xb4] sm:$0xff]
  %v46 = vld [vmem:[%s0 + $0xbc] sm:$0xf]
  %v47 = vld [vmem:[%s0 + $0xc0] sm:$0xff]
  %v48 = vld [vmem:[%s0 + $0xc8] sm:$0xf]
  %v49 = vld [vmem:[%s0 + $0xcc] sm:$0xff]
  %v50 = vld [vmem:[%s0 + $0xd4] sm:$0xf]
  %v51 = vld [vmem:[%s0 + $0xd8] sm:$0xff]
  %v52 = vld [vmem:[%s0 + $0xe0] sm:$0xf]
  %v53 = vld [vmem:[%s0 + $0xe4] sm:$0xff]
  %v54 = vld [vmem:[%s0 + $0xec] sm:$0xf]
  %v55 = vld [vmem:[%s0 + $0xf0] sm:$0xff]
  %v56 = vld [vmem:[%s0 + $0xf8] sm:$0xf]
  %v57 = vld [vmem:[%s0 + $0xfc] sm:$0xff]
  %v58 = vld [vmem:[%s0 + $0x104] sm:$0xf]
  %v59 = vld [vmem:[%s1] sm:$0xf]
  %v60 = vld [vmem:[%s1 + $0x4] sm:$0xf]
  %v61 = vld [vmem:[%s1 + $0x8] sm:$0xf]
  %v62 = vld [vmem:[%s1 + $0xc] sm:$0xf]
  %v63 = vld [vmem:[%s1 + $0x10] sm:$0xf]
  %v64 = vld [vmem:[%s1 + $0x14] sm:$0xf]
  %v65 = vld [vmem:[%s1 + $0x18] sm:$0xf]
  %v66 = vld [vmem:[%s1 + $0x1c] sm:$0xf]
  %v67 = vld [vmem:[%s1 + $0x20] sm:$0xf]
  %v68 = vld [vmem:[%s1 + $0x24] sm:$0xf]
  %v69 = vld [vmem:[%s1 + $0x28] sm:$0xf]
  %v70 = vld [vmem:[%s1 + $0x2c] sm:$0xf]
  %v71 = vld [vmem:[%s1 + $0x30] sm:$0xf]
  %v72 = vld [vmem:[%s1 + $0x34] sm:$0xf]
  %v73 = vld [vmem:[%s1 + $0x38] sm:$0xf]
  %v74 = vld [vmem:[%s1 + $0x3c] sm:$0xf]
  %v75 = vld [vmem:[%s1 + $0x40] sm:$0xf]
  %v76 = vld [vmem:[%s1 + $0x44] sm:$0xf]
  %v77 = vld [vmem:[%s1 + $0x48] sm:$0xf]
  %v78 = vld [vmem:[%s1 + $0x4c] sm:$0xf]
  %v79 = vld [vmem:[%s1 + $0x50] sm:$0xf]
  %v80 = vld [vmem:[%s1 + $0x54] sm:$0xf]
  %v81 = vld [vmem:[%s1 + $0x58] sm:$0xf]
  %v82 = vld [vmem:[%s1 + $0x5c] sm:$0xf]
  %v83 = vld [vmem:[%s1 + $0x60] sm:$0xf]
  %v84 = vld [vmem:[%s1 + $0x64] sm:$0xf]
  %v85 = vld [vmem:[%s1 + $0x68] sm:$0xf]
  %v86 = vld [vmem:[%s1 + $0x6c] sm:$0xf]
  %v87 = vld [vmem:[%s1 + $0x70] sm:$0xf]
  %v88 = vld [vmem:[%s1 + $0x74] sm:$0xf]
  %v89 = vld [vmem:[%s1 + $0x78] sm:$0xf]
  %v90 = vld [vmem:[%s1 + $0x7c] sm:$0xf]
  %v91 = vld [vmem:[%s1 + $0x80] sm:$0xf]
  %v92 = vld [vmem:[%s1 + $0x84] sm:$0xf]
  %v93 = vld [vmem:[%s1 + $0x88] sm:$0xf]
  %v94 = vld [vmem:[%s1 + $0x8c] sm:$0xf]
  %v95 = vld [vmem:[%s2] sm:$0x1]
  %v97 = vlaneseq
  %v98 = vshrl.u32 %v97, 7
  %v99 = vsub.s32 0, %v98
  %v100 = vrot.slane %v95, %v99
  %v146 = vunpack.c.l.b16 %v15
  %v147 = vunpack.c.h.b16 %v15
  %v148 = vunpack.c.l.b16 %v16
  %v149 = vunpack.c.l.b16 %v17
  %v150 = vunpack.c.h.b16 %v17
  %v151 = vunpack.c.l.b16 %v18
  %v152 = vunpack.c.l.b16 %v19
  %v153 = vunpack.c.h.b16 %v19
  %v154 = vunpack.c.l.b16 %v20
  %v155 = vunpack.c.l.b16 %v21
  %v156 = vunpack.c.h.b16 %v21
  %v157 = vunpack.c.l.b16 %v22
  %v158 = vunpack.c.l.b16 %v23
  %v159 = vunpack.c.h.b16 %v23
  %v160 = vunpack.c.l.b16 %v24
  %v161 = vunpack.c.l.b16 %v25
  %v162 = vunpack.c.h.b16 %v25
  %v163 = vunpack.c.l.b16 %v26
  %v164 = vunpack.c.l.b16 %v27
  %v165 = vunpack.c.h.b16 %v27
  %v166 = vunpack.c.l.b16 %v28
  %v167 = vunpack.c.l.b16 %v29
  %v168 = vunpack.c.h.b16 %v29
  %v169 = vunpack.c.l.b16 %v30
  %v170 = vunpack.c.l.b16 %v31
  %v171 = vunpack.c.h.b16 %v31
  %v172 = vunpack.c.l.b16 %v32
  %v173 = vunpack.c.l.b16 %v33
  %v174 = vunpack.c.h.b16 %v33
  %v175 = vunpack.c.l.b16 %v34
  %v176 = vunpack.c.l.b16 %v35
  %v177 = vunpack.c.h.b16 %v35
  %v178 = vunpack.c.l.b16 %v36
  %v179 = vunpack.c.l.b16 %v37
  %v180 = vunpack.c.h.b16 %v37
  %v181 = vunpack.c.l.b16 %v38
  %v182 = vunpack.c.l.b16 %v39
  %v183 = vunpack.c.h.b16 %v39
  %v184 = vunpack.c.l.b16 %v40
  %v185 = vunpack.c.l.b16 %v41
  %v186 = vunpack.c.h.b16 %v41
  %v187 = vunpack.c.l.b16 %v42
  %v188 = vunpack.c.l.b16 %v43
  %v189 = vunpack.c.h.b16 %v43
  %v190 = vunpack.c.l.b16 %v44
  %v191 = vunpack.c.l.b16 %v45
  %v192 = vunpack.c.h.b16 %v45
  %v193 = vunpack.c.l.b16 %v46
  %v194 = vunpack.c.l.b16 %v47
  %v195 = vunpack.c.h.b16 %v47
  %v196 = vunpack.c.l.b16 %v48
  %v197 = vunpack.c.l.b16 %v49
  %v198 = vunpack.c.h.b16 %v49
  %v199 = vunpack.c.l.b16 %v50
  %v200 = vunpack.c.l.b16 %v51
  %v201 = vunpack.c.h.b16 %v51
  %v202 = vunpack.c.l.b16 %v52
  %v203 = vunpack.c.l.b16 %v53
  %v204 = vunpack.c.h.b16 %v53
  %v205 = vunpack.c.l.b16 %v54
  %v206 = vunpack.c.l.b16 %v55
  %v207 = vunpack.c.h.b16 %v55
  %v208 = vunpack.c.l.b16 %v56
  %v209 = vunpack.c.l.b16 %v57
  %v210 = vunpack.c.h.b16 %v57
  %v211 = vunpack.c.l.b16 %v58
  %v212 = vpack.c.b16 %v149, %v146
  %v213 = vpack.c.b16 %v150, %v147
  %v214 = vpack.c.b16 %v151, %v148
  %v215 = vpack.c.b16 %v155, %v152
  %v216 = vpack.c.b16 %v156, %v153
  %v217 = vpack.c.b16 %v157, %v154
  %v218 = vpack.c.b16 %v161, %v158
  %v219 = vpack.c.b16 %v162, %v159
  %v220 = vpack.c.b16 %v163, %v160
  %v221 = vpack.c.b16 %v167, %v164
  %v222 = vpack.c.b16 %v168, %v165
  %v223 = vpack.c.b16 %v169, %v166
  %v224 = vpack.c.b16 %v173, %v170
  %v225 = vpack.c.b16 %v174, %v171
  %v226 = vpack.c.b16 %v175, %v172
  %v227 = vpack.c.b16 %v179, %v176
  %v228 = vpack.c.b16 %v180, %v177
  %v229 = vpack.c.b16 %v181, %v178
  %v230 = vpack.c.b16 %v185, %v182
  %v231 = vpack.c.b16 %v186, %v183
  %v232 = vpack.c.b16 %v187, %v184
  %v233 = vpack.c.b16 %v191, %v188
  %v234 = vpack.c.b16 %v192, %v189
  %v235 = vpack.c.b16 %v193, %v190
  %v236 = vpack.c.b16 %v197, %v194
  %v237 = vpack.c.b16 %v198, %v195
  %v238 = vpack.c.b16 %v199, %v196
  %v239 = vpack.c.b16 %v203, %v200
  %v240 = vpack.c.b16 %v204, %v201
  %v241 = vpack.c.b16 %v205, %v202
  %v242 = vpack.c.b16 %v209, %v206
  %v243 = vpack.c.b16 %v210, %v207
  %v244 = vpack.c.b16 %v211, %v208
  %v303 = vunpack.c.l.b16 %v59
  %v304 = vunpack.c.l.b16 %v60
  %v305 = vunpack.c.l.b16 %v61
  %v306 = vunpack.c.l.b16 %v62
  %v307 = vunpack.c.l.b16 %v63
  %v308 = vunpack.c.l.b16 %v64
  %v309 = vunpack.c.l.b16 %v65
  %v310 = vunpack.c.l.b16 %v66
  %v311 = vunpack.c.l.b16 %v67
  %v312 = vunpack.c.l.b16 %v68
  %v313 = vunpack.c.l.b16 %v69
  %v314 = vunpack.c.l.b16 %v70
  %v315 = vunpack.c.l.b16 %v71
  %v316 = vunpack.c.l.b16 %v72
  %v317 = vunpack.c.l.b16 %v73
  %v318 = vunpack.c.l.b16 %v74
  %v319 = vunpack.c.l.b16 %v75
  %v320 = vunpack.c.l.b16 %v76
  %v321 = vunpack.c.l.b16 %v77
  %v322 = vunpack.c.l.b16 %v78
  %v323 = vunpack.c.l.b16 %v79
  %v324 = vunpack.c.l.b16 %v80
  %v325 = vunpack.c.l.b16 %v81
  %v326 = vunpack.c.l.b16 %v82
  %v327 = vunpack.c.l.b16 %v83
  %v328 = vunpack.c.l.b16 %v84
  %v329 = vunpack.c.l.b16 %v85
  %v330 = vunpack.c.l.b16 %v86
  %v331 = vunpack.c.l.b16 %v87
  %v332 = vunpack.c.l.b16 %v88
  %v333 = vunpack.c.l.b16 %v89
  %v334 = vunpack.c.l.b16 %v90
  %v335 = vunpack.c.l.b16 %v91
  %v336 = vunpack.c.l.b16 %v92
  %v337 = vunpack.c.l.b16 %v93
  %v338 = vunpack.c.l.b16 %v94
  %v339 = vpack.c.b16 %v304, %v303
  %v340 = vpack.c.b16 %v306, %v305
  %v341 = vpack.c.b16 %v308, %v307
  %v342 = vpack.c.b16 %v310, %v309
  %v343 = vpack.c.b16 %v312, %v311
  %v344 = vpack.c.b16 %v314, %v313
  %v345 = vpack.c.b16 %v316, %v315
  %v346 = vpack.c.b16 %v318, %v317
  %v347 = vpack.c.b16 %v320, %v319
  %v348 = vpack.c.b16 %v322, %v321
  %v349 = vpack.c.b16 %v324, %v323
  %v350 = vpack.c.b16 %v326, %v325
  %v351 = vpack.c.b16 %v328, %v327
  %v352 = vpack.c.b16 %v330, %v329
  %v353 = vpack.c.b16 %v332, %v331
  %v354 = vpack.c.b16 %v334, %v333
  %v355 = vpack.c.b16 %v336, %v335
  %v356 = vpack.c.b16 %v338, %v337
  %vm375 = vcmask 261120
  %v377 = vsel %vm375, %v214, 0
  %v380 = vsel %vm375, %v217, 0
  %v383 = vsel %vm375, %v220, 0
  %v386 = vsel %vm375, %v223, 0
  %v389 = vsel %vm375, %v226, 0
  %v392 = vsel %vm375, %v229, 0
  %v395 = vsel %vm375, %v232, 0
  %v398 = vsel %vm375, %v235, 0
  %v401 = vsel %vm375, %v238, 0
  %v404 = vsel %vm375, %v241, 0
  %v407 = vsel %vm375, %v244, 0
  %409 = vmatprep.subr.bf16.mxu0 0
  %410 = vmatpush1.bf16.msra.mxu0 %v346
  %411 = vmatprep.subr.bf16.mxu0 0
  %412 = vmatpush1.bf16.msra.mxu0 %v345
  %413 = vmatprep.subr.bf16.mxu0 0
  %414 = vmatpush1.bf16.msra.mxu0 %v344
  %415 = vmatprep.subr.bf16.mxu0 0
  %416 = vmatpush1.bf16.msra.mxu0 %v343
  %417 = vmatprep.subr.bf16.mxu0 0
  %418 = vmatpush1.bf16.msra.mxu0 %v342
  %419 = vmatprep.subr.bf16.mxu0 0
  %420 = vmatpush1.bf16.msra.mxu0 %v341
  %421 = vmatprep.subr.bf16.mxu0 0
  %422 = vmatpush1.bf16.msra.mxu0 %v340
  %423 = vmatprep.subr.bf16.mxu0 0
  %424 = vmatpush1.bf16.msra.mxu0 %v339
  %425 = vmatprep.subr.bf16.mxu0 0
  %426 = vmatpush2.bf16.msra.mxu0 %v354
  %427 = vmatprep.subr.bf16.mxu0 0
  %428 = vmatpush2.bf16.msra.mxu0 %v353
  %429 = vmatprep.subr.bf16.mxu0 0
  %430 = vmatpush2.bf16.msra.mxu0 %v352
  %431 = vmatprep.subr.bf16.mxu0 0
  %432 = vmatpush2.bf16.msra.mxu0 %v351
  %433 = vmatprep.subr.bf16.mxu0 0
  %434 = vmatpush2.bf16.msra.mxu0 %v350
  %435 = vmatprep.subr.bf16.mxu0 0
  %436 = vmatpush2.bf16.msra.mxu0 %v349
  %437 = vmatprep.subr.bf16.mxu0 0
  %438 = vmatpush2.bf16.msra.mxu0 %v348
  %439 = vmatprep.subr.bf16.mxu0 0
  %440 = vmatpush2.bf16.msra.mxu0 %v347
  %441 = vmatprep.mubr.bf16.mxu0 %v213
  %442 = vmatmul.mubr.bf16.gmra.mxu0 %v212
  %v443 = vpop.f32.mrf.mxu0
  %v444 = vadd.f32 %v100, %v443
  %v445 = vpop.f32.mrf.mxu0
  %v446 = vpop.f32.mrf.mxu0
  %v447 = vadd.f32 %v100, %v446
  %v448 = vpop.f32.mrf.mxu0
  %449 = vmatprep.mubr.bf16.mxu0 %v216
  %450 = vmatmul.mubr.bf16.gmra.mxu0 %v215
  %v451 = vpop.f32.mrf.mxu0
  %v452 = vadd.f32 %v100, %v451
  %v453 = vpop.f32.mrf.mxu0
  %v454 = vpop.f32.mrf.mxu0
  %v455 = vadd.f32 %v100, %v454
  %v456 = vpop.f32.mrf.mxu0
  %457 = vmatprep.mubr.bf16.mxu0 %v219
  %458 = vmatmul.mubr.bf16.gmra.mxu0 %v218
  %v459 = vpop.f32.mrf.mxu0
  %v460 = vadd.f32 %v100, %v459
  %v461 = vpop.f32.mrf.mxu0
  %v462 = vpop.f32.mrf.mxu0
  %v463 = vadd.f32 %v100, %v462
  %v464 = vpop.f32.mrf.mxu0
  %465 = vmatprep.mubr.bf16.mxu0 %v222
  %466 = vmatmul.mubr.bf16.gmra.mxu0 %v221
  %v467 = vpop.f32.mrf.mxu0
  %v468 = vadd.f32 %v100, %v467
  %v469 = vpop.f32.mrf.mxu0
  %v470 = vpop.f32.mrf.mxu0
  %v471 = vadd.f32 %v100, %v470
  %v472 = vpop.f32.mrf.mxu0
  %473 = vmatprep.mubr.bf16.mxu0 %v225
  %474 = vmatmul.mubr.bf16.gmra.mxu0 %v224
  %v475 = vpop.f32.mrf.mxu0
  %v476 = vadd.f32 %v100, %v475
  %v477 = vpop.f32.mrf.mxu0
  %v478 = vpop.f32.mrf.mxu0
  %v479 = vadd.f32 %v100, %v478
  %v480 = vpop.f32.mrf.mxu0
  %481 = vmatprep.mubr.bf16.mxu0 %v228
  %482 = vmatmul.mubr.bf16.gmra.mxu0 %v227
  %v483 = vpop.f32.mrf.mxu0
  %v484 = vadd.f32 %v100, %v483
  %v485 = vpop.f32.mrf.mxu0
  %v486 = vpop.f32.mrf.mxu0
  %v487 = vadd.f32 %v100, %v486
  %v488 = vpop.f32.mrf.mxu0
  %489 = vmatprep.mubr.bf16.mxu0 %v231
  %490 = vmatmul.mubr.bf16.gmra.mxu0 %v230
  %v491 = vpop.f32.mrf.mxu0
  %v492 = vadd.f32 %v100, %v491
  %v493 = vpop.f32.mrf.mxu0
  %v494 = vpop.f32.mrf.mxu0
  %v495 = vadd.f32 %v100, %v494
  %v496 = vpop.f32.mrf.mxu0
  %497 = vmatprep.mubr.bf16.mxu0 %v234
  %498 = vmatmul.mubr.bf16.gmra.mxu0 %v233
  %v499 = vpop.f32.mrf.mxu0
  %v500 = vadd.f32 %v100, %v499
  %v501 = vpop.f32.mrf.mxu0
  %v502 = vpop.f32.mrf.mxu0
  %v503 = vadd.f32 %v100, %v502
  %v504 = vpop.f32.mrf.mxu0
  %505 = vmatprep.mubr.bf16.mxu0 %v237
  %506 = vmatmul.mubr.bf16.gmra.mxu0 %v236
  %v507 = vpop.f32.mrf.mxu0
  %v508 = vadd.f32 %v100, %v507
  %v509 = vpop.f32.mrf.mxu0
  %v510 = vpop.f32.mrf.mxu0
  %v511 = vadd.f32 %v100, %v510
  %v512 = vpop.f32.mrf.mxu0
  %513 = vmatprep.mubr.bf16.mxu0 %v240
  %514 = vmatmul.mubr.bf16.gmra.mxu0 %v239
  %v515 = vpop.f32.mrf.mxu0
  %v516 = vadd.f32 %v100, %v515
  %v517 = vpop.f32.mrf.mxu0
  %v518 = vpop.f32.mrf.mxu0
  %v519 = vadd.f32 %v100, %v518
  %v520 = vpop.f32.mrf.mxu0
  %521 = vmatprep.mubr.bf16.mxu0 %v243
  %522 = vmatmul.mubr.bf16.gmra.mxu0 %v242
  %v523 = vpop.f32.mrf.mxu0
  %v524 = vadd.f32 %v100, %v523
  %v525 = vpop.f32.mrf.mxu0
  %v526 = vpop.f32.mrf.mxu0
  %v527 = vadd.f32 %v100, %v526
  %v528 = vpop.f32.mrf.mxu0
  %529 = vdwg.mxu0
  %530 = vmatprep.subr.bf16.mxu0 0
  %531 = vmatpush1.bf16.msra.mxu0 0
  %532 = vmatprep.subr.bf16.mxu0 0
  %533 = vmatpush1.bf16.msra.mxu0 0
  %534 = vmatprep.subr.bf16.mxu0 0
  %535 = vmatpush1.bf16.msra.mxu0 0
  %536 = vmatprep.subr.bf16.mxu0 0
  %537 = vmatpush1.bf16.msra.mxu0 0
  %538 = vmatprep.subr.bf16.mxu0 0
  %539 = vmatpush1.bf16.msra.mxu0 0
  %540 = vmatprep.subr.bf16.mxu0 0
  %541 = vmatpush1.bf16.msra.mxu0 0
  %542 = vmatprep.subr.bf16.mxu0 0
  %543 = vmatpush1.bf16.msra.mxu0 %v356
  %544 = vmatprep.subr.bf16.mxu0 0
  %545 = vmatpush1.bf16.msra.mxu0 %v355
  %546 = vmatprep.subr.bf16.mxu0 0
  %547 = vmatpush2.bf16.msra.mxu0 0
  %548 = vmatprep.subr.bf16.mxu0 0
  %549 = vmatpush2.bf16.msra.mxu0 0
  %550 = vmatprep.subr.bf16.mxu0 0
  %551 = vmatpush2.bf16.msra.mxu0 0
  %552 = vmatprep.subr.bf16.mxu0 0
  %553 = vmatpush2.bf16.msra.mxu0 0
  %554 = vmatprep.subr.bf16.mxu0 0
  %555 = vmatpush2.bf16.msra.mxu0 0
  %556 = vmatprep.subr.bf16.mxu0 0
  %557 = vmatpush2.bf16.msra.mxu0 0
  %558 = vmatprep.subr.bf16.mxu0 0
  %559 = vmatpush2.bf16.msra.mxu0 0
  %560 = vmatprep.subr.bf16.mxu0 0
  %561 = vmatpush2.bf16.msra.mxu0 0
  %562 = vmatprep.mubr.bf16.mxu0 0
  %563 = vmatmul.mubr.bf16.gmra.mxu0 %v377
  %v564 = vpop.f32.mrf.mxu0
  %v565 = vadd.f32 %v444, %v564
  %v566 = vpop.f32.mrf.mxu0
  %v567 = vpop.f32.mrf.mxu0
  %v568 = vadd.f32 %v447, %v567
  %v569 = vpop.f32.mrf.mxu0
  %570 = vmatprep.mubr.bf16.mxu0 0
  %571 = vmatmul.mubr.bf16.gmra.mxu0 %v380
  %v572 = vpop.f32.mrf.mxu0
  %v573 = vadd.f32 %v452, %v572
  %v574 = vpop.f32.mrf.mxu0
  %v575 = vpop.f32.mrf.mxu0
  %v576 = vadd.f32 %v455, %v575
  %v577 = vpop.f32.mrf.mxu0
  %578 = vmatprep.mubr.bf16.mxu0 0
  %579 = vmatmul.mubr.bf16.gmra.mxu0 %v383
  %v580 = vpop.f32.mrf.mxu0
  %v581 = vadd.f32 %v460, %v580
  %v582 = vpop.f32.mrf.mxu0
  %v583 = vpop.f32.mrf.mxu0
  %v584 = vadd.f32 %v463, %v583
  %v585 = vpop.f32.mrf.mxu0
  %586 = vmatprep.mubr.bf16.mxu0 0
  %587 = vmatmul.mubr.bf16.gmra.mxu0 %v386
  %v588 = vpop.f32.mrf.mxu0
  %v589 = vadd.f32 %v468, %v588
  %v590 = vpop.f32.mrf.mxu0
  %v591 = vpop.f32.mrf.mxu0
  %v592 = vadd.f32 %v471, %v591
  %v593 = vpop.f32.mrf.mxu0
  %594 = vmatprep.mubr.bf16.mxu0 0
  %595 = vmatmul.mubr.bf16.gmra.mxu0 %v389
  %v596 = vpop.f32.mrf.mxu0
  %v597 = vadd.f32 %v476, %v596
  %v598 = vpop.f32.mrf.mxu0
  %v599 = vpop.f32.mrf.mxu0
  %v600 = vadd.f32 %v479, %v599
  %v601 = vpop.f32.mrf.mxu0
  %602 = vmatprep.mubr.bf16.mxu0 0
  %603 = vmatmul.mubr.bf16.gmra.mxu0 %v392
  %v604 = vpop.f32.mrf.mxu0
  %v605 = vadd.f32 %v484, %v604
  %v606 = vpop.f32.mrf.mxu0
  %v607 = vpop.f32.mrf.mxu0
  %v608 = vadd.f32 %v487, %v607
  %v609 = vpop.f32.mrf.mxu0
  %610 = vmatprep.mubr.bf16.mxu0 0
  %611 = vmatmul.mubr.bf16.gmra.mxu0 %v395
  %v612 = vpop.f32.mrf.mxu0
  %v613 = vadd.f32 %v492, %v612
  %v614 = vpop.f32.mrf.mxu0
  %v615 = vpop.f32.mrf.mxu0
  %v616 = vadd.f32 %v495, %v615
  %v617 = vpop.f32.mrf.mxu0
  %618 = vmatprep.mubr.bf16.mxu0 0
  %619 = vmatmul.mubr.bf16.gmra.mxu0 %v398
  %v620 = vpop.f32.mrf.mxu0
  %v621 = vadd.f32 %v500, %v620
  %v622 = vpop.f32.mrf.mxu0
  %v623 = vpop.f32.mrf.mxu0
  %v624 = vadd.f32 %v503, %v623
  %v625 = vpop.f32.mrf.mxu0
  %626 = vmatprep.mubr.bf16.mxu0 0
  %627 = vmatmul.mubr.bf16.gmra.mxu0 %v401
  %v628 = vpop.f32.mrf.mxu0
  %v629 = vadd.f32 %v508, %v628
  %v630 = vpop.f32.mrf.mxu0
  %v631 = vpop.f32.mrf.mxu0
  %v632 = vadd.f32 %v511, %v631
  %v633 = vpop.f32.mrf.mxu0
  %634 = vmatprep.mubr.bf16.mxu0 0
  %635 = vmatmul.mubr.bf16.gmra.mxu0 %v404
  %v636 = vpop.f32.mrf.mxu0
  %v637 = vadd.f32 %v516, %v636
  %v638 = vpop.f32.mrf.mxu0
  %v639 = vpop.f32.mrf.mxu0
  %v640 = vadd.f32 %v519, %v639
  %v641 = vpop.f32.mrf.mxu0
  %642 = vmatprep.mubr.bf16.mxu0 0
  %643 = vmatmul.mubr.bf16.gmra.mxu0 %v407
  %v644 = vpop.f32.mrf.mxu0
  %v645 = vadd.f32 %v524, %v644
  %v646 = vpop.f32.mrf.mxu0
  %v647 = vpop.f32.mrf.mxu0
  %v648 = vadd.f32 %v527, %v647
  %v649 = vpop.f32.mrf.mxu0
  %650 = vdwg.mxu0
  %v651 = vxor.u32 %v565, 2147483648
  %v652 = vxor.u32 %v568, 2147483648
  %v653 = vxor.u32 %v573, 2147483648
  %v654 = vxor.u32 %v576, 2147483648
  %v655 = vxor.u32 %v581, 2147483648
  %v656 = vxor.u32 %v584, 2147483648
  %v657 = vxor.u32 %v589, 2147483648
  %v658 = vxor.u32 %v592, 2147483648
  %v659 = vxor.u32 %v597, 2147483648
  %v660 = vxor.u32 %v600, 2147483648
  %v661 = vxor.u32 %v605, 2147483648
  %v662 = vxor.u32 %v608, 2147483648
  %v663 = vxor.u32 %v613, 2147483648
  %v664 = vxor.u32 %v616, 2147483648
  %v665 = vxor.u32 %v621, 2147483648
  %v666 = vxor.u32 %v624, 2147483648
  %v667 = vxor.u32 %v629, 2147483648
  %v668 = vxor.u32 %v632, 2147483648
  %v669 = vxor.u32 %v637, 2147483648
  %v670 = vxor.u32 %v640, 2147483648
  %v671 = vxor.u32 %v645, 2147483648
  %v672 = vxor.u32 %v648, 2147483648
  %v673 = vmul.f32 %v651, 1.442695
  %v674 = vpow.pop %v673
  %v675 = vmul.f32 %v652, 1.442695
  %v676 = vpow.pop %v675
  %v677 = vmul.f32 %v653, 1.442695
  %v678 = vpow.pop %v677
  %v679 = vmul.f32 %v654, 1.442695
  %v680 = vpow.pop %v679
  %v681 = vmul.f32 %v655, 1.442695
  %v682 = vpow.pop %v681
  %v683 = vmul.f32 %v656, 1.442695
  %v684 = vpow.pop %v683
  %v685 = vmul.f32 %v657, 1.442695
  %v686 = vpow.pop %v685
  %v687 = vmul.f32 %v658, 1.442695
  %v688 = vpow.pop %v687
  %v689 = vmul.f32 %v659, 1.442695
  %v690 = vpow.pop %v689
  %v691 = vmul.f32 %v660, 1.442695
  %v692 = vpow.pop %v691
  %v693 = vmul.f32 %v661, 1.442695
  %v694 = vpow.pop %v693
  %v695 = vmul.f32 %v662, 1.442695
  %v696 = vpow.pop %v695
  %v697 = vmul.f32 %v663, 1.442695
  %v698 = vpow.pop %v697
  %v699 = vmul.f32 %v664, 1.442695
  %v700 = vpow.pop %v699
  %v701 = vmul.f32 %v665, 1.442695
  %v702 = vpow.pop %v701
  %v703 = vmul.f32 %v666, 1.442695
  %v704 = vpow.pop %v703
  %v705 = vmul.f32 %v667, 1.442695
  %v706 = vpow.pop %v705
  %v707 = vmul.f32 %v668, 1.442695
  %v708 = vpow.pop %v707
  %v709 = vmul.f32 %v669, 1.442695
  %v710 = vpow.pop %v709
  %v711 = vmul.f32 %v670, 1.442695
  %v712 = vpow.pop %v711
  %v713 = vmul.f32 %v671, 1.442695
  %v714 = vpow.pop %v713
  %v715 = vmul.f32 %v672, 1.442695
  %v716 = vpow.pop %v715
  %v717 = vadd.f32 %v674, 1.0
  %v718 = vadd.f32 %v676, 1.0
  %v719 = vadd.f32 %v678, 1.0
  %v720 = vadd.f32 %v680, 1.0
  %v721 = vadd.f32 %v682, 1.0
  %v722 = vadd.f32 %v684, 1.0
  %v723 = vadd.f32 %v686, 1.0
  %v724 = vadd.f32 %v688, 1.0
  %v725 = vadd.f32 %v690, 1.0
  %v726 = vadd.f32 %v692, 1.0
  %v727 = vadd.f32 %v694, 1.0
  %v728 = vadd.f32 %v696, 1.0
  %v729 = vadd.f32 %v698, 1.0
  %v730 = vadd.f32 %v700, 1.0
  %v731 = vadd.f32 %v702, 1.0
  %v732 = vadd.f32 %v704, 1.0
  %v733 = vadd.f32 %v706, 1.0
  %v734 = vadd.f32 %v708, 1.0
  %v735 = vadd.f32 %v710, 1.0
  %v736 = vadd.f32 %v712, 1.0
  %v737 = vadd.f32 %v714, 1.0
  %v738 = vadd.f32 %v716, 1.0
  %v739 = vrcp.pop %v717
  %v740 = vmul.f32 1.0, %v739
  %v741 = vrcp.pop %v718
  %v742 = vmul.f32 1.0, %v741
  %v743 = vrcp.pop %v719
  %v744 = vmul.f32 1.0, %v743
  %v745 = vrcp.pop %v720
  %v746 = vmul.f32 1.0, %v745
  %v747 = vrcp.pop %v721
  %v748 = vmul.f32 1.0, %v747
  %v749 = vrcp.pop %v722
  %v750 = vmul.f32 1.0, %v749
  %v751 = vrcp.pop %v723
  %v752 = vmul.f32 1.0, %v751
  %v753 = vrcp.pop %v724
  %v754 = vmul.f32 1.0, %v753
  %v755 = vrcp.pop %v725
  %v756 = vmul.f32 1.0, %v755
  %v757 = vrcp.pop %v726
  %v758 = vmul.f32 1.0, %v757
  %v759 = vrcp.pop %v727
  %v760 = vmul.f32 1.0, %v759
  %v761 = vrcp.pop %v728
  %v762 = vmul.f32 1.0, %v761
  %v763 = vrcp.pop %v729
  %v764 = vmul.f32 1.0, %v763
  %v765 = vrcp.pop %v730
  %v766 = vmul.f32 1.0, %v765
  %v767 = vrcp.pop %v731
  %v768 = vmul.f32 1.0, %v767
  %v769 = vrcp.pop %v732
  %v770 = vmul.f32 1.0, %v769
  %v771 = vrcp.pop %v733
  %v772 = vmul.f32 1.0, %v771
  %v773 = vrcp.pop %v734
  %v774 = vmul.f32 1.0, %v773
  %v775 = vrcp.pop %v735
  %v776 = vmul.f32 1.0, %v775
  %v777 = vrcp.pop %v736
  %v778 = vmul.f32 1.0, %v777
  %v779 = vrcp.pop %v737
  %v780 = vmul.f32 1.0, %v779
  %v781 = vrcp.pop %v738
  %v782 = vmul.f32 1.0, %v781
  %783 = vst [vmem:[%s3] sm:$0xff] %v740
  %784 = vst [vmem:[%s3 + $0x8] sm:$0xff] %v742
  %785 = vst [vmem:[%s3 + $0x10] sm:$0xff] %v744
  %786 = vst [vmem:[%s3 + $0x18] sm:$0xff] %v746
  %787 = vst [vmem:[%s3 + $0x20] sm:$0xff] %v748
  %788 = vst [vmem:[%s3 + $0x28] sm:$0xff] %v750
  %789 = vst [vmem:[%s3 + $0x30] sm:$0xff] %v752
  %790 = vst [vmem:[%s3 + $0x38] sm:$0xff] %v754
  %791 = vst [vmem:[%s3 + $0x40] sm:$0xff] %v756
  %792 = vst [vmem:[%s3 + $0x48] sm:$0xff] %v758
  %793 = vst [vmem:[%s3 + $0x50] sm:$0xff] %v760
  %794 = vst [vmem:[%s3 + $0x58] sm:$0xff] %v762
  %795 = vst [vmem:[%s3 + $0x60] sm:$0xff] %v764
  %796 = vst [vmem:[%s3 + $0x68] sm:$0xff] %v766
  %797 = vst [vmem:[%s3 + $0x70] sm:$0xff] %v768
  %798 = vst [vmem:[%s3 + $0x78] sm:$0xff] %v770
  %799 = vst [vmem:[%s3 + $0x80] sm:$0xff] %v772
  %800 = vst [vmem:[%s3 + $0x88] sm:$0xff] %v774
  %801 = vst [vmem:[%s3 + $0x90] sm:$0xff] %v776
  %802 = vst [vmem:[%s3 + $0x98] sm:$0xff] %v778
  %803 = vst [vmem:[%s3 + $0xa0] sm:$0xff] %v780
  %804 = vst [vmem:[%s3 + $0xa8] sm:$0xff] %v782
  // Predicated region
  $region14: #{retinanet_forward.45} parent=0 // pred_check
    _
  $region15: #{retinanet_forward.45} parent=0 // pred_check_branch
    %806 = sbr.rel (0) target = $region17
  $region16: #{retinanet_forward.45} parent=0 // pred_region
    _
  $region17: #{retinanet_forward.45} parent=0 // pred_fallthru
    _
  // Predicated region
  $region18: #{retinanet_forward.45} parent=0 // pred_check
    _
  $region19: #{retinanet_forward.45} parent=0 // pred_check_branch
    %808 = sbr.rel (0) target = $region21
  $region20: #{retinanet_forward.45} parent=0 // pred_region
    _
  $region21: #{retinanet_forward.45} parent=0 // pred_fallthru
    _

</llo_original>
